<compile_context>
chip_gen: v7x
topology: tpu7x:2x2x1
jax: 0.10.0
libtpu: 0.0.40
codegen_flags: <defaults>
</compile_context>

<pallas_src>
import functools
import math

import jax
import jax.numpy as jnp
import numpy as np
from jax.experimental import pallas as pl
from jax.experimental.pallas import tpu as pltpu


# ----------------------------------------------------------------------------
# Helpers
# ----------------------------------------------------------------------------

def _fs(shape):
    """Full-array BlockSpec (single block)."""
    n = len(shape)
    return pl.BlockSpec(shape, lambda *_: (0,) * n)


def _conv_dims(H):
    """Pooled output heights of the three conv stages for input height H."""
    H1 = (H + 2 * 3 - 7) // 5 + 1
    assert H1 % 2 == 0
    P1 = H1 // 2
    H2 = (P1 + 2 * 2 - 5) // 2 + 1
    assert H2 % 2 == 0
    P2 = H2 // 2
    H3 = (P2 + 2 * 1 - 3) // 2 + 1
    assert H3 % 2 == 0
    P3 = H3 // 2
    return P1, P2, P3


# ----------------------------------------------------------------------------
# The single fused kernel
# ----------------------------------------------------------------------------

def _fused_forward_kernel(
        part1_ref, part2_ref, w1a_ref, w1b_ref, cb1_ref,
        g2_ref, w2_ref, cb2_ref,
        g3_ref, w3_ref, cb3_ref,
        pos_ref, mask_ref,
        wqkv_ref, bqkv_ref, wout_ref, bout_ref,
        wff1_ref, bff1_ref, wff2_ref, bff2_ref,
        ln1g_ref, ln1b_ref, ln2g_ref, ln2b_ref,
        midw_ref, midb_ref, c1w_ref, c1b_ref, decw_ref, decb_ref,
        o_ref, *, B, S, D, P1, P2, nheads, eps):
    f32, bf16 = jnp.float32, jnp.bfloat16
    hd = D // nheads
    BS = B * S
    L = wqkv_ref.shape[0]

    def mm(a, b):
        return jnp.dot(a.astype(bf16), b.astype(bf16),
                       preferred_element_type=f32)

    def pool_bias_relu(acc, bias, half):
        # maxpool((2,1)) + folded-BN bias + ReLU.  Correct only because the bias is
        # shared by the two pooled rows and relu/max commute.
        return jnp.maximum(jnp.maximum(acc[:, :half], acc[:, half:]) + bias, 0.0)

    # ----------------- conv1 + bn1 + relu + maxpool (two matmuls) -----------
    acc1 = mm(part1_ref[...], w1a_ref[...]) + mm(part2_ref[...], w1b_ref[...])
    y1 = pool_bias_relu(acc1, cb1_ref[...], 48)            # (B*P1, 3*16)

    # ----------------- conv2 + bn2 + relu + maxpool --------------------------
    gat2 = mm(g2_ref[...], y1)                              # (7*B*P2, 48) row-gathered taps
    rows2 = B * P2
    acc2 = mm(gat2[0:rows2], w2_ref[0])
    for t in range(1, 7):
        acc2 = acc2 + mm(gat2[t * rows2:(t + 1) * rows2], w2_ref[t])
    y2 = pool_bias_relu(acc2, cb2_ref[...], 192)            # (B*P2, 3*64)

    # ----------------- conv3 + bn3 + relu + maxpool --------------------------
    gat3 = mm(g3_ref[...], y2)                              # (5*B*S, 192)
    rows3 = B * S
    acc3 = mm(gat3[0:rows3], w3_ref[0])
    for t in range(1, 5):
        acc3 = acc3 + mm(gat3[t * rows3:(t + 1) * rows3], w3_ref[t])
    src = pool_bias_relu(acc3, cb3_ref[...], D)             # (B*S, D), rows = (b, s)

    # ----------------- positional encoding + 2 post-norm encoder layers ------
    def layer_norm(z, g, b):
        mu = jnp.mean(z, axis=-1, keepdims=True)
        var = jnp.mean(jnp.square(z - mu), axis=-1, keepdims=True)
        return (z - mu) * jax.lax.rsqrt(var + eps) * g + b

    mask = mask_ref[...]                                    # block-diagonal 0 / -1e9
    y = src + pos_ref[...]                                  # pos pre-tiled to (B*S, D)
    for l in range(L):
        wout_l = wout_ref[l]
        qkv = mm(y, wqkv_ref[l]) + bqkv_ref[l]              # (BS, 3D); q pre-scaled
        attn = jnp.zeros((BS, D), f32)
        for h in range(nheads):
            c = h * hd
            q = qkv[:, c:c + hd]
            k = qkv[:, D + c:D + c + hd]
            v = qkv[:, 2 * D + c:2 * D + c + hd]
            s = jax.lax.dot_general(q.astype(bf16), k.astype(bf16),
                                    (((1,), (1,)), ((), ())),
                                    preferred_element_type=f32) + mask
            s = s - jnp.max(s, axis=-1, keepdims=True)
            p = jnp.exp(s)
            p = p * pl.reciprocal(jnp.sum(p, axis=-1, keepdims=True), approx=True)
            attn = attn + mm(mm(p, v), wout_l[c:c + hd, :])  # per-head out-proj partials
        attn = attn + bout_ref[l]
        y = layer_norm(y + attn, ln1g_ref[l], ln1b_ref[l])
        ff = jnp.maximum(mm(y, wff1_ref[l]) + bff1_ref[l], 0.0)
        ff = mm(ff, wff2_ref[l]) + bff2_ref[l]
        y = layer_norm(y + ff, ln2g_ref[l], ln2b_ref[l])

    # ----------------- mid_layer residual + ReLU + Conv1d(6->1) + decoder ----
    mid = mm(src, midw_ref[...]) + midb_ref[...]
    act = jnp.maximum(y + mid, 0.0)                         # (B*S, D)
    z = mm(c1w_ref[...], act) + c1b_ref[...]                # (B, D): block-diag Conv1d
    o_ref[...] = mm(z, decw_ref[...]) + decb_ref[...]       # (B, 100)


# ----------------------------------------------------------------------------
# Parameters (PyTorch layout) and one-time packing for the kernel
# ----------------------------------------------------------------------------

def init_params(key, feature_size=128):
    def nrm(k, shape, scale=0.05):
        return scale * jax.random.normal(k, shape, jnp.float32)

    keys = iter(jax.random.split(key, 64))
    p = {}
    for name, cin, cout, (kh, kw) in [("conv1", 1, 16, (7, 3)),
                                      ("conv2", 16, 64, (5, 3)),
                                      ("conv3", 64, feature_size, (3, 3))]:
        p[name + "_w"] = nrm(next(keys), (cout, cin, kh, kw))
        p[name + "_b"] = nrm(next(keys), (cout,))
        p[name + "_bn_g"] = 1.0 + nrm(next(keys), (cout,))
        p[name + "_bn_b"] = nrm(next(keys), (cout,))
        p[name + "_bn_mean"] = jnp.zeros((cout,), jnp.float32)
        p[name + "_bn_var"] = jnp.ones((cout,), jnp.float32)
    D = feature_size
    for l in range(2):
        pr = f"enc{l}_"
        p[pr + "in_proj_w"] = nrm(next(keys), (3 * D, D))
        p[pr + "in_proj_b"] = nrm(next(keys), (3 * D,))
        p[pr + "out_proj_w"] = nrm(next(keys), (D, D))
        p[pr + "out_proj_b"] = nrm(next(keys), (D,))
        p[pr + "lin1_w"] = nrm(next(keys), (256, D))
        p[pr + "lin1_b"] = nrm(next(keys), (256,))
        p[pr + "lin2_w"] = nrm(next(keys), (D, 256))
        p[pr + "lin2_b"] = nrm(next(keys), (D,))
        p[pr + "norm1_g"] = jnp.ones((D,), jnp.float32)
        p[pr + "norm1_b"] = jnp.zeros((D,), jnp.float32)
        p[pr + "norm2_g"] = jnp.ones((D,), jnp.float32)
        p[pr + "norm2_b"] = jnp.zeros((D,), jnp.float32)
    p["mid_w"] = nrm(next(keys), (D, D))
    p["mid_b"] = nrm(next(keys), (D,))
    p["conv1d_w"] = nrm(next(keys), (1, 6, 1))
    p["conv1d_b"] = nrm(next(keys), (1,))
    p["dec_w"] = nrm(next(keys), (100, D))
    p["dec_b"] = nrm(next(keys), (100,))
    # Positional encoding, same construction as the torch module.
    max_len = 1500
    pos = jnp.arange(max_len, dtype=jnp.float32)[:, None]
    div = jnp.power(10000.0, jnp.arange(0, D, 2, dtype=jnp.float32) / D)
    X = pos / div
    P = jnp.zeros((1, max_len, D), jnp.float32)
    P = P.at[:, :, 0::2].set(jnp.sin(X))
    P = P.at[:, :, 1::2].set(jnp.cos(X))
    p["pos_P"] = P
    return p


def pack_params(p, *, B, H, feature_size=128, n_layers=2, n_heads=4, eps=1e-5):
    """One-time weight prep (BN folding, block-structured conv weights, gather
    matrices, scale folding, bf16 casts).  Batch/height specific (B, H)."""
    P1, P2, S = _conv_dims(H)
    D = feature_size
    assert S == int(p["conv1d_w"].shape[1]), "conv stack must reduce H to seq len 6"

    def npf(x):
        return np.asarray(x, np.float32)

    def fold(name):
        w = npf(p[name + "_w"])
        scale = npf(p[name + "_bn_g"]) / np.sqrt(npf(p[name + "_bn_var"]) + eps)
        shift = npf(p[name + "_bn_b"]) - npf(p[name + "_bn_mean"]) * scale
        return w * scale[:, None, None, None], npf(p[name + "_b"]) * scale + shift

    w1, b1 = fold("conv1")
    w2, b2 = fold("conv2")
    w3, b3 = fold("conv3")
    pk = {}

    # ---- stage 1: window-slab weights (50 -> 2*48), even/odd pooled halves ----
    w1a = np.zeros((50, 96), np.float32)
    w1b = np.zeros((50, 96), np.float32)
    for t in range(12):                           # window rows per pooled output
        for par, di in ((0, t), (1, t - 5)):      # even conv row / odd conv row
            if not 0 <= di < 7:
                continue
            for dj in range(3):
                for wo in range(3):
                    col = par * 48 + wo * 16
                    lane = wo + dj                # padded-width position
                    if t < 10:
                        w1a[t * 5 + lane, col:col + 16] += w1[:, 0, di, dj]
                    else:
                        w1b[(t - 10) * 5 + lane, col:col + 16] += w1[:, 0, di, dj]
    pk["w1a"] = jnp.asarray(w1a, jnp.bfloat16)
    pk["w1b"] = jnp.asarray(w1b, jnp.bfloat16)
    pk["cb1"] = jnp.asarray(np.tile(b1, 3)[None, :], jnp.float32)

    # ---- stage 2: per-tap weights (48 -> 2*192) + row-gather matrix ----------
    w2s = np.zeros((7, 48, 384), np.float32)
    for t in range(7):
        for par, di in ((0, t), (1, t - 2)):
            if not 0 <= di < 5:
                continue
            for dj in range(3):
                for wo in range(3):
                    w = wo + dj - 1               # real (unpadded) width position
                    if not 0 <= w < 3:
                        continue
                    w2s[t, w * 16:(w + 1) * 16,
                        par * 192 + wo * 64: par * 192 + (wo + 1) * 64] += w2[:, :, di, dj].T
    pk["w2"] = jnp.asarray(w2s, jnp.bfloat16)
    pk["cb2"] = jnp.asarray(np.tile(b2, 3)[None, :], jnp.float32)

    g2 = np.zeros((7 * B * P2, B * P1), np.float32)
    for t in range(7):
        for b in range(B):
            for q in range(P2):
                h = 4 * q + t - 2                 # padded row -> real row (ph=2)
                if 0 <= h < P1:
                    g2[t * B * P2 + b * P2 + q, b * P1 + h] = 1.0
    pk["g2"] = jnp.asarray(g2, jnp.bfloat16)

    # ---- stage 3: per-tap weights (192 -> 2*128) + row-gather matrix ---------
    w3s = np.zeros((5, 192, 256), np.float32)
    for t in range(5):
        for par, di in ((0, t), (1, t - 2)):
            if not 0 <= di < 3:
                continue
            for dj in range(3):
                w3s[t, dj * 64:(dj + 1) * 64,
                    par * 128:(par + 1) * 128] += w3[:, :, di, dj].T
    pk["w3"] = jnp.asarray(w3s, jnp.bfloat16)
    pk["cb3"] = jnp.asarray(b3[None, :], jnp.float32)

    g3 = np.zeros((5 * B * S, B * P2), np.float32)
    for t in range(5):
        for b in range(B):
            for q in range(S):
                h = 4 * q + t - 1                 # padded row -> real row (ph=1)
                if 0 <= h < P2:
                    g3[t * B * S + b * S + q, b * P2 + h] = 1.0
    pk["g3"] = jnp.asarray(g3, jnp.bfloat16)

    # ---- transformer encoder (scale folded into q columns of in_proj) --------
    def stack_t(key_):
        return jnp.asarray(
            np.stack([npf(p[f"enc{l}_{key_}"]).T for l in range(n_layers)]), jnp.bfloat16)

    def stack_v(key_):
        return jnp.asarray(
            np.stack([npf(p[f"enc{l}_{key_}"])[None, :] for l in range(n_layers)]),
            jnp.float32)

    wqkv = np.stack([npf(p[f"enc{l}_in_proj_w"]).T for l in range(n_layers)])
    bqkv = np.stack([npf(p[f"enc{l}_in_proj_b"])[None, :] for l in range(n_layers)])
    scale = 1.0 / math.sqrt(D // n_heads)
    wqkv[:, :, :D] *= scale
    bqkv[:, :, :D] *= scale
    pk["wqkv"] = jnp.asarray(wqkv, jnp.bfloat16)
    pk["bqkv"] = jnp.asarray(bqkv, jnp.float32)
    pk["wout"] = stack_t("out_proj_w"); pk["bout"] = stack_v("out_proj_b")
    pk["wff1"] = stack_t("lin1_w");     pk["bff1"] = stack_v("lin1_b")
    pk["wff2"] = stack_t("lin2_w");     pk["bff2"] = stack_v("lin2_b")
    pk["ln1g"] = stack_v("norm1_g");    pk["ln1b"] = stack_v("norm1_b")
    pk["ln2g"] = stack_v("norm2_g");    pk["ln2b"] = stack_v("norm2_b")

    # ---- tail: mid_layer, block-diagonal Conv1d, decoder, pos, attention mask
    pk["midw"] = jnp.asarray(npf(p["mid_w"]).T, jnp.bfloat16)
    pk["midb"] = jnp.asarray(npf(p["mid_b"])[None, :], jnp.float32)

    c1 = npf(p["conv1d_w"])[0, :, 0]
    c1bd = np.zeros((B, B * S), np.float32)
    for b in range(B):
        c1bd[b, b * S:(b + 1) * S] = c1
    pk["c1w"] = jnp.asarray(c1bd, jnp.float32)
    pk["c1b"] = jnp.asarray(np.full((1, D), float(npf(p["conv1d_b"])[0]), np.float32))

    pk["decw"] = jnp.asarray(npf(p["dec_w"]).T, jnp.bfloat16)
    pk["decb"] = jnp.asarray(npf(p["dec_b"])[None, :], jnp.float32)

    pos = npf(p["pos_P"])[0, :S, :]
    pk["pos"] = jnp.asarray(np.tile(pos, (B, 1)), jnp.float32)

    mask = np.full((B * S, B * S), -1e9, np.float32)
    for b in range(B):
        mask[b * S:(b + 1) * S, b * S:(b + 1) * S] = 0.0
    pk["mask"] = jnp.asarray(mask)
    return pk


# ----------------------------------------------------------------------------
# Full forward pass (inference semantics) -- one pallas_call
# ----------------------------------------------------------------------------

def cnn2d_transam_forward(src, pk):
    """src: (B, H, 3) float32 -- same logical input as the torch model (pre-unsqueeze)."""
    B, H, W = src.shape
    assert W == 3
    P1, P2, S = _conv_dims(H)
    D = pk["midw"].shape[0]
    n_out = pk["decw"].shape[1]

    # Minimal wrapper glue for stage 1: zero-pad and view as disjoint 10-row windows.
    rows = 10 * P1 + 10
    assert rows - 3 - H >= 3
    xpad = jnp.pad(src.astype(jnp.float32), ((0, 0), (3, rows - 3 - H), (1, 1)))
    part1 = xpad[:, :10 * P1, :].reshape(B * P1, 50).astype(jnp.bfloat16)
    part2 = xpad[:, 10:10 * P1 + 10, :].reshape(B * P1, 50).astype(jnp.bfloat16)

    inputs = [part1, part2, pk["w1a"], pk["w1b"], pk["cb1"],
              pk["g2"], pk["w2"], pk["cb2"],
              pk["g3"], pk["w3"], pk["cb3"],
              pk["pos"], pk["mask"],
              pk["wqkv"], pk["bqkv"], pk["wout"], pk["bout"],
              pk["wff1"], pk["bff1"], pk["wff2"], pk["bff2"],
              pk["ln1g"], pk["ln1b"], pk["ln2g"], pk["ln2b"],
              pk["midw"], pk["midb"], pk["c1w"], pk["c1b"],
              pk["decw"], pk["decb"]]

    kernel = functools.partial(_fused_forward_kernel,
                               B=B, S=S, D=D, P1=P1, P2=P2, nheads=4, eps=1e-5)

    return pl.pallas_call(
        kernel,
        out_shape=jax.ShapeDtypeStruct((B, n_out), jnp.float32),
        grid=(1,),
        in_specs=[_fs(a.shape) for a in inputs],
        out_specs=_fs((B, n_out)),
        compiler_params=pltpu.CompilerParams(dimension_semantics=("arbitrary",)),
    )(*inputs)


if __name__ == "__main__":
    key = jax.random.PRNGKey(0)
    pkey, xkey = jax.random.split(key)
    raw_params = init_params(pkey)

    # The module's structure requires input width 3 (so squeeze(dim=3) works) and a
    # height the conv stack reduces to seq=6 (Conv1d has in_channels=6):
    # H: 960 -> 192 -> 96 -> 48 -> 24 -> 12 -> 6 ; W: 3 -> 3 -> 3 -> 1.
    B, H, W = 2, 960, 3
    packed = pack_params(raw_params, B=B, H=H)
    x = jax.random.normal(xkey, (B, H, W), jnp.float32)

    fwd = jax.jit(cnn2d_transam_forward)
    out = jax.block_until_ready(fwd(x, packed))
    assert out.shape == (B, 100) and out.dtype == jnp.float32
    assert bool(jnp.all(jnp.isfinite(out)))
    print("KERNEL_OK")
</pallas_src>

<mosaic_0001>
module attributes {stable_mosaic.version = 11 : i64} {
  func.func @_fused_forward_kernel(%arg0: i32, %arg1: memref<192x50xbf16, #tpu.memory_space<vmem>>, %arg2: memref<192x50xbf16, #tpu.memory_space<vmem>>, %arg3: memref<50x96xbf16, #tpu.memory_space<vmem>>, %arg4: memref<50x96xbf16, #tpu.memory_space<vmem>>, %arg5: memref<1x48xf32, #tpu.memory_space<vmem>>, %arg6: memref<336x192xbf16, #tpu.memory_space<vmem>>, %arg7: memref<7x48x384xbf16, #tpu.memory_space<vmem>>, %arg8: memref<1x192xf32, #tpu.memory_space<vmem>>, %arg9: memref<60x48xbf16, #tpu.memory_space<vmem>>, %arg10: memref<5x192x256xbf16, #tpu.memory_space<vmem>>, %arg11: memref<1x128xf32, #tpu.memory_space<vmem>>, %arg12: memref<12x128xf32, #tpu.memory_space<vmem>>, %arg13: memref<12x12xf32, #tpu.memory_space<vmem>>, %arg14: memref<2x128x384xbf16, #tpu.memory_space<vmem>>, %arg15: memref<2x1x384xf32, #tpu.memory_space<vmem>>, %arg16: memref<2x128x128xbf16, #tpu.memory_space<vmem>>, %arg17: memref<2x1x128xf32, #tpu.memory_space<vmem>>, %arg18: memref<2x128x256xbf16, #tpu.memory_space<vmem>>, %arg19: memref<2x1x256xf32, #tpu.memory_space<vmem>>, %arg20: memref<2x256x128xbf16, #tpu.memory_space<vmem>>, %arg21: memref<2x1x128xf32, #tpu.memory_space<vmem>>, %arg22: memref<2x1x128xf32, #tpu.memory_space<vmem>>, %arg23: memref<2x1x128xf32, #tpu.memory_space<vmem>>, %arg24: memref<2x1x128xf32, #tpu.memory_space<vmem>>, %arg25: memref<2x1x128xf32, #tpu.memory_space<vmem>>, %arg26: memref<128x128xbf16, #tpu.memory_space<vmem>>, %arg27: memref<1x128xf32, #tpu.memory_space<vmem>>, %arg28: memref<2x12xf32, #tpu.memory_space<vmem>>, %arg29: memref<1x128xf32, #tpu.memory_space<vmem>>, %arg30: memref<128x100xbf16, #tpu.memory_space<vmem>>, %arg31: memref<1x100xf32, #tpu.memory_space<vmem>>, %arg32: memref<2x100xf32, #tpu.memory_space<vmem>>) attributes {dimension_semantics = [#tpu.dimension_semantics<arbitrary>], iteration_bounds = array<i64: 1>, scalar_prefetch = 0 : i64, scratch_operands = 0 : i64, tpu.core_type = #tpu.core_type<tc>, window_params = [{pipeline_mode = #tpu.pipeline_mode<synchronous>, transform_indices = @transform_0, window_bounds = array<i64: 192, 50>}, {pipeline_mode = #tpu.pipeline_mode<synchronous>, transform_indices = @transform_1, window_bounds = array<i64: 192, 50>}, {pipeline_mode = #tpu.pipeline_mode<synchronous>, transform_indices = @transform_2, window_bounds = array<i64: 50, 96>}, {pipeline_mode = #tpu.pipeline_mode<synchronous>, transform_indices = @transform_3, window_bounds = array<i64: 50, 96>}, {pipeline_mode = #tpu.pipeline_mode<synchronous>, transform_indices = @transform_4, window_bounds = array<i64: 1, 48>}, {pipeline_mode = #tpu.pipeline_mode<synchronous>, transform_indices = @transform_5, window_bounds = array<i64: 336, 192>}, {pipeline_mode = #tpu.pipeline_mode<synchronous>, transform_indices = @transform_6, window_bounds = array<i64: 7, 48, 384>}, {pipeline_mode = #tpu.pipeline_mode<synchronous>, transform_indices = @transform_7, window_bounds = array<i64: 1, 192>}, {pipeline_mode = #tpu.pipeline_mode<synchronous>, transform_indices = @transform_8, window_bounds = array<i64: 60, 48>}, {pipeline_mode = #tpu.pipeline_mode<synchronous>, transform_indices = @transform_9, window_bounds = array<i64: 5, 192, 256>}, {pipeline_mode = #tpu.pipeline_mode<synchronous>, transform_indices = @transform_10, window_bounds = array<i64: 1, 128>}, {pipeline_mode = #tpu.pipeline_mode<synchronous>, transform_indices = @transform_11, window_bounds = array<i64: 12, 128>}, {pipeline_mode = #tpu.pipeline_mode<synchronous>, transform_indices = @transform_12, window_bounds = array<i64: 12, 12>}, {pipeline_mode = #tpu.pipeline_mode<synchronous>, transform_indices = @transform_13, window_bounds = array<i64: 2, 128, 384>}, {pipeline_mode = #tpu.pipeline_mode<synchronous>, transform_indices = @transform_14, window_bounds = array<i64: 2, 1, 384>}, {pipeline_mode = #tpu.pipeline_mode<synchronous>, transform_indices = @transform_15, window_bounds = array<i64: 2, 128, 128>}, {pipeline_mode = #tpu.pipeline_mode<synchronous>, transform_indices = @transform_16, window_bounds = array<i64: 2, 1, 128>}, {pipeline_mode = #tpu.pipeline_mode<synchronous>, transform_indices = @transform_17, window_bounds = array<i64: 2, 128, 256>}, {pipeline_mode = #tpu.pipeline_mode<synchronous>, transform_indices = @transform_18, window_bounds = array<i64: 2, 1, 256>}, {pipeline_mode = #tpu.pipeline_mode<synchronous>, transform_indices = @transform_19, window_bounds = array<i64: 2, 256, 128>}, {pipeline_mode = #tpu.pipeline_mode<synchronous>, transform_indices = @transform_20, window_bounds = array<i64: 2, 1, 128>}, {pipeline_mode = #tpu.pipeline_mode<synchronous>, transform_indices = @transform_21, window_bounds = array<i64: 2, 1, 128>}, {pipeline_mode = #tpu.pipeline_mode<synchronous>, transform_indices = @transform_22, window_bounds = array<i64: 2, 1, 128>}, {pipeline_mode = #tpu.pipeline_mode<synchronous>, transform_indices = @transform_23, window_bounds = array<i64: 2, 1, 128>}, {pipeline_mode = #tpu.pipeline_mode<synchronous>, transform_indices = @transform_24, window_bounds = array<i64: 2, 1, 128>}, {pipeline_mode = #tpu.pipeline_mode<synchronous>, transform_indices = @transform_25, window_bounds = array<i64: 128, 128>}, {pipeline_mode = #tpu.pipeline_mode<synchronous>, transform_indices = @transform_26, window_bounds = array<i64: 1, 128>}, {pipeline_mode = #tpu.pipeline_mode<synchronous>, transform_indices = @transform_27, window_bounds = array<i64: 2, 12>}, {pipeline_mode = #tpu.pipeline_mode<synchronous>, transform_indices = @transform_28, window_bounds = array<i64: 1, 128>}, {pipeline_mode = #tpu.pipeline_mode<synchronous>, transform_indices = @transform_29, window_bounds = array<i64: 128, 100>}, {pipeline_mode = #tpu.pipeline_mode<synchronous>, transform_indices = @transform_30, window_bounds = array<i64: 1, 100>}, {pipeline_mode = #tpu.pipeline_mode<synchronous>, transform_indices = @transform_31, window_bounds = array<i64: 2, 100>}]} {
    %c0 = arith.constant 0 : index
    %c0_0 = arith.constant 0 : index
    %0 = vector.load %arg1[%c0, %c0_0] : memref<192x50xbf16, #tpu.memory_space<vmem>>, vector<192x50xbf16>
    %c0_1 = arith.constant 0 : index
    %c0_2 = arith.constant 0 : index
    %1 = vector.load %arg3[%c0_1, %c0_2] : memref<50x96xbf16, #tpu.memory_space<vmem>>, vector<50x96xbf16>
    %cst = arith.constant dense<0.000000e+00> : vector<192x96xf32>
    %2 = tpu.matmul %0, %1, %cst {dimension_numbers = #tpu.dot_dimension_numbers<[1], [0], [0], [1], [0, 0, 1, 1], [], []>} : vector<192x50xbf16>, vector<50x96xbf16>, vector<192x96xf32> -> vector<192x96xf32>
    %c0_3 = arith.constant 0 : index
    %c0_4 = arith.constant 0 : index
    %3 = vector.load %arg2[%c0_3, %c0_4] : memref<192x50xbf16, #tpu.memory_space<vmem>>, vector<192x50xbf16>
    %c0_5 = arith.constant 0 : index
    %c0_6 = arith.constant 0 : index
    %4 = vector.load %arg4[%c0_5, %c0_6] : memref<50x96xbf16, #tpu.memory_space<vmem>>, vector<50x96xbf16>
    %cst_7 = arith.constant dense<0.000000e+00> : vector<192x96xf32>
    %5 = tpu.matmul %3, %4, %cst_7 {dimension_numbers = #tpu.dot_dimension_numbers<[1], [0], [0], [1], [0, 0, 1, 1], [], []>} : vector<192x50xbf16>, vector<50x96xbf16>, vector<192x96xf32> -> vector<192x96xf32>
    %6 = arith.addf %2, %5 : vector<192x96xf32>
    %c0_8 = arith.constant 0 : index
    %c0_9 = arith.constant 0 : index
    %7 = vector.load %arg5[%c0_8, %c0_9] : memref<1x48xf32, #tpu.memory_space<vmem>>, vector<1x48xf32>
    %8 = vector.extract_strided_slice %6 {offsets = [0, 0], sizes = [192, 48], strides = [1, 1]} : vector<192x96xf32> to vector<192x48xf32>
    %9 = vector.extract_strided_slice %6 {offsets = [0, 48], sizes = [192, 48], strides = [1, 1]} : vector<192x96xf32> to vector<192x48xf32>
    %10 = arith.maximumf %8, %9 : vector<192x48xf32>
    %11 = vector.broadcast %7 : vector<1x48xf32> to vector<192x48xf32>
    %12 = arith.addf %10, %11 : vector<192x48xf32>
    %cst_10 = arith.constant 0.000000e+00 : f32
    %13 = vector.broadcast %cst_10 : f32 to vector<192x48xf32>
    %14 = arith.maximumf %12, %13 : vector<192x48xf32>
    %c0_11 = arith.constant 0 : index
    %c0_12 = arith.constant 0 : index
    %15 = vector.load %arg6[%c0_11, %c0_12] : memref<336x192xbf16, #tpu.memory_space<vmem>>, vector<336x192xbf16>
    %16 = arith.truncf %14 : vector<192x48xf32> to vector<192x48xbf16>
    %cst_13 = arith.constant dense<0.000000e+00> : vector<336x48xf32>
    %17 = tpu.matmul %15, %16, %cst_13 {dimension_numbers = #tpu.dot_dimension_numbers<[1], [0], [0], [1], [0, 0, 1, 1], [], []>} : vector<336x192xbf16>, vector<192x48xbf16>, vector<336x48xf32> -> vector<336x48xf32>
    %18 = vector.extract_strided_slice %17 {offsets = [0, 0], sizes = [48, 48], strides = [1, 1]} : vector<336x48xf32> to vector<48x48xf32>
    %c0_14 = arith.constant 0 : index
    %c0_15 = arith.constant 0 : index
    %c0_16 = arith.constant 0 : index
    %19 = vector.load %arg7[%c0_14, %c0_15, %c0_16] : memref<7x48x384xbf16, #tpu.memory_space<vmem>>, vector<1x48x384xbf16>
    %20 = vector.shape_cast %19 : vector<1x48x384xbf16> to vector<48x384xbf16>
    %21 = arith.truncf %18 : vector<48x48xf32> to vector<48x48xbf16>
    %cst_17 = arith.constant dense<0.000000e+00> : vector<48x384xf32>
    %22 = tpu.matmul %21, %20, %cst_17 {dimension_numbers = #tpu.dot_dimension_numbers<[1], [0], [0], [1], [0, 0, 1, 1], [], []>} : vector<48x48xbf16>, vector<48x384xbf16>, vector<48x384xf32> -> vector<48x384xf32>
    %23 = vector.extract_strided_slice %17 {offsets = [48, 0], sizes = [48, 48], strides = [1, 1]} : vector<336x48xf32> to vector<48x48xf32>
    %c1 = arith.constant 1 : index
    %c0_18 = arith.constant 0 : index
    %c0_19 = arith.constant 0 : index
    %24 = vector.load %arg7[%c1, %c0_18, %c0_19] : memref<7x48x384xbf16, #tpu.memory_space<vmem>>, vector<1x48x384xbf16>
    %25 = vector.shape_cast %24 : vector<1x48x384xbf16> to vector<48x384xbf16>
    %26 = arith.truncf %23 : vector<48x48xf32> to vector<48x48xbf16>
    %cst_20 = arith.constant dense<0.000000e+00> : vector<48x384xf32>
    %27 = tpu.matmul %26, %25, %cst_20 {dimension_numbers = #tpu.dot_dimension_numbers<[1], [0], [0], [1], [0, 0, 1, 1], [], []>} : vector<48x48xbf16>, vector<48x384xbf16>, vector<48x384xf32> -> vector<48x384xf32>
    %28 = arith.addf %22, %27 : vector<48x384xf32>
    %29 = vector.extract_strided_slice %17 {offsets = [96, 0], sizes = [48, 48], strides = [1, 1]} : vector<336x48xf32> to vector<48x48xf32>
    %c2 = arith.constant 2 : index
    %c0_21 = arith.constant 0 : index
    %c0_22 = arith.constant 0 : index
    %30 = vector.load %arg7[%c2, %c0_21, %c0_22] : memref<7x48x384xbf16, #tpu.memory_space<vmem>>, vector<1x48x384xbf16>
    %31 = vector.shape_cast %30 : vector<1x48x384xbf16> to vector<48x384xbf16>
    %32 = arith.truncf %29 : vector<48x48xf32> to vector<48x48xbf16>
    %cst_23 = arith.constant dense<0.000000e+00> : vector<48x384xf32>
    %33 = tpu.matmul %32, %31, %cst_23 {dimension_numbers = #tpu.dot_dimension_numbers<[1], [0], [0], [1], [0, 0, 1, 1], [], []>} : vector<48x48xbf16>, vector<48x384xbf16>, vector<48x384xf32> -> vector<48x384xf32>
    %34 = arith.addf %28, %33 : vector<48x384xf32>
    %35 = vector.extract_strided_slice %17 {offsets = [144, 0], sizes = [48, 48], strides = [1, 1]} : vector<336x48xf32> to vector<48x48xf32>
    %c3 = arith.constant 3 : index
    %c0_24 = arith.constant 0 : index
    %c0_25 = arith.constant 0 : index
    %36 = vector.load %arg7[%c3, %c0_24, %c0_25] : memref<7x48x384xbf16, #tpu.memory_space<vmem>>, vector<1x48x384xbf16>
    %37 = vector.shape_cast %36 : vector<1x48x384xbf16> to vector<48x384xbf16>
    %38 = arith.truncf %35 : vector<48x48xf32> to vector<48x48xbf16>
    %cst_26 = arith.constant dense<0.000000e+00> : vector<48x384xf32>
    %39 = tpu.matmul %38, %37, %cst_26 {dimension_numbers = #tpu.dot_dimension_numbers<[1], [0], [0], [1], [0, 0, 1, 1], [], []>} : vector<48x48xbf16>, vector<48x384xbf16>, vector<48x384xf32> -> vector<48x384xf32>
    %40 = arith.addf %34, %39 : vector<48x384xf32>
    %41 = vector.extract_strided_slice %17 {offsets = [192, 0], sizes = [48, 48], strides = [1, 1]} : vector<336x48xf32> to vector<48x48xf32>
    %c4 = arith.constant 4 : index
    %c0_27 = arith.constant 0 : index
    %c0_28 = arith.constant 0 : index
    %42 = vector.load %arg7[%c4, %c0_27, %c0_28] : memref<7x48x384xbf16, #tpu.memory_space<vmem>>, vector<1x48x384xbf16>
    %43 = vector.shape_cast %42 : vector<1x48x384xbf16> to vector<48x384xbf16>
    %44 = arith.truncf %41 : vector<48x48xf32> to vector<48x48xbf16>
    %cst_29 = arith.constant dense<0.000000e+00> : vector<48x384xf32>
    %45 = tpu.matmul %44, %43, %cst_29 {dimension_numbers = #tpu.dot_dimension_numbers<[1], [0], [0], [1], [0, 0, 1, 1], [], []>} : vector<48x48xbf16>, vector<48x384xbf16>, vector<48x384xf32> -> vector<48x384xf32>
    %46 = arith.addf %40, %45 : vector<48x384xf32>
    %47 = vector.extract_strided_slice %17 {offsets = [240, 0], sizes = [48, 48], strides = [1, 1]} : vector<336x48xf32> to vector<48x48xf32>
    %c5 = arith.constant 5 : index
    %c0_30 = arith.constant 0 : index
    %c0_31 = arith.constant 0 : index
    %48 = vector.load %arg7[%c5, %c0_30, %c0_31] : memref<7x48x384xbf16, #tpu.memory_space<vmem>>, vector<1x48x384xbf16>
    %49 = vector.shape_cast %48 : vector<1x48x384xbf16> to vector<48x384xbf16>
    %50 = arith.truncf %47 : vector<48x48xf32> to vector<48x48xbf16>
    %cst_32 = arith.constant dense<0.000000e+00> : vector<48x384xf32>
    %51 = tpu.matmul %50, %49, %cst_32 {dimension_numbers = #tpu.dot_dimension_numbers<[1], [0], [0], [1], [0, 0, 1, 1], [], []>} : vector<48x48xbf16>, vector<48x384xbf16>, vector<48x384xf32> -> vector<48x384xf32>
    %52 = arith.addf %46, %51 : vector<48x384xf32>
    %53 = vector.extract_strided_slice %17 {offsets = [288, 0], sizes = [48, 48], strides = [1, 1]} : vector<336x48xf32> to vector<48x48xf32>
    %c6 = arith.constant 6 : index
    %c0_33 = arith.constant 0 : index
    %c0_34 = arith.constant 0 : index
    %54 = vector.load %arg7[%c6, %c0_33, %c0_34] : memref<7x48x384xbf16, #tpu.memory_space<vmem>>, vector<1x48x384xbf16>
    %55 = vector.shape_cast %54 : vector<1x48x384xbf16> to vector<48x384xbf16>
    %56 = arith.truncf %53 : vector<48x48xf32> to vector<48x48xbf16>
    %cst_35 = arith.constant dense<0.000000e+00> : vector<48x384xf32>
    %57 = tpu.matmul %56, %55, %cst_35 {dimension_numbers = #tpu.dot_dimension_numbers<[1], [0], [0], [1], [0, 0, 1, 1], [], []>} : vector<48x48xbf16>, vector<48x384xbf16>, vector<48x384xf32> -> vector<48x384xf32>
    %58 = arith.addf %52, %57 : vector<48x384xf32>
    %c0_36 = arith.constant 0 : index
    %c0_37 = arith.constant 0 : index
    %59 = vector.load %arg8[%c0_36, %c0_37] : memref<1x192xf32, #tpu.memory_space<vmem>>, vector<1x192xf32>
    %60 = vector.extract_strided_slice %58 {offsets = [0, 0], sizes = [48, 192], strides = [1, 1]} : vector<48x384xf32> to vector<48x192xf32>
    %61 = vector.extract_strided_slice %58 {offsets = [0, 192], sizes = [48, 192], strides = [1, 1]} : vector<48x384xf32> to vector<48x192xf32>
    %62 = arith.maximumf %60, %61 : vector<48x192xf32>
    %63 = vector.broadcast %59 : vector<1x192xf32> to vector<48x192xf32>
    %64 = arith.addf %62, %63 : vector<48x192xf32>
    %cst_38 = arith.constant 0.000000e+00 : f32
    %65 = vector.broadcast %cst_38 : f32 to vector<48x192xf32>
    %66 = arith.maximumf %64, %65 : vector<48x192xf32>
    %c0_39 = arith.constant 0 : index
    %c0_40 = arith.constant 0 : index
    %67 = vector.load %arg9[%c0_39, %c0_40] : memref<60x48xbf16, #tpu.memory_space<vmem>>, vector<60x48xbf16>
    %68 = arith.truncf %66 : vector<48x192xf32> to vector<48x192xbf16>
    %cst_41 = arith.constant dense<0.000000e+00> : vector<60x192xf32>
    %69 = tpu.matmul %67, %68, %cst_41 {dimension_numbers = #tpu.dot_dimension_numbers<[1], [0], [0], [1], [0, 0, 1, 1], [], []>} : vector<60x48xbf16>, vector<48x192xbf16>, vector<60x192xf32> -> vector<60x192xf32>
    %70 = vector.extract_strided_slice %69 {offsets = [0, 0], sizes = [12, 192], strides = [1, 1]} : vector<60x192xf32> to vector<12x192xf32>
    %c0_42 = arith.constant 0 : index
    %c0_43 = arith.constant 0 : index
    %c0_44 = arith.constant 0 : index
    %71 = vector.load %arg10[%c0_42, %c0_43, %c0_44] : memref<5x192x256xbf16, #tpu.memory_space<vmem>>, vector<1x192x256xbf16>
    %72 = vector.shape_cast %71 : vector<1x192x256xbf16> to vector<192x256xbf16>
    %73 = arith.truncf %70 : vector<12x192xf32> to vector<12x192xbf16>
    %cst_45 = arith.constant dense<0.000000e+00> : vector<12x256xf32>
    %74 = tpu.matmul %73, %72, %cst_45 {dimension_numbers = #tpu.dot_dimension_numbers<[1], [0], [0], [1], [0, 0, 1, 1], [], []>} : vector<12x192xbf16>, vector<192x256xbf16>, vector<12x256xf32> -> vector<12x256xf32>
    %75 = vector.extract_strided_slice %69 {offsets = [12, 0], sizes = [12, 192], strides = [1, 1]} : vector<60x192xf32> to vector<12x192xf32>
    %c1_46 = arith.constant 1 : index
    %c0_47 = arith.constant 0 : index
    %c0_48 = arith.constant 0 : index
    %76 = vector.load %arg10[%c1_46, %c0_47, %c0_48] : memref<5x192x256xbf16, #tpu.memory_space<vmem>>, vector<1x192x256xbf16>
    %77 = vector.shape_cast %76 : vector<1x192x256xbf16> to vector<192x256xbf16>
    %78 = arith.truncf %75 : vector<12x192xf32> to vector<12x192xbf16>
    %cst_49 = arith.constant dense<0.000000e+00> : vector<12x256xf32>
    %79 = tpu.matmul %78, %77, %cst_49 {dimension_numbers = #tpu.dot_dimension_numbers<[1], [0], [0], [1], [0, 0, 1, 1], [], []>} : vector<12x192xbf16>, vector<192x256xbf16>, vector<12x256xf32> -> vector<12x256xf32>
    %80 = arith.addf %74, %79 : vector<12x256xf32>
    %81 = vector.extract_strided_slice %69 {offsets = [24, 0], sizes = [12, 192], strides = [1, 1]} : vector<60x192xf32> to vector<12x192xf32>
    %c2_50 = arith.constant 2 : index
    %c0_51 = arith.constant 0 : index
    %c0_52 = arith.constant 0 : index
    %82 = vector.load %arg10[%c2_50, %c0_51, %c0_52] : memref<5x192x256xbf16, #tpu.memory_space<vmem>>, vector<1x192x256xbf16>
    %83 = vector.shape_cast %82 : vector<1x192x256xbf16> to vector<192x256xbf16>
    %84 = arith.truncf %81 : vector<12x192xf32> to vector<12x192xbf16>
    %cst_53 = arith.constant dense<0.000000e+00> : vector<12x256xf32>
    %85 = tpu.matmul %84, %83, %cst_53 {dimension_numbers = #tpu.dot_dimension_numbers<[1], [0], [0], [1], [0, 0, 1, 1], [], []>} : vector<12x192xbf16>, vector<192x256xbf16>, vector<12x256xf32> -> vector<12x256xf32>
    %86 = arith.addf %80, %85 : vector<12x256xf32>
    %87 = vector.extract_strided_slice %69 {offsets = [36, 0], sizes = [12, 192], strides = [1, 1]} : vector<60x192xf32> to vector<12x192xf32>
    %c3_54 = arith.constant 3 : index
    %c0_55 = arith.constant 0 : index
    %c0_56 = arith.constant 0 : index
    %88 = vector.load %arg10[%c3_54, %c0_55, %c0_56] : memref<5x192x256xbf16, #tpu.memory_space<vmem>>, vector<1x192x256xbf16>
    %89 = vector.shape_cast %88 : vector<1x192x256xbf16> to vector<192x256xbf16>
    %90 = arith.truncf %87 : vector<12x192xf32> to vector<12x192xbf16>
    %cst_57 = arith.constant dense<0.000000e+00> : vector<12x256xf32>
    %91 = tpu.matmul %90, %89, %cst_57 {dimension_numbers = #tpu.dot_dimension_numbers<[1], [0], [0], [1], [0, 0, 1, 1], [], []>} : vector<12x192xbf16>, vector<192x256xbf16>, vector<12x256xf32> -> vector<12x256xf32>
    %92 = arith.addf %86, %91 : vector<12x256xf32>
    %93 = vector.extract_strided_slice %69 {offsets = [48, 0], sizes = [12, 192], strides = [1, 1]} : vector<60x192xf32> to vector<12x192xf32>
    %c4_58 = arith.constant 4 : index
    %c0_59 = arith.constant 0 : index
    %c0_60 = arith.constant 0 : index
    %94 = vector.load %arg10[%c4_58, %c0_59, %c0_60] : memref<5x192x256xbf16, #tpu.memory_space<vmem>>, vector<1x192x256xbf16>
    %95 = vector.shape_cast %94 : vector<1x192x256xbf16> to vector<192x256xbf16>
    %96 = arith.truncf %93 : vector<12x192xf32> to vector<12x192xbf16>
    %cst_61 = arith.constant dense<0.000000e+00> : vector<12x256xf32>
    %97 = tpu.matmul %96, %95, %cst_61 {dimension_numbers = #tpu.dot_dimension_numbers<[1], [0], [0], [1], [0, 0, 1, 1], [], []>} : vector<12x192xbf16>, vector<192x256xbf16>, vector<12x256xf32> -> vector<12x256xf32>
    %98 = arith.addf %92, %97 : vector<12x256xf32>
    %c0_62 = arith.constant 0 : index
    %c0_63 = arith.constant 0 : index
    %99 = vector.load %arg11[%c0_62, %c0_63] : memref<1x128xf32, #tpu.memory_space<vmem>>, vector<1x128xf32>
    %100 = vector.extract_strided_slice %98 {offsets = [0, 0], sizes = [12, 128], strides = [1, 1]} : vector<12x256xf32> to vector<12x128xf32>
    %101 = vector.extract_strided_slice %98 {offsets = [0, 128], sizes = [12, 128], strides = [1, 1]} : vector<12x256xf32> to vector<12x128xf32>
    %102 = arith.maximumf %100, %101 : vector<12x128xf32>
    %103 = vector.broadcast %99 : vector<1x128xf32> to vector<12x128xf32>
    %104 = arith.addf %102, %103 : vector<12x128xf32>
    %cst_64 = arith.constant 0.000000e+00 : f32
    %105 = vector.broadcast %cst_64 : f32 to vector<12x128xf32>
    %106 = arith.maximumf %104, %105 : vector<12x128xf32>
    %c0_65 = arith.constant 0 : index
    %c0_66 = arith.constant 0 : index
    %107 = vector.load %arg13[%c0_65, %c0_66] : memref<12x12xf32, #tpu.memory_space<vmem>>, vector<12x12xf32>
    %c0_67 = arith.constant 0 : index
    %c0_68 = arith.constant 0 : index
    %108 = vector.load %arg12[%c0_67, %c0_68] : memref<12x128xf32, #tpu.memory_space<vmem>>, vector<12x128xf32>
    %109 = arith.addf %106, %108 : vector<12x128xf32>
    %c0_69 = arith.constant 0 : index
    %c0_70 = arith.constant 0 : index
    %c0_71 = arith.constant 0 : index
    %110 = vector.load %arg16[%c0_69, %c0_70, %c0_71] : memref<2x128x128xbf16, #tpu.memory_space<vmem>>, vector<1x128x128xbf16>
    %111 = vector.shape_cast %110 : vector<1x128x128xbf16> to vector<128x128xbf16>
    %c0_72 = arith.constant 0 : index
    %c0_73 = arith.constant 0 : index
    %c0_74 = arith.constant 0 : index
    %112 = vector.load %arg14[%c0_72, %c0_73, %c0_74] : memref<2x128x384xbf16, #tpu.memory_space<vmem>>, vector<1x128x384xbf16>
    %113 = vector.shape_cast %112 : vector<1x128x384xbf16> to vector<128x384xbf16>
    %114 = arith.truncf %109 : vector<12x128xf32> to vector<12x128xbf16>
    %cst_75 = arith.constant dense<0.000000e+00> : vector<12x384xf32>
    %115 = tpu.matmul %114, %113, %cst_75 {dimension_numbers = #tpu.dot_dimension_numbers<[1], [0], [0], [1], [0, 0, 1, 1], [], []>} : vector<12x128xbf16>, vector<128x384xbf16>, vector<12x384xf32> -> vector<12x384xf32>
    %c0_76 = arith.constant 0 : index
    %c0_77 = arith.constant 0 : index
    %c0_78 = arith.constant 0 : index
    %116 = vector.load %arg15[%c0_76, %c0_77, %c0_78] : memref<2x1x384xf32, #tpu.memory_space<vmem>>, vector<1x1x384xf32>
    %117 = vector.shape_cast %116 : vector<1x1x384xf32> to vector<1x384xf32>
    %118 = vector.broadcast %117 : vector<1x384xf32> to vector<12x384xf32>
    %119 = arith.addf %115, %118 : vector<12x384xf32>
    %cst_79 = arith.constant 0.000000e+00 : f32
    %120 = vector.broadcast %cst_79 : f32 to vector<12x128xf32>
    %121 = vector.extract_strided_slice %119 {offsets = [0, 0], sizes = [12, 32], strides = [1, 1]} : vector<12x384xf32> to vector<12x32xf32>
    %122 = vector.extract_strided_slice %119 {offsets = [0, 128], sizes = [12, 32], strides = [1, 1]} : vector<12x384xf32> to vector<12x32xf32>
    %123 = vector.extract_strided_slice %119 {offsets = [0, 256], sizes = [12, 32], strides = [1, 1]} : vector<12x384xf32> to vector<12x32xf32>
    %124 = arith.truncf %121 : vector<12x32xf32> to vector<12x32xbf16>
    %125 = arith.truncf %122 : vector<12x32xf32> to vector<12x32xbf16>
    %cst_80 = arith.constant dense<0.000000e+00> : vector<12x12xf32>
    %126 = tpu.matmul %124, %125, %cst_80 {dimension_numbers = #tpu.dot_dimension_numbers<[1], [1], [0], [0], [0, 0, 1, 0], [], []>} : vector<12x32xbf16>, vector<12x32xbf16>, vector<12x12xf32> -> vector<12x12xf32>
    %127 = arith.addf %126, %107 : vector<12x12xf32>
    %cst_81 = arith.constant dense<0xFF800000> : vector<12xf32>
    %128 = vector.multi_reduction <maximumf>, %127, %cst_81 [1] : vector<12x12xf32> to vector<12xf32>
    %129 = vector.shape_cast %128 : vector<12xf32> to vector<12x1xf32>
    %130 = vector.broadcast %129 : vector<12x1xf32> to vector<12x12xf32>
    %131 = arith.subf %127, %130 : vector<12x12xf32>
    %132 = math.exp %131 : vector<12x12xf32>
    %cst_82 = arith.constant dense<0.000000e+00> : vector<12xf32>
    %133 = vector.multi_reduction <add>, %132, %cst_82 [1] : vector<12x12xf32> to vector<12xf32>
    %134 = vector.shape_cast %133 : vector<12xf32> to vector<12x1xf32>
    %135 = tpu.reciprocal %134 {approx = true} : vector<12x1xf32> -> vector<12x1xf32>
    %136 = vector.broadcast %135 : vector<12x1xf32> to vector<12x12xf32>
    %137 = arith.mulf %132, %136 : vector<12x12xf32>
    %138 = arith.truncf %137 : vector<12x12xf32> to vector<12x12xbf16>
    %139 = arith.truncf %123 : vector<12x32xf32> to vector<12x32xbf16>
    %cst_83 = arith.constant dense<0.000000e+00> : vector<12x32xf32>
    %140 = tpu.matmul %138, %139, %cst_83 {dimension_numbers = #tpu.dot_dimension_numbers<[1], [0], [0], [1], [0, 0, 1, 1], [], []>} : vector<12x12xbf16>, vector<12x32xbf16>, vector<12x32xf32> -> vector<12x32xf32>
    %141 = vector.extract_strided_slice %111 {offsets = [0, 0], sizes = [32, 128], strides = [1, 1]} : vector<128x128xbf16> to vector<32x128xbf16>
    %142 = arith.truncf %140 : vector<12x32xf32> to vector<12x32xbf16>
    %cst_84 = arith.constant dense<0.000000e+00> : vector<12x128xf32>
    %143 = tpu.matmul %142, %141, %cst_84 {dimension_numbers = #tpu.dot_dimension_numbers<[1], [0], [0], [1], [0, 0, 1, 1], [], []>} : vector<12x32xbf16>, vector<32x128xbf16>, vector<12x128xf32> -> vector<12x128xf32>
    %144 = arith.addf %120, %143 : vector<12x128xf32>
    %145 = vector.extract_strided_slice %119 {offsets = [0, 32], sizes = [12, 32], strides = [1, 1]} : vector<12x384xf32> to vector<12x32xf32>
    %146 = vector.extract_strided_slice %119 {offsets = [0, 160], sizes = [12, 32], strides = [1, 1]} : vector<12x384xf32> to vector<12x32xf32>
    %147 = vector.extract_strided_slice %119 {offsets = [0, 288], sizes = [12, 32], strides = [1, 1]} : vector<12x384xf32> to vector<12x32xf32>
    %148 = arith.truncf %145 : vector<12x32xf32> to vector<12x32xbf16>
    %149 = arith.truncf %146 : vector<12x32xf32> to vector<12x32xbf16>
    %cst_85 = arith.constant dense<0.000000e+00> : vector<12x12xf32>
    %150 = tpu.matmul %148, %149, %cst_85 {dimension_numbers = #tpu.dot_dimension_numbers<[1], [1], [0], [0], [0, 0, 1, 0], [], []>} : vector<12x32xbf16>, vector<12x32xbf16>, vector<12x12xf32> -> vector<12x12xf32>
    %151 = arith.addf %150, %107 : vector<12x12xf32>
    %cst_86 = arith.constant dense<0xFF800000> : vector<12xf32>
    %152 = vector.multi_reduction <maximumf>, %151, %cst_86 [1] : vector<12x12xf32> to vector<12xf32>
    %153 = vector.shape_cast %152 : vector<12xf32> to vector<12x1xf32>
    %154 = vector.broadcast %153 : vector<12x1xf32> to vector<12x12xf32>
    %155 = arith.subf %151, %154 : vector<12x12xf32>
    %156 = math.exp %155 : vector<12x12xf32>
    %cst_87 = arith.constant dense<0.000000e+00> : vector<12xf32>
    %157 = vector.multi_reduction <add>, %156, %cst_87 [1] : vector<12x12xf32> to vector<12xf32>
    %158 = vector.shape_cast %157 : vector<12xf32> to vector<12x1xf32>
    %159 = tpu.reciprocal %158 {approx = true} : vector<12x1xf32> -> vector<12x1xf32>
    %160 = vector.broadcast %159 : vector<12x1xf32> to vector<12x12xf32>
    %161 = arith.mulf %156, %160 : vector<12x12xf32>
    %162 = arith.truncf %161 : vector<12x12xf32> to vector<12x12xbf16>
    %163 = arith.truncf %147 : vector<12x32xf32> to vector<12x32xbf16>
    %cst_88 = arith.constant dense<0.000000e+00> : vector<12x32xf32>
    %164 = tpu.matmul %162, %163, %cst_88 {dimension_numbers = #tpu.dot_dimension_numbers<[1], [0], [0], [1], [0, 0, 1, 1], [], []>} : vector<12x12xbf16>, vector<12x32xbf16>, vector<12x32xf32> -> vector<12x32xf32>
    %165 = vector.extract_strided_slice %111 {offsets = [32, 0], sizes = [32, 128], strides = [1, 1]} : vector<128x128xbf16> to vector<32x128xbf16>
    %166 = arith.truncf %164 : vector<12x32xf32> to vector<12x32xbf16>
    %cst_89 = arith.constant dense<0.000000e+00> : vector<12x128xf32>
    %167 = tpu.matmul %166, %165, %cst_89 {dimension_numbers = #tpu.dot_dimension_numbers<[1], [0], [0], [1], [0, 0, 1, 1], [], []>} : vector<12x32xbf16>, vector<32x128xbf16>, vector<12x128xf32> -> vector<12x128xf32>
    %168 = arith.addf %144, %167 : vector<12x128xf32>
    %169 = vector.extract_strided_slice %119 {offsets = [0, 64], sizes = [12, 32], strides = [1, 1]} : vector<12x384xf32> to vector<12x32xf32>
    %170 = vector.extract_strided_slice %119 {offsets = [0, 192], sizes = [12, 32], strides = [1, 1]} : vector<12x384xf32> to vector<12x32xf32>
    %171 = vector.extract_strided_slice %119 {offsets = [0, 320], sizes = [12, 32], strides = [1, 1]} : vector<12x384xf32> to vector<12x32xf32>
    %172 = arith.truncf %169 : vector<12x32xf32> to vector<12x32xbf16>
    %173 = arith.truncf %170 : vector<12x32xf32> to vector<12x32xbf16>
    %cst_90 = arith.constant dense<0.000000e+00> : vector<12x12xf32>
    %174 = tpu.matmul %172, %173, %cst_90 {dimension_numbers = #tpu.dot_dimension_numbers<[1], [1], [0], [0], [0, 0, 1, 0], [], []>} : vector<12x32xbf16>, vector<12x32xbf16>, vector<12x12xf32> -> vector<12x12xf32>
    %175 = arith.addf %174, %107 : vector<12x12xf32>
    %cst_91 = arith.constant dense<0xFF800000> : vector<12xf32>
    %176 = vector.multi_reduction <maximumf>, %175, %cst_91 [1] : vector<12x12xf32> to vector<12xf32>
    %177 = vector.shape_cast %176 : vector<12xf32> to vector<12x1xf32>
    %178 = vector.broadcast %177 : vector<12x1xf32> to vector<12x12xf32>
    %179 = arith.subf %175, %178 : vector<12x12xf32>
    %180 = math.exp %179 : vector<12x12xf32>
    %cst_92 = arith.constant dense<0.000000e+00> : vector<12xf32>
    %181 = vector.multi_reduction <add>, %180, %cst_92 [1] : vector<12x12xf32> to vector<12xf32>
    %182 = vector.shape_cast %181 : vector<12xf32> to vector<12x1xf32>
    %183 = tpu.reciprocal %182 {approx = true} : vector<12x1xf32> -> vector<12x1xf32>
    %184 = vector.broadcast %183 : vector<12x1xf32> to vector<12x12xf32>
    %185 = arith.mulf %180, %184 : vector<12x12xf32>
    %186 = arith.truncf %185 : vector<12x12xf32> to vector<12x12xbf16>
    %187 = arith.truncf %171 : vector<12x32xf32> to vector<12x32xbf16>
    %cst_93 = arith.constant dense<0.000000e+00> : vector<12x32xf32>
    %188 = tpu.matmul %186, %187, %cst_93 {dimension_numbers = #tpu.dot_dimension_numbers<[1], [0], [0], [1], [0, 0, 1, 1], [], []>} : vector<12x12xbf16>, vector<12x32xbf16>, vector<12x32xf32> -> vector<12x32xf32>
    %189 = vector.extract_strided_slice %111 {offsets = [64, 0], sizes = [32, 128], strides = [1, 1]} : vector<128x128xbf16> to vector<32x128xbf16>
    %190 = arith.truncf %188 : vector<12x32xf32> to vector<12x32xbf16>
    %cst_94 = arith.constant dense<0.000000e+00> : vector<12x128xf32>
    %191 = tpu.matmul %190, %189, %cst_94 {dimension_numbers = #tpu.dot_dimension_numbers<[1], [0], [0], [1], [0, 0, 1, 1], [], []>} : vector<12x32xbf16>, vector<32x128xbf16>, vector<12x128xf32> -> vector<12x128xf32>
    %192 = arith.addf %168, %191 : vector<12x128xf32>
    %193 = vector.extract_strided_slice %119 {offsets = [0, 96], sizes = [12, 32], strides = [1, 1]} : vector<12x384xf32> to vector<12x32xf32>
    %194 = vector.extract_strided_slice %119 {offsets = [0, 224], sizes = [12, 32], strides = [1, 1]} : vector<12x384xf32> to vector<12x32xf32>
    %195 = vector.extract_strided_slice %119 {offsets = [0, 352], sizes = [12, 32], strides = [1, 1]} : vector<12x384xf32> to vector<12x32xf32>
    %196 = arith.truncf %193 : vector<12x32xf32> to vector<12x32xbf16>
    %197 = arith.truncf %194 : vector<12x32xf32> to vector<12x32xbf16>
    %cst_95 = arith.constant dense<0.000000e+00> : vector<12x12xf32>
    %198 = tpu.matmul %196, %197, %cst_95 {dimension_numbers = #tpu.dot_dimension_numbers<[1], [1], [0], [0], [0, 0, 1, 0], [], []>} : vector<12x32xbf16>, vector<12x32xbf16>, vector<12x12xf32> -> vector<12x12xf32>
    %199 = arith.addf %198, %107 : vector<12x12xf32>
    %cst_96 = arith.constant dense<0xFF800000> : vector<12xf32>
    %200 = vector.multi_reduction <maximumf>, %199, %cst_96 [1] : vector<12x12xf32> to vector<12xf32>
    %201 = vector.shape_cast %200 : vector<12xf32> to vector<12x1xf32>
    %202 = vector.broadcast %201 : vector<12x1xf32> to vector<12x12xf32>
    %203 = arith.subf %199, %202 : vector<12x12xf32>
    %204 = math.exp %203 : vector<12x12xf32>
    %cst_97 = arith.constant dense<0.000000e+00> : vector<12xf32>
    %205 = vector.multi_reduction <add>, %204, %cst_97 [1] : vector<12x12xf32> to vector<12xf32>
    %206 = vector.shape_cast %205 : vector<12xf32> to vector<12x1xf32>
    %207 = tpu.reciprocal %206 {approx = true} : vector<12x1xf32> -> vector<12x1xf32>
    %208 = vector.broadcast %207 : vector<12x1xf32> to vector<12x12xf32>
    %209 = arith.mulf %204, %208 : vector<12x12xf32>
    %210 = arith.truncf %209 : vector<12x12xf32> to vector<12x12xbf16>
    %211 = arith.truncf %195 : vector<12x32xf32> to vector<12x32xbf16>
    %cst_98 = arith.constant dense<0.000000e+00> : vector<12x32xf32>
    %212 = tpu.matmul %210, %211, %cst_98 {dimension_numbers = #tpu.dot_dimension_numbers<[1], [0], [0], [1], [0, 0, 1, 1], [], []>} : vector<12x12xbf16>, vector<12x32xbf16>, vector<12x32xf32> -> vector<12x32xf32>
    %213 = vector.extract_strided_slice %111 {offsets = [96, 0], sizes = [32, 128], strides = [1, 1]} : vector<128x128xbf16> to vector<32x128xbf16>
    %214 = arith.truncf %212 : vector<12x32xf32> to vector<12x32xbf16>
    %cst_99 = arith.constant dense<0.000000e+00> : vector<12x128xf32>
    %215 = tpu.matmul %214, %213, %cst_99 {dimension_numbers = #tpu.dot_dimension_numbers<[1], [0], [0], [1], [0, 0, 1, 1], [], []>} : vector<12x32xbf16>, vector<32x128xbf16>, vector<12x128xf32> -> vector<12x128xf32>
    %216 = arith.addf %192, %215 : vector<12x128xf32>
    %c0_100 = arith.constant 0 : index
    %c0_101 = arith.constant 0 : index
    %c0_102 = arith.constant 0 : index
    %217 = vector.load %arg17[%c0_100, %c0_101, %c0_102] : memref<2x1x128xf32, #tpu.memory_space<vmem>>, vector<1x1x128xf32>
    %218 = vector.shape_cast %217 : vector<1x1x128xf32> to vector<1x128xf32>
    %219 = vector.broadcast %218 : vector<1x128xf32> to vector<12x128xf32>
    %220 = arith.addf %216, %219 : vector<12x128xf32>
    %221 = arith.addf %109, %220 : vector<12x128xf32>
    %c0_103 = arith.constant 0 : index
    %c0_104 = arith.constant 0 : index
    %c0_105 = arith.constant 0 : index
    %222 = vector.load %arg22[%c0_103, %c0_104, %c0_105] : memref<2x1x128xf32, #tpu.memory_space<vmem>>, vector<1x1x128xf32>
    %223 = vector.shape_cast %222 : vector<1x1x128xf32> to vector<1x128xf32>
    %c0_106 = arith.constant 0 : index
    %c0_107 = arith.constant 0 : index
    %c0_108 = arith.constant 0 : index
    %224 = vector.load %arg23[%c0_106, %c0_107, %c0_108] : memref<2x1x128xf32, #tpu.memory_space<vmem>>, vector<1x1x128xf32>
    %225 = vector.shape_cast %224 : vector<1x1x128xf32> to vector<1x128xf32>
    %cst_109 = arith.constant dense<0.000000e+00> : vector<12xf32>
    %226 = vector.multi_reduction <add>, %221, %cst_109 [1] : vector<12x128xf32> to vector<12xf32>
    %227 = vector.shape_cast %226 : vector<12xf32> to vector<12x1xf32>
    %cst_110 = arith.constant 1.280000e+02 : f32
    %228 = vector.broadcast %cst_110 : f32 to vector<12x1xf32>
    %229 = arith.divf %227, %228 : vector<12x1xf32>
    %230 = vector.broadcast %229 : vector<12x1xf32> to vector<12x128xf32>
    %231 = arith.subf %221, %230 : vector<12x128xf32>
    %232 = arith.mulf %231, %231 : vector<12x128xf32>
    %cst_111 = arith.constant dense<0.000000e+00> : vector<12xf32>
    %233 = vector.multi_reduction <add>, %232, %cst_111 [1] : vector<12x128xf32> to vector<12xf32>
    %234 = vector.shape_cast %233 : vector<12xf32> to vector<12x1xf32>
    %cst_112 = arith.constant 1.280000e+02 : f32
    %235 = vector.broadcast %cst_112 : f32 to vector<12x1xf32>
    %236 = arith.divf %234, %235 : vector<12x1xf32>
    %237 = vector.broadcast %229 : vector<12x1xf32> to vector<12x128xf32>
    %238 = arith.subf %221, %237 : vector<12x128xf32>
    %cst_113 = arith.constant 9.99999974E-6 : f32
    %239 = vector.broadcast %cst_113 : f32 to vector<12x1xf32>
    %240 = arith.addf %236, %239 : vector<12x1xf32>
    %241 = math.rsqrt %240 : vector<12x1xf32>
    %242 = vector.broadcast %241 : vector<12x1xf32> to vector<12x128xf32>
    %243 = arith.mulf %238, %242 : vector<12x128xf32>
    %244 = vector.broadcast %223 : vector<1x128xf32> to vector<12x128xf32>
    %245 = arith.mulf %243, %244 : vector<12x128xf32>
    %246 = vector.broadcast %225 : vector<1x128xf32> to vector<12x128xf32>
    %247 = arith.addf %245, %246 : vector<12x128xf32>
    %c0_114 = arith.constant 0 : index
    %c0_115 = arith.constant 0 : index
    %c0_116 = arith.constant 0 : index
    %248 = vector.load %arg18[%c0_114, %c0_115, %c0_116] : memref<2x128x256xbf16, #tpu.memory_space<vmem>>, vector<1x128x256xbf16>
    %249 = vector.shape_cast %248 : vector<1x128x256xbf16> to vector<128x256xbf16>
    %250 = arith.truncf %247 : vector<12x128xf32> to vector<12x128xbf16>
    %cst_117 = arith.constant dense<0.000000e+00> : vector<12x256xf32>
    %251 = tpu.matmul %250, %249, %cst_117 {dimension_numbers = #tpu.dot_dimension_numbers<[1], [0], [0], [1], [0, 0, 1, 1], [], []>} : vector<12x128xbf16>, vector<128x256xbf16>, vector<12x256xf32> -> vector<12x256xf32>
    %c0_118 = arith.constant 0 : index
    %c0_119 = arith.constant 0 : index
    %c0_120 = arith.constant 0 : index
    %252 = vector.load %arg19[%c0_118, %c0_119, %c0_120] : memref<2x1x256xf32, #tpu.memory_space<vmem>>, vector<1x1x256xf32>
    %253 = vector.shape_cast %252 : vector<1x1x256xf32> to vector<1x256xf32>
    %254 = vector.broadcast %253 : vector<1x256xf32> to vector<12x256xf32>
    %255 = arith.addf %251, %254 : vector<12x256xf32>
    %cst_121 = arith.constant 0.000000e+00 : f32
    %256 = vector.broadcast %cst_121 : f32 to vector<12x256xf32>
    %257 = arith.maximumf %255, %256 : vector<12x256xf32>
    %c0_122 = arith.constant 0 : index
    %c0_123 = arith.constant 0 : index
    %c0_124 = arith.constant 0 : index
    %258 = vector.load %arg20[%c0_122, %c0_123, %c0_124] : memref<2x256x128xbf16, #tpu.memory_space<vmem>>, vector<1x256x128xbf16>
    %259 = vector.shape_cast %258 : vector<1x256x128xbf16> to vector<256x128xbf16>
    %260 = arith.truncf %257 : vector<12x256xf32> to vector<12x256xbf16>
    %cst_125 = arith.constant dense<0.000000e+00> : vector<12x128xf32>
    %261 = tpu.matmul %260, %259, %cst_125 {dimension_numbers = #tpu.dot_dimension_numbers<[1], [0], [0], [1], [0, 0, 1, 1], [], []>} : vector<12x256xbf16>, vector<256x128xbf16>, vector<12x128xf32> -> vector<12x128xf32>
    %c0_126 = arith.constant 0 : index
    %c0_127 = arith.constant 0 : index
    %c0_128 = arith.constant 0 : index
    %262 = vector.load %arg21[%c0_126, %c0_127, %c0_128] : memref<2x1x128xf32, #tpu.memory_space<vmem>>, vector<1x1x128xf32>
    %263 = vector.shape_cast %262 : vector<1x1x128xf32> to vector<1x128xf32>
    %264 = vector.broadcast %263 : vector<1x128xf32> to vector<12x128xf32>
    %265 = arith.addf %261, %264 : vector<12x128xf32>
    %266 = arith.addf %247, %265 : vector<12x128xf32>
    %c0_129 = arith.constant 0 : index
    %c0_130 = arith.constant 0 : index
    %c0_131 = arith.constant 0 : index
    %267 = vector.load %arg24[%c0_129, %c0_130, %c0_131] : memref<2x1x128xf32, #tpu.memory_space<vmem>>, vector<1x1x128xf32>
    %268 = vector.shape_cast %267 : vector<1x1x128xf32> to vector<1x128xf32>
    %c0_132 = arith.constant 0 : index
    %c0_133 = arith.constant 0 : index
    %c0_134 = arith.constant 0 : index
    %269 = vector.load %arg25[%c0_132, %c0_133, %c0_134] : memref<2x1x128xf32, #tpu.memory_space<vmem>>, vector<1x1x128xf32>
    %270 = vector.shape_cast %269 : vector<1x1x128xf32> to vector<1x128xf32>
    %cst_135 = arith.constant dense<0.000000e+00> : vector<12xf32>
    %271 = vector.multi_reduction <add>, %266, %cst_135 [1] : vector<12x128xf32> to vector<12xf32>
    %272 = vector.shape_cast %271 : vector<12xf32> to vector<12x1xf32>
    %cst_136 = arith.constant 1.280000e+02 : f32
    %273 = vector.broadcast %cst_136 : f32 to vector<12x1xf32>
    %274 = arith.divf %272, %273 : vector<12x1xf32>
    %275 = vector.broadcast %274 : vector<12x1xf32> to vector<12x128xf32>
    %276 = arith.subf %266, %275 : vector<12x128xf32>
    %277 = arith.mulf %276, %276 : vector<12x128xf32>
    %cst_137 = arith.constant dense<0.000000e+00> : vector<12xf32>
    %278 = vector.multi_reduction <add>, %277, %cst_137 [1] : vector<12x128xf32> to vector<12xf32>
    %279 = vector.shape_cast %278 : vector<12xf32> to vector<12x1xf32>
    %cst_138 = arith.constant 1.280000e+02 : f32
    %280 = vector.broadcast %cst_138 : f32 to vector<12x1xf32>
    %281 = arith.divf %279, %280 : vector<12x1xf32>
    %282 = vector.broadcast %274 : vector<12x1xf32> to vector<12x128xf32>
    %283 = arith.subf %266, %282 : vector<12x128xf32>
    %cst_139 = arith.constant 9.99999974E-6 : f32
    %284 = vector.broadcast %cst_139 : f32 to vector<12x1xf32>
    %285 = arith.addf %281, %284 : vector<12x1xf32>
    %286 = math.rsqrt %285 : vector<12x1xf32>
    %287 = vector.broadcast %286 : vector<12x1xf32> to vector<12x128xf32>
    %288 = arith.mulf %283, %287 : vector<12x128xf32>
    %289 = vector.broadcast %268 : vector<1x128xf32> to vector<12x128xf32>
    %290 = arith.mulf %288, %289 : vector<12x128xf32>
    %291 = vector.broadcast %270 : vector<1x128xf32> to vector<12x128xf32>
    %292 = arith.addf %290, %291 : vector<12x128xf32>
    %c1_140 = arith.constant 1 : index
    %c0_141 = arith.constant 0 : index
    %c0_142 = arith.constant 0 : index
    %293 = vector.load %arg16[%c1_140, %c0_141, %c0_142] : memref<2x128x128xbf16, #tpu.memory_space<vmem>>, vector<1x128x128xbf16>
    %294 = vector.shape_cast %293 : vector<1x128x128xbf16> to vector<128x128xbf16>
    %c1_143 = arith.constant 1 : index
    %c0_144 = arith.constant 0 : index
    %c0_145 = arith.constant 0 : index
    %295 = vector.load %arg14[%c1_143, %c0_144, %c0_145] : memref<2x128x384xbf16, #tpu.memory_space<vmem>>, vector<1x128x384xbf16>
    %296 = vector.shape_cast %295 : vector<1x128x384xbf16> to vector<128x384xbf16>
    %297 = arith.truncf %292 : vector<12x128xf32> to vector<12x128xbf16>
    %cst_146 = arith.constant dense<0.000000e+00> : vector<12x384xf32>
    %298 = tpu.matmul %297, %296, %cst_146 {dimension_numbers = #tpu.dot_dimension_numbers<[1], [0], [0], [1], [0, 0, 1, 1], [], []>} : vector<12x128xbf16>, vector<128x384xbf16>, vector<12x384xf32> -> vector<12x384xf32>
    %c1_147 = arith.constant 1 : index
    %c0_148 = arith.constant 0 : index
    %c0_149 = arith.constant 0 : index
    %299 = vector.load %arg15[%c1_147, %c0_148, %c0_149] : memref<2x1x384xf32, #tpu.memory_space<vmem>>, vector<1x1x384xf32>
    %300 = vector.shape_cast %299 : vector<1x1x384xf32> to vector<1x384xf32>
    %301 = vector.broadcast %300 : vector<1x384xf32> to vector<12x384xf32>
    %302 = arith.addf %298, %301 : vector<12x384xf32>
    %cst_150 = arith.constant 0.000000e+00 : f32
    %303 = vector.broadcast %cst_150 : f32 to vector<12x128xf32>
    %304 = vector.extract_strided_slice %302 {offsets = [0, 0], sizes = [12, 32], strides = [1, 1]} : vector<12x384xf32> to vector<12x32xf32>
    %305 = vector.extract_strided_slice %302 {offsets = [0, 128], sizes = [12, 32], strides = [1, 1]} : vector<12x384xf32> to vector<12x32xf32>
    %306 = vector.extract_strided_slice %302 {offsets = [0, 256], sizes = [12, 32], strides = [1, 1]} : vector<12x384xf32> to vector<12x32xf32>
    %307 = arith.truncf %304 : vector<12x32xf32> to vector<12x32xbf16>
    %308 = arith.truncf %305 : vector<12x32xf32> to vector<12x32xbf16>
    %cst_151 = arith.constant dense<0.000000e+00> : vector<12x12xf32>
    %309 = tpu.matmul %307, %308, %cst_151 {dimension_numbers = #tpu.dot_dimension_numbers<[1], [1], [0], [0], [0, 0, 1, 0], [], []>} : vector<12x32xbf16>, vector<12x32xbf16>, vector<12x12xf32> -> vector<12x12xf32>
    %310 = arith.addf %309, %107 : vector<12x12xf32>
    %cst_152 = arith.constant dense<0xFF800000> : vector<12xf32>
    %311 = vector.multi_reduction <maximumf>, %310, %cst_152 [1] : vector<12x12xf32> to vector<12xf32>
    %312 = vector.shape_cast %311 : vector<12xf32> to vector<12x1xf32>
    %313 = vector.broadcast %312 : vector<12x1xf32> to vector<12x12xf32>
    %314 = arith.subf %310, %313 : vector<12x12xf32>
    %315 = math.exp %314 : vector<12x12xf32>
    %cst_153 = arith.constant dense<0.000000e+00> : vector<12xf32>
    %316 = vector.multi_reduction <add>, %315, %cst_153 [1] : vector<12x12xf32> to vector<12xf32>
    %317 = vector.shape_cast %316 : vector<12xf32> to vector<12x1xf32>
    %318 = tpu.reciprocal %317 {approx = true} : vector<12x1xf32> -> vector<12x1xf32>
    %319 = vector.broadcast %318 : vector<12x1xf32> to vector<12x12xf32>
    %320 = arith.mulf %315, %319 : vector<12x12xf32>
    %321 = arith.truncf %320 : vector<12x12xf32> to vector<12x12xbf16>
    %322 = arith.truncf %306 : vector<12x32xf32> to vector<12x32xbf16>
    %cst_154 = arith.constant dense<0.000000e+00> : vector<12x32xf32>
    %323 = tpu.matmul %321, %322, %cst_154 {dimension_numbers = #tpu.dot_dimension_numbers<[1], [0], [0], [1], [0, 0, 1, 1], [], []>} : vector<12x12xbf16>, vector<12x32xbf16>, vector<12x32xf32> -> vector<12x32xf32>
    %324 = vector.extract_strided_slice %294 {offsets = [0, 0], sizes = [32, 128], strides = [1, 1]} : vector<128x128xbf16> to vector<32x128xbf16>
    %325 = arith.truncf %323 : vector<12x32xf32> to vector<12x32xbf16>
    %cst_155 = arith.constant dense<0.000000e+00> : vector<12x128xf32>
    %326 = tpu.matmul %325, %324, %cst_155 {dimension_numbers = #tpu.dot_dimension_numbers<[1], [0], [0], [1], [0, 0, 1, 1], [], []>} : vector<12x32xbf16>, vector<32x128xbf16>, vector<12x128xf32> -> vector<12x128xf32>
    %327 = arith.addf %303, %326 : vector<12x128xf32>
    %328 = vector.extract_strided_slice %302 {offsets = [0, 32], sizes = [12, 32], strides = [1, 1]} : vector<12x384xf32> to vector<12x32xf32>
    %329 = vector.extract_strided_slice %302 {offsets = [0, 160], sizes = [12, 32], strides = [1, 1]} : vector<12x384xf32> to vector<12x32xf32>
    %330 = vector.extract_strided_slice %302 {offsets = [0, 288], sizes = [12, 32], strides = [1, 1]} : vector<12x384xf32> to vector<12x32xf32>
    %331 = arith.truncf %328 : vector<12x32xf32> to vector<12x32xbf16>
    %332 = arith.truncf %329 : vector<12x32xf32> to vector<12x32xbf16>
    %cst_156 = arith.constant dense<0.000000e+00> : vector<12x12xf32>
    %333 = tpu.matmul %331, %332, %cst_156 {dimension_numbers = #tpu.dot_dimension_numbers<[1], [1], [0], [0], [0, 0, 1, 0], [], []>} : vector<12x32xbf16>, vector<12x32xbf16>, vector<12x12xf32> -> vector<12x12xf32>
    %334 = arith.addf %333, %107 : vector<12x12xf32>
    %cst_157 = arith.constant dense<0xFF800000> : vector<12xf32>
    %335 = vector.multi_reduction <maximumf>, %334, %cst_157 [1] : vector<12x12xf32> to vector<12xf32>
    %336 = vector.shape_cast %335 : vector<12xf32> to vector<12x1xf32>
    %337 = vector.broadcast %336 : vector<12x1xf32> to vector<12x12xf32>
    %338 = arith.subf %334, %337 : vector<12x12xf32>
    %339 = math.exp %338 : vector<12x12xf32>
    %cst_158 = arith.constant dense<0.000000e+00> : vector<12xf32>
    %340 = vector.multi_reduction <add>, %339, %cst_158 [1] : vector<12x12xf32> to vector<12xf32>
    %341 = vector.shape_cast %340 : vector<12xf32> to vector<12x1xf32>
    %342 = tpu.reciprocal %341 {approx = true} : vector<12x1xf32> -> vector<12x1xf32>
    %343 = vector.broadcast %342 : vector<12x1xf32> to vector<12x12xf32>
    %344 = arith.mulf %339, %343 : vector<12x12xf32>
    %345 = arith.truncf %344 : vector<12x12xf32> to vector<12x12xbf16>
    %346 = arith.truncf %330 : vector<12x32xf32> to vector<12x32xbf16>
    %cst_159 = arith.constant dense<0.000000e+00> : vector<12x32xf32>
    %347 = tpu.matmul %345, %346, %cst_159 {dimension_numbers = #tpu.dot_dimension_numbers<[1], [0], [0], [1], [0, 0, 1, 1], [], []>} : vector<12x12xbf16>, vector<12x32xbf16>, vector<12x32xf32> -> vector<12x32xf32>
    %348 = vector.extract_strided_slice %294 {offsets = [32, 0], sizes = [32, 128], strides = [1, 1]} : vector<128x128xbf16> to vector<32x128xbf16>
    %349 = arith.truncf %347 : vector<12x32xf32> to vector<12x32xbf16>
    %cst_160 = arith.constant dense<0.000000e+00> : vector<12x128xf32>
    %350 = tpu.matmul %349, %348, %cst_160 {dimension_numbers = #tpu.dot_dimension_numbers<[1], [0], [0], [1], [0, 0, 1, 1], [], []>} : vector<12x32xbf16>, vector<32x128xbf16>, vector<12x128xf32> -> vector<12x128xf32>
    %351 = arith.addf %327, %350 : vector<12x128xf32>
    %352 = vector.extract_strided_slice %302 {offsets = [0, 64], sizes = [12, 32], strides = [1, 1]} : vector<12x384xf32> to vector<12x32xf32>
    %353 = vector.extract_strided_slice %302 {offsets = [0, 192], sizes = [12, 32], strides = [1, 1]} : vector<12x384xf32> to vector<12x32xf32>
    %354 = vector.extract_strided_slice %302 {offsets = [0, 320], sizes = [12, 32], strides = [1, 1]} : vector<12x384xf32> to vector<12x32xf32>
    %355 = arith.truncf %352 : vector<12x32xf32> to vector<12x32xbf16>
    %356 = arith.truncf %353 : vector<12x32xf32> to vector<12x32xbf16>
    %cst_161 = arith.constant dense<0.000000e+00> : vector<12x12xf32>
    %357 = tpu.matmul %355, %356, %cst_161 {dimension_numbers = #tpu.dot_dimension_numbers<[1], [1], [0], [0], [0, 0, 1, 0], [], []>} : vector<12x32xbf16>, vector<12x32xbf16>, vector<12x12xf32> -> vector<12x12xf32>
    %358 = arith.addf %357, %107 : vector<12x12xf32>
    %cst_162 = arith.constant dense<0xFF800000> : vector<12xf32>
    %359 = vector.multi_reduction <maximumf>, %358, %cst_162 [1] : vector<12x12xf32> to vector<12xf32>
    %360 = vector.shape_cast %359 : vector<12xf32> to vector<12x1xf32>
    %361 = vector.broadcast %360 : vector<12x1xf32> to vector<12x12xf32>
    %362 = arith.subf %358, %361 : vector<12x12xf32>
    %363 = math.exp %362 : vector<12x12xf32>
    %cst_163 = arith.constant dense<0.000000e+00> : vector<12xf32>
    %364 = vector.multi_reduction <add>, %363, %cst_163 [1] : vector<12x12xf32> to vector<12xf32>
    %365 = vector.shape_cast %364 : vector<12xf32> to vector<12x1xf32>
    %366 = tpu.reciprocal %365 {approx = true} : vector<12x1xf32> -> vector<12x1xf32>
    %367 = vector.broadcast %366 : vector<12x1xf32> to vector<12x12xf32>
    %368 = arith.mulf %363, %367 : vector<12x12xf32>
    %369 = arith.truncf %368 : vector<12x12xf32> to vector<12x12xbf16>
    %370 = arith.truncf %354 : vector<12x32xf32> to vector<12x32xbf16>
    %cst_164 = arith.constant dense<0.000000e+00> : vector<12x32xf32>
    %371 = tpu.matmul %369, %370, %cst_164 {dimension_numbers = #tpu.dot_dimension_numbers<[1], [0], [0], [1], [0, 0, 1, 1], [], []>} : vector<12x12xbf16>, vector<12x32xbf16>, vector<12x32xf32> -> vector<12x32xf32>
    %372 = vector.extract_strided_slice %294 {offsets = [64, 0], sizes = [32, 128], strides = [1, 1]} : vector<128x128xbf16> to vector<32x128xbf16>
    %373 = arith.truncf %371 : vector<12x32xf32> to vector<12x32xbf16>
    %cst_165 = arith.constant dense<0.000000e+00> : vector<12x128xf32>
    %374 = tpu.matmul %373, %372, %cst_165 {dimension_numbers = #tpu.dot_dimension_numbers<[1], [0], [0], [1], [0, 0, 1, 1], [], []>} : vector<12x32xbf16>, vector<32x128xbf16>, vector<12x128xf32> -> vector<12x128xf32>
    %375 = arith.addf %351, %374 : vector<12x128xf32>
    %376 = vector.extract_strided_slice %302 {offsets = [0, 96], sizes = [12, 32], strides = [1, 1]} : vector<12x384xf32> to vector<12x32xf32>
    %377 = vector.extract_strided_slice %302 {offsets = [0, 224], sizes = [12, 32], strides = [1, 1]} : vector<12x384xf32> to vector<12x32xf32>
    %378 = vector.extract_strided_slice %302 {offsets = [0, 352], sizes = [12, 32], strides = [1, 1]} : vector<12x384xf32> to vector<12x32xf32>
    %379 = arith.truncf %376 : vector<12x32xf32> to vector<12x32xbf16>
    %380 = arith.truncf %377 : vector<12x32xf32> to vector<12x32xbf16>
    %cst_166 = arith.constant dense<0.000000e+00> : vector<12x12xf32>
    %381 = tpu.matmul %379, %380, %cst_166 {dimension_numbers = #tpu.dot_dimension_numbers<[1], [1], [0], [0], [0, 0, 1, 0], [], []>} : vector<12x32xbf16>, vector<12x32xbf16>, vector<12x12xf32> -> vector<12x12xf32>
    %382 = arith.addf %381, %107 : vector<12x12xf32>
    %cst_167 = arith.constant dense<0xFF800000> : vector<12xf32>
    %383 = vector.multi_reduction <maximumf>, %382, %cst_167 [1] : vector<12x12xf32> to vector<12xf32>
    %384 = vector.shape_cast %383 : vector<12xf32> to vector<12x1xf32>
    %385 = vector.broadcast %384 : vector<12x1xf32> to vector<12x12xf32>
    %386 = arith.subf %382, %385 : vector<12x12xf32>
    %387 = math.exp %386 : vector<12x12xf32>
    %cst_168 = arith.constant dense<0.000000e+00> : vector<12xf32>
    %388 = vector.multi_reduction <add>, %387, %cst_168 [1] : vector<12x12xf32> to vector<12xf32>
    %389 = vector.shape_cast %388 : vector<12xf32> to vector<12x1xf32>
    %390 = tpu.reciprocal %389 {approx = true} : vector<12x1xf32> -> vector<12x1xf32>
    %391 = vector.broadcast %390 : vector<12x1xf32> to vector<12x12xf32>
    %392 = arith.mulf %387, %391 : vector<12x12xf32>
    %393 = arith.truncf %392 : vector<12x12xf32> to vector<12x12xbf16>
    %394 = arith.truncf %378 : vector<12x32xf32> to vector<12x32xbf16>
    %cst_169 = arith.constant dense<0.000000e+00> : vector<12x32xf32>
    %395 = tpu.matmul %393, %394, %cst_169 {dimension_numbers = #tpu.dot_dimension_numbers<[1], [0], [0], [1], [0, 0, 1, 1], [], []>} : vector<12x12xbf16>, vector<12x32xbf16>, vector<12x32xf32> -> vector<12x32xf32>
    %396 = vector.extract_strided_slice %294 {offsets = [96, 0], sizes = [32, 128], strides = [1, 1]} : vector<128x128xbf16> to vector<32x128xbf16>
    %397 = arith.truncf %395 : vector<12x32xf32> to vector<12x32xbf16>
    %cst_170 = arith.constant dense<0.000000e+00> : vector<12x128xf32>
    %398 = tpu.matmul %397, %396, %cst_170 {dimension_numbers = #tpu.dot_dimension_numbers<[1], [0], [0], [1], [0, 0, 1, 1], [], []>} : vector<12x32xbf16>, vector<32x128xbf16>, vector<12x128xf32> -> vector<12x128xf32>
    %399 = arith.addf %375, %398 : vector<12x128xf32>
    %c1_171 = arith.constant 1 : index
    %c0_172 = arith.constant 0 : index
    %c0_173 = arith.constant 0 : index
    %400 = vector.load %arg17[%c1_171, %c0_172, %c0_173] : memref<2x1x128xf32, #tpu.memory_space<vmem>>, vector<1x1x128xf32>
    %401 = vector.shape_cast %400 : vector<1x1x128xf32> to vector<1x128xf32>
    %402 = vector.broadcast %401 : vector<1x128xf32> to vector<12x128xf32>
    %403 = arith.addf %399, %402 : vector<12x128xf32>
    %404 = arith.addf %292, %403 : vector<12x128xf32>
    %c1_174 = arith.constant 1 : index
    %c0_175 = arith.constant 0 : index
    %c0_176 = arith.constant 0 : index
    %405 = vector.load %arg22[%c1_174, %c0_175, %c0_176] : memref<2x1x128xf32, #tpu.memory_space<vmem>>, vector<1x1x128xf32>
    %406 = vector.shape_cast %405 : vector<1x1x128xf32> to vector<1x128xf32>
    %c1_177 = arith.constant 1 : index
    %c0_178 = arith.constant 0 : index
    %c0_179 = arith.constant 0 : index
    %407 = vector.load %arg23[%c1_177, %c0_178, %c0_179] : memref<2x1x128xf32, #tpu.memory_space<vmem>>, vector<1x1x128xf32>
    %408 = vector.shape_cast %407 : vector<1x1x128xf32> to vector<1x128xf32>
    %cst_180 = arith.constant dense<0.000000e+00> : vector<12xf32>
    %409 = vector.multi_reduction <add>, %404, %cst_180 [1] : vector<12x128xf32> to vector<12xf32>
    %410 = vector.shape_cast %409 : vector<12xf32> to vector<12x1xf32>
    %cst_181 = arith.constant 1.280000e+02 : f32
    %411 = vector.broadcast %cst_181 : f32 to vector<12x1xf32>
    %412 = arith.divf %410, %411 : vector<12x1xf32>
    %413 = vector.broadcast %412 : vector<12x1xf32> to vector<12x128xf32>
    %414 = arith.subf %404, %413 : vector<12x128xf32>
    %415 = arith.mulf %414, %414 : vector<12x128xf32>
    %cst_182 = arith.constant dense<0.000000e+00> : vector<12xf32>
    %416 = vector.multi_reduction <add>, %415, %cst_182 [1] : vector<12x128xf32> to vector<12xf32>
    %417 = vector.shape_cast %416 : vector<12xf32> to vector<12x1xf32>
    %cst_183 = arith.constant 1.280000e+02 : f32
    %418 = vector.broadcast %cst_183 : f32 to vector<12x1xf32>
    %419 = arith.divf %417, %418 : vector<12x1xf32>
    %420 = vector.broadcast %412 : vector<12x1xf32> to vector<12x128xf32>
    %421 = arith.subf %404, %420 : vector<12x128xf32>
    %cst_184 = arith.constant 9.99999974E-6 : f32
    %422 = vector.broadcast %cst_184 : f32 to vector<12x1xf32>
    %423 = arith.addf %419, %422 : vector<12x1xf32>
    %424 = math.rsqrt %423 : vector<12x1xf32>
    %425 = vector.broadcast %424 : vector<12x1xf32> to vector<12x128xf32>
    %426 = arith.mulf %421, %425 : vector<12x128xf32>
    %427 = vector.broadcast %406 : vector<1x128xf32> to vector<12x128xf32>
    %428 = arith.mulf %426, %427 : vector<12x128xf32>
    %429 = vector.broadcast %408 : vector<1x128xf32> to vector<12x128xf32>
    %430 = arith.addf %428, %429 : vector<12x128xf32>
    %c1_185 = arith.constant 1 : index
    %c0_186 = arith.constant 0 : index
    %c0_187 = arith.constant 0 : index
    %431 = vector.load %arg18[%c1_185, %c0_186, %c0_187] : memref<2x128x256xbf16, #tpu.memory_space<vmem>>, vector<1x128x256xbf16>
    %432 = vector.shape_cast %431 : vector<1x128x256xbf16> to vector<128x256xbf16>
    %433 = arith.truncf %430 : vector<12x128xf32> to vector<12x128xbf16>
    %cst_188 = arith.constant dense<0.000000e+00> : vector<12x256xf32>
    %434 = tpu.matmul %433, %432, %cst_188 {dimension_numbers = #tpu.dot_dimension_numbers<[1], [0], [0], [1], [0, 0, 1, 1], [], []>} : vector<12x128xbf16>, vector<128x256xbf16>, vector<12x256xf32> -> vector<12x256xf32>
    %c1_189 = arith.constant 1 : index
    %c0_190 = arith.constant 0 : index
    %c0_191 = arith.constant 0 : index
    %435 = vector.load %arg19[%c1_189, %c0_190, %c0_191] : memref<2x1x256xf32, #tpu.memory_space<vmem>>, vector<1x1x256xf32>
    %436 = vector.shape_cast %435 : vector<1x1x256xf32> to vector<1x256xf32>
    %437 = vector.broadcast %436 : vector<1x256xf32> to vector<12x256xf32>
    %438 = arith.addf %434, %437 : vector<12x256xf32>
    %cst_192 = arith.constant 0.000000e+00 : f32
    %439 = vector.broadcast %cst_192 : f32 to vector<12x256xf32>
    %440 = arith.maximumf %438, %439 : vector<12x256xf32>
    %c1_193 = arith.constant 1 : index
    %c0_194 = arith.constant 0 : index
    %c0_195 = arith.constant 0 : index
    %441 = vector.load %arg20[%c1_193, %c0_194, %c0_195] : memref<2x256x128xbf16, #tpu.memory_space<vmem>>, vector<1x256x128xbf16>
    %442 = vector.shape_cast %441 : vector<1x256x128xbf16> to vector<256x128xbf16>
    %443 = arith.truncf %440 : vector<12x256xf32> to vector<12x256xbf16>
    %cst_196 = arith.constant dense<0.000000e+00> : vector<12x128xf32>
    %444 = tpu.matmul %443, %442, %cst_196 {dimension_numbers = #tpu.dot_dimension_numbers<[1], [0], [0], [1], [0, 0, 1, 1], [], []>} : vector<12x256xbf16>, vector<256x128xbf16>, vector<12x128xf32> -> vector<12x128xf32>
    %c1_197 = arith.constant 1 : index
    %c0_198 = arith.constant 0 : index
    %c0_199 = arith.constant 0 : index
    %445 = vector.load %arg21[%c1_197, %c0_198, %c0_199] : memref<2x1x128xf32, #tpu.memory_space<vmem>>, vector<1x1x128xf32>
    %446 = vector.shape_cast %445 : vector<1x1x128xf32> to vector<1x128xf32>
    %447 = vector.broadcast %446 : vector<1x128xf32> to vector<12x128xf32>
    %448 = arith.addf %444, %447 : vector<12x128xf32>
    %449 = arith.addf %430, %448 : vector<12x128xf32>
    %c1_200 = arith.constant 1 : index
    %c0_201 = arith.constant 0 : index
    %c0_202 = arith.constant 0 : index
    %450 = vector.load %arg24[%c1_200, %c0_201, %c0_202] : memref<2x1x128xf32, #tpu.memory_space<vmem>>, vector<1x1x128xf32>
    %451 = vector.shape_cast %450 : vector<1x1x128xf32> to vector<1x128xf32>
    %c1_203 = arith.constant 1 : index
    %c0_204 = arith.constant 0 : index
    %c0_205 = arith.constant 0 : index
    %452 = vector.load %arg25[%c1_203, %c0_204, %c0_205] : memref<2x1x128xf32, #tpu.memory_space<vmem>>, vector<1x1x128xf32>
    %453 = vector.shape_cast %452 : vector<1x1x128xf32> to vector<1x128xf32>
    %cst_206 = arith.constant dense<0.000000e+00> : vector<12xf32>
    %454 = vector.multi_reduction <add>, %449, %cst_206 [1] : vector<12x128xf32> to vector<12xf32>
    %455 = vector.shape_cast %454 : vector<12xf32> to vector<12x1xf32>
    %cst_207 = arith.constant 1.280000e+02 : f32
    %456 = vector.broadcast %cst_207 : f32 to vector<12x1xf32>
    %457 = arith.divf %455, %456 : vector<12x1xf32>
    %458 = vector.broadcast %457 : vector<12x1xf32> to vector<12x128xf32>
    %459 = arith.subf %449, %458 : vector<12x128xf32>
    %460 = arith.mulf %459, %459 : vector<12x128xf32>
    %cst_208 = arith.constant dense<0.000000e+00> : vector<12xf32>
    %461 = vector.multi_reduction <add>, %460, %cst_208 [1] : vector<12x128xf32> to vector<12xf32>
    %462 = vector.shape_cast %461 : vector<12xf32> to vector<12x1xf32>
    %cst_209 = arith.constant 1.280000e+02 : f32
    %463 = vector.broadcast %cst_209 : f32 to vector<12x1xf32>
    %464 = arith.divf %462, %463 : vector<12x1xf32>
    %465 = vector.broadcast %457 : vector<12x1xf32> to vector<12x128xf32>
    %466 = arith.subf %449, %465 : vector<12x128xf32>
    %cst_210 = arith.constant 9.99999974E-6 : f32
    %467 = vector.broadcast %cst_210 : f32 to vector<12x1xf32>
    %468 = arith.addf %464, %467 : vector<12x1xf32>
    %469 = math.rsqrt %468 : vector<12x1xf32>
    %470 = vector.broadcast %469 : vector<12x1xf32> to vector<12x128xf32>
    %471 = arith.mulf %466, %470 : vector<12x128xf32>
    %472 = vector.broadcast %451 : vector<1x128xf32> to vector<12x128xf32>
    %473 = arith.mulf %471, %472 : vector<12x128xf32>
    %474 = vector.broadcast %453 : vector<1x128xf32> to vector<12x128xf32>
    %475 = arith.addf %473, %474 : vector<12x128xf32>
    %c0_211 = arith.constant 0 : index
    %c0_212 = arith.constant 0 : index
    %476 = vector.load %arg26[%c0_211, %c0_212] : memref<128x128xbf16, #tpu.memory_space<vmem>>, vector<128x128xbf16>
    %477 = arith.truncf %106 : vector<12x128xf32> to vector<12x128xbf16>
    %cst_213 = arith.constant dense<0.000000e+00> : vector<12x128xf32>
    %478 = tpu.matmul %477, %476, %cst_213 {dimension_numbers = #tpu.dot_dimension_numbers<[1], [0], [0], [1], [0, 0, 1, 1], [], []>} : vector<12x128xbf16>, vector<128x128xbf16>, vector<12x128xf32> -> vector<12x128xf32>
    %c0_214 = arith.constant 0 : index
    %c0_215 = arith.constant 0 : index
    %479 = vector.load %arg27[%c0_214, %c0_215] : memref<1x128xf32, #tpu.memory_space<vmem>>, vector<1x128xf32>
    %480 = vector.broadcast %479 : vector<1x128xf32> to vector<12x128xf32>
    %481 = arith.addf %478, %480 : vector<12x128xf32>
    %482 = arith.addf %475, %481 : vector<12x128xf32>
    %cst_216 = arith.constant 0.000000e+00 : f32
    %483 = vector.broadcast %cst_216 : f32 to vector<12x128xf32>
    %484 = arith.maximumf %482, %483 : vector<12x128xf32>
    %c0_217 = arith.constant 0 : index
    %c0_218 = arith.constant 0 : index
    %485 = vector.load %arg28[%c0_217, %c0_218] : memref<2x12xf32, #tpu.memory_space<vmem>>, vector<2x12xf32>
    %486 = arith.truncf %485 : vector<2x12xf32> to vector<2x12xbf16>
    %487 = arith.truncf %484 : vector<12x128xf32> to vector<12x128xbf16>
    %cst_219 = arith.constant dense<0.000000e+00> : vector<2x128xf32>
    %488 = tpu.matmul %486, %487, %cst_219 {dimension_numbers = #tpu.dot_dimension_numbers<[1], [0], [0], [1], [0, 0, 1, 1], [], []>} : vector<2x12xbf16>, vector<12x128xbf16>, vector<2x128xf32> -> vector<2x128xf32>
    %c0_220 = arith.constant 0 : index
    %c0_221 = arith.constant 0 : index
    %489 = vector.load %arg29[%c0_220, %c0_221] : memref<1x128xf32, #tpu.memory_space<vmem>>, vector<1x128xf32>
    %490 = vector.broadcast %489 : vector<1x128xf32> to vector<2x128xf32>
    %491 = arith.addf %488, %490 : vector<2x128xf32>
    %c0_222 = arith.constant 0 : index
    %c0_223 = arith.constant 0 : index
    %492 = vector.load %arg30[%c0_222, %c0_223] : memref<128x100xbf16, #tpu.memory_space<vmem>>, vector<128x100xbf16>
    %493 = arith.truncf %491 : vector<2x128xf32> to vector<2x128xbf16>
    %cst_224 = arith.constant dense<0.000000e+00> : vector<2x100xf32>
    %494 = tpu.matmul %493, %492, %cst_224 {dimension_numbers = #tpu.dot_dimension_numbers<[1], [0], [0], [1], [0, 0, 1, 1], [], []>} : vector<2x128xbf16>, vector<128x100xbf16>, vector<2x100xf32> -> vector<2x100xf32>
    %c0_225 = arith.constant 0 : index
    %c0_226 = arith.constant 0 : index
    %495 = vector.load %arg31[%c0_225, %c0_226] : memref<1x100xf32, #tpu.memory_space<vmem>>, vector<1x100xf32>
    %496 = vector.broadcast %495 : vector<1x100xf32> to vector<2x100xf32>
    %497 = arith.addf %494, %496 : vector<2x100xf32>
    %c0_227 = arith.constant 0 : index
    %c0_228 = arith.constant 0 : index
    %498 = vector.load %arg32[%c0_227, %c0_228] : memref<2x100xf32, #tpu.memory_space<vmem>>, vector<2x100xf32>
    tpu.vector_store %arg32[%c0_227, %c0_228], %497 {strides = array<i32>} : memref<2x100xf32, #tpu.memory_space<vmem>>, vector<2x100xf32>,
    return
  }
  func.func @transform_0(%arg0: i32) -> (i32, i32) {
    %c0_i32 = arith.constant 0 : i32
    %c0_i32_0 = arith.constant 0 : i32
    %c0_i32_1 = arith.constant 0 : i32
    return %c0_i32, %c0_i32_0 : i32, i32
  }
  func.func @transform_1(%arg0: i32) -> (i32, i32) {
    %c0_i32 = arith.constant 0 : i32
    %c0_i32_0 = arith.constant 0 : i32
    %c0_i32_1 = arith.constant 0 : i32
    return %c0_i32, %c0_i32_0 : i32, i32
  }
  func.func @transform_2(%arg0: i32) -> (i32, i32) {
    %c0_i32 = arith.constant 0 : i32
    %c0_i32_0 = arith.constant 0 : i32
    %c0_i32_1 = arith.constant 0 : i32
    return %c0_i32, %c0_i32_0 : i32, i32
  }
  func.func @transform_3(%arg0: i32) -> (i32, i32) {
    %c0_i32 = arith.constant 0 : i32
    %c0_i32_0 = arith.constant 0 : i32
    %c0_i32_1 = arith.constant 0 : i32
    return %c0_i32, %c0_i32_0 : i32, i32
  }
  func.func @transform_4(%arg0: i32) -> (i32, i32) {
    %c0_i32 = arith.constant 0 : i32
    %c0_i32_0 = arith.constant 0 : i32
    %c0_i32_1 = arith.constant 0 : i32
    return %c0_i32, %c0_i32_0 : i32, i32
  }
  func.func @transform_5(%arg0: i32) -> (i32, i32) {
    %c0_i32 = arith.constant 0 : i32
    %c0_i32_0 = arith.constant 0 : i32
    %c0_i32_1 = arith.constant 0 : i32
    return %c0_i32, %c0_i32_0 : i32, i32
  }
  func.func @transform_6(%arg0: i32) -> (i32, i32, i32) {
    %c0_i32 = arith.constant 0 : i32
    %c0_i32_0 = arith.constant 0 : i32
    %c0_i32_1 = arith.constant 0 : i32
    %c0_i32_2 = arith.constant 0 : i32
    return %c0_i32, %c0_i32_0, %c0_i32_1 : i32, i32, i32
  }
  func.func @transform_7(%arg0: i32) -> (i32, i32) {
    %c0_i32 = arith.constant 0 : i32
    %c0_i32_0 = arith.constant 0 : i32
    %c0_i32_1 = arith.constant 0 : i32
    return %c0_i32, %c0_i32_0 : i32, i32
  }
  func.func @transform_8(%arg0: i32) -> (i32, i32) {
    %c0_i32 = arith.constant 0 : i32
    %c0_i32_0 = arith.constant 0 : i32
    %c0_i32_1 = arith.constant 0 : i32
    return %c0_i32, %c0_i32_0 : i32, i32
  }
  func.func @transform_9(%arg0: i32) -> (i32, i32, i32) {
    %c0_i32 = arith.constant 0 : i32
    %c0_i32_0 = arith.constant 0 : i32
    %c0_i32_1 = arith.constant 0 : i32
    %c0_i32_2 = arith.constant 0 : i32
    return %c0_i32, %c0_i32_0, %c0_i32_1 : i32, i32, i32
  }
  func.func @transform_10(%arg0: i32) -> (i32, i32) {
    %c0_i32 = arith.constant 0 : i32
    %c0_i32_0 = arith.constant 0 : i32
    %c0_i32_1 = arith.constant 0 : i32
    return %c0_i32, %c0_i32_0 : i32, i32
  }
  func.func @transform_11(%arg0: i32) -> (i32, i32) {
    %c0_i32 = arith.constant 0 : i32
    %c0_i32_0 = arith.constant 0 : i32
    %c0_i32_1 = arith.constant 0 : i32
    return %c0_i32, %c0_i32_0 : i32, i32
  }
  func.func @transform_12(%arg0: i32) -> (i32, i32) {
    %c0_i32 = arith.constant 0 : i32
    %c0_i32_0 = arith.constant 0 : i32
    %c0_i32_1 = arith.constant 0 : i32
    return %c0_i32, %c0_i32_0 : i32, i32
  }
  func.func @transform_13(%arg0: i32) -> (i32, i32, i32) {
    %c0_i32 = arith.constant 0 : i32
    %c0_i32_0 = arith.constant 0 : i32
    %c0_i32_1 = arith.constant 0 : i32
    %c0_i32_2 = arith.constant 0 : i32
    return %c0_i32, %c0_i32_0, %c0_i32_1 : i32, i32, i32
  }
  func.func @transform_14(%arg0: i32) -> (i32, i32, i32) {
    %c0_i32 = arith.constant 0 : i32
    %c0_i32_0 = arith.constant 0 : i32
    %c0_i32_1 = arith.constant 0 : i32
    %c0_i32_2 = arith.constant 0 : i32
    return %c0_i32, %c0_i32_0, %c0_i32_1 : i32, i32, i32
  }
  func.func @transform_15(%arg0: i32) -> (i32, i32, i32) {
    %c0_i32 = arith.constant 0 : i32
    %c0_i32_0 = arith.constant 0 : i32
    %c0_i32_1 = arith.constant 0 : i32
    %c0_i32_2 = arith.constant 0 : i32
    return %c0_i32, %c0_i32_0, %c0_i32_1 : i32, i32, i32
  }
  func.func @transform_16(%arg0: i32) -> (i32, i32, i32) {
    %c0_i32 = arith.constant 0 : i32
    %c0_i32_0 = arith.constant 0 : i32
    %c0_i32_1 = arith.constant 0 : i32
    %c0_i32_2 = arith.constant 0 : i32
    return %c0_i32, %c0_i32_0, %c0_i32_1 : i32, i32, i32
  }
  func.func @transform_17(%arg0: i32) -> (i32, i32, i32) {
    %c0_i32 = arith.constant 0 : i32
    %c0_i32_0 = arith.constant 0 : i32
    %c0_i32_1 = arith.constant 0 : i32
    %c0_i32_2 = arith.constant 0 : i32
    return %c0_i32, %c0_i32_0, %c0_i32_1 : i32, i32, i32
  }
  func.func @transform_18(%arg0: i32) -> (i32, i32, i32) {
    %c0_i32 = arith.constant 0 : i32
    %c0_i32_0 = arith.constant 0 : i32
    %c0_i32_1 = arith.constant 0 : i32
    %c0_i32_2 = arith.constant 0 : i32
    return %c0_i32, %c0_i32_0, %c0_i32_1 : i32, i32, i32
  }
  func.func @transform_19(%arg0: i32) -> (i32, i32, i32) {
    %c0_i32 = arith.constant 0 : i32
    %c0_i32_0 = arith.constant 0 : i32
    %c0_i32_1 = arith.constant 0 : i32
    %c0_i32_2 = arith.constant 0 : i32
    return %c0_i32, %c0_i32_0, %c0_i32_1 : i32, i32, i32
  }
  func.func @transform_20(%arg0: i32) -> (i32, i32, i32) {
    %c0_i32 = arith.constant 0 : i32
    %c0_i32_0 = arith.constant 0 : i32
    %c0_i32_1 = arith.constant 0 : i32
    %c0_i32_2 = arith.constant 0 : i32
    return %c0_i32, %c0_i32_0, %c0_i32_1 : i32, i32, i32
  }
  func.func @transform_21(%arg0: i32) -> (i32, i32, i32) {
    %c0_i32 = arith.constant 0 : i32
    %c0_i32_0 = arith.constant 0 : i32
    %c0_i32_1 = arith.constant 0 : i32
    %c0_i32_2 = arith.constant 0 : i32
    return %c0_i32, %c0_i32_0, %c0_i32_1 : i32, i32, i32
  }
  func.func @transform_22(%arg0: i32) -> (i32, i32, i32) {
    %c0_i32 = arith.constant 0 : i32
    %c0_i32_0 = arith.constant 0 : i32
    %c0_i32_1 = arith.constant 0 : i32
    %c0_i32_2 = arith.constant 0 : i32
    return %c0_i32, %c0_i32_0, %c0_i32_1 : i32, i32, i32
  }
  func.func @transform_23(%arg0: i32) -> (i32, i32, i32) {
    %c0_i32 = arith.constant 0 : i32
    %c0_i32_0 = arith.constant 0 : i32
    %c0_i32_1 = arith.constant 0 : i32
    %c0_i32_2 = arith.constant 0 : i32
    return %c0_i32, %c0_i32_0, %c0_i32_1 : i32, i32, i32
  }
  func.func @transform_24(%arg0: i32) -> (i32, i32, i32) {
    %c0_i32 = arith.constant 0 : i32
    %c0_i32_0 = arith.constant 0 : i32
    %c0_i32_1 = arith.constant 0 : i32
    %c0_i32_2 = arith.constant 0 : i32
    return %c0_i32, %c0_i32_0, %c0_i32_1 : i32, i32, i32
  }
  func.func @transform_25(%arg0: i32) -> (i32, i32) {
    %c0_i32 = arith.constant 0 : i32
    %c0_i32_0 = arith.constant 0 : i32
    %c0_i32_1 = arith.constant 0 : i32
    return %c0_i32, %c0_i32_0 : i32, i32
  }
  func.func @transform_26(%arg0: i32) -> (i32, i32) {
    %c0_i32 = arith.constant 0 : i32
    %c0_i32_0 = arith.constant 0 : i32
    %c0_i32_1 = arith.constant 0 : i32
    return %c0_i32, %c0_i32_0 : i32, i32
  }
  func.func @transform_27(%arg0: i32) -> (i32, i32) {
    %c0_i32 = arith.constant 0 : i32
    %c0_i32_0 = arith.constant 0 : i32
    %c0_i32_1 = arith.constant 0 : i32
    return %c0_i32, %c0_i32_0 : i32, i32
  }
  func.func @transform_28(%arg0: i32) -> (i32, i32) {
    %c0_i32 = arith.constant 0 : i32
    %c0_i32_0 = arith.constant 0 : i32
    %c0_i32_1 = arith.constant 0 : i32
    return %c0_i32, %c0_i32_0 : i32, i32
  }
  func.func @transform_29(%arg0: i32) -> (i32, i32) {
    %c0_i32 = arith.constant 0 : i32
    %c0_i32_0 = arith.constant 0 : i32
    %c0_i32_1 = arith.constant 0 : i32
    return %c0_i32, %c0_i32_0 : i32, i32
  }
  func.func @transform_30(%arg0: i32) -> (i32, i32) {
    %c0_i32 = arith.constant 0 : i32
    %c0_i32_0 = arith.constant 0 : i32
    %c0_i32_1 = arith.constant 0 : i32
    return %c0_i32, %c0_i32_0 : i32, i32
  }
  func.func @transform_31(%arg0: i32) -> (i32, i32) {
    %c0_i32 = arith.constant 0 : i32
    %c0_i32_0 = arith.constant 0 : i32
    %c0_i32_1 = arith.constant 0 : i32
    return %c0_i32, %c0_i32_0 : i32, i32
  }
}

</mosaic_0001>

<llo_original>
// kernel: cnn2d_transam_forward.1
$region0: #{cnn2d_transam_forward.1}
  #allocation0 [shape = 'u32[]', space=smem, size = 0x4, offset = 0x4, fixed_abs, tag = 'smem constant byte address 0x4 - core index']
  #allocation1 [shape = 'u32[144,128]{1,0:T(1,128)}', space=vmem, size = 0x12000, scoped, tag = 'internal scratch']
  %s0 = inlined_call_operand.smem [shape: u32[32], index: -1, kind: input, shape index: {}]
  %s1 = sld [smem:[%s0]]
  %s2 = scalar_lea.smem %s0, 1
  %s3 = sld [smem:[%s2]]
  %s4 = scalar_lea.smem %s0, 2
  %s5 = sld [smem:[%s4]]
  %s6 = scalar_lea.smem %s0, 3
  %s7 = sld [smem:[%s6]]
  %s8 = scalar_lea.smem %s0, 4
  %s9 = sld [smem:[%s8]]
  %s10 = scalar_lea.smem %s0, 5
  %s11 = sld [smem:[%s10]]
  %s12 = scalar_lea.smem %s0, 6
  %s13 = sld [smem:[%s12]]
  %s14 = scalar_lea.smem %s0, 7
  %s15 = sld [smem:[%s14]]
  %s16 = scalar_lea.smem %s0, 8
  %s17 = sld [smem:[%s16]]
  %s18 = scalar_lea.smem %s0, 9
  %s19 = sld [smem:[%s18]]
  %s20 = scalar_lea.smem %s0, 10
  %s21 = sld [smem:[%s20]]
  %s22 = scalar_lea.smem %s0, 11
  %s23 = sld [smem:[%s22]]
  %s24 = scalar_lea.smem %s0, 12
  %s25 = sld [smem:[%s24]]
  %s26 = scalar_lea.smem %s0, 13
  %s27 = sld [smem:[%s26]]
  %s28 = scalar_lea.smem %s0, 14
  %s29 = sld [smem:[%s28]]
  %s30 = scalar_lea.smem %s0, 15
  %s31 = sld [smem:[%s30]]
  %s32 = scalar_lea.smem %s0, 16
  %s33 = sld [smem:[%s32]]
  %s34 = scalar_lea.smem %s0, 17
  %s35 = sld [smem:[%s34]]
  %s36 = scalar_lea.smem %s0, 18
  %s37 = sld [smem:[%s36]]
  %s38 = scalar_lea.smem %s0, 19
  %s39 = sld [smem:[%s38]]
  %s40 = scalar_lea.smem %s0, 20
  %s41 = sld [smem:[%s40]]
  %s42 = scalar_lea.smem %s0, 21
  %s43 = sld [smem:[%s42]]
  %s44 = scalar_lea.smem %s0, 22
  %s45 = sld [smem:[%s44]]
  %s46 = scalar_lea.smem %s0, 23
  %s47 = sld [smem:[%s46]]
  %s48 = scalar_lea.smem %s0, 24
  %s49 = sld [smem:[%s48]]
  %s50 = scalar_lea.smem %s0, 25
  %s51 = sld [smem:[%s50]]
  %s52 = scalar_lea.smem %s0, 26
  %s53 = sld [smem:[%s52]]
  %s54 = scalar_lea.smem %s0, 27
  %s55 = sld [smem:[%s54]]
  %s56 = scalar_lea.smem %s0, 28
  %s57 = sld [smem:[%s56]]
  %s58 = scalar_lea.smem %s0, 29
  %s59 = sld [smem:[%s58]]
  %s60 = scalar_lea.smem %s0, 30
  %s61 = sld [smem:[%s60]]
  %s62 = scalar_lea.smem %s0, 31
  %s63 = sld [smem:[%s62]]
  %s64 = sld [smem:[#allocation0]]
  $region134: #{cnn2d_transam_forward.1} parent=0
    _
  %s66 = ssub.s32 1, %s64
  %s67 = scalar_select 0, %s66, %s64
  $region1: #{cnn2d_transam_forward.1} parent=0
    #allocation2 [shape = 'u8[1024]{0}', space=vmem, size = 0x400, scoped, tag = 'output window, operand 0, single buffered']
    #allocation3 [shape = 's32[1]{0}', space=sflag, size = 0x4, scoped, tag = 'scoped memory for cnn2d_transam_forward.1']
    %68 = vsyncpa [#allocation3], 0
    // Predicated region
    $region2: #{cnn2d_transam_forward.1} parent=1 // pred_check
      _
    $region3: #{cnn2d_transam_forward.1} parent=1 // pred_check_branch
      %70 = sbr.rel (0) target = $region5
    $region4: #{cnn2d_transam_forward.1} parent=1 // pred_region
      _
    $region5: #{cnn2d_transam_forward.1} parent=1 // pred_fallthru
      _
    // Predicated region
    $region6: #{cnn2d_transam_forward.1} parent=1 // pred_check
      _
    $region7: #{cnn2d_transam_forward.1} parent=1 // pred_check_branch
      %72 = sbr.rel (0) target = $region9
    $region8: #{cnn2d_transam_forward.1} parent=1 // pred_region
      _
    $region9: #{cnn2d_transam_forward.1} parent=1 // pred_fallthru
      _
    // Predicated region
    $region10: #{cnn2d_transam_forward.1} parent=1 // pred_check
      _
    $region11: #{cnn2d_transam_forward.1} parent=1 // pred_check_branch
      %74 = sbr.rel (0) target = $region13
    $region12: #{cnn2d_transam_forward.1} parent=1 // pred_region
      _
    $region13: #{cnn2d_transam_forward.1} parent=1 // pred_fallthru
      _
    // Predicated region
    $region14: #{cnn2d_transam_forward.1} parent=1 // pred_check
      _
    $region15: #{cnn2d_transam_forward.1} parent=1 // pred_check_branch
      %76 = sbr.rel (0) target = $region17
    $region16: #{cnn2d_transam_forward.1} parent=1 // pred_region
      _
    $region17: #{cnn2d_transam_forward.1} parent=1 // pred_fallthru
      _
    // Predicated region
    $region18: #{cnn2d_transam_forward.1} parent=1 // pred_check
      _
    $region19: #{cnn2d_transam_forward.1} parent=1 // pred_check_branch
      %78 = sbr.rel (0) target = $region21
    $region20: #{cnn2d_transam_forward.1} parent=1 // pred_region
      _
    $region21: #{cnn2d_transam_forward.1} parent=1 // pred_fallthru
      _
    // Predicated region
    $region22: #{cnn2d_transam_forward.1} parent=1 // pred_check
      _
    $region23: #{cnn2d_transam_forward.1} parent=1 // pred_check_branch
      %80 = sbr.rel (0) target = $region25
    $region24: #{cnn2d_transam_forward.1} parent=1 // pred_region
      _
    $region25: #{cnn2d_transam_forward.1} parent=1 // pred_fallthru
      _
    // Predicated region
    $region26: #{cnn2d_transam_forward.1} parent=1 // pred_check
      _
    $region27: #{cnn2d_transam_forward.1} parent=1 // pred_check_branch
      %82 = sbr.rel (0) target = $region29
    $region28: #{cnn2d_transam_forward.1} parent=1 // pred_region
      _
    $region29: #{cnn2d_transam_forward.1} parent=1 // pred_fallthru
      _
    // Predicated region
    $region30: #{cnn2d_transam_forward.1} parent=1 // pred_check
      _
    $region31: #{cnn2d_transam_forward.1} parent=1 // pred_check_branch
      %84 = sbr.rel (0) target = $region33
    $region32: #{cnn2d_transam_forward.1} parent=1 // pred_region
      _
    $region33: #{cnn2d_transam_forward.1} parent=1 // pred_fallthru
      _
    // Predicated region
    $region34: #{cnn2d_transam_forward.1} parent=1 // pred_check
      _
    $region35: #{cnn2d_transam_forward.1} parent=1 // pred_check_branch
      %86 = sbr.rel (0) target = $region37
    $region36: #{cnn2d_transam_forward.1} parent=1 // pred_region
      _
    $region37: #{cnn2d_transam_forward.1} parent=1 // pred_fallthru
      _
    // Predicated region
    $region38: #{cnn2d_transam_forward.1} parent=1 // pred_check
      _
    $region39: #{cnn2d_transam_forward.1} parent=1 // pred_check_branch
      %88 = sbr.rel (0) target = $region41
    $region40: #{cnn2d_transam_forward.1} parent=1 // pred_region
      _
    $region41: #{cnn2d_transam_forward.1} parent=1 // pred_fallthru
      _
    // Predicated region
    $region42: #{cnn2d_transam_forward.1} parent=1 // pred_check
      _
    $region43: #{cnn2d_transam_forward.1} parent=1 // pred_check_branch
      %90 = sbr.rel (0) target = $region45
    $region44: #{cnn2d_transam_forward.1} parent=1 // pred_region
      _
    $region45: #{cnn2d_transam_forward.1} parent=1 // pred_fallthru
      _
    // Predicated region
    $region46: #{cnn2d_transam_forward.1} parent=1 // pred_check
      _
    $region47: #{cnn2d_transam_forward.1} parent=1 // pred_check_branch
      %92 = sbr.rel (0) target = $region49
    $region48: #{cnn2d_transam_forward.1} parent=1 // pred_region
      _
    $region49: #{cnn2d_transam_forward.1} parent=1 // pred_fallthru
      _
    // Predicated region
    $region50: #{cnn2d_transam_forward.1} parent=1 // pred_check
      _
    $region51: #{cnn2d_transam_forward.1} parent=1 // pred_check_branch
      %94 = sbr.rel (0) target = $region53
    $region52: #{cnn2d_transam_forward.1} parent=1 // pred_region
      _
    $region53: #{cnn2d_transam_forward.1} parent=1 // pred_fallthru
      _
    // Predicated region
    $region54: #{cnn2d_transam_forward.1} parent=1 // pred_check
      _
    $region55: #{cnn2d_transam_forward.1} parent=1 // pred_check_branch
      %96 = sbr.rel (0) target = $region57
    $region56: #{cnn2d_transam_forward.1} parent=1 // pred_region
      _
    $region57: #{cnn2d_transam_forward.1} parent=1 // pred_fallthru
      _
    // Predicated region
    $region58: #{cnn2d_transam_forward.1} parent=1 // pred_check
      _
    $region59: #{cnn2d_transam_forward.1} parent=1 // pred_check_branch
      %98 = sbr.rel (0) target = $region61
    $region60: #{cnn2d_transam_forward.1} parent=1 // pred_region
      _
    $region61: #{cnn2d_transam_forward.1} parent=1 // pred_fallthru
      _
    // Predicated region
    $region62: #{cnn2d_transam_forward.1} parent=1 // pred_check
      _
    $region63: #{cnn2d_transam_forward.1} parent=1 // pred_check_branch
      %100 = sbr.rel (0) target = $region65
    $region64: #{cnn2d_transam_forward.1} parent=1 // pred_region
      _
    $region65: #{cnn2d_transam_forward.1} parent=1 // pred_fallthru
      _
    // Predicated region
    $region66: #{cnn2d_transam_forward.1} parent=1 // pred_check
      _
    $region67: #{cnn2d_transam_forward.1} parent=1 // pred_check_branch
      %102 = sbr.rel (0) target = $region69
    $region68: #{cnn2d_transam_forward.1} parent=1 // pred_region
      _
    $region69: #{cnn2d_transam_forward.1} parent=1 // pred_fallthru
      _
    // Predicated region
    $region70: #{cnn2d_transam_forward.1} parent=1 // pred_check
      _
    $region71: #{cnn2d_transam_forward.1} parent=1 // pred_check_branch
      %104 = sbr.rel (0) target = $region73
    $region72: #{cnn2d_transam_forward.1} parent=1 // pred_region
      _
    $region73: #{cnn2d_transam_forward.1} parent=1 // pred_fallthru
      _
    // Predicated region
    $region74: #{cnn2d_transam_forward.1} parent=1 // pred_check
      _
    $region75: #{cnn2d_transam_forward.1} parent=1 // pred_check_branch
      %106 = sbr.rel (0) target = $region77
    $region76: #{cnn2d_transam_forward.1} parent=1 // pred_region
      _
    $region77: #{cnn2d_transam_forward.1} parent=1 // pred_fallthru
      _
    // Predicated region
    $region78: #{cnn2d_transam_forward.1} parent=1 // pred_check
      _
    $region79: #{cnn2d_transam_forward.1} parent=1 // pred_check_branch
      %108 = sbr.rel (0) target = $region81
    $region80: #{cnn2d_transam_forward.1} parent=1 // pred_region
      _
    $region81: #{cnn2d_transam_forward.1} parent=1 // pred_fallthru
      _
    // Predicated region
    $region82: #{cnn2d_transam_forward.1} parent=1 // pred_check
      _
    $region83: #{cnn2d_transam_forward.1} parent=1 // pred_check_branch
      %110 = sbr.rel (0) target = $region85
    $region84: #{cnn2d_transam_forward.1} parent=1 // pred_region
      _
    $region85: #{cnn2d_transam_forward.1} parent=1 // pred_fallthru
      _
    // Predicated region
    $region86: #{cnn2d_transam_forward.1} parent=1 // pred_check
      _
    $region87: #{cnn2d_transam_forward.1} parent=1 // pred_check_branch
      %112 = sbr.rel (0) target = $region89
    $region88: #{cnn2d_transam_forward.1} parent=1 // pred_region
      _
    $region89: #{cnn2d_transam_forward.1} parent=1 // pred_fallthru
      _
    // Predicated region
    $region90: #{cnn2d_transam_forward.1} parent=1 // pred_check
      _
    $region91: #{cnn2d_transam_forward.1} parent=1 // pred_check_branch
      %114 = sbr.rel (0) target = $region93
    $region92: #{cnn2d_transam_forward.1} parent=1 // pred_region
      _
    $region93: #{cnn2d_transam_forward.1} parent=1 // pred_fallthru
      _
    // Predicated region
    $region94: #{cnn2d_transam_forward.1} parent=1 // pred_check
      _
    $region95: #{cnn2d_transam_forward.1} parent=1 // pred_check_branch
      %116 = sbr.rel (0) target = $region97
    $region96: #{cnn2d_transam_forward.1} parent=1 // pred_region
      _
    $region97: #{cnn2d_transam_forward.1} parent=1 // pred_fallthru
      _
    // Predicated region
    $region98: #{cnn2d_transam_forward.1} parent=1 // pred_check
      _
    $region99: #{cnn2d_transam_forward.1} parent=1 // pred_check_branch
      %118 = sbr.rel (0) target = $region101
    $region100: #{cnn2d_transam_forward.1} parent=1 // pred_region
      _
    $region101: #{cnn2d_transam_forward.1} parent=1 // pred_fallthru
      _
    // Predicated region
    $region102: #{cnn2d_transam_forward.1} parent=1 // pred_check
      _
    $region103: #{cnn2d_transam_forward.1} parent=1 // pred_check_branch
      %120 = sbr.rel (0) target = $region105
    $region104: #{cnn2d_transam_forward.1} parent=1 // pred_region
      _
    $region105: #{cnn2d_transam_forward.1} parent=1 // pred_fallthru
      _
    // Predicated region
    $region106: #{cnn2d_transam_forward.1} parent=1 // pred_check
      _
    $region107: #{cnn2d_transam_forward.1} parent=1 // pred_check_branch
      %122 = sbr.rel (0) target = $region109
    $region108: #{cnn2d_transam_forward.1} parent=1 // pred_region
      _
    $region109: #{cnn2d_transam_forward.1} parent=1 // pred_fallthru
      _
    // Predicated region
    $region110: #{cnn2d_transam_forward.1} parent=1 // pred_check
      _
    $region111: #{cnn2d_transam_forward.1} parent=1 // pred_check_branch
      %124 = sbr.rel (0) target = $region113
    $region112: #{cnn2d_transam_forward.1} parent=1 // pred_region
      _
    $region113: #{cnn2d_transam_forward.1} parent=1 // pred_fallthru
      _
    // Predicated region
    $region114: #{cnn2d_transam_forward.1} parent=1 // pred_check
      _
    $region115: #{cnn2d_transam_forward.1} parent=1 // pred_check_branch
      %126 = sbr.rel (0) target = $region117
    $region116: #{cnn2d_transam_forward.1} parent=1 // pred_region
      _
    $region117: #{cnn2d_transam_forward.1} parent=1 // pred_fallthru
      _
    // Predicated region
    $region118: #{cnn2d_transam_forward.1} parent=1 // pred_check
      _
    $region119: #{cnn2d_transam_forward.1} parent=1 // pred_check_branch
      %128 = sbr.rel (0) target = $region121
    $region120: #{cnn2d_transam_forward.1} parent=1 // pred_region
      _
    $region121: #{cnn2d_transam_forward.1} parent=1 // pred_fallthru
      _
    // Predicated region
    $region122: #{cnn2d_transam_forward.1} parent=1 // pred_check
      _
    $region123: #{cnn2d_transam_forward.1} parent=1 // pred_check_branch
      %130 = sbr.rel (0) target = $region125
    $region124: #{cnn2d_transam_forward.1} parent=1 // pred_region
      _
    $region125: #{cnn2d_transam_forward.1} parent=1 // pred_fallthru
      _
    %v132 = vld [vmem:[%s1] sm:$0xf]
    %v133 = vld [vmem:[%s1 + $0x4] sm:$0xf]
    %v134 = vld [vmem:[%s1 + $0x8] sm:$0xf]
    %v135 = vld [vmem:[%s1 + $0xc] sm:$0xf]
    %v136 = vld [vmem:[%s1 + $0x10] sm:$0xf]
    %v137 = vld [vmem:[%s1 + $0x14] sm:$0xf]
    %v138 = vld [vmem:[%s1 + $0x18] sm:$0xf]
    %v139 = vld [vmem:[%s1 + $0x1c] sm:$0xf]
    %v140 = vld [vmem:[%s1 + $0x20] sm:$0xf]
    %v141 = vld [vmem:[%s1 + $0x24] sm:$0xf]
    %v142 = vld [vmem:[%s1 + $0x28] sm:$0xf]
    %v143 = vld [vmem:[%s1 + $0x2c] sm:$0xf]
    %v144 = vld [vmem:[%s1 + $0x30] sm:$0xf]
    %v145 = vld [vmem:[%s1 + $0x34] sm:$0xf]
    %v146 = vld [vmem:[%s1 + $0x38] sm:$0xf]
    %v147 = vld [vmem:[%s1 + $0x3c] sm:$0xf]
    %v148 = vld [vmem:[%s1 + $0x40] sm:$0xf]
    %v149 = vld [vmem:[%s1 + $0x44] sm:$0xf]
    %v150 = vld [vmem:[%s1 + $0x48] sm:$0xf]
    %v151 = vld [vmem:[%s1 + $0x4c] sm:$0xf]
    %v152 = vld [vmem:[%s1 + $0x50] sm:$0xf]
    %v153 = vld [vmem:[%s1 + $0x54] sm:$0xf]
    %v154 = vld [vmem:[%s1 + $0x58] sm:$0xf]
    %v155 = vld [vmem:[%s1 + $0x5c] sm:$0xf]
    %v156 = vld [vmem:[%s5] sm:$0xf]
    %v157 = vld [vmem:[%s5 + $0x4] sm:$0xf]
    %v158 = vld [vmem:[%s5 + $0x8] sm:$0xf]
    %v159 = vld [vmem:[%s5 + $0xc] sm:$0xf]
    %v160 = vld [vmem:[%s5 + $0x10] sm:$0xf]
    %v161 = vld [vmem:[%s5 + $0x14] sm:$0xf]
    %v162 = vld [vmem:[%s5 + $0x18] sm:$0x1]
    %v163 = vld [vmem:[%s3] sm:$0xf]
    %v164 = vld [vmem:[%s3 + $0x4] sm:$0xf]
    %v165 = vld [vmem:[%s3 + $0x8] sm:$0xf]
    %v166 = vld [vmem:[%s3 + $0xc] sm:$0xf]
    %v167 = vld [vmem:[%s3 + $0x10] sm:$0xf]
    %v168 = vld [vmem:[%s3 + $0x14] sm:$0xf]
    %v169 = vld [vmem:[%s3 + $0x18] sm:$0xf]
    %v170 = vld [vmem:[%s3 + $0x1c] sm:$0xf]
    %v171 = vld [vmem:[%s3 + $0x20] sm:$0xf]
    %v172 = vld [vmem:[%s3 + $0x24] sm:$0xf]
    %v173 = vld [vmem:[%s3 + $0x28] sm:$0xf]
    %v174 = vld [vmem:[%s3 + $0x2c] sm:$0xf]
    %v175 = vld [vmem:[%s3 + $0x30] sm:$0xf]
    %v176 = vld [vmem:[%s3 + $0x34] sm:$0xf]
    %v177 = vld [vmem:[%s3 + $0x38] sm:$0xf]
    %v178 = vld [vmem:[%s3 + $0x3c] sm:$0xf]
    %v179 = vld [vmem:[%s3 + $0x40] sm:$0xf]
    %v180 = vld [vmem:[%s3 + $0x44] sm:$0xf]
    %v181 = vld [vmem:[%s3 + $0x48] sm:$0xf]
    %v182 = vld [vmem:[%s3 + $0x4c] sm:$0xf]
    %v183 = vld [vmem:[%s3 + $0x50] sm:$0xf]
    %v184 = vld [vmem:[%s3 + $0x54] sm:$0xf]
    %v185 = vld [vmem:[%s3 + $0x58] sm:$0xf]
    %v186 = vld [vmem:[%s3 + $0x5c] sm:$0xf]
    %v187 = vld [vmem:[%s7] sm:$0xf]
    %v188 = vld [vmem:[%s7 + $0x4] sm:$0xf]
    %v189 = vld [vmem:[%s7 + $0x8] sm:$0xf]
    %v190 = vld [vmem:[%s7 + $0xc] sm:$0xf]
    %v191 = vld [vmem:[%s7 + $0x10] sm:$0xf]
    %v192 = vld [vmem:[%s7 + $0x14] sm:$0xf]
    %v193 = vld [vmem:[%s7 + $0x18] sm:$0x1]
    %v218 = vunpack.c.l.b16 %v163
    %v219 = vunpack.c.l.b16 %v164
    %v220 = vunpack.c.l.b16 %v165
    %v221 = vunpack.c.l.b16 %v166
    %v222 = vunpack.c.l.b16 %v167
    %v223 = vunpack.c.l.b16 %v168
    %v224 = vunpack.c.l.b16 %v169
    %v225 = vunpack.c.l.b16 %v170
    %v226 = vunpack.c.l.b16 %v171
    %v227 = vunpack.c.l.b16 %v172
    %v228 = vunpack.c.l.b16 %v173
    %v229 = vunpack.c.l.b16 %v174
    %v230 = vunpack.c.l.b16 %v175
    %v231 = vunpack.c.l.b16 %v176
    %v232 = vunpack.c.l.b16 %v177
    %v233 = vunpack.c.l.b16 %v178
    %v234 = vunpack.c.l.b16 %v179
    %v235 = vunpack.c.l.b16 %v180
    %v236 = vunpack.c.l.b16 %v181
    %v237 = vunpack.c.l.b16 %v182
    %v238 = vunpack.c.l.b16 %v183
    %v239 = vunpack.c.l.b16 %v184
    %v240 = vunpack.c.l.b16 %v185
    %v241 = vunpack.c.l.b16 %v186
    %v242 = vpack.c.b16 %v219, %v218
    %v243 = vpack.c.b16 %v221, %v220
    %v244 = vpack.c.b16 %v223, %v222
    %v245 = vpack.c.b16 %v225, %v224
    %v246 = vpack.c.b16 %v227, %v226
    %v247 = vpack.c.b16 %v229, %v228
    %v248 = vpack.c.b16 %v231, %v230
    %v249 = vpack.c.b16 %v233, %v232
    %v250 = vpack.c.b16 %v235, %v234
    %v251 = vpack.c.b16 %v237, %v236
    %v252 = vpack.c.b16 %v239, %v238
    %v253 = vpack.c.b16 %v241, %v240
    %v261 = vunpack.c.l.b16 %v187
    %v262 = vunpack.c.l.b16 %v188
    %v263 = vunpack.c.l.b16 %v189
    %v264 = vunpack.c.l.b16 %v190
    %v265 = vunpack.c.l.b16 %v191
    %v266 = vunpack.c.l.b16 %v192
    %v267 = vunpack.c.l.b16 %v193
    %v268 = vpack.c.b16 %v262, %v261
    %v269 = vpack.c.b16 %v264, %v263
    %v270 = vpack.c.b16 %v266, %v265
    %v271 = vpack.c.b16 %v267, %v267
    %vm275 = vcmask 408576
    %v277 = vsel %vm275, %v242, 0
    %v280 = vsel %vm275, %v243, 0
    %v283 = vsel %vm275, %v244, 0
    %v286 = vsel %vm275, %v245, 0
    %v289 = vsel %vm275, %v246, 0
    %v292 = vsel %vm275, %v247, 0
    %v295 = vsel %vm275, %v248, 0
    %v298 = vsel %vm275, %v249, 0
    %v301 = vsel %vm275, %v250, 0
    %v304 = vsel %vm275, %v251, 0
    %v307 = vsel %vm275, %v252, 0
    %v310 = vsel %vm275, %v253, 0
    %vm312 = vcmask 1040384
    %v314 = vsel %vm312, %v271, 0
    %316 = vmatprep.subr.bf16.mxu0 0
    %317 = vmatpush1.bf16.msra.mxu0 %v268
    %318 = vmatprep.subr.bf16.mxu0 0
    %319 = vmatpush1.bf16.msra.mxu0 %v269
    %320 = vmatprep.subr.bf16.mxu0 0
    %321 = vmatpush1.bf16.msra.mxu0 %v270
    %322 = vmatprep.subr.bf16.mxu0 0
    %323 = vmatpush1.bf16.msra.mxu0 %v314
    %324 = vmatprep.subr.bf16.mxu0 0
    %325 = vmatpush1.bf16.msra.mxu0 0
    %326 = vmatprep.subr.bf16.mxu0 0
    %327 = vmatpush1.bf16.msra.mxu0 0
    %328 = vmatprep.subr.bf16.mxu0 0
    %329 = vmatpush1.bf16.msra.mxu0 0
    %330 = vmatprep.subr.bf16.mxu0 0
    %331 = vmatpush1.bf16.msra.mxu0 0
    %332 = vmatprep.subr.bf16.mxu0 0
    %333 = vmatpush1.bf16.msra.mxu0 0
    %334 = vmatprep.subr.bf16.mxu0 0
    %335 = vmatpush1.bf16.msra.mxu0 0
    %336 = vmatprep.subr.bf16.mxu0 0
    %337 = vmatpush1.bf16.msra.mxu0 0
    %338 = vmatprep.subr.bf16.mxu0 0
    %339 = vmatpush1.bf16.msra.mxu0 0
    %340 = vmatprep.subr.bf16.mxu0 0
    %341 = vmatpush1.bf16.msra.mxu0 0
    %342 = vmatprep.subr.bf16.mxu0 0
    %343 = vmatpush1.bf16.msra.mxu0 0
    %344 = vmatprep.subr.bf16.mxu0 0
    %345 = vmatpush1.bf16.msra.mxu0 0
    %346 = vmatprep.subr.bf16.mxu0 0
    %347 = vmatpush1.bf16.msra.mxu0 0
    %348 = vmatprep.mubr.bf16.mxu0 0
    %349 = vmatmul.mubr.bf16.gmra.mrb[0].mxu0 %v277
    %v350 = vpop.f32.mrb[0].mxu0
    %v351 = vadd.f32 0.0, %v350
    %v352 = vpop.f32.mrb[0].mxu0
    %v353 = vpop.f32.mrb[0].mxu0
    %v354 = vadd.f32 0.0, %v353
    %v355 = vpop.f32.mrb[0].mxu0
    %356 = vmatprep.mubr.bf16.mxu0 0
    %357 = vmatmul.mubr.bf16.gmra.mrb[0].mxu0 %v280
    %v358 = vpop.f32.mrb[0].mxu0
    %v359 = vadd.f32 0.0, %v358
    %v360 = vpop.f32.mrb[0].mxu0
    %v361 = vpop.f32.mrb[0].mxu0
    %v362 = vadd.f32 0.0, %v361
    %v363 = vpop.f32.mrb[0].mxu0
    %364 = vmatprep.mubr.bf16.mxu0 0
    %365 = vmatmul.mubr.bf16.gmra.mrb[0].mxu0 %v283
    %v366 = vpop.f32.mrb[0].mxu0
    %v367 = vadd.f32 0.0, %v366
    %v368 = vpop.f32.mrb[0].mxu0
    %v369 = vpop.f32.mrb[0].mxu0
    %v370 = vadd.f32 0.0, %v369
    %v371 = vpop.f32.mrb[0].mxu0
    %372 = vmatprep.mubr.bf16.mxu0 0
    %373 = vmatmul.mubr.bf16.gmra.mrb[0].mxu0 %v286
    %v374 = vpop.f32.mrb[0].mxu0
    %v375 = vadd.f32 0.0, %v374
    %v376 = vpop.f32.mrb[0].mxu0
    %v377 = vpop.f32.mrb[0].mxu0
    %v378 = vadd.f32 0.0, %v377
    %v379 = vpop.f32.mrb[0].mxu0
    %380 = vmatprep.mubr.bf16.mxu0 0
    %381 = vmatmul.mubr.bf16.gmra.mrb[0].mxu0 %v289
    %v382 = vpop.f32.mrb[0].mxu0
    %v383 = vadd.f32 0.0, %v382
    %v384 = vpop.f32.mrb[0].mxu0
    %v385 = vpop.f32.mrb[0].mxu0
    %v386 = vadd.f32 0.0, %v385
    %v387 = vpop.f32.mrb[0].mxu0
    %388 = vmatprep.mubr.bf16.mxu0 0
    %389 = vmatmul.mubr.bf16.gmra.mrb[0].mxu0 %v292
    %v390 = vpop.f32.mrb[0].mxu0
    %v391 = vadd.f32 0.0, %v390
    %v392 = vpop.f32.mrb[0].mxu0
    %v393 = vpop.f32.mrb[0].mxu0
    %v394 = vadd.f32 0.0, %v393
    %v395 = vpop.f32.mrb[0].mxu0
    %396 = vmatprep.mubr.bf16.mxu0 0
    %397 = vmatmul.mubr.bf16.gmra.mrb[0].mxu0 %v295
    %v398 = vpop.f32.mrb[0].mxu0
    %v399 = vadd.f32 0.0, %v398
    %v400 = vpop.f32.mrb[0].mxu0
    %v401 = vpop.f32.mrb[0].mxu0
    %v402 = vadd.f32 0.0, %v401
    %v403 = vpop.f32.mrb[0].mxu0
    %404 = vmatprep.mubr.bf16.mxu0 0
    %405 = vmatmul.mubr.bf16.gmra.mrb[0].mxu0 %v298
    %v406 = vpop.f32.mrb[0].mxu0
    %v407 = vadd.f32 0.0, %v406
    %v408 = vpop.f32.mrb[0].mxu0
    %v409 = vpop.f32.mrb[0].mxu0
    %v410 = vadd.f32 0.0, %v409
    %v411 = vpop.f32.mrb[0].mxu0
    %412 = vmatprep.mubr.bf16.mxu0 0
    %413 = vmatmul.mubr.bf16.gmra.mrb[0].mxu0 %v301
    %v414 = vpop.f32.mrb[0].mxu0
    %v415 = vadd.f32 0.0, %v414
    %v416 = vpop.f32.mrb[0].mxu0
    %v417 = vpop.f32.mrb[0].mxu0
    %v418 = vadd.f32 0.0, %v417
    %v419 = vpop.f32.mrb[0].mxu0
    %420 = vmatprep.mubr.bf16.mxu0 0
    %421 = vmatmul.mubr.bf16.gmra.mrb[0].mxu0 %v304
    %v422 = vpop.f32.mrb[0].mxu0
    %v423 = vadd.f32 0.0, %v422
    %v424 = vpop.f32.mrb[0].mxu0
    %v425 = vpop.f32.mrb[0].mxu0
    %v426 = vadd.f32 0.0, %v425
    %v427 = vpop.f32.mrb[0].mxu0
    %428 = vmatprep.mubr.bf16.mxu0 0
    %429 = vmatmul.mubr.bf16.gmra.mrb[0].mxu0 %v307
    %v430 = vpop.f32.mrb[0].mxu0
    %v431 = vadd.f32 0.0, %v430
    %v432 = vpop.f32.mrb[0].mxu0
    %v433 = vpop.f32.mrb[0].mxu0
    %v434 = vadd.f32 0.0, %v433
    %v435 = vpop.f32.mrb[0].mxu0
    %436 = vmatprep.mubr.bf16.mxu0 0
    %437 = vmatmul.mubr.bf16.gmra.mrb[0].mxu0 %v310
    %v438 = vpop.f32.mrb[0].mxu0
    %v439 = vadd.f32 0.0, %v438
    %v440 = vpop.f32.mrb[0].mxu0
    %v441 = vpop.f32.mrb[0].mxu0
    %v442 = vadd.f32 0.0, %v441
    %v443 = vpop.f32.mrb[0].mxu0
    %444 = vdwg.mxu0
    %v469 = vunpack.c.l.b16 %v132
    %v470 = vunpack.c.l.b16 %v133
    %v471 = vunpack.c.l.b16 %v134
    %v472 = vunpack.c.l.b16 %v135
    %v473 = vunpack.c.l.b16 %v136
    %v474 = vunpack.c.l.b16 %v137
    %v475 = vunpack.c.l.b16 %v138
    %v476 = vunpack.c.l.b16 %v139
    %v477 = vunpack.c.l.b16 %v140
    %v478 = vunpack.c.l.b16 %v141
    %v479 = vunpack.c.l.b16 %v142
    %v480 = vunpack.c.l.b16 %v143
    %v481 = vunpack.c.l.b16 %v144
    %v482 = vunpack.c.l.b16 %v145
    %v483 = vunpack.c.l.b16 %v146
    %v484 = vunpack.c.l.b16 %v147
    %v485 = vunpack.c.l.b16 %v148
    %v486 = vunpack.c.l.b16 %v149
    %v487 = vunpack.c.l.b16 %v150
    %v488 = vunpack.c.l.b16 %v151
    %v489 = vunpack.c.l.b16 %v152
    %v490 = vunpack.c.l.b16 %v153
    %v491 = vunpack.c.l.b16 %v154
    %v492 = vunpack.c.l.b16 %v155
    %v493 = vpack.c.b16 %v470, %v469
    %v494 = vpack.c.b16 %v472, %v471
    %v495 = vpack.c.b16 %v474, %v473
    %v496 = vpack.c.b16 %v476, %v475
    %v497 = vpack.c.b16 %v478, %v477
    %v498 = vpack.c.b16 %v480, %v479
    %v499 = vpack.c.b16 %v482, %v481
    %v500 = vpack.c.b16 %v484, %v483
    %v501 = vpack.c.b16 %v486, %v485
    %v502 = vpack.c.b16 %v488, %v487
    %v503 = vpack.c.b16 %v490, %v489
    %v504 = vpack.c.b16 %v492, %v491
    %v512 = vunpack.c.l.b16 %v156
    %v513 = vunpack.c.l.b16 %v157
    %v514 = vunpack.c.l.b16 %v158
    %v515 = vunpack.c.l.b16 %v159
    %v516 = vunpack.c.l.b16 %v160
    %v517 = vunpack.c.l.b16 %v161
    %v518 = vunpack.c.l.b16 %v162
    %v519 = vpack.c.b16 %v513, %v512
    %v520 = vpack.c.b16 %v515, %v514
    %v521 = vpack.c.b16 %v517, %v516
    %v522 = vpack.c.b16 %v518, %v518
    %v527 = vsel %vm275, %v493, 0
    %v530 = vsel %vm275, %v494, 0
    %v533 = vsel %vm275, %v495, 0
    %v536 = vsel %vm275, %v496, 0
    %v539 = vsel %vm275, %v497, 0
    %v542 = vsel %vm275, %v498, 0
    %v545 = vsel %vm275, %v499, 0
    %v548 = vsel %vm275, %v500, 0
    %v551 = vsel %vm275, %v501, 0
    %v554 = vsel %vm275, %v502, 0
    %v557 = vsel %vm275, %v503, 0
    %v560 = vsel %vm275, %v504, 0
    %v563 = vsel %vm312, %v522, 0
    %565 = vmatprep.subr.bf16.mxu0 0
    %566 = vmatpush1.bf16.msra.mxu0 %v519
    %567 = vmatprep.subr.bf16.mxu0 0
    %568 = vmatpush1.bf16.msra.mxu0 %v520
    %569 = vmatprep.subr.bf16.mxu0 0
    %570 = vmatpush1.bf16.msra.mxu0 %v521
    %571 = vmatprep.subr.bf16.mxu0 0
    %572 = vmatpush1.bf16.msra.mxu0 %v563
    %573 = vmatprep.subr.bf16.mxu0 0
    %574 = vmatpush1.bf16.msra.mxu0 0
    %575 = vmatprep.subr.bf16.mxu0 0
    %576 = vmatpush1.bf16.msra.mxu0 0
    %577 = vmatprep.subr.bf16.mxu0 0
    %578 = vmatpush1.bf16.msra.mxu0 0
    %579 = vmatprep.subr.bf16.mxu0 0
    %580 = vmatpush1.bf16.msra.mxu0 0
    %581 = vmatprep.subr.bf16.mxu0 0
    %582 = vmatpush1.bf16.msra.mxu0 0
    %583 = vmatprep.subr.bf16.mxu0 0
    %584 = vmatpush1.bf16.msra.mxu0 0
    %585 = vmatprep.subr.bf16.mxu0 0
    %586 = vmatpush1.bf16.msra.mxu0 0
    %587 = vmatprep.subr.bf16.mxu0 0
    %588 = vmatpush1.bf16.msra.mxu0 0
    %589 = vmatprep.subr.bf16.mxu0 0
    %590 = vmatpush1.bf16.msra.mxu0 0
    %591 = vmatprep.subr.bf16.mxu0 0
    %592 = vmatpush1.bf16.msra.mxu0 0
    %593 = vmatprep.subr.bf16.mxu0 0
    %594 = vmatpush1.bf16.msra.mxu0 0
    %595 = vmatprep.subr.bf16.mxu0 0
    %596 = vmatpush1.bf16.msra.mxu0 0
    %597 = vmatprep.mubr.bf16.mxu0 0
    %598 = vmatmul.mubr.bf16.gmra.mrb[0].mxu0 %v527
    %v599 = vpop.f32.mrb[0].mxu0
    %v600 = vadd.f32 %v351, %v599
    %v601 = vpop.f32.mrb[0].mxu0
    %v602 = vpop.f32.mrb[0].mxu0
    %v603 = vadd.f32 %v354, %v602
    %v604 = vpop.f32.mrb[0].mxu0
    %605 = vmatprep.mubr.bf16.mxu0 0
    %606 = vmatmul.mubr.bf16.gmra.mrb[0].mxu0 %v530
    %v607 = vpop.f32.mrb[0].mxu0
    %v608 = vadd.f32 %v359, %v607
    %v609 = vpop.f32.mrb[0].mxu0
    %v610 = vpop.f32.mrb[0].mxu0
    %v611 = vadd.f32 %v362, %v610
    %v612 = vpop.f32.mrb[0].mxu0
    %613 = vmatprep.mubr.bf16.mxu0 0
    %614 = vmatmul.mubr.bf16.gmra.mrb[0].mxu0 %v533
    %v615 = vpop.f32.mrb[0].mxu0
    %v616 = vadd.f32 %v367, %v615
    %v617 = vpop.f32.mrb[0].mxu0
    %v618 = vpop.f32.mrb[0].mxu0
    %v619 = vadd.f32 %v370, %v618
    %v620 = vpop.f32.mrb[0].mxu0
    %621 = vmatprep.mubr.bf16.mxu0 0
    %622 = vmatmul.mubr.bf16.gmra.mrb[0].mxu0 %v536
    %v623 = vpop.f32.mrb[0].mxu0
    %v624 = vadd.f32 %v375, %v623
    %v625 = vpop.f32.mrb[0].mxu0
    %v626 = vpop.f32.mrb[0].mxu0
    %v627 = vadd.f32 %v378, %v626
    %v628 = vpop.f32.mrb[0].mxu0
    %629 = vmatprep.mubr.bf16.mxu0 0
    %630 = vmatmul.mubr.bf16.gmra.mrb[0].mxu0 %v539
    %v631 = vpop.f32.mrb[0].mxu0
    %v632 = vadd.f32 %v383, %v631
    %v633 = vpop.f32.mrb[0].mxu0
    %v634 = vpop.f32.mrb[0].mxu0
    %v635 = vadd.f32 %v386, %v634
    %v636 = vpop.f32.mrb[0].mxu0
    %637 = vmatprep.mubr.bf16.mxu0 0
    %638 = vmatmul.mubr.bf16.gmra.mrb[0].mxu0 %v542
    %v639 = vpop.f32.mrb[0].mxu0
    %v640 = vadd.f32 %v391, %v639
    %v641 = vpop.f32.mrb[0].mxu0
    %v642 = vpop.f32.mrb[0].mxu0
    %v643 = vadd.f32 %v394, %v642
    %v644 = vpop.f32.mrb[0].mxu0
    %645 = vmatprep.mubr.bf16.mxu0 0
    %646 = vmatmul.mubr.bf16.gmra.mrb[0].mxu0 %v545
    %v647 = vpop.f32.mrb[0].mxu0
    %v648 = vadd.f32 %v399, %v647
    %v649 = vpop.f32.mrb[0].mxu0
    %v650 = vpop.f32.mrb[0].mxu0
    %v651 = vadd.f32 %v402, %v650
    %v652 = vpop.f32.mrb[0].mxu0
    %653 = vmatprep.mubr.bf16.mxu0 0
    %654 = vmatmul.mubr.bf16.gmra.mrb[0].mxu0 %v548
    %v655 = vpop.f32.mrb[0].mxu0
    %v656 = vadd.f32 %v407, %v655
    %v657 = vpop.f32.mrb[0].mxu0
    %v658 = vpop.f32.mrb[0].mxu0
    %v659 = vadd.f32 %v410, %v658
    %v660 = vpop.f32.mrb[0].mxu0
    %661 = vmatprep.mubr.bf16.mxu0 0
    %662 = vmatmul.mubr.bf16.gmra.mrb[0].mxu0 %v551
    %v663 = vpop.f32.mrb[0].mxu0
    %v664 = vadd.f32 %v415, %v663
    %v665 = vpop.f32.mrb[0].mxu0
    %v666 = vpop.f32.mrb[0].mxu0
    %v667 = vadd.f32 %v418, %v666
    %v668 = vpop.f32.mrb[0].mxu0
    %669 = vmatprep.mubr.bf16.mxu0 0
    %670 = vmatmul.mubr.bf16.gmra.mrb[0].mxu0 %v554
    %v671 = vpop.f32.mrb[0].mxu0
    %v672 = vadd.f32 %v423, %v671
    %v673 = vpop.f32.mrb[0].mxu0
    %v674 = vpop.f32.mrb[0].mxu0
    %v675 = vadd.f32 %v426, %v674
    %v676 = vpop.f32.mrb[0].mxu0
    %677 = vmatprep.mubr.bf16.mxu0 0
    %678 = vmatmul.mubr.bf16.gmra.mrb[0].mxu0 %v557
    %v679 = vpop.f32.mrb[0].mxu0
    %v680 = vadd.f32 %v431, %v679
    %v681 = vpop.f32.mrb[0].mxu0
    %v682 = vpop.f32.mrb[0].mxu0
    %v683 = vadd.f32 %v434, %v682
    %v684 = vpop.f32.mrb[0].mxu0
    %685 = vmatprep.mubr.bf16.mxu0 0
    %686 = vmatmul.mubr.bf16.gmra.mrb[0].mxu0 %v560
    %v687 = vpop.f32.mrb[0].mxu0
    %v688 = vadd.f32 %v439, %v687
    %v689 = vpop.f32.mrb[0].mxu0
    %v690 = vpop.f32.mrb[0].mxu0
    %v691 = vadd.f32 %v442, %v690
    %v692 = vpop.f32.mrb[0].mxu0
    %693 = vdwg.mxu0
    %v694 = vld [vmem:[%s9] sm:$0x1]
    %719 = vrot.lane.b32.xlu0 %v600, 80
    %v720 = vpop.permute.xlu0 %719
    %721 = vrot.lane.b32.xlu0 %v603, 80
    %v722 = vpop.permute.xlu0 %721
    %723 = vrot.lane.b32.xlu0 %v608, 80
    %v724 = vpop.permute.xlu0 %723
    %725 = vrot.lane.b32.xlu0 %v611, 80
    %v726 = vpop.permute.xlu0 %725
    %727 = vrot.lane.b32.xlu0 %v616, 80
    %v728 = vpop.permute.xlu0 %727
    %729 = vrot.lane.b32.xlu0 %v619, 80
    %v730 = vpop.permute.xlu0 %729
    %731 = vrot.lane.b32.xlu0 %v624, 80
    %v732 = vpop.permute.xlu0 %731
    %733 = vrot.lane.b32.xlu0 %v627, 80
    %v734 = vpop.permute.xlu0 %733
    %735 = vrot.lane.b32.xlu0 %v632, 80
    %v736 = vpop.permute.xlu0 %735
    %737 = vrot.lane.b32.xlu0 %v635, 80
    %v738 = vpop.permute.xlu0 %737
    %739 = vrot.lane.b32.xlu0 %v640, 80
    %v740 = vpop.permute.xlu0 %739
    %741 = vrot.lane.b32.xlu0 %v643, 80
    %v742 = vpop.permute.xlu0 %741
    %743 = vrot.lane.b32.xlu0 %v648, 80
    %v744 = vpop.permute.xlu0 %743
    %745 = vrot.lane.b32.xlu0 %v651, 80
    %v746 = vpop.permute.xlu0 %745
    %747 = vrot.lane.b32.xlu0 %v656, 80
    %v748 = vpop.permute.xlu0 %747
    %749 = vrot.lane.b32.xlu0 %v659, 80
    %v750 = vpop.permute.xlu0 %749
    %751 = vrot.lane.b32.xlu0 %v664, 80
    %v752 = vpop.permute.xlu0 %751
    %753 = vrot.lane.b32.xlu0 %v667, 80
    %v754 = vpop.permute.xlu0 %753
    %755 = vrot.lane.b32.xlu0 %v672, 80
    %v756 = vpop.permute.xlu0 %755
    %757 = vrot.lane.b32.xlu0 %v675, 80
    %v758 = vpop.permute.xlu0 %757
    %759 = vrot.lane.b32.xlu0 %v680, 80
    %v760 = vpop.permute.xlu0 %759
    %761 = vrot.lane.b32.xlu0 %v683, 80
    %v762 = vpop.permute.xlu0 %761
    %763 = vrot.lane.b32.xlu0 %v688, 80
    %v764 = vpop.permute.xlu0 %763
    %765 = vrot.lane.b32.xlu0 %v691, 80
    %v766 = vpop.permute.xlu0 %765
    %v791 = vmax.f32 %v600, %v720
    %v792 = vmax.f32 %v603, %v722
    %v793 = vmax.f32 %v608, %v724
    %v794 = vmax.f32 %v611, %v726
    %v795 = vmax.f32 %v616, %v728
    %v796 = vmax.f32 %v619, %v730
    %v797 = vmax.f32 %v624, %v732
    %v798 = vmax.f32 %v627, %v734
    %v799 = vmax.f32 %v632, %v736
    %v800 = vmax.f32 %v635, %v738
    %v801 = vmax.f32 %v640, %v740
    %v802 = vmax.f32 %v643, %v742
    %v803 = vmax.f32 %v648, %v744
    %v804 = vmax.f32 %v651, %v746
    %v805 = vmax.f32 %v656, %v748
    %v806 = vmax.f32 %v659, %v750
    %v807 = vmax.f32 %v664, %v752
    %v808 = vmax.f32 %v667, %v754
    %v809 = vmax.f32 %v672, %v756
    %v810 = vmax.f32 %v675, %v758
    %v811 = vmax.f32 %v680, %v760
    %v812 = vmax.f32 %v683, %v762
    %v813 = vmax.f32 %v688, %v764
    %v814 = vmax.f32 %v691, %v766
    %v816 = vlaneseq
    %v817 = vshrl.u32 %v816, 7
    %v818 = vsub.s32 0, %v817
    %v819 = vrot.slane %v694, %v818
    %v821 = vadd.f32 %v791, %v819
    %v822 = vadd.f32 %v792, %v819
    %v823 = vadd.f32 %v793, %v819
    %v824 = vadd.f32 %v794, %v819
    %v825 = vadd.f32 %v795, %v819
    %v826 = vadd.f32 %v796, %v819
    %v827 = vadd.f32 %v797, %v819
    %v828 = vadd.f32 %v798, %v819
    %v829 = vadd.f32 %v799, %v819
    %v830 = vadd.f32 %v800, %v819
    %v831 = vadd.f32 %v801, %v819
    %v832 = vadd.f32 %v802, %v819
    %v833 = vadd.f32 %v803, %v819
    %v834 = vadd.f32 %v804, %v819
    %v835 = vadd.f32 %v805, %v819
    %v836 = vadd.f32 %v806, %v819
    %v837 = vadd.f32 %v807, %v819
    %v838 = vadd.f32 %v808, %v819
    %v839 = vadd.f32 %v809, %v819
    %v840 = vadd.f32 %v810, %v819
    %v841 = vadd.f32 %v811, %v819
    %v842 = vadd.f32 %v812, %v819
    %v843 = vadd.f32 %v813, %v819
    %v844 = vadd.f32 %v814, %v819
    %v845 = vmax.f32 %v821, 0.0
    %v846 = vmax.f32 %v822, 0.0
    %v847 = vmax.f32 %v823, 0.0
    %v848 = vmax.f32 %v824, 0.0
    %v849 = vmax.f32 %v825, 0.0
    %v850 = vmax.f32 %v826, 0.0
    %v851 = vmax.f32 %v827, 0.0
    %v852 = vmax.f32 %v828, 0.0
    %v853 = vmax.f32 %v829, 0.0
    %v854 = vmax.f32 %v830, 0.0
    %v855 = vmax.f32 %v831, 0.0
    %v856 = vmax.f32 %v832, 0.0
    %v857 = vmax.f32 %v833, 0.0
    %v858 = vmax.f32 %v834, 0.0
    %v859 = vmax.f32 %v835, 0.0
    %v860 = vmax.f32 %v836, 0.0
    %v861 = vmax.f32 %v837, 0.0
    %v862 = vmax.f32 %v838, 0.0
    %v863 = vmax.f32 %v839, 0.0
    %v864 = vmax.f32 %v840, 0.0
    %v865 = vmax.f32 %v841, 0.0
    %v866 = vmax.f32 %v842, 0.0
    %v867 = vmax.f32 %v843, 0.0
    %v868 = vmax.f32 %v844, 0.0
    %v869 = vld [vmem:[%s11] sm:$0xff]
    %v870 = vld [vmem:[%s11 + $0x8] sm:$0xff]
    %v871 = vld [vmem:[%s11 + $0x10] sm:$0xff]
    %v872 = vld [vmem:[%s11 + $0x18] sm:$0xff]
    %v873 = vld [vmem:[%s11 + $0x20] sm:$0xff]
    %v874 = vld [vmem:[%s11 + $0x28] sm:$0xff]
    %v875 = vld [vmem:[%s11 + $0x30] sm:$0xff]
    %v876 = vld [vmem:[%s11 + $0x38] sm:$0xff]
    %v877 = vld [vmem:[%s11 + $0x40] sm:$0xff]
    %v878 = vld [vmem:[%s11 + $0x48] sm:$0xff]
    %v879 = vld [vmem:[%s11 + $0x50] sm:$0xff]
    %v880 = vld [vmem:[%s11 + $0x58] sm:$0xff]
    %v881 = vld [vmem:[%s11 + $0x60] sm:$0xff]
    %v882 = vld [vmem:[%s11 + $0x68] sm:$0xff]
    %v883 = vld [vmem:[%s11 + $0x70] sm:$0xff]
    %v884 = vld [vmem:[%s11 + $0x78] sm:$0xff]
    %v885 = vld [vmem:[%s11 + $0x80] sm:$0xff]
    %v886 = vld [vmem:[%s11 + $0x88] sm:$0xff]
    %v887 = vld [vmem:[%s11 + $0x90] sm:$0xff]
    %v888 = vld [vmem:[%s11 + $0x98] sm:$0xff]
    %v889 = vld [vmem:[%s11 + $0xa0] sm:$0xff]
    %v890 = vld [vmem:[%s11 + $0xa8] sm:$0xff]
    %v891 = vld [vmem:[%s11 + $0xb0] sm:$0xff]
    %v892 = vld [vmem:[%s11 + $0xb8] sm:$0xff]
    %v893 = vld [vmem:[%s11 + $0xc0] sm:$0xff]
    %v894 = vld [vmem:[%s11 + $0xc8] sm:$0xff]
    %v895 = vld [vmem:[%s11 + $0xd0] sm:$0xff]
    %v896 = vld [vmem:[%s11 + $0xd8] sm:$0xff]
    %v897 = vld [vmem:[%s11 + $0xe0] sm:$0xff]
    %v898 = vld [vmem:[%s11 + $0xe8] sm:$0xff]
    %v899 = vld [vmem:[%s11 + $0xf0] sm:$0xff]
    %v900 = vld [vmem:[%s11 + $0xf8] sm:$0xff]
    %v901 = vld [vmem:[%s11 + $0x100] sm:$0xff]
    %v902 = vld [vmem:[%s11 + $0x108] sm:$0xff]
    %v903 = vld [vmem:[%s11 + $0x110] sm:$0xff]
    %v904 = vld [vmem:[%s11 + $0x118] sm:$0xff]
    %v905 = vld [vmem:[%s11 + $0x120] sm:$0xff]
    %v906 = vld [vmem:[%s11 + $0x128] sm:$0xff]
    %v907 = vld [vmem:[%s11 + $0x130] sm:$0xff]
    %v908 = vld [vmem:[%s11 + $0x138] sm:$0xff]
    %v909 = vld [vmem:[%s11 + $0x140] sm:$0xff]
    %v910 = vld [vmem:[%s11 + $0x148] sm:$0xff]
    %v911 = vpack.c.bf16 %v846, %v845
    %v912 = vpack.c.bf16 %v848, %v847
    %v913 = vpack.c.bf16 %v850, %v849
    %v914 = vpack.c.bf16 %v852, %v851
    %v915 = vpack.c.bf16 %v854, %v853
    %v916 = vpack.c.bf16 %v856, %v855
    %v917 = vpack.c.bf16 %v858, %v857
    %v918 = vpack.c.bf16 %v860, %v859
    %v919 = vpack.c.bf16 %v862, %v861
    %v920 = vpack.c.bf16 %v864, %v863
    %v921 = vpack.c.bf16 %v866, %v865
    %v922 = vpack.c.bf16 %v868, %v867
    %v965 = vunpack.c.l.b16 %v869
    %v966 = vunpack.c.h.b16 %v869
    %v967 = vunpack.c.l.b16 %v870
    %v968 = vunpack.c.h.b16 %v870
    %v969 = vunpack.c.l.b16 %v871
    %v970 = vunpack.c.h.b16 %v871
    %v971 = vunpack.c.l.b16 %v872
    %v972 = vunpack.c.h.b16 %v872
    %v973 = vunpack.c.l.b16 %v873
    %v974 = vunpack.c.h.b16 %v873
    %v975 = vunpack.c.l.b16 %v874
    %v976 = vunpack.c.h.b16 %v874
    %v977 = vunpack.c.l.b16 %v875
    %v978 = vunpack.c.h.b16 %v875
    %v979 = vunpack.c.l.b16 %v876
    %v980 = vunpack.c.h.b16 %v876
    %v981 = vunpack.c.l.b16 %v877
    %v982 = vunpack.c.h.b16 %v877
    %v983 = vunpack.c.l.b16 %v878
    %v984 = vunpack.c.h.b16 %v878
    %v985 = vunpack.c.l.b16 %v879
    %v986 = vunpack.c.h.b16 %v879
    %v987 = vunpack.c.l.b16 %v880
    %v988 = vunpack.c.h.b16 %v880
    %v989 = vunpack.c.l.b16 %v881
    %v990 = vunpack.c.h.b16 %v881
    %v991 = vunpack.c.l.b16 %v882
    %v992 = vunpack.c.h.b16 %v882
    %v993 = vunpack.c.l.b16 %v883
    %v994 = vunpack.c.h.b16 %v883
    %v995 = vunpack.c.l.b16 %v884
    %v996 = vunpack.c.h.b16 %v884
    %v997 = vunpack.c.l.b16 %v885
    %v998 = vunpack.c.h.b16 %v885
    %v999 = vunpack.c.l.b16 %v886
    %v1000 = vunpack.c.h.b16 %v886
    %v1001 = vunpack.c.l.b16 %v887
    %v1002 = vunpack.c.h.b16 %v887
    %v1003 = vunpack.c.l.b16 %v888
    %v1004 = vunpack.c.h.b16 %v888
    %v1005 = vunpack.c.l.b16 %v889
    %v1006 = vunpack.c.h.b16 %v889
    %v1007 = vunpack.c.l.b16 %v890
    %v1008 = vunpack.c.h.b16 %v890
    %v1009 = vunpack.c.l.b16 %v891
    %v1010 = vunpack.c.h.b16 %v891
    %v1011 = vunpack.c.l.b16 %v892
    %v1012 = vunpack.c.h.b16 %v892
    %v1013 = vunpack.c.l.b16 %v893
    %v1014 = vunpack.c.h.b16 %v893
    %v1015 = vunpack.c.l.b16 %v894
    %v1016 = vunpack.c.h.b16 %v894
    %v1017 = vunpack.c.l.b16 %v895
    %v1018 = vunpack.c.h.b16 %v895
    %v1019 = vunpack.c.l.b16 %v896
    %v1020 = vunpack.c.h.b16 %v896
    %v1021 = vunpack.c.l.b16 %v897
    %v1022 = vunpack.c.h.b16 %v897
    %v1023 = vunpack.c.l.b16 %v898
    %v1024 = vunpack.c.h.b16 %v898
    %v1025 = vunpack.c.l.b16 %v899
    %v1026 = vunpack.c.h.b16 %v899
    %v1027 = vunpack.c.l.b16 %v900
    %v1028 = vunpack.c.h.b16 %v900
    %v1029 = vunpack.c.l.b16 %v901
    %v1030 = vunpack.c.h.b16 %v901
    %v1031 = vunpack.c.l.b16 %v902
    %v1032 = vunpack.c.h.b16 %v902
    %v1033 = vunpack.c.l.b16 %v903
    %v1034 = vunpack.c.h.b16 %v903
    %v1035 = vunpack.c.l.b16 %v904
    %v1036 = vunpack.c.h.b16 %v904
    %v1037 = vunpack.c.l.b16 %v905
    %v1038 = vunpack.c.h.b16 %v905
    %v1039 = vunpack.c.l.b16 %v906
    %v1040 = vunpack.c.h.b16 %v906
    %v1041 = vunpack.c.l.b16 %v907
    %v1042 = vunpack.c.h.b16 %v907
    %v1043 = vunpack.c.l.b16 %v908
    %v1044 = vunpack.c.h.b16 %v908
    %v1045 = vunpack.c.l.b16 %v909
    %v1046 = vunpack.c.h.b16 %v909
    %v1047 = vunpack.c.l.b16 %v910
    %v1048 = vunpack.c.h.b16 %v910
    %v1049 = vpack.c.b16 %v967, %v965
    %v1050 = vpack.c.b16 %v968, %v966
    %v1051 = vpack.c.b16 %v971, %v969
    %v1052 = vpack.c.b16 %v972, %v970
    %v1053 = vpack.c.b16 %v975, %v973
    %v1054 = vpack.c.b16 %v976, %v974
    %v1055 = vpack.c.b16 %v979, %v977
    %v1056 = vpack.c.b16 %v980, %v978
    %v1057 = vpack.c.b16 %v983, %v981
    %v1058 = vpack.c.b16 %v984, %v982
    %v1059 = vpack.c.b16 %v987, %v985
    %v1060 = vpack.c.b16 %v988, %v986
    %v1061 = vpack.c.b16 %v991, %v989
    %v1062 = vpack.c.b16 %v992, %v990
    %v1063 = vpack.c.b16 %v995, %v993
    %v1064 = vpack.c.b16 %v996, %v994
    %v1065 = vpack.c.b16 %v999, %v997
    %v1066 = vpack.c.b16 %v1000, %v998
    %v1067 = vpack.c.b16 %v1003, %v1001
    %v1068 = vpack.c.b16 %v1004, %v1002
    %v1069 = vpack.c.b16 %v1007, %v1005
    %v1070 = vpack.c.b16 %v1008, %v1006
    %v1071 = vpack.c.b16 %v1011, %v1009
    %v1072 = vpack.c.b16 %v1012, %v1010
    %v1073 = vpack.c.b16 %v1015, %v1013
    %v1074 = vpack.c.b16 %v1016, %v1014
    %v1075 = vpack.c.b16 %v1019, %v1017
    %v1076 = vpack.c.b16 %v1020, %v1018
    %v1077 = vpack.c.b16 %v1023, %v1021
    %v1078 = vpack.c.b16 %v1024, %v1022
    %v1079 = vpack.c.b16 %v1027, %v1025
    %v1080 = vpack.c.b16 %v1028, %v1026
    %v1081 = vpack.c.b16 %v1031, %v1029
    %v1082 = vpack.c.b16 %v1032, %v1030
    %v1083 = vpack.c.b16 %v1035, %v1033
    %v1084 = vpack.c.b16 %v1036, %v1034
    %v1085 = vpack.c.b16 %v1039, %v1037
    %v1086 = vpack.c.b16 %v1040, %v1038
    %v1087 = vpack.c.b16 %v1043, %v1041
    %v1088 = vpack.c.b16 %v1044, %v1042
    %v1089 = vpack.c.b16 %v1047, %v1045
    %v1090 = vpack.c.b16 %v1048, %v1046
    %vm1112 = vcmask 523264
    %v1114 = vsel %vm1112, %v1050, 0
    %v1117 = vsel %vm1112, %v1052, 0
    %v1120 = vsel %vm1112, %v1054, 0
    %v1123 = vsel %vm1112, %v1056, 0
    %v1126 = vsel %vm1112, %v1058, 0
    %v1129 = vsel %vm1112, %v1060, 0
    %v1132 = vsel %vm1112, %v1062, 0
    %v1135 = vsel %vm1112, %v1064, 0
    %v1138 = vsel %vm1112, %v1066, 0
    %v1141 = vsel %vm1112, %v1068, 0
    %v1144 = vsel %vm1112, %v1070, 0
    %v1147 = vsel %vm1112, %v1072, 0
    %v1150 = vsel %vm1112, %v1074, 0
    %v1153 = vsel %vm1112, %v1076, 0
    %v1156 = vsel %vm1112, %v1078, 0
    %v1159 = vsel %vm1112, %v1080, 0
    %v1162 = vsel %vm1112, %v1082, 0
    %v1165 = vsel %vm1112, %v1084, 0
    %v1168 = vsel %vm1112, %v1086, 0
    %v1171 = vsel %vm1112, %v1088, 0
    %v1174 = vsel %vm1112, %v1090, 0
    %1176 = vmatprep.subr.bf16.mxu0 0
    %1177 = vmatpush1.bf16.msra.mxu0 %v911
    %1178 = vmatprep.subr.bf16.mxu0 0
    %1179 = vmatpush1.bf16.msra.mxu0 %v912
    %1180 = vmatprep.subr.bf16.mxu0 0
    %1181 = vmatpush1.bf16.msra.mxu0 %v913
    %1182 = vmatprep.subr.bf16.mxu0 0
    %1183 = vmatpush1.bf16.msra.mxu0 %v914
    %1184 = vmatprep.subr.bf16.mxu0 0
    %1185 = vmatpush1.bf16.msra.mxu0 %v915
    %1186 = vmatprep.subr.bf16.mxu0 0
    %1187 = vmatpush1.bf16.msra.mxu0 %v916
    %1188 = vmatprep.subr.bf16.mxu0 0
    %1189 = vmatpush1.bf16.msra.mxu0 %v917
    %1190 = vmatprep.subr.bf16.mxu0 0
    %1191 = vmatpush1.bf16.msra.mxu0 %v918
    %1192 = vmatprep.subr.bf16.mxu0 0
    %1193 = vmatpush1.bf16.msra.mxu0 %v919
    %1194 = vmatprep.subr.bf16.mxu0 0
    %1195 = vmatpush1.bf16.msra.mxu0 %v920
    %1196 = vmatprep.subr.bf16.mxu0 0
    %1197 = vmatpush1.bf16.msra.mxu0 %v921
    %1198 = vmatprep.subr.bf16.mxu0 0
    %1199 = vmatpush1.bf16.msra.mxu0 %v922
    %1200 = vmatprep.subr.bf16.mxu0 0
    %1201 = vmatpush1.bf16.msra.mxu0 0
    %1202 = vmatprep.subr.bf16.mxu0 0
    %1203 = vmatpush1.bf16.msra.mxu0 0
    %1204 = vmatprep.subr.bf16.mxu0 0
    %1205 = vmatpush1.bf16.msra.mxu0 0
    %1206 = vmatprep.subr.bf16.mxu0 0
    %1207 = vmatpush1.bf16.msra.mxu0 0
    %1208 = vmatprep.mubr.bf16.mxu0 %v1114
    %1209 = vmatmul.mubr.bf16.gmra.mrb[0].mxu0 %v1049
    %v1210 = vpop.f32.mrb[0].mxu0
    %v1211 = vadd.f32 0.0, %v1210
    %v1212 = vpop.f32.mrb[0].mxu0
    %v1213 = vpop.f32.mrb[0].mxu0
    %v1214 = vadd.f32 0.0, %v1213
    %v1215 = vpop.f32.mrb[0].mxu0
    %1216 = vmatprep.mubr.bf16.mxu0 %v1117
    %1217 = vmatmul.mubr.bf16.gmra.mrb[0].mxu0 %v1051
    %v1218 = vpop.f32.mrb[0].mxu0
    %v1219 = vadd.f32 0.0, %v1218
    %v1220 = vpop.f32.mrb[0].mxu0
    %v1221 = vpop.f32.mrb[0].mxu0
    %v1222 = vadd.f32 0.0, %v1221
    %v1223 = vpop.f32.mrb[0].mxu0
    %1224 = vmatprep.mubr.bf16.mxu0 %v1120
    %1225 = vmatmul.mubr.bf16.gmra.mrb[0].mxu0 %v1053
    %v1226 = vpop.f32.mrb[0].mxu0
    %v1227 = vadd.f32 0.0, %v1226
    %v1228 = vpop.f32.mrb[0].mxu0
    %v1229 = vpop.f32.mrb[0].mxu0
    %v1230 = vadd.f32 0.0, %v1229
    %v1231 = vpop.f32.mrb[0].mxu0
    %1232 = vmatprep.mubr.bf16.mxu0 %v1123
    %1233 = vmatmul.mubr.bf16.gmra.mrb[0].mxu0 %v1055
    %v1234 = vpop.f32.mrb[0].mxu0
    %v1235 = vadd.f32 0.0, %v1234
    %v1236 = vpop.f32.mrb[0].mxu0
    %v1237 = vpop.f32.mrb[0].mxu0
    %v1238 = vadd.f32 0.0, %v1237
    %v1239 = vpop.f32.mrb[0].mxu0
    %1240 = vmatprep.mubr.bf16.mxu0 %v1126
    %1241 = vmatmul.mubr.bf16.gmra.mrb[0].mxu0 %v1057
    %v1242 = vpop.f32.mrb[0].mxu0
    %v1243 = vadd.f32 0.0, %v1242
    %v1244 = vpop.f32.mrb[0].mxu0
    %v1245 = vpop.f32.mrb[0].mxu0
    %v1246 = vadd.f32 0.0, %v1245
    %v1247 = vpop.f32.mrb[0].mxu0
    %1248 = vmatprep.mubr.bf16.mxu0 %v1129
    %1249 = vmatmul.mubr.bf16.gmra.mrb[0].mxu0 %v1059
    %v1250 = vpop.f32.mrb[0].mxu0
    %v1251 = vadd.f32 0.0, %v1250
    %v1252 = vpop.f32.mrb[0].mxu0
    %v1253 = vpop.f32.mrb[0].mxu0
    %v1254 = vadd.f32 0.0, %v1253
    %v1255 = vpop.f32.mrb[0].mxu0
    %1256 = vmatprep.mubr.bf16.mxu0 %v1132
    %1257 = vmatmul.mubr.bf16.gmra.mrb[0].mxu0 %v1061
    %v1258 = vpop.f32.mrb[0].mxu0
    %v1259 = vadd.f32 0.0, %v1258
    %v1260 = vpop.f32.mrb[0].mxu0
    %v1261 = vpop.f32.mrb[0].mxu0
    %v1262 = vadd.f32 0.0, %v1261
    %v1263 = vpop.f32.mrb[0].mxu0
    %1264 = vmatprep.mubr.bf16.mxu0 %v1135
    %1265 = vmatmul.mubr.bf16.gmra.mrb[0].mxu0 %v1063
    %v1266 = vpop.f32.mrb[0].mxu0
    %v1267 = vadd.f32 0.0, %v1266
    %v1268 = vpop.f32.mrb[0].mxu0
    %v1269 = vpop.f32.mrb[0].mxu0
    %v1270 = vadd.f32 0.0, %v1269
    %v1271 = vpop.f32.mrb[0].mxu0
    %1272 = vmatprep.mubr.bf16.mxu0 %v1138
    %1273 = vmatmul.mubr.bf16.gmra.mrb[0].mxu0 %v1065
    %v1274 = vpop.f32.mrb[0].mxu0
    %v1275 = vadd.f32 0.0, %v1274
    %v1276 = vpop.f32.mrb[0].mxu0
    %v1277 = vpop.f32.mrb[0].mxu0
    %v1278 = vadd.f32 0.0, %v1277
    %v1279 = vpop.f32.mrb[0].mxu0
    %1280 = vmatprep.mubr.bf16.mxu0 %v1141
    %1281 = vmatmul.mubr.bf16.gmra.mrb[0].mxu0 %v1067
    %v1282 = vpop.f32.mrb[0].mxu0
    %v1283 = vadd.f32 0.0, %v1282
    %v1284 = vpop.f32.mrb[0].mxu0
    %v1285 = vpop.f32.mrb[0].mxu0
    %v1286 = vadd.f32 0.0, %v1285
    %v1287 = vpop.f32.mrb[0].mxu0
    %1288 = vmatprep.mubr.bf16.mxu0 %v1144
    %1289 = vmatmul.mubr.bf16.gmra.mrb[0].mxu0 %v1069
    %v1290 = vpop.f32.mrb[0].mxu0
    %v1291 = vadd.f32 0.0, %v1290
    %v1292 = vpop.f32.mrb[0].mxu0
    %v1293 = vpop.f32.mrb[0].mxu0
    %v1294 = vadd.f32 0.0, %v1293
    %v1295 = vpop.f32.mrb[0].mxu0
    %1296 = vmatprep.mubr.bf16.mxu0 %v1147
    %1297 = vmatmul.mubr.bf16.gmra.mrb[0].mxu0 %v1071
    %v1298 = vpop.f32.mrb[0].mxu0
    %v1299 = vadd.f32 0.0, %v1298
    %v1300 = vpop.f32.mrb[0].mxu0
    %v1301 = vpop.f32.mrb[0].mxu0
    %v1302 = vadd.f32 0.0, %v1301
    %v1303 = vpop.f32.mrb[0].mxu0
    %1304 = vmatprep.mubr.bf16.mxu0 %v1150
    %1305 = vmatmul.mubr.bf16.gmra.mrb[0].mxu0 %v1073
    %v1306 = vpop.f32.mrb[0].mxu0
    %v1307 = vadd.f32 0.0, %v1306
    %v1308 = vpop.f32.mrb[0].mxu0
    %v1309 = vpop.f32.mrb[0].mxu0
    %v1310 = vadd.f32 0.0, %v1309
    %v1311 = vpop.f32.mrb[0].mxu0
    %1312 = vmatprep.mubr.bf16.mxu0 %v1153
    %1313 = vmatmul.mubr.bf16.gmra.mrb[0].mxu0 %v1075
    %v1314 = vpop.f32.mrb[0].mxu0
    %v1315 = vadd.f32 0.0, %v1314
    %v1316 = vpop.f32.mrb[0].mxu0
    %v1317 = vpop.f32.mrb[0].mxu0
    %v1318 = vadd.f32 0.0, %v1317
    %v1319 = vpop.f32.mrb[0].mxu0
    %1320 = vmatprep.mubr.bf16.mxu0 %v1156
    %1321 = vmatmul.mubr.bf16.gmra.mrb[0].mxu0 %v1077
    %v1322 = vpop.f32.mrb[0].mxu0
    %v1323 = vadd.f32 0.0, %v1322
    %v1324 = vpop.f32.mrb[0].mxu0
    %v1325 = vpop.f32.mrb[0].mxu0
    %v1326 = vadd.f32 0.0, %v1325
    %v1327 = vpop.f32.mrb[0].mxu0
    %1328 = vmatprep.mubr.bf16.mxu0 %v1159
    %1329 = vmatmul.mubr.bf16.gmra.mrb[0].mxu0 %v1079
    %v1330 = vpop.f32.mrb[0].mxu0
    %v1331 = vadd.f32 0.0, %v1330
    %v1332 = vpop.f32.mrb[0].mxu0
    %v1333 = vpop.f32.mrb[0].mxu0
    %v1334 = vadd.f32 0.0, %v1333
    %v1335 = vpop.f32.mrb[0].mxu0
    %1336 = vmatprep.mubr.bf16.mxu0 %v1162
    %1337 = vmatmul.mubr.bf16.gmra.mrb[0].mxu0 %v1081
    %v1338 = vpop.f32.mrb[0].mxu0
    %v1339 = vadd.f32 0.0, %v1338
    %v1340 = vpop.f32.mrb[0].mxu0
    %v1341 = vpop.f32.mrb[0].mxu0
    %v1342 = vadd.f32 0.0, %v1341
    %v1343 = vpop.f32.mrb[0].mxu0
    %1344 = vmatprep.mubr.bf16.mxu0 %v1165
    %1345 = vmatmul.mubr.bf16.gmra.mrb[0].mxu0 %v1083
    %v1346 = vpop.f32.mrb[0].mxu0
    %v1347 = vadd.f32 0.0, %v1346
    %v1348 = vpop.f32.mrb[0].mxu0
    %v1349 = vpop.f32.mrb[0].mxu0
    %v1350 = vadd.f32 0.0, %v1349
    %v1351 = vpop.f32.mrb[0].mxu0
    %1352 = vmatprep.mubr.bf16.mxu0 %v1168
    %1353 = vmatmul.mubr.bf16.gmra.mrb[0].mxu0 %v1085
    %v1354 = vpop.f32.mrb[0].mxu0
    %v1355 = vadd.f32 0.0, %v1354
    %v1356 = vpop.f32.mrb[0].mxu0
    %v1357 = vpop.f32.mrb[0].mxu0
    %v1358 = vadd.f32 0.0, %v1357
    %v1359 = vpop.f32.mrb[0].mxu0
    %1360 = vmatprep.mubr.bf16.mxu0 %v1171
    %1361 = vmatmul.mubr.bf16.gmra.mrb[0].mxu0 %v1087
    %v1362 = vpop.f32.mrb[0].mxu0
    %v1363 = vadd.f32 0.0, %v1362
    %v1364 = vpop.f32.mrb[0].mxu0
    %v1365 = vpop.f32.mrb[0].mxu0
    %v1366 = vadd.f32 0.0, %v1365
    %v1367 = vpop.f32.mrb[0].mxu0
    %1368 = vmatprep.mubr.bf16.mxu0 %v1174
    %1369 = vmatmul.mubr.bf16.gmra.mrb[0].mxu0 %v1089
    %v1370 = vpop.f32.mrb[0].mxu0
    %v1371 = vadd.f32 0.0, %v1370
    %v1372 = vpop.f32.mrb[0].mxu0
    %v1373 = vpop.f32.mrb[0].mxu0
    %v1374 = vadd.f32 0.0, %v1373
    %v1375 = vpop.f32.mrb[0].mxu0
    %1376 = vdwg.mxu0
    %v1377 = vld [vmem:[%s13] sm:$0xff]
    %v1378 = vld [vmem:[%s13 + $0x8] sm:$0xf]
    %v1379 = vld [vmem:[%s13 + $0xc] sm:$0xff]
    %v1380 = vld [vmem:[%s13 + $0x14] sm:$0xf]
    %v1381 = vld [vmem:[%s13 + $0x18] sm:$0xff]
    %v1382 = vld [vmem:[%s13 + $0x20] sm:$0xf]
    %v1383 = vld [vmem:[%s13 + $0x24] sm:$0xff]
    %v1384 = vld [vmem:[%s13 + $0x2c] sm:$0xf]
    %v1385 = vld [vmem:[%s13 + $0x30] sm:$0xff]
    %v1386 = vld [vmem:[%s13 + $0x38] sm:$0xf]
    %v1387 = vld [vmem:[%s13 + $0x3c] sm:$0xff]
    %v1388 = vld [vmem:[%s13 + $0x44] sm:$0xf]
    %v1389 = vpack.c.bf16 %v1214, %v1211
    %v1390 = vpack.c.bf16 %v1222, %v1219
    %v1391 = vpack.c.bf16 %v1230, %v1227
    %s1392 = scalar_lea.vmem %s13, 72
    %v1393 = vld [vmem:[%s1392] sm:$0xff]
    %v1394 = vld [vmem:[%s1392 + $0x8] sm:$0xf]
    %v1395 = vld [vmem:[%s1392 + $0xc] sm:$0xff]
    %v1396 = vld [vmem:[%s1392 + $0x14] sm:$0xf]
    %v1397 = vld [vmem:[%s1392 + $0x18] sm:$0xff]
    %v1398 = vld [vmem:[%s1392 + $0x20] sm:$0xf]
    %v1399 = vld [vmem:[%s1392 + $0x24] sm:$0xff]
    %v1400 = vld [vmem:[%s1392 + $0x2c] sm:$0xf]
    %v1401 = vld [vmem:[%s1392 + $0x30] sm:$0xff]
    %v1402 = vld [vmem:[%s1392 + $0x38] sm:$0xf]
    %v1403 = vld [vmem:[%s1392 + $0x3c] sm:$0xff]
    %v1404 = vld [vmem:[%s1392 + $0x44] sm:$0xf]
    %v1405 = vpack.c.bf16 %v1238, %v1235
    %v1406 = vpack.c.bf16 %v1246, %v1243
    %v1407 = vpack.c.bf16 %v1254, %v1251
    %v1420 = vunpack.c.l.b16 %v1393
    %v1421 = vunpack.c.h.b16 %v1393
    %v1422 = vunpack.c.l.b16 %v1394
    %v1423 = vunpack.c.l.b16 %v1395
    %v1424 = vunpack.c.h.b16 %v1395
    %v1425 = vunpack.c.l.b16 %v1396
    %v1426 = vunpack.c.l.b16 %v1397
    %v1427 = vunpack.c.h.b16 %v1397
    %v1428 = vunpack.c.l.b16 %v1398
    %v1429 = vunpack.c.l.b16 %v1399
    %v1430 = vunpack.c.h.b16 %v1399
    %v1431 = vunpack.c.l.b16 %v1400
    %v1432 = vunpack.c.l.b16 %v1401
    %v1433 = vunpack.c.h.b16 %v1401
    %v1434 = vunpack.c.l.b16 %v1402
    %v1435 = vunpack.c.l.b16 %v1403
    %v1436 = vunpack.c.h.b16 %v1403
    %v1437 = vunpack.c.l.b16 %v1404
    %v1438 = vpack.c.b16 %v1423, %v1420
    %v1439 = vpack.c.b16 %v1424, %v1421
    %v1440 = vpack.c.b16 %v1425, %v1422
    %v1441 = vpack.c.b16 %v1429, %v1426
    %v1442 = vpack.c.b16 %v1430, %v1427
    %v1443 = vpack.c.b16 %v1431, %v1428
    %v1444 = vpack.c.b16 %v1435, %v1432
    %v1445 = vpack.c.b16 %v1436, %v1433
    %v1446 = vpack.c.b16 %v1437, %v1434
    %vm1456 = vcmask 392192
    %v1458 = vsel %vm1456, %v1405, 0
    %v1461 = vsel %vm1456, %v1406, 0
    %v1464 = vsel %vm1456, %v1407, 0
    %1466 = vmatprep.subr.bf16.mxu0 %v1439
    %1467 = vmatpush1.bf16.msra.mxu0 %v1438
    %1468 = vmatprep.subr.bf16.mxu0 %v1442
    %1469 = vmatpush1.bf16.msra.mxu0 %v1441
    %1470 = vmatprep.subr.bf16.mxu0 %v1445
    %1471 = vmatpush1.bf16.msra.mxu0 %v1444
    %1472 = vmatprep.subr.bf16.mxu0 0
    %1473 = vmatpush1.bf16.msra.mxu0 0
    %1474 = vmatprep.subr.bf16.mxu0 0
    %1475 = vmatpush1.bf16.msra.mxu0 0
    %1476 = vmatprep.subr.bf16.mxu0 0
    %1477 = vmatpush1.bf16.msra.mxu0 0
    %1478 = vmatprep.subr.bf16.mxu0 0
    %1479 = vmatpush1.bf16.msra.mxu0 0
    %1480 = vmatprep.subr.bf16.mxu0 0
    %1481 = vmatpush1.bf16.msra.mxu0 0
    %1482 = vmatprep.subr.bf16.mxu0 0
    %1483 = vmatpush1.bf16.msra.mxu0 0
    %1484 = vmatprep.subr.bf16.mxu0 0
    %1485 = vmatpush1.bf16.msra.mxu0 0
    %1486 = vmatprep.subr.bf16.mxu0 0
    %1487 = vmatpush1.bf16.msra.mxu0 0
    %1488 = vmatprep.subr.bf16.mxu0 0
    %1489 = vmatpush1.bf16.msra.mxu0 0
    %1490 = vmatprep.subr.bf16.mxu0 0
    %1491 = vmatpush1.bf16.msra.mxu0 0
    %1492 = vmatprep.subr.bf16.mxu0 0
    %1493 = vmatpush1.bf16.msra.mxu0 0
    %1494 = vmatprep.subr.bf16.mxu0 0
    %1495 = vmatpush1.bf16.msra.mxu0 0
    %1496 = vmatprep.subr.bf16.mxu0 0
    %1497 = vmatpush1.bf16.msra.mxu0 0
    %1498 = vmatprep.mubr.bf16.mxu0 0
    %1499 = vmatmul.mubr.bf16.gmra.mrb[0].mxu0 %v1458
    %v1500 = vpop.f32.mrb[0].mxu0
    %v1501 = vadd.f32 0.0, %v1500
    %v1502 = vpop.f32.mrb[0].mxu0
    %v1503 = vadd.f32 0.0, %v1502
    %v1504 = vpop.f32.mrb[0].mxu0
    %v1505 = vadd.f32 0.0, %v1504
    %v1506 = vpop.f32.mrb[0].mxu0
    %v1507 = vadd.f32 0.0, %v1506
    %1508 = vmatprep.mubr.bf16.mxu0 0
    %1509 = vmatmul.mubr.bf16.gmra.mrb[0].mxu0 %v1461
    %v1510 = vpop.f32.mrb[0].mxu0
    %v1511 = vadd.f32 0.0, %v1510
    %v1512 = vpop.f32.mrb[0].mxu0
    %v1513 = vadd.f32 0.0, %v1512
    %v1514 = vpop.f32.mrb[0].mxu0
    %v1515 = vadd.f32 0.0, %v1514
    %v1516 = vpop.f32.mrb[0].mxu0
    %v1517 = vadd.f32 0.0, %v1516
    %1518 = vmatprep.mubr.bf16.mxu0 0
    %1519 = vmatmul.mubr.bf16.gmra.mrb[0].mxu0 %v1464
    %v1520 = vpop.f32.mrb[0].mxu0
    %v1521 = vadd.f32 0.0, %v1520
    %v1522 = vpop.f32.mrb[0].mxu0
    %v1523 = vadd.f32 0.0, %v1522
    %v1524 = vpop.f32.mrb[0].mxu0
    %v1525 = vadd.f32 0.0, %v1524
    %v1526 = vpop.f32.mrb[0].mxu0
    %v1527 = vadd.f32 0.0, %v1526
    %1528 = vdwg.mxu0
    %1529 = vmatprep.subr.bf16.mxu0 0
    %1530 = vmatpush1.bf16.msra.mxu0 %v1440
    %1531 = vmatprep.subr.bf16.mxu0 0
    %1532 = vmatpush1.bf16.msra.mxu0 %v1443
    %1533 = vmatprep.subr.bf16.mxu0 0
    %1534 = vmatpush1.bf16.msra.mxu0 %v1446
    %1535 = vmatprep.subr.bf16.mxu0 0
    %1536 = vmatpush1.bf16.msra.mxu0 0
    %1537 = vmatprep.subr.bf16.mxu0 0
    %1538 = vmatpush1.bf16.msra.mxu0 0
    %1539 = vmatprep.subr.bf16.mxu0 0
    %1540 = vmatpush1.bf16.msra.mxu0 0
    %1541 = vmatprep.subr.bf16.mxu0 0
    %1542 = vmatpush1.bf16.msra.mxu0 0
    %1543 = vmatprep.subr.bf16.mxu0 0
    %1544 = vmatpush1.bf16.msra.mxu0 0
    %1545 = vmatprep.subr.bf16.mxu0 0
    %1546 = vmatpush1.bf16.msra.mxu0 0
    %1547 = vmatprep.subr.bf16.mxu0 0
    %1548 = vmatpush1.bf16.msra.mxu0 0
    %1549 = vmatprep.subr.bf16.mxu0 0
    %1550 = vmatpush1.bf16.msra.mxu0 0
    %1551 = vmatprep.subr.bf16.mxu0 0
    %1552 = vmatpush1.bf16.msra.mxu0 0
    %1553 = vmatprep.subr.bf16.mxu0 0
    %1554 = vmatpush1.bf16.msra.mxu0 0
    %1555 = vmatprep.subr.bf16.mxu0 0
    %1556 = vmatpush1.bf16.msra.mxu0 0
    %1557 = vmatprep.subr.bf16.mxu0 0
    %1558 = vmatpush1.bf16.msra.mxu0 0
    %1559 = vmatprep.subr.bf16.mxu0 0
    %1560 = vmatpush1.bf16.msra.mxu0 0
    %1561 = vmatprep.mubr.bf16.mxu0 0
    %1562 = vmatmul.mubr.bf16.gmra.mrb[0].mxu0 %v1458
    %v1563 = vpop.f32.mrb[0].mxu0
    %v1564 = vadd.f32 0.0, %v1563
    %v1565 = vpop.f32.mrb[0].mxu0
    %v1566 = vpop.f32.mrb[0].mxu0
    %v1567 = vadd.f32 0.0, %v1566
    %v1568 = vpop.f32.mrb[0].mxu0
    %1569 = vmatprep.mubr.bf16.mxu0 0
    %1570 = vmatmul.mubr.bf16.gmra.mrb[0].mxu0 %v1461
    %v1571 = vpop.f32.mrb[0].mxu0
    %v1572 = vadd.f32 0.0, %v1571
    %v1573 = vpop.f32.mrb[0].mxu0
    %v1574 = vpop.f32.mrb[0].mxu0
    %v1575 = vadd.f32 0.0, %v1574
    %v1576 = vpop.f32.mrb[0].mxu0
    %1577 = vmatprep.mubr.bf16.mxu0 0
    %1578 = vmatmul.mubr.bf16.gmra.mrb[0].mxu0 %v1464
    %v1579 = vpop.f32.mrb[0].mxu0
    %v1580 = vadd.f32 0.0, %v1579
    %v1581 = vpop.f32.mrb[0].mxu0
    %v1582 = vpop.f32.mrb[0].mxu0
    %v1583 = vadd.f32 0.0, %v1582
    %v1584 = vpop.f32.mrb[0].mxu0
    %1585 = vdwg.mxu0
    %v1598 = vunpack.c.l.b16 %v1377
    %v1599 = vunpack.c.h.b16 %v1377
    %v1600 = vunpack.c.l.b16 %v1378
    %v1601 = vunpack.c.l.b16 %v1379
    %v1602 = vunpack.c.h.b16 %v1379
    %v1603 = vunpack.c.l.b16 %v1380
    %v1604 = vunpack.c.l.b16 %v1381
    %v1605 = vunpack.c.h.b16 %v1381
    %v1606 = vunpack.c.l.b16 %v1382
    %v1607 = vunpack.c.l.b16 %v1383
    %v1608 = vunpack.c.h.b16 %v1383
    %v1609 = vunpack.c.l.b16 %v1384
    %v1610 = vunpack.c.l.b16 %v1385
    %v1611 = vunpack.c.h.b16 %v1385
    %v1612 = vunpack.c.l.b16 %v1386
    %v1613 = vunpack.c.l.b16 %v1387
    %v1614 = vunpack.c.h.b16 %v1387
    %v1615 = vunpack.c.l.b16 %v1388
    %v1616 = vpack.c.b16 %v1601, %v1598
    %v1617 = vpack.c.b16 %v1602, %v1599
    %v1618 = vpack.c.b16 %v1603, %v1600
    %v1619 = vpack.c.b16 %v1607, %v1604
    %v1620 = vpack.c.b16 %v1608, %v1605
    %v1621 = vpack.c.b16 %v1609, %v1606
    %v1622 = vpack.c.b16 %v1613, %v1610
    %v1623 = vpack.c.b16 %v1614, %v1611
    %v1624 = vpack.c.b16 %v1615, %v1612
    %v1635 = vsel %vm1456, %v1389, 0
    %v1638 = vsel %vm1456, %v1390, 0
    %v1641 = vsel %vm1456, %v1391, 0
    %1643 = vmatprep.subr.bf16.mxu0 %v1617
    %1644 = vmatpush1.bf16.msra.mxu0 %v1616
    %1645 = vmatprep.subr.bf16.mxu0 %v1620
    %1646 = vmatpush1.bf16.msra.mxu0 %v1619
    %1647 = vmatprep.subr.bf16.mxu0 %v1623
    %1648 = vmatpush1.bf16.msra.mxu0 %v1622
    %1649 = vmatprep.subr.bf16.mxu0 0
    %1650 = vmatpush1.bf16.msra.mxu0 0
    %1651 = vmatprep.subr.bf16.mxu0 0
    %1652 = vmatpush1.bf16.msra.mxu0 0
    %1653 = vmatprep.subr.bf16.mxu0 0
    %1654 = vmatpush1.bf16.msra.mxu0 0
    %1655 = vmatprep.subr.bf16.mxu0 0
    %1656 = vmatpush1.bf16.msra.mxu0 0
    %1657 = vmatprep.subr.bf16.mxu0 0
    %1658 = vmatpush1.bf16.msra.mxu0 0
    %1659 = vmatprep.subr.bf16.mxu0 0
    %1660 = vmatpush1.bf16.msra.mxu0 0
    %1661 = vmatprep.subr.bf16.mxu0 0
    %1662 = vmatpush1.bf16.msra.mxu0 0
    %1663 = vmatprep.subr.bf16.mxu0 0
    %1664 = vmatpush1.bf16.msra.mxu0 0
    %1665 = vmatprep.subr.bf16.mxu0 0
    %1666 = vmatpush1.bf16.msra.mxu0 0
    %1667 = vmatprep.subr.bf16.mxu0 0
    %1668 = vmatpush1.bf16.msra.mxu0 0
    %1669 = vmatprep.subr.bf16.mxu0 0
    %1670 = vmatpush1.bf16.msra.mxu0 0
    %1671 = vmatprep.subr.bf16.mxu0 0
    %1672 = vmatpush1.bf16.msra.mxu0 0
    %1673 = vmatprep.subr.bf16.mxu0 0
    %1674 = vmatpush1.bf16.msra.mxu0 0
    %1675 = vmatprep.mubr.bf16.mxu0 0
    %1676 = vmatmul.mubr.bf16.gmra.mrb[0].mxu0 %v1635
    %v1677 = vpop.f32.mrb[0].mxu0
    %v1678 = vadd.f32 %v1501, %v1677
    %v1679 = vpop.f32.mrb[0].mxu0
    %v1680 = vadd.f32 %v1503, %v1679
    %v1681 = vpop.f32.mrb[0].mxu0
    %v1682 = vadd.f32 %v1505, %v1681
    %v1683 = vpop.f32.mrb[0].mxu0
    %v1684 = vadd.f32 %v1507, %v1683
    %1685 = vmatprep.mubr.bf16.mxu0 0
    %1686 = vmatmul.mubr.bf16.gmra.mrb[0].mxu0 %v1638
    %v1687 = vpop.f32.mrb[0].mxu0
    %v1688 = vadd.f32 %v1511, %v1687
    %v1689 = vpop.f32.mrb[0].mxu0
    %v1690 = vadd.f32 %v1513, %v1689
    %v1691 = vpop.f32.mrb[0].mxu0
    %v1692 = vadd.f32 %v1515, %v1691
    %v1693 = vpop.f32.mrb[0].mxu0
    %v1694 = vadd.f32 %v1517, %v1693
    %1695 = vmatprep.mubr.bf16.mxu0 0
    %1696 = vmatmul.mubr.bf16.gmra.mrb[0].mxu0 %v1641
    %v1697 = vpop.f32.mrb[0].mxu0
    %v1698 = vadd.f32 %v1521, %v1697
    %v1699 = vpop.f32.mrb[0].mxu0
    %v1700 = vadd.f32 %v1523, %v1699
    %v1701 = vpop.f32.mrb[0].mxu0
    %v1702 = vadd.f32 %v1525, %v1701
    %v1703 = vpop.f32.mrb[0].mxu0
    %v1704 = vadd.f32 %v1527, %v1703
    %1705 = vdwg.mxu0
    %1706 = vmatprep.subr.bf16.mxu0 0
    %1707 = vmatpush1.bf16.msra.mxu0 %v1618
    %1708 = vmatprep.subr.bf16.mxu0 0
    %1709 = vmatpush1.bf16.msra.mxu0 %v1621
    %1710 = vmatprep.subr.bf16.mxu0 0
    %1711 = vmatpush1.bf16.msra.mxu0 %v1624
    %1712 = vmatprep.subr.bf16.mxu0 0
    %1713 = vmatpush1.bf16.msra.mxu0 0
    %1714 = vmatprep.subr.bf16.mxu0 0
    %1715 = vmatpush1.bf16.msra.mxu0 0
    %1716 = vmatprep.subr.bf16.mxu0 0
    %1717 = vmatpush1.bf16.msra.mxu0 0
    %1718 = vmatprep.subr.bf16.mxu0 0
    %1719 = vmatpush1.bf16.msra.mxu0 0
    %1720 = vmatprep.subr.bf16.mxu0 0
    %1721 = vmatpush1.bf16.msra.mxu0 0
    %1722 = vmatprep.subr.bf16.mxu0 0
    %1723 = vmatpush1.bf16.msra.mxu0 0
    %1724 = vmatprep.subr.bf16.mxu0 0
    %1725 = vmatpush1.bf16.msra.mxu0 0
    %1726 = vmatprep.subr.bf16.mxu0 0
    %1727 = vmatpush1.bf16.msra.mxu0 0
    %1728 = vmatprep.subr.bf16.mxu0 0
    %1729 = vmatpush1.bf16.msra.mxu0 0
    %1730 = vmatprep.subr.bf16.mxu0 0
    %1731 = vmatpush1.bf16.msra.mxu0 0
    %1732 = vmatprep.subr.bf16.mxu0 0
    %1733 = vmatpush1.bf16.msra.mxu0 0
    %1734 = vmatprep.subr.bf16.mxu0 0
    %1735 = vmatpush1.bf16.msra.mxu0 0
    %1736 = vmatprep.subr.bf16.mxu0 0
    %1737 = vmatpush1.bf16.msra.mxu0 0
    %1738 = vmatprep.mubr.bf16.mxu0 0
    %1739 = vmatmul.mubr.bf16.gmra.mrb[0].mxu0 %v1635
    %v1740 = vpop.f32.mrb[0].mxu0
    %v1741 = vadd.f32 %v1564, %v1740
    %v1742 = vpop.f32.mrb[0].mxu0
    %v1743 = vpop.f32.mrb[0].mxu0
    %v1744 = vadd.f32 %v1567, %v1743
    %v1745 = vpop.f32.mrb[0].mxu0
    %1746 = vmatprep.mubr.bf16.mxu0 0
    %1747 = vmatmul.mubr.bf16.gmra.mrb[0].mxu0 %v1638
    %v1748 = vpop.f32.mrb[0].mxu0
    %v1749 = vadd.f32 %v1572, %v1748
    %v1750 = vpop.f32.mrb[0].mxu0
    %v1751 = vpop.f32.mrb[0].mxu0
    %v1752 = vadd.f32 %v1575, %v1751
    %v1753 = vpop.f32.mrb[0].mxu0
    %1754 = vmatprep.mubr.bf16.mxu0 0
    %1755 = vmatmul.mubr.bf16.gmra.mrb[0].mxu0 %v1641
    %v1756 = vpop.f32.mrb[0].mxu0
    %v1757 = vadd.f32 %v1580, %v1756
    %v1758 = vpop.f32.mrb[0].mxu0
    %v1759 = vpop.f32.mrb[0].mxu0
    %v1760 = vadd.f32 %v1583, %v1759
    %v1761 = vpop.f32.mrb[0].mxu0
    %1762 = vdwg.mxu0
    %s1763 = scalar_lea.vmem %s13, 144
    %v1764 = vld [vmem:[%s1763] sm:$0xff]
    %v1765 = vld [vmem:[%s1763 + $0x8] sm:$0xf]
    %v1766 = vld [vmem:[%s1763 + $0xc] sm:$0xff]
    %v1767 = vld [vmem:[%s1763 + $0x14] sm:$0xf]
    %v1768 = vld [vmem:[%s1763 + $0x18] sm:$0xff]
    %v1769 = vld [vmem:[%s1763 + $0x20] sm:$0xf]
    %v1770 = vld [vmem:[%s1763 + $0x24] sm:$0xff]
    %v1771 = vld [vmem:[%s1763 + $0x2c] sm:$0xf]
    %v1772 = vld [vmem:[%s1763 + $0x30] sm:$0xff]
    %v1773 = vld [vmem:[%s1763 + $0x38] sm:$0xf]
    %v1774 = vld [vmem:[%s1763 + $0x3c] sm:$0xff]
    %v1775 = vld [vmem:[%s1763 + $0x44] sm:$0xf]
    %v1776 = vpack.c.bf16 %v1262, %v1259
    %v1777 = vpack.c.bf16 %v1270, %v1267
    %v1778 = vpack.c.bf16 %v1278, %v1275
    %v1791 = vunpack.c.l.b16 %v1764
    %v1792 = vunpack.c.h.b16 %v1764
    %v1793 = vunpack.c.l.b16 %v1765
    %v1794 = vunpack.c.l.b16 %v1766
    %v1795 = vunpack.c.h.b16 %v1766
    %v1796 = vunpack.c.l.b16 %v1767
    %v1797 = vunpack.c.l.b16 %v1768
    %v1798 = vunpack.c.h.b16 %v1768
    %v1799 = vunpack.c.l.b16 %v1769
    %v1800 = vunpack.c.l.b16 %v1770
    %v1801 = vunpack.c.h.b16 %v1770
    %v1802 = vunpack.c.l.b16 %v1771
    %v1803 = vunpack.c.l.b16 %v1772
    %v1804 = vunpack.c.h.b16 %v1772
    %v1805 = vunpack.c.l.b16 %v1773
    %v1806 = vunpack.c.l.b16 %v1774
    %v1807 = vunpack.c.h.b16 %v1774
    %v1808 = vunpack.c.l.b16 %v1775
    %v1809 = vpack.c.b16 %v1794, %v1791
    %v1810 = vpack.c.b16 %v1795, %v1792
    %v1811 = vpack.c.b16 %v1796, %v1793
    %v1812 = vpack.c.b16 %v1800, %v1797
    %v1813 = vpack.c.b16 %v1801, %v1798
    %v1814 = vpack.c.b16 %v1802, %v1799
    %v1815 = vpack.c.b16 %v1806, %v1803
    %v1816 = vpack.c.b16 %v1807, %v1804
    %v1817 = vpack.c.b16 %v1808, %v1805
    %v1828 = vsel %vm1456, %v1776, 0
    %v1831 = vsel %vm1456, %v1777, 0
    %v1834 = vsel %vm1456, %v1778, 0
    %1836 = vmatprep.subr.bf16.mxu0 %v1810
    %1837 = vmatpush1.bf16.msra.mxu0 %v1809
    %1838 = vmatprep.subr.bf16.mxu0 %v1813
    %1839 = vmatpush1.bf16.msra.mxu0 %v1812
    %1840 = vmatprep.subr.bf16.mxu0 %v1816
    %1841 = vmatpush1.bf16.msra.mxu0 %v1815
    %1842 = vmatprep.subr.bf16.mxu0 0
    %1843 = vmatpush1.bf16.msra.mxu0 0
    %1844 = vmatprep.subr.bf16.mxu0 0
    %1845 = vmatpush1.bf16.msra.mxu0 0
    %1846 = vmatprep.subr.bf16.mxu0 0
    %1847 = vmatpush1.bf16.msra.mxu0 0
    %1848 = vmatprep.subr.bf16.mxu0 0
    %1849 = vmatpush1.bf16.msra.mxu0 0
    %1850 = vmatprep.subr.bf16.mxu0 0
    %1851 = vmatpush1.bf16.msra.mxu0 0
    %1852 = vmatprep.subr.bf16.mxu0 0
    %1853 = vmatpush1.bf16.msra.mxu0 0
    %1854 = vmatprep.subr.bf16.mxu0 0
    %1855 = vmatpush1.bf16.msra.mxu0 0
    %1856 = vmatprep.subr.bf16.mxu0 0
    %1857 = vmatpush1.bf16.msra.mxu0 0
    %1858 = vmatprep.subr.bf16.mxu0 0
    %1859 = vmatpush1.bf16.msra.mxu0 0
    %1860 = vmatprep.subr.bf16.mxu0 0
    %1861 = vmatpush1.bf16.msra.mxu0 0
    %1862 = vmatprep.subr.bf16.mxu0 0
    %1863 = vmatpush1.bf16.msra.mxu0 0
    %1864 = vmatprep.subr.bf16.mxu0 0
    %1865 = vmatpush1.bf16.msra.mxu0 0
    %1866 = vmatprep.subr.bf16.mxu0 0
    %1867 = vmatpush1.bf16.msra.mxu0 0
    %1868 = vmatprep.mubr.bf16.mxu0 0
    %1869 = vmatmul.mubr.bf16.gmra.mrb[0].mxu0 %v1828
    %v1870 = vpop.f32.mrb[0].mxu0
    %v1871 = vadd.f32 0.0, %v1870
    %v1872 = vpop.f32.mrb[0].mxu0
    %v1873 = vadd.f32 0.0, %v1872
    %v1874 = vpop.f32.mrb[0].mxu0
    %v1875 = vadd.f32 0.0, %v1874
    %v1876 = vpop.f32.mrb[0].mxu0
    %v1877 = vadd.f32 0.0, %v1876
    %1878 = vmatprep.mubr.bf16.mxu0 0
    %1879 = vmatmul.mubr.bf16.gmra.mrb[0].mxu0 %v1831
    %v1880 = vpop.f32.mrb[0].mxu0
    %v1881 = vadd.f32 0.0, %v1880
    %v1882 = vpop.f32.mrb[0].mxu0
    %v1883 = vadd.f32 0.0, %v1882
    %v1884 = vpop.f32.mrb[0].mxu0
    %v1885 = vadd.f32 0.0, %v1884
    %v1886 = vpop.f32.mrb[0].mxu0
    %v1887 = vadd.f32 0.0, %v1886
    %1888 = vmatprep.mubr.bf16.mxu0 0
    %1889 = vmatmul.mubr.bf16.gmra.mrb[0].mxu0 %v1834
    %v1890 = vpop.f32.mrb[0].mxu0
    %v1891 = vadd.f32 0.0, %v1890
    %v1892 = vpop.f32.mrb[0].mxu0
    %v1893 = vadd.f32 0.0, %v1892
    %v1894 = vpop.f32.mrb[0].mxu0
    %v1895 = vadd.f32 0.0, %v1894
    %v1896 = vpop.f32.mrb[0].mxu0
    %v1897 = vadd.f32 0.0, %v1896
    %1898 = vdwg.mxu0
    %1899 = vmatprep.subr.bf16.mxu0 0
    %1900 = vmatpush1.bf16.msra.mxu0 %v1811
    %1901 = vmatprep.subr.bf16.mxu0 0
    %1902 = vmatpush1.bf16.msra.mxu0 %v1814
    %1903 = vmatprep.subr.bf16.mxu0 0
    %1904 = vmatpush1.bf16.msra.mxu0 %v1817
    %1905 = vmatprep.subr.bf16.mxu0 0
    %1906 = vmatpush1.bf16.msra.mxu0 0
    %1907 = vmatprep.subr.bf16.mxu0 0
    %1908 = vmatpush1.bf16.msra.mxu0 0
    %1909 = vmatprep.subr.bf16.mxu0 0
    %1910 = vmatpush1.bf16.msra.mxu0 0
    %1911 = vmatprep.subr.bf16.mxu0 0
    %1912 = vmatpush1.bf16.msra.mxu0 0
    %1913 = vmatprep.subr.bf16.mxu0 0
    %1914 = vmatpush1.bf16.msra.mxu0 0
    %1915 = vmatprep.subr.bf16.mxu0 0
    %1916 = vmatpush1.bf16.msra.mxu0 0
    %1917 = vmatprep.subr.bf16.mxu0 0
    %1918 = vmatpush1.bf16.msra.mxu0 0
    %1919 = vmatprep.subr.bf16.mxu0 0
    %1920 = vmatpush1.bf16.msra.mxu0 0
    %1921 = vmatprep.subr.bf16.mxu0 0
    %1922 = vmatpush1.bf16.msra.mxu0 0
    %1923 = vmatprep.subr.bf16.mxu0 0
    %1924 = vmatpush1.bf16.msra.mxu0 0
    %1925 = vmatprep.subr.bf16.mxu0 0
    %1926 = vmatpush1.bf16.msra.mxu0 0
    %1927 = vmatprep.subr.bf16.mxu0 0
    %1928 = vmatpush1.bf16.msra.mxu0 0
    %1929 = vmatprep.subr.bf16.mxu0 0
    %1930 = vmatpush1.bf16.msra.mxu0 0
    %1931 = vmatprep.mubr.bf16.mxu0 0
    %1932 = vmatmul.mubr.bf16.gmra.mrb[0].mxu0 %v1828
    %v1933 = vpop.f32.mrb[0].mxu0
    %v1934 = vadd.f32 0.0, %v1933
    %v1935 = vpop.f32.mrb[0].mxu0
    %v1936 = vpop.f32.mrb[0].mxu0
    %v1937 = vadd.f32 0.0, %v1936
    %v1938 = vpop.f32.mrb[0].mxu0
    %1939 = vmatprep.mubr.bf16.mxu0 0
    %1940 = vmatmul.mubr.bf16.gmra.mrb[0].mxu0 %v1831
    %v1941 = vpop.f32.mrb[0].mxu0
    %v1942 = vadd.f32 0.0, %v1941
    %v1943 = vpop.f32.mrb[0].mxu0
    %v1944 = vpop.f32.mrb[0].mxu0
    %v1945 = vadd.f32 0.0, %v1944
    %v1946 = vpop.f32.mrb[0].mxu0
    %1947 = vmatprep.mubr.bf16.mxu0 0
    %1948 = vmatmul.mubr.bf16.gmra.mrb[0].mxu0 %v1834
    %v1949 = vpop.f32.mrb[0].mxu0
    %v1950 = vadd.f32 0.0, %v1949
    %v1951 = vpop.f32.mrb[0].mxu0
    %v1952 = vpop.f32.mrb[0].mxu0
    %v1953 = vadd.f32 0.0, %v1952
    %v1954 = vpop.f32.mrb[0].mxu0
    %1955 = vdwg.mxu0
    %v1956 = vadd.f32 %v1678, %v1871
    %v1957 = vadd.f32 %v1680, %v1873
    %v1958 = vadd.f32 %v1741, %v1934
    %v1959 = vadd.f32 %v1682, %v1875
    %v1960 = vadd.f32 %v1684, %v1877
    %v1961 = vadd.f32 %v1744, %v1937
    %v1962 = vadd.f32 %v1688, %v1881
    %v1963 = vadd.f32 %v1690, %v1883
    %v1964 = vadd.f32 %v1749, %v1942
    %v1965 = vadd.f32 %v1692, %v1885
    %v1966 = vadd.f32 %v1694, %v1887
    %v1967 = vadd.f32 %v1752, %v1945
    %v1968 = vadd.f32 %v1698, %v1891
    %v1969 = vadd.f32 %v1700, %v1893
    %v1970 = vadd.f32 %v1757, %v1950
    %v1971 = vadd.f32 %v1702, %v1895
    %v1972 = vadd.f32 %v1704, %v1897
    %v1973 = vadd.f32 %v1760, %v1953
    %s1974 = scalar_lea.vmem %s13, 216
    %v1975 = vld [vmem:[%s1974] sm:$0xff]
    %v1976 = vld [vmem:[%s1974 + $0x8] sm:$0xf]
    %v1977 = vld [vmem:[%s1974 + $0xc] sm:$0xff]
    %v1978 = vld [vmem:[%s1974 + $0x14] sm:$0xf]
    %v1979 = vld [vmem:[%s1974 + $0x18] sm:$0xff]
    %v1980 = vld [vmem:[%s1974 + $0x20] sm:$0xf]
    %v1981 = vld [vmem:[%s1974 + $0x24] sm:$0xff]
    %v1982 = vld [vmem:[%s1974 + $0x2c] sm:$0xf]
    %v1983 = vld [vmem:[%s1974 + $0x30] sm:$0xff]
    %v1984 = vld [vmem:[%s1974 + $0x38] sm:$0xf]
    %v1985 = vld [vmem:[%s1974 + $0x3c] sm:$0xff]
    %v1986 = vld [vmem:[%s1974 + $0x44] sm:$0xf]
    %v1987 = vpack.c.bf16 %v1286, %v1283
    %v1988 = vpack.c.bf16 %v1294, %v1291
    %v1989 = vpack.c.bf16 %v1302, %v1299
    %v2002 = vunpack.c.l.b16 %v1975
    %v2003 = vunpack.c.h.b16 %v1975
    %v2004 = vunpack.c.l.b16 %v1976
    %v2005 = vunpack.c.l.b16 %v1977
    %v2006 = vunpack.c.h.b16 %v1977
    %v2007 = vunpack.c.l.b16 %v1978
    %v2008 = vunpack.c.l.b16 %v1979
    %v2009 = vunpack.c.h.b16 %v1979
    %v2010 = vunpack.c.l.b16 %v1980
    %v2011 = vunpack.c.l.b16 %v1981
    %v2012 = vunpack.c.h.b16 %v1981
    %v2013 = vunpack.c.l.b16 %v1982
    %v2014 = vunpack.c.l.b16 %v1983
    %v2015 = vunpack.c.h.b16 %v1983
    %v2016 = vunpack.c.l.b16 %v1984
    %v2017 = vunpack.c.l.b16 %v1985
    %v2018 = vunpack.c.h.b16 %v1985
    %v2019 = vunpack.c.l.b16 %v1986
    %v2020 = vpack.c.b16 %v2005, %v2002
    %v2021 = vpack.c.b16 %v2006, %v2003
    %v2022 = vpack.c.b16 %v2007, %v2004
    %v2023 = vpack.c.b16 %v2011, %v2008
    %v2024 = vpack.c.b16 %v2012, %v2009
    %v2025 = vpack.c.b16 %v2013, %v2010
    %v2026 = vpack.c.b16 %v2017, %v2014
    %v2027 = vpack.c.b16 %v2018, %v2015
    %v2028 = vpack.c.b16 %v2019, %v2016
    %v2039 = vsel %vm1456, %v1987, 0
    %v2042 = vsel %vm1456, %v1988, 0
    %v2045 = vsel %vm1456, %v1989, 0
    %2047 = vmatprep.subr.bf16.mxu0 %v2021
    %2048 = vmatpush1.bf16.msra.mxu0 %v2020
    %2049 = vmatprep.subr.bf16.mxu0 %v2024
    %2050 = vmatpush1.bf16.msra.mxu0 %v2023
    %2051 = vmatprep.subr.bf16.mxu0 %v2027
    %2052 = vmatpush1.bf16.msra.mxu0 %v2026
    %2053 = vmatprep.subr.bf16.mxu0 0
    %2054 = vmatpush1.bf16.msra.mxu0 0
    %2055 = vmatprep.subr.bf16.mxu0 0
    %2056 = vmatpush1.bf16.msra.mxu0 0
    %2057 = vmatprep.subr.bf16.mxu0 0
    %2058 = vmatpush1.bf16.msra.mxu0 0
    %2059 = vmatprep.subr.bf16.mxu0 0
    %2060 = vmatpush1.bf16.msra.mxu0 0
    %2061 = vmatprep.subr.bf16.mxu0 0
    %2062 = vmatpush1.bf16.msra.mxu0 0
    %2063 = vmatprep.subr.bf16.mxu0 0
    %2064 = vmatpush1.bf16.msra.mxu0 0
    %2065 = vmatprep.subr.bf16.mxu0 0
    %2066 = vmatpush1.bf16.msra.mxu0 0
    %2067 = vmatprep.subr.bf16.mxu0 0
    %2068 = vmatpush1.bf16.msra.mxu0 0
    %2069 = vmatprep.subr.bf16.mxu0 0
    %2070 = vmatpush1.bf16.msra.mxu0 0
    %2071 = vmatprep.subr.bf16.mxu0 0
    %2072 = vmatpush1.bf16.msra.mxu0 0
    %2073 = vmatprep.subr.bf16.mxu0 0
    %2074 = vmatpush1.bf16.msra.mxu0 0
    %2075 = vmatprep.subr.bf16.mxu0 0
    %2076 = vmatpush1.bf16.msra.mxu0 0
    %2077 = vmatprep.subr.bf16.mxu0 0
    %2078 = vmatpush1.bf16.msra.mxu0 0
    %2079 = vmatprep.mubr.bf16.mxu0 0
    %2080 = vmatmul.mubr.bf16.gmra.mrb[0].mxu0 %v2039
    %v2081 = vpop.f32.mrb[0].mxu0
    %v2082 = vadd.f32 0.0, %v2081
    %v2083 = vpop.f32.mrb[0].mxu0
    %v2084 = vadd.f32 0.0, %v2083
    %v2085 = vpop.f32.mrb[0].mxu0
    %v2086 = vadd.f32 0.0, %v2085
    %v2087 = vpop.f32.mrb[0].mxu0
    %v2088 = vadd.f32 0.0, %v2087
    %2089 = vmatprep.mubr.bf16.mxu0 0
    %2090 = vmatmul.mubr.bf16.gmra.mrb[0].mxu0 %v2042
    %v2091 = vpop.f32.mrb[0].mxu0
    %v2092 = vadd.f32 0.0, %v2091
    %v2093 = vpop.f32.mrb[0].mxu0
    %v2094 = vadd.f32 0.0, %v2093
    %v2095 = vpop.f32.mrb[0].mxu0
    %v2096 = vadd.f32 0.0, %v2095
    %v2097 = vpop.f32.mrb[0].mxu0
    %v2098 = vadd.f32 0.0, %v2097
    %2099 = vmatprep.mubr.bf16.mxu0 0
    %2100 = vmatmul.mubr.bf16.gmra.mrb[0].mxu0 %v2045
    %v2101 = vpop.f32.mrb[0].mxu0
    %v2102 = vadd.f32 0.0, %v2101
    %v2103 = vpop.f32.mrb[0].mxu0
    %v2104 = vadd.f32 0.0, %v2103
    %v2105 = vpop.f32.mrb[0].mxu0
    %v2106 = vadd.f32 0.0, %v2105
    %v2107 = vpop.f32.mrb[0].mxu0
    %v2108 = vadd.f32 0.0, %v2107
    %2109 = vdwg.mxu0
    %2110 = vmatprep.subr.bf16.mxu0 0
    %2111 = vmatpush1.bf16.msra.mxu0 %v2022
    %2112 = vmatprep.subr.bf16.mxu0 0
    %2113 = vmatpush1.bf16.msra.mxu0 %v2025
    %2114 = vmatprep.subr.bf16.mxu0 0
    %2115 = vmatpush1.bf16.msra.mxu0 %v2028
    %2116 = vmatprep.subr.bf16.mxu0 0
    %2117 = vmatpush1.bf16.msra.mxu0 0
    %2118 = vmatprep.subr.bf16.mxu0 0
    %2119 = vmatpush1.bf16.msra.mxu0 0
    %2120 = vmatprep.subr.bf16.mxu0 0
    %2121 = vmatpush1.bf16.msra.mxu0 0
    %2122 = vmatprep.subr.bf16.mxu0 0
    %2123 = vmatpush1.bf16.msra.mxu0 0
    %2124 = vmatprep.subr.bf16.mxu0 0
    %2125 = vmatpush1.bf16.msra.mxu0 0
    %2126 = vmatprep.subr.bf16.mxu0 0
    %2127 = vmatpush1.bf16.msra.mxu0 0
    %2128 = vmatprep.subr.bf16.mxu0 0
    %2129 = vmatpush1.bf16.msra.mxu0 0
    %2130 = vmatprep.subr.bf16.mxu0 0
    %2131 = vmatpush1.bf16.msra.mxu0 0
    %2132 = vmatprep.subr.bf16.mxu0 0
    %2133 = vmatpush1.bf16.msra.mxu0 0
    %2134 = vmatprep.subr.bf16.mxu0 0
    %2135 = vmatpush1.bf16.msra.mxu0 0
    %2136 = vmatprep.subr.bf16.mxu0 0
    %2137 = vmatpush1.bf16.msra.mxu0 0
    %2138 = vmatprep.subr.bf16.mxu0 0
    %2139 = vmatpush1.bf16.msra.mxu0 0
    %2140 = vmatprep.subr.bf16.mxu0 0
    %2141 = vmatpush1.bf16.msra.mxu0 0
    %2142 = vmatprep.mubr.bf16.mxu0 0
    %2143 = vmatmul.mubr.bf16.gmra.mrb[0].mxu0 %v2039
    %v2144 = vpop.f32.mrb[0].mxu0
    %v2145 = vadd.f32 0.0, %v2144
    %v2146 = vpop.f32.mrb[0].mxu0
    %v2147 = vpop.f32.mrb[0].mxu0
    %v2148 = vadd.f32 0.0, %v2147
    %v2149 = vpop.f32.mrb[0].mxu0
    %2150 = vmatprep.mubr.bf16.mxu0 0
    %2151 = vmatmul.mubr.bf16.gmra.mrb[0].mxu0 %v2042
    %v2152 = vpop.f32.mrb[0].mxu0
    %v2153 = vadd.f32 0.0, %v2152
    %v2154 = vpop.f32.mrb[0].mxu0
    %v2155 = vpop.f32.mrb[0].mxu0
    %v2156 = vadd.f32 0.0, %v2155
    %v2157 = vpop.f32.mrb[0].mxu0
    %2158 = vmatprep.mubr.bf16.mxu0 0
    %2159 = vmatmul.mubr.bf16.gmra.mrb[0].mxu0 %v2045
    %v2160 = vpop.f32.mrb[0].mxu0
    %v2161 = vadd.f32 0.0, %v2160
    %v2162 = vpop.f32.mrb[0].mxu0
    %v2163 = vpop.f32.mrb[0].mxu0
    %v2164 = vadd.f32 0.0, %v2163
    %v2165 = vpop.f32.mrb[0].mxu0
    %2166 = vdwg.mxu0
    %v2167 = vadd.f32 %v1956, %v2082
    %v2168 = vadd.f32 %v1957, %v2084
    %v2169 = vadd.f32 %v1958, %v2145
    %v2170 = vadd.f32 %v1959, %v2086
    %v2171 = vadd.f32 %v1960, %v2088
    %v2172 = vadd.f32 %v1961, %v2148
    %v2173 = vadd.f32 %v1962, %v2092
    %v2174 = vadd.f32 %v1963, %v2094
    %v2175 = vadd.f32 %v1964, %v2153
    %v2176 = vadd.f32 %v1965, %v2096
    %v2177 = vadd.f32 %v1966, %v2098
    %v2178 = vadd.f32 %v1967, %v2156
    %v2179 = vadd.f32 %v1968, %v2102
    %v2180 = vadd.f32 %v1969, %v2104
    %v2181 = vadd.f32 %v1970, %v2161
    %v2182 = vadd.f32 %v1971, %v2106
    %v2183 = vadd.f32 %v1972, %v2108
    %v2184 = vadd.f32 %v1973, %v2164
    %s2185 = scalar_lea.vmem %s13, 288
    %v2186 = vld [vmem:[%s2185] sm:$0xff]
    %v2187 = vld [vmem:[%s2185 + $0x8] sm:$0xf]
    %v2188 = vld [vmem:[%s2185 + $0xc] sm:$0xff]
    %v2189 = vld [vmem:[%s2185 + $0x14] sm:$0xf]
    %v2190 = vld [vmem:[%s2185 + $0x18] sm:$0xff]
    %v2191 = vld [vmem:[%s2185 + $0x20] sm:$0xf]
    %v2192 = vld [vmem:[%s2185 + $0x24] sm:$0xff]
    %v2193 = vld [vmem:[%s2185 + $0x2c] sm:$0xf]
    %v2194 = vld [vmem:[%s2185 + $0x30] sm:$0xff]
    %v2195 = vld [vmem:[%s2185 + $0x38] sm:$0xf]
    %v2196 = vld [vmem:[%s2185 + $0x3c] sm:$0xff]
    %v2197 = vld [vmem:[%s2185 + $0x44] sm:$0xf]
    %v2198 = vpack.c.bf16 %v1310, %v1307
    %v2199 = vpack.c.bf16 %v1318, %v1315
    %v2200 = vpack.c.bf16 %v1326, %v1323
    %v2213 = vunpack.c.l.b16 %v2186
    %v2214 = vunpack.c.h.b16 %v2186
    %v2215 = vunpack.c.l.b16 %v2187
    %v2216 = vunpack.c.l.b16 %v2188
    %v2217 = vunpack.c.h.b16 %v2188
    %v2218 = vunpack.c.l.b16 %v2189
    %v2219 = vunpack.c.l.b16 %v2190
    %v2220 = vunpack.c.h.b16 %v2190
    %v2221 = vunpack.c.l.b16 %v2191
    %v2222 = vunpack.c.l.b16 %v2192
    %v2223 = vunpack.c.h.b16 %v2192
    %v2224 = vunpack.c.l.b16 %v2193
    %v2225 = vunpack.c.l.b16 %v2194
    %v2226 = vunpack.c.h.b16 %v2194
    %v2227 = vunpack.c.l.b16 %v2195
    %v2228 = vunpack.c.l.b16 %v2196
    %v2229 = vunpack.c.h.b16 %v2196
    %v2230 = vunpack.c.l.b16 %v2197
    %v2231 = vpack.c.b16 %v2216, %v2213
    %v2232 = vpack.c.b16 %v2217, %v2214
    %v2233 = vpack.c.b16 %v2218, %v2215
    %v2234 = vpack.c.b16 %v2222, %v2219
    %v2235 = vpack.c.b16 %v2223, %v2220
    %v2236 = vpack.c.b16 %v2224, %v2221
    %v2237 = vpack.c.b16 %v2228, %v2225
    %v2238 = vpack.c.b16 %v2229, %v2226
    %v2239 = vpack.c.b16 %v2230, %v2227
    %v2250 = vsel %vm1456, %v2198, 0
    %v2253 = vsel %vm1456, %v2199, 0
    %v2256 = vsel %vm1456, %v2200, 0
    %2258 = vmatprep.subr.bf16.mxu0 %v2232
    %2259 = vmatpush1.bf16.msra.mxu0 %v2231
    %2260 = vmatprep.subr.bf16.mxu0 %v2235
    %2261 = vmatpush1.bf16.msra.mxu0 %v2234
    %2262 = vmatprep.subr.bf16.mxu0 %v2238
    %2263 = vmatpush1.bf16.msra.mxu0 %v2237
    %2264 = vmatprep.subr.bf16.mxu0 0
    %2265 = vmatpush1.bf16.msra.mxu0 0
    %2266 = vmatprep.subr.bf16.mxu0 0
    %2267 = vmatpush1.bf16.msra.mxu0 0
    %2268 = vmatprep.subr.bf16.mxu0 0
    %2269 = vmatpush1.bf16.msra.mxu0 0
    %2270 = vmatprep.subr.bf16.mxu0 0
    %2271 = vmatpush1.bf16.msra.mxu0 0
    %2272 = vmatprep.subr.bf16.mxu0 0
    %2273 = vmatpush1.bf16.msra.mxu0 0
    %2274 = vmatprep.subr.bf16.mxu0 0
    %2275 = vmatpush1.bf16.msra.mxu0 0
    %2276 = vmatprep.subr.bf16.mxu0 0
    %2277 = vmatpush1.bf16.msra.mxu0 0
    %2278 = vmatprep.subr.bf16.mxu0 0
    %2279 = vmatpush1.bf16.msra.mxu0 0
    %2280 = vmatprep.subr.bf16.mxu0 0
    %2281 = vmatpush1.bf16.msra.mxu0 0
    %2282 = vmatprep.subr.bf16.mxu0 0
    %2283 = vmatpush1.bf16.msra.mxu0 0
    %2284 = vmatprep.subr.bf16.mxu0 0
    %2285 = vmatpush1.bf16.msra.mxu0 0
    %2286 = vmatprep.subr.bf16.mxu0 0
    %2287 = vmatpush1.bf16.msra.mxu0 0
    %2288 = vmatprep.subr.bf16.mxu0 0
    %2289 = vmatpush1.bf16.msra.mxu0 0
    %2290 = vmatprep.mubr.bf16.mxu0 0
    %2291 = vmatmul.mubr.bf16.gmra.mrb[0].mxu0 %v2250
    %v2292 = vpop.f32.mrb[0].mxu0
    %v2293 = vadd.f32 0.0, %v2292
    %v2294 = vpop.f32.mrb[0].mxu0
    %v2295 = vadd.f32 0.0, %v2294
    %v2296 = vpop.f32.mrb[0].mxu0
    %v2297 = vadd.f32 0.0, %v2296
    %v2298 = vpop.f32.mrb[0].mxu0
    %v2299 = vadd.f32 0.0, %v2298
    %2300 = vmatprep.mubr.bf16.mxu0 0
    %2301 = vmatmul.mubr.bf16.gmra.mrb[0].mxu0 %v2253
    %v2302 = vpop.f32.mrb[0].mxu0
    %v2303 = vadd.f32 0.0, %v2302
    %v2304 = vpop.f32.mrb[0].mxu0
    %v2305 = vadd.f32 0.0, %v2304
    %v2306 = vpop.f32.mrb[0].mxu0
    %v2307 = vadd.f32 0.0, %v2306
    %v2308 = vpop.f32.mrb[0].mxu0
    %v2309 = vadd.f32 0.0, %v2308
    %2310 = vmatprep.mubr.bf16.mxu0 0
    %2311 = vmatmul.mubr.bf16.gmra.mrb[0].mxu0 %v2256
    %v2312 = vpop.f32.mrb[0].mxu0
    %v2313 = vadd.f32 0.0, %v2312
    %v2314 = vpop.f32.mrb[0].mxu0
    %v2315 = vadd.f32 0.0, %v2314
    %v2316 = vpop.f32.mrb[0].mxu0
    %v2317 = vadd.f32 0.0, %v2316
    %v2318 = vpop.f32.mrb[0].mxu0
    %v2319 = vadd.f32 0.0, %v2318
    %2320 = vdwg.mxu0
    %2321 = vmatprep.subr.bf16.mxu0 0
    %2322 = vmatpush1.bf16.msra.mxu0 %v2233
    %2323 = vmatprep.subr.bf16.mxu0 0
    %2324 = vmatpush1.bf16.msra.mxu0 %v2236
    %2325 = vmatprep.subr.bf16.mxu0 0
    %2326 = vmatpush1.bf16.msra.mxu0 %v2239
    %2327 = vmatprep.subr.bf16.mxu0 0
    %2328 = vmatpush1.bf16.msra.mxu0 0
    %2329 = vmatprep.subr.bf16.mxu0 0
    %2330 = vmatpush1.bf16.msra.mxu0 0
    %2331 = vmatprep.subr.bf16.mxu0 0
    %2332 = vmatpush1.bf16.msra.mxu0 0
    %2333 = vmatprep.subr.bf16.mxu0 0
    %2334 = vmatpush1.bf16.msra.mxu0 0
    %2335 = vmatprep.subr.bf16.mxu0 0
    %2336 = vmatpush1.bf16.msra.mxu0 0
    %2337 = vmatprep.subr.bf16.mxu0 0
    %2338 = vmatpush1.bf16.msra.mxu0 0
    %2339 = vmatprep.subr.bf16.mxu0 0
    %2340 = vmatpush1.bf16.msra.mxu0 0
    %2341 = vmatprep.subr.bf16.mxu0 0
    %2342 = vmatpush1.bf16.msra.mxu0 0
    %2343 = vmatprep.subr.bf16.mxu0 0
    %2344 = vmatpush1.bf16.msra.mxu0 0
    %2345 = vmatprep.subr.bf16.mxu0 0
    %2346 = vmatpush1.bf16.msra.mxu0 0
    %2347 = vmatprep.subr.bf16.mxu0 0
    %2348 = vmatpush1.bf16.msra.mxu0 0
    %2349 = vmatprep.subr.bf16.mxu0 0
    %2350 = vmatpush1.bf16.msra.mxu0 0
    %2351 = vmatprep.subr.bf16.mxu0 0
    %2352 = vmatpush1.bf16.msra.mxu0 0
    %2353 = vmatprep.mubr.bf16.mxu0 0
    %2354 = vmatmul.mubr.bf16.gmra.mrb[0].mxu0 %v2250
    %v2355 = vpop.f32.mrb[0].mxu0
    %v2356 = vadd.f32 0.0, %v2355
    %v2357 = vpop.f32.mrb[0].mxu0
    %v2358 = vpop.f32.mrb[0].mxu0
    %v2359 = vadd.f32 0.0, %v2358
    %v2360 = vpop.f32.mrb[0].mxu0
    %2361 = vmatprep.mubr.bf16.mxu0 0
    %2362 = vmatmul.mubr.bf16.gmra.mrb[0].mxu0 %v2253
    %v2363 = vpop.f32.mrb[0].mxu0
    %v2364 = vadd.f32 0.0, %v2363
    %v2365 = vpop.f32.mrb[0].mxu0
    %v2366 = vpop.f32.mrb[0].mxu0
    %v2367 = vadd.f32 0.0, %v2366
    %v2368 = vpop.f32.mrb[0].mxu0
    %2369 = vmatprep.mubr.bf16.mxu0 0
    %2370 = vmatmul.mubr.bf16.gmra.mrb[0].mxu0 %v2256
    %v2371 = vpop.f32.mrb[0].mxu0
    %v2372 = vadd.f32 0.0, %v2371
    %v2373 = vpop.f32.mrb[0].mxu0
    %v2374 = vpop.f32.mrb[0].mxu0
    %v2375 = vadd.f32 0.0, %v2374
    %v2376 = vpop.f32.mrb[0].mxu0
    %2377 = vdwg.mxu0
    %v2378 = vadd.f32 %v2167, %v2293
    %v2379 = vadd.f32 %v2168, %v2295
    %v2380 = vadd.f32 %v2169, %v2356
    %v2381 = vadd.f32 %v2170, %v2297
    %v2382 = vadd.f32 %v2171, %v2299
    %v2383 = vadd.f32 %v2172, %v2359
    %v2384 = vadd.f32 %v2173, %v2303
    %v2385 = vadd.f32 %v2174, %v2305
    %v2386 = vadd.f32 %v2175, %v2364
    %v2387 = vadd.f32 %v2176, %v2307
    %v2388 = vadd.f32 %v2177, %v2309
    %v2389 = vadd.f32 %v2178, %v2367
    %v2390 = vadd.f32 %v2179, %v2313
    %v2391 = vadd.f32 %v2180, %v2315
    %v2392 = vadd.f32 %v2181, %v2372
    %v2393 = vadd.f32 %v2182, %v2317
    %v2394 = vadd.f32 %v2183, %v2319
    %v2395 = vadd.f32 %v2184, %v2375
    %s2396 = scalar_lea.vmem %s13, 360
    %v2397 = vld [vmem:[%s2396] sm:$0xff]
    %v2398 = vld [vmem:[%s2396 + $0x8] sm:$0xf]
    %v2399 = vld [vmem:[%s2396 + $0xc] sm:$0xff]
    %v2400 = vld [vmem:[%s2396 + $0x14] sm:$0xf]
    %v2401 = vld [vmem:[%s2396 + $0x18] sm:$0xff]
    %v2402 = vld [vmem:[%s2396 + $0x20] sm:$0xf]
    %v2403 = vld [vmem:[%s2396 + $0x24] sm:$0xff]
    %v2404 = vld [vmem:[%s2396 + $0x2c] sm:$0xf]
    %v2405 = vld [vmem:[%s2396 + $0x30] sm:$0xff]
    %v2406 = vld [vmem:[%s2396 + $0x38] sm:$0xf]
    %v2407 = vld [vmem:[%s2396 + $0x3c] sm:$0xff]
    %v2408 = vld [vmem:[%s2396 + $0x44] sm:$0xf]
    %v2409 = vpack.c.bf16 %v1334, %v1331
    %v2410 = vpack.c.bf16 %v1342, %v1339
    %v2411 = vpack.c.bf16 %v1350, %v1347
    %v2424 = vunpack.c.l.b16 %v2397
    %v2425 = vunpack.c.h.b16 %v2397
    %v2426 = vunpack.c.l.b16 %v2398
    %v2427 = vunpack.c.l.b16 %v2399
    %v2428 = vunpack.c.h.b16 %v2399
    %v2429 = vunpack.c.l.b16 %v2400
    %v2430 = vunpack.c.l.b16 %v2401
    %v2431 = vunpack.c.h.b16 %v2401
    %v2432 = vunpack.c.l.b16 %v2402
    %v2433 = vunpack.c.l.b16 %v2403
    %v2434 = vunpack.c.h.b16 %v2403
    %v2435 = vunpack.c.l.b16 %v2404
    %v2436 = vunpack.c.l.b16 %v2405
    %v2437 = vunpack.c.h.b16 %v2405
    %v2438 = vunpack.c.l.b16 %v2406
    %v2439 = vunpack.c.l.b16 %v2407
    %v2440 = vunpack.c.h.b16 %v2407
    %v2441 = vunpack.c.l.b16 %v2408
    %v2442 = vpack.c.b16 %v2427, %v2424
    %v2443 = vpack.c.b16 %v2428, %v2425
    %v2444 = vpack.c.b16 %v2429, %v2426
    %v2445 = vpack.c.b16 %v2433, %v2430
    %v2446 = vpack.c.b16 %v2434, %v2431
    %v2447 = vpack.c.b16 %v2435, %v2432
    %v2448 = vpack.c.b16 %v2439, %v2436
    %v2449 = vpack.c.b16 %v2440, %v2437
    %v2450 = vpack.c.b16 %v2441, %v2438
    %v2461 = vsel %vm1456, %v2409, 0
    %v2464 = vsel %vm1456, %v2410, 0
    %v2467 = vsel %vm1456, %v2411, 0
    %2469 = vmatprep.subr.bf16.mxu0 %v2443
    %2470 = vmatpush1.bf16.msra.mxu0 %v2442
    %2471 = vmatprep.subr.bf16.mxu0 %v2446
    %2472 = vmatpush1.bf16.msra.mxu0 %v2445
    %2473 = vmatprep.subr.bf16.mxu0 %v2449
    %2474 = vmatpush1.bf16.msra.mxu0 %v2448
    %2475 = vmatprep.subr.bf16.mxu0 0
    %2476 = vmatpush1.bf16.msra.mxu0 0
    %2477 = vmatprep.subr.bf16.mxu0 0
    %2478 = vmatpush1.bf16.msra.mxu0 0
    %2479 = vmatprep.subr.bf16.mxu0 0
    %2480 = vmatpush1.bf16.msra.mxu0 0
    %2481 = vmatprep.subr.bf16.mxu0 0
    %2482 = vmatpush1.bf16.msra.mxu0 0
    %2483 = vmatprep.subr.bf16.mxu0 0
    %2484 = vmatpush1.bf16.msra.mxu0 0
    %2485 = vmatprep.subr.bf16.mxu0 0
    %2486 = vmatpush1.bf16.msra.mxu0 0
    %2487 = vmatprep.subr.bf16.mxu0 0
    %2488 = vmatpush1.bf16.msra.mxu0 0
    %2489 = vmatprep.subr.bf16.mxu0 0
    %2490 = vmatpush1.bf16.msra.mxu0 0
    %2491 = vmatprep.subr.bf16.mxu0 0
    %2492 = vmatpush1.bf16.msra.mxu0 0
    %2493 = vmatprep.subr.bf16.mxu0 0
    %2494 = vmatpush1.bf16.msra.mxu0 0
    %2495 = vmatprep.subr.bf16.mxu0 0
    %2496 = vmatpush1.bf16.msra.mxu0 0
    %2497 = vmatprep.subr.bf16.mxu0 0
    %2498 = vmatpush1.bf16.msra.mxu0 0
    %2499 = vmatprep.subr.bf16.mxu0 0
    %2500 = vmatpush1.bf16.msra.mxu0 0
    %2501 = vmatprep.mubr.bf16.mxu0 0
    %2502 = vmatmul.mubr.bf16.gmra.mrb[0].mxu0 %v2461
    %v2503 = vpop.f32.mrb[0].mxu0
    %v2504 = vadd.f32 0.0, %v2503
    %v2505 = vpop.f32.mrb[0].mxu0
    %v2506 = vadd.f32 0.0, %v2505
    %v2507 = vpop.f32.mrb[0].mxu0
    %v2508 = vadd.f32 0.0, %v2507
    %v2509 = vpop.f32.mrb[0].mxu0
    %v2510 = vadd.f32 0.0, %v2509
    %2511 = vmatprep.mubr.bf16.mxu0 0
    %2512 = vmatmul.mubr.bf16.gmra.mrb[0].mxu0 %v2464
    %v2513 = vpop.f32.mrb[0].mxu0
    %v2514 = vadd.f32 0.0, %v2513
    %v2515 = vpop.f32.mrb[0].mxu0
    %v2516 = vadd.f32 0.0, %v2515
    %v2517 = vpop.f32.mrb[0].mxu0
    %v2518 = vadd.f32 0.0, %v2517
    %v2519 = vpop.f32.mrb[0].mxu0
    %v2520 = vadd.f32 0.0, %v2519
    %2521 = vmatprep.mubr.bf16.mxu0 0
    %2522 = vmatmul.mubr.bf16.gmra.mrb[0].mxu0 %v2467
    %v2523 = vpop.f32.mrb[0].mxu0
    %v2524 = vadd.f32 0.0, %v2523
    %v2525 = vpop.f32.mrb[0].mxu0
    %v2526 = vadd.f32 0.0, %v2525
    %v2527 = vpop.f32.mrb[0].mxu0
    %v2528 = vadd.f32 0.0, %v2527
    %v2529 = vpop.f32.mrb[0].mxu0
    %v2530 = vadd.f32 0.0, %v2529
    %2531 = vdwg.mxu0
    %2532 = vmatprep.subr.bf16.mxu0 0
    %2533 = vmatpush1.bf16.msra.mxu0 %v2444
    %2534 = vmatprep.subr.bf16.mxu0 0
    %2535 = vmatpush1.bf16.msra.mxu0 %v2447
    %2536 = vmatprep.subr.bf16.mxu0 0
    %2537 = vmatpush1.bf16.msra.mxu0 %v2450
    %2538 = vmatprep.subr.bf16.mxu0 0
    %2539 = vmatpush1.bf16.msra.mxu0 0
    %2540 = vmatprep.subr.bf16.mxu0 0
    %2541 = vmatpush1.bf16.msra.mxu0 0
    %2542 = vmatprep.subr.bf16.mxu0 0
    %2543 = vmatpush1.bf16.msra.mxu0 0
    %2544 = vmatprep.subr.bf16.mxu0 0
    %2545 = vmatpush1.bf16.msra.mxu0 0
    %2546 = vmatprep.subr.bf16.mxu0 0
    %2547 = vmatpush1.bf16.msra.mxu0 0
    %2548 = vmatprep.subr.bf16.mxu0 0
    %2549 = vmatpush1.bf16.msra.mxu0 0
    %2550 = vmatprep.subr.bf16.mxu0 0
    %2551 = vmatpush1.bf16.msra.mxu0 0
    %2552 = vmatprep.subr.bf16.mxu0 0
    %2553 = vmatpush1.bf16.msra.mxu0 0
    %2554 = vmatprep.subr.bf16.mxu0 0
    %2555 = vmatpush1.bf16.msra.mxu0 0
    %2556 = vmatprep.subr.bf16.mxu0 0
    %2557 = vmatpush1.bf16.msra.mxu0 0
    %2558 = vmatprep.subr.bf16.mxu0 0
    %2559 = vmatpush1.bf16.msra.mxu0 0
    %2560 = vmatprep.subr.bf16.mxu0 0
    %2561 = vmatpush1.bf16.msra.mxu0 0
    %2562 = vmatprep.subr.bf16.mxu0 0
    %2563 = vmatpush1.bf16.msra.mxu0 0
    %2564 = vmatprep.mubr.bf16.mxu0 0
    %2565 = vmatmul.mubr.bf16.gmra.mrb[0].mxu0 %v2461
    %v2566 = vpop.f32.mrb[0].mxu0
    %v2567 = vadd.f32 0.0, %v2566
    %v2568 = vpop.f32.mrb[0].mxu0
    %v2569 = vpop.f32.mrb[0].mxu0
    %v2570 = vadd.f32 0.0, %v2569
    %v2571 = vpop.f32.mrb[0].mxu0
    %2572 = vmatprep.mubr.bf16.mxu0 0
    %2573 = vmatmul.mubr.bf16.gmra.mrb[0].mxu0 %v2464
    %v2574 = vpop.f32.mrb[0].mxu0
    %v2575 = vadd.f32 0.0, %v2574
    %v2576 = vpop.f32.mrb[0].mxu0
    %v2577 = vpop.f32.mrb[0].mxu0
    %v2578 = vadd.f32 0.0, %v2577
    %v2579 = vpop.f32.mrb[0].mxu0
    %2580 = vmatprep.mubr.bf16.mxu0 0
    %2581 = vmatmul.mubr.bf16.gmra.mrb[0].mxu0 %v2467
    %v2582 = vpop.f32.mrb[0].mxu0
    %v2583 = vadd.f32 0.0, %v2582
    %v2584 = vpop.f32.mrb[0].mxu0
    %v2585 = vpop.f32.mrb[0].mxu0
    %v2586 = vadd.f32 0.0, %v2585
    %v2587 = vpop.f32.mrb[0].mxu0
    %2588 = vdwg.mxu0
    %v2589 = vadd.f32 %v2378, %v2504
    %v2590 = vadd.f32 %v2379, %v2506
    %v2591 = vadd.f32 %v2380, %v2567
    %v2592 = vadd.f32 %v2381, %v2508
    %v2593 = vadd.f32 %v2382, %v2510
    %v2594 = vadd.f32 %v2383, %v2570
    %v2595 = vadd.f32 %v2384, %v2514
    %v2596 = vadd.f32 %v2385, %v2516
    %v2597 = vadd.f32 %v2386, %v2575
    %v2598 = vadd.f32 %v2387, %v2518
    %v2599 = vadd.f32 %v2388, %v2520
    %v2600 = vadd.f32 %v2389, %v2578
    %v2601 = vadd.f32 %v2390, %v2524
    %v2602 = vadd.f32 %v2391, %v2526
    %v2603 = vadd.f32 %v2392, %v2583
    %v2604 = vadd.f32 %v2393, %v2528
    %v2605 = vadd.f32 %v2394, %v2530
    %v2606 = vadd.f32 %v2395, %v2586
    %s2607 = scalar_lea.vmem %s13, 432
    %v2608 = vld [vmem:[%s2607] sm:$0xff]
    %v2609 = vld [vmem:[%s2607 + $0x8] sm:$0xf]
    %v2610 = vld [vmem:[%s2607 + $0xc] sm:$0xff]
    %v2611 = vld [vmem:[%s2607 + $0x14] sm:$0xf]
    %v2612 = vld [vmem:[%s2607 + $0x18] sm:$0xff]
    %v2613 = vld [vmem:[%s2607 + $0x20] sm:$0xf]
    %v2614 = vld [vmem:[%s2607 + $0x24] sm:$0xff]
    %v2615 = vld [vmem:[%s2607 + $0x2c] sm:$0xf]
    %v2616 = vld [vmem:[%s2607 + $0x30] sm:$0xff]
    %v2617 = vld [vmem:[%s2607 + $0x38] sm:$0xf]
    %v2618 = vld [vmem:[%s2607 + $0x3c] sm:$0xff]
    %v2619 = vld [vmem:[%s2607 + $0x44] sm:$0xf]
    %v2620 = vpack.c.bf16 %v1358, %v1355
    %v2621 = vpack.c.bf16 %v1366, %v1363
    %v2622 = vpack.c.bf16 %v1374, %v1371
    %v2635 = vunpack.c.l.b16 %v2608
    %v2636 = vunpack.c.h.b16 %v2608
    %v2637 = vunpack.c.l.b16 %v2609
    %v2638 = vunpack.c.l.b16 %v2610
    %v2639 = vunpack.c.h.b16 %v2610
    %v2640 = vunpack.c.l.b16 %v2611
    %v2641 = vunpack.c.l.b16 %v2612
    %v2642 = vunpack.c.h.b16 %v2612
    %v2643 = vunpack.c.l.b16 %v2613
    %v2644 = vunpack.c.l.b16 %v2614
    %v2645 = vunpack.c.h.b16 %v2614
    %v2646 = vunpack.c.l.b16 %v2615
    %v2647 = vunpack.c.l.b16 %v2616
    %v2648 = vunpack.c.h.b16 %v2616
    %v2649 = vunpack.c.l.b16 %v2617
    %v2650 = vunpack.c.l.b16 %v2618
    %v2651 = vunpack.c.h.b16 %v2618
    %v2652 = vunpack.c.l.b16 %v2619
    %v2653 = vpack.c.b16 %v2638, %v2635
    %v2654 = vpack.c.b16 %v2639, %v2636
    %v2655 = vpack.c.b16 %v2640, %v2637
    %v2656 = vpack.c.b16 %v2644, %v2641
    %v2657 = vpack.c.b16 %v2645, %v2642
    %v2658 = vpack.c.b16 %v2646, %v2643
    %v2659 = vpack.c.b16 %v2650, %v2647
    %v2660 = vpack.c.b16 %v2651, %v2648
    %v2661 = vpack.c.b16 %v2652, %v2649
    %v2672 = vsel %vm1456, %v2620, 0
    %v2675 = vsel %vm1456, %v2621, 0
    %v2678 = vsel %vm1456, %v2622, 0
    %2680 = vmatprep.subr.bf16.mxu0 %v2654
    %2681 = vmatpush1.bf16.msra.mxu0 %v2653
    %2682 = vmatprep.subr.bf16.mxu0 %v2657
    %2683 = vmatpush1.bf16.msra.mxu0 %v2656
    %2684 = vmatprep.subr.bf16.mxu0 %v2660
    %2685 = vmatpush1.bf16.msra.mxu0 %v2659
    %2686 = vmatprep.subr.bf16.mxu0 0
    %2687 = vmatpush1.bf16.msra.mxu0 0
    %2688 = vmatprep.subr.bf16.mxu0 0
    %2689 = vmatpush1.bf16.msra.mxu0 0
    %2690 = vmatprep.subr.bf16.mxu0 0
    %2691 = vmatpush1.bf16.msra.mxu0 0
    %2692 = vmatprep.subr.bf16.mxu0 0
    %2693 = vmatpush1.bf16.msra.mxu0 0
    %2694 = vmatprep.subr.bf16.mxu0 0
    %2695 = vmatpush1.bf16.msra.mxu0 0
    %2696 = vmatprep.subr.bf16.mxu0 0
    %2697 = vmatpush1.bf16.msra.mxu0 0
    %2698 = vmatprep.subr.bf16.mxu0 0
    %2699 = vmatpush1.bf16.msra.mxu0 0
    %2700 = vmatprep.subr.bf16.mxu0 0
    %2701 = vmatpush1.bf16.msra.mxu0 0
    %2702 = vmatprep.subr.bf16.mxu0 0
    %2703 = vmatpush1.bf16.msra.mxu0 0
    %2704 = vmatprep.subr.bf16.mxu0 0
    %2705 = vmatpush1.bf16.msra.mxu0 0
    %2706 = vmatprep.subr.bf16.mxu0 0
    %2707 = vmatpush1.bf16.msra.mxu0 0
    %2708 = vmatprep.subr.bf16.mxu0 0
    %2709 = vmatpush1.bf16.msra.mxu0 0
    %2710 = vmatprep.subr.bf16.mxu0 0
    %2711 = vmatpush1.bf16.msra.mxu0 0
    %2712 = vmatprep.mubr.bf16.mxu0 0
    %2713 = vmatmul.mubr.bf16.gmra.mrb[0].mxu0 %v2672
    %v2714 = vpop.f32.mrb[0].mxu0
    %v2715 = vadd.f32 0.0, %v2714
    %v2716 = vpop.f32.mrb[0].mxu0
    %v2717 = vadd.f32 0.0, %v2716
    %v2718 = vpop.f32.mrb[0].mxu0
    %v2719 = vadd.f32 0.0, %v2718
    %v2720 = vpop.f32.mrb[0].mxu0
    %v2721 = vadd.f32 0.0, %v2720
    %2722 = vmatprep.mubr.bf16.mxu0 0
    %2723 = vmatmul.mubr.bf16.gmra.mrb[0].mxu0 %v2675
    %v2724 = vpop.f32.mrb[0].mxu0
    %v2725 = vadd.f32 0.0, %v2724
    %v2726 = vpop.f32.mrb[0].mxu0
    %v2727 = vadd.f32 0.0, %v2726
    %v2728 = vpop.f32.mrb[0].mxu0
    %v2729 = vadd.f32 0.0, %v2728
    %v2730 = vpop.f32.mrb[0].mxu0
    %v2731 = vadd.f32 0.0, %v2730
    %2732 = vmatprep.mubr.bf16.mxu0 0
    %2733 = vmatmul.mubr.bf16.gmra.mrb[0].mxu0 %v2678
    %v2734 = vpop.f32.mrb[0].mxu0
    %v2735 = vadd.f32 0.0, %v2734
    %v2736 = vpop.f32.mrb[0].mxu0
    %v2737 = vadd.f32 0.0, %v2736
    %v2738 = vpop.f32.mrb[0].mxu0
    %v2739 = vadd.f32 0.0, %v2738
    %v2740 = vpop.f32.mrb[0].mxu0
    %v2741 = vadd.f32 0.0, %v2740
    %2742 = vdwg.mxu0
    %2743 = vmatprep.subr.bf16.mxu0 0
    %2744 = vmatpush1.bf16.msra.mxu0 %v2655
    %2745 = vmatprep.subr.bf16.mxu0 0
    %2746 = vmatpush1.bf16.msra.mxu0 %v2658
    %2747 = vmatprep.subr.bf16.mxu0 0
    %2748 = vmatpush1.bf16.msra.mxu0 %v2661
    %2749 = vmatprep.subr.bf16.mxu0 0
    %2750 = vmatpush1.bf16.msra.mxu0 0
    %2751 = vmatprep.subr.bf16.mxu0 0
    %2752 = vmatpush1.bf16.msra.mxu0 0
    %2753 = vmatprep.subr.bf16.mxu0 0
    %2754 = vmatpush1.bf16.msra.mxu0 0
    %2755 = vmatprep.subr.bf16.mxu0 0
    %2756 = vmatpush1.bf16.msra.mxu0 0
    %2757 = vmatprep.subr.bf16.mxu0 0
    %2758 = vmatpush1.bf16.msra.mxu0 0
    %2759 = vmatprep.subr.bf16.mxu0 0
    %2760 = vmatpush1.bf16.msra.mxu0 0
    %2761 = vmatprep.subr.bf16.mxu0 0
    %2762 = vmatpush1.bf16.msra.mxu0 0
    %2763 = vmatprep.subr.bf16.mxu0 0
    %2764 = vmatpush1.bf16.msra.mxu0 0
    %2765 = vmatprep.subr.bf16.mxu0 0
    %2766 = vmatpush1.bf16.msra.mxu0 0
    %2767 = vmatprep.subr.bf16.mxu0 0
    %2768 = vmatpush1.bf16.msra.mxu0 0
    %2769 = vmatprep.subr.bf16.mxu0 0
    %2770 = vmatpush1.bf16.msra.mxu0 0
    %2771 = vmatprep.subr.bf16.mxu0 0
    %2772 = vmatpush1.bf16.msra.mxu0 0
    %2773 = vmatprep.subr.bf16.mxu0 0
    %2774 = vmatpush1.bf16.msra.mxu0 0
    %2775 = vmatprep.mubr.bf16.mxu0 0
    %2776 = vmatmul.mubr.bf16.gmra.mrb[0].mxu0 %v2672
    %v2777 = vpop.f32.mrb[0].mxu0
    %v2778 = vadd.f32 0.0, %v2777
    %v2779 = vpop.f32.mrb[0].mxu0
    %v2780 = vpop.f32.mrb[0].mxu0
    %v2781 = vadd.f32 0.0, %v2780
    %v2782 = vpop.f32.mrb[0].mxu0
    %2783 = vmatprep.mubr.bf16.mxu0 0
    %2784 = vmatmul.mubr.bf16.gmra.mrb[0].mxu0 %v2675
    %v2785 = vpop.f32.mrb[0].mxu0
    %v2786 = vadd.f32 0.0, %v2785
    %v2787 = vpop.f32.mrb[0].mxu0
    %v2788 = vpop.f32.mrb[0].mxu0
    %v2789 = vadd.f32 0.0, %v2788
    %v2790 = vpop.f32.mrb[0].mxu0
    %2791 = vmatprep.mubr.bf16.mxu0 0
    %2792 = vmatmul.mubr.bf16.gmra.mrb[0].mxu0 %v2678
    %v2793 = vpop.f32.mrb[0].mxu0
    %v2794 = vadd.f32 0.0, %v2793
    %v2795 = vpop.f32.mrb[0].mxu0
    %v2796 = vpop.f32.mrb[0].mxu0
    %v2797 = vadd.f32 0.0, %v2796
    %v2798 = vpop.f32.mrb[0].mxu0
    %2799 = vdwg.mxu0
    %v2800 = vadd.f32 %v2589, %v2715
    %v2801 = vadd.f32 %v2590, %v2717
    %v2802 = vadd.f32 %v2591, %v2778
    %v2803 = vadd.f32 %v2592, %v2719
    %v2804 = vadd.f32 %v2593, %v2721
    %v2805 = vadd.f32 %v2594, %v2781
    %v2806 = vadd.f32 %v2595, %v2725
    %v2807 = vadd.f32 %v2596, %v2727
    %v2808 = vadd.f32 %v2597, %v2786
    %v2809 = vadd.f32 %v2598, %v2729
    %v2810 = vadd.f32 %v2599, %v2731
    %v2811 = vadd.f32 %v2600, %v2789
    %v2812 = vadd.f32 %v2601, %v2735
    %v2813 = vadd.f32 %v2602, %v2737
    %v2814 = vadd.f32 %v2603, %v2794
    %v2815 = vadd.f32 %v2604, %v2739
    %v2816 = vadd.f32 %v2605, %v2741
    %v2817 = vadd.f32 %v2606, %v2797
    %v2818 = vld [vmem:[%s15] sm:$0x3]
    %2831 = vrot.lane.b32.xlu0 %v2801, 64
    %v2832 = vpop.permute.xlu0 %2831
    %2833 = vrot.lane.b32.xlu0 %v2802, 64
    %v2834 = vpop.permute.xlu0 %2833
    %2835 = vrot.lane.b32.xlu0 %v2804, 64
    %v2836 = vpop.permute.xlu0 %2835
    %2837 = vrot.lane.b32.xlu0 %v2805, 64
    %v2838 = vpop.permute.xlu0 %2837
    %2839 = vrot.lane.b32.xlu0 %v2807, 64
    %v2840 = vpop.permute.xlu0 %2839
    %2841 = vrot.lane.b32.xlu0 %v2808, 64
    %v2842 = vpop.permute.xlu0 %2841
    %2843 = vrot.lane.b32.xlu0 %v2810, 64
    %v2844 = vpop.permute.xlu0 %2843
    %2845 = vrot.lane.b32.xlu0 %v2811, 64
    %v2846 = vpop.permute.xlu0 %2845
    %2847 = vrot.lane.b32.xlu0 %v2813, 64
    %v2848 = vpop.permute.xlu0 %2847
    %2849 = vrot.lane.b32.xlu0 %v2814, 64
    %v2850 = vpop.permute.xlu0 %2849
    %2851 = vrot.lane.b32.xlu0 %v2816, 64
    %v2852 = vpop.permute.xlu0 %2851
    %2853 = vrot.lane.b32.xlu0 %v2817, 64
    %v2854 = vpop.permute.xlu0 %2853
    %v2855 = vsel %vm1112, %v2832, %v2834
    %v2856 = vsel %vm1112, %v2836, %v2838
    %v2857 = vsel %vm1112, %v2840, %v2842
    %v2858 = vsel %vm1112, %v2844, %v2846
    %v2859 = vsel %vm1112, %v2848, %v2850
    %v2860 = vsel %vm1112, %v2852, %v2854
    %v2873 = vmax.f32 %v2800, %v2855
    %v2874 = vmax.f32 %v2801, %v2834
    %v2875 = vmax.f32 %v2803, %v2856
    %v2876 = vmax.f32 %v2804, %v2838
    %v2877 = vmax.f32 %v2806, %v2857
    %v2878 = vmax.f32 %v2807, %v2842
    %v2879 = vmax.f32 %v2809, %v2858
    %v2880 = vmax.f32 %v2810, %v2846
    %v2881 = vmax.f32 %v2812, %v2859
    %v2882 = vmax.f32 %v2813, %v2850
    %v2883 = vmax.f32 %v2815, %v2860
    %v2884 = vmax.f32 %v2816, %v2854
    %v2886 = vlaneseq
    %v2887 = vshrl.u32 %v2886, 7
    %v2888 = vsub.s32 0, %v2887
    %v2889 = vrot.slane %v2818, %v2888
    %v2890 = vlaneseq
    %v2891 = vshrl.u32 %v2890, 7
    %v2892 = vsub.s32 1, %v2891
    %v2893 = vrot.slane %v2818, %v2892
    %v2896 = vadd.f32 %v2873, %v2889
    %v2897 = vadd.f32 %v2874, %v2893
    %v2898 = vadd.f32 %v2875, %v2889
    %v2899 = vadd.f32 %v2876, %v2893
    %v2900 = vadd.f32 %v2877, %v2889
    %v2901 = vadd.f32 %v2878, %v2893
    %v2902 = vadd.f32 %v2879, %v2889
    %v2903 = vadd.f32 %v2880, %v2893
    %v2904 = vadd.f32 %v2881, %v2889
    %v2905 = vadd.f32 %v2882, %v2893
    %v2906 = vadd.f32 %v2883, %v2889
    %v2907 = vadd.f32 %v2884, %v2893
    %v2908 = vmax.f32 %v2896, 0.0
    %v2909 = vmax.f32 %v2897, 0.0
    %v2910 = vmax.f32 %v2898, 0.0
    %v2911 = vmax.f32 %v2899, 0.0
    %v2912 = vmax.f32 %v2900, 0.0
    %v2913 = vmax.f32 %v2901, 0.0
    %v2914 = vmax.f32 %v2902, 0.0
    %v2915 = vmax.f32 %v2903, 0.0
    %v2916 = vmax.f32 %v2904, 0.0
    %v2917 = vmax.f32 %v2905, 0.0
    %v2918 = vmax.f32 %v2906, 0.0
    %v2919 = vmax.f32 %v2907, 0.0
    %v2920 = vld [vmem:[%s17] sm:$0xf]
    %v2921 = vld [vmem:[%s17 + $0x4] sm:$0xf]
    %v2922 = vld [vmem:[%s17 + $0x8] sm:$0xf]
    %v2923 = vld [vmem:[%s17 + $0xc] sm:$0xf]
    %v2924 = vld [vmem:[%s17 + $0x10] sm:$0xf]
    %v2925 = vld [vmem:[%s17 + $0x14] sm:$0xf]
    %v2926 = vld [vmem:[%s17 + $0x18] sm:$0xf]
    %v2927 = vld [vmem:[%s17 + $0x1c] sm:$0x3]
    %v2928 = vpack.c.bf16 %v2910, %v2908
    %v2929 = vpack.c.bf16 %v2911, %v2909
    %v2930 = vpack.c.bf16 %v2914, %v2912
    %v2931 = vpack.c.bf16 %v2915, %v2913
    %v2932 = vpack.c.bf16 %v2918, %v2916
    %v2933 = vpack.c.bf16 %v2919, %v2917
    %v2942 = vunpack.c.l.b16 %v2920
    %v2943 = vunpack.c.l.b16 %v2921
    %v2944 = vunpack.c.l.b16 %v2922
    %v2945 = vunpack.c.l.b16 %v2923
    %v2946 = vunpack.c.l.b16 %v2924
    %v2947 = vunpack.c.l.b16 %v2925
    %v2948 = vunpack.c.l.b16 %v2926
    %v2949 = vunpack.c.l.b16 %v2927
    %v2950 = vpack.c.b16 %v2943, %v2942
    %v2951 = vpack.c.b16 %v2945, %v2944
    %v2952 = vpack.c.b16 %v2947, %v2946
    %v2953 = vpack.c.b16 %v2949, %v2948
    %v2955 = vsel %vm1456, %v2950, 0
    %v2958 = vsel %vm1456, %v2951, 0
    %v2961 = vsel %vm1456, %v2952, 0
    %v2964 = vsel %vm1456, %v2953, 0
    %2966 = vmatprep.subr.bf16.mxu0 %v2929
    %2967 = vmatpush1.bf16.msra.mxu0 %v2928
    %2968 = vmatprep.subr.bf16.mxu0 %v2931
    %2969 = vmatpush1.bf16.msra.mxu0 %v2930
    %2970 = vmatprep.subr.bf16.mxu0 %v2933
    %2971 = vmatpush1.bf16.msra.mxu0 %v2932
    %2972 = vmatprep.subr.bf16.mxu0 0
    %2973 = vmatpush1.bf16.msra.mxu0 0
    %2974 = vmatprep.subr.bf16.mxu0 0
    %2975 = vmatpush1.bf16.msra.mxu0 0
    %2976 = vmatprep.subr.bf16.mxu0 0
    %2977 = vmatpush1.bf16.msra.mxu0 0
    %2978 = vmatprep.subr.bf16.mxu0 0
    %2979 = vmatpush1.bf16.msra.mxu0 0
    %2980 = vmatprep.subr.bf16.mxu0 0
    %2981 = vmatpush1.bf16.msra.mxu0 0
    %2982 = vmatprep.subr.bf16.mxu0 0
    %2983 = vmatpush1.bf16.msra.mxu0 0
    %2984 = vmatprep.subr.bf16.mxu0 0
    %2985 = vmatpush1.bf16.msra.mxu0 0
    %2986 = vmatprep.subr.bf16.mxu0 0
    %2987 = vmatpush1.bf16.msra.mxu0 0
    %2988 = vmatprep.subr.bf16.mxu0 0
    %2989 = vmatpush1.bf16.msra.mxu0 0
    %2990 = vmatprep.subr.bf16.mxu0 0
    %2991 = vmatpush1.bf16.msra.mxu0 0
    %2992 = vmatprep.subr.bf16.mxu0 0
    %2993 = vmatpush1.bf16.msra.mxu0 0
    %2994 = vmatprep.subr.bf16.mxu0 0
    %2995 = vmatpush1.bf16.msra.mxu0 0
    %2996 = vmatprep.subr.bf16.mxu0 0
    %2997 = vmatpush1.bf16.msra.mxu0 0
    %2998 = vmatprep.mubr.bf16.mxu0 0
    %2999 = vmatmul.mubr.bf16.gmra.mrb[0].mxu0 %v2955
    %v3000 = vpop.f32.mrb[0].mxu0
    %v3001 = vadd.f32 0.0, %v3000
    %v3002 = vpop.f32.mrb[0].mxu0
    %v3003 = vadd.f32 0.0, %v3002
    %v3004 = vpop.f32.mrb[0].mxu0
    %v3005 = vadd.f32 0.0, %v3004
    %v3006 = vpop.f32.mrb[0].mxu0
    %v3007 = vadd.f32 0.0, %v3006
    %3008 = vmatprep.mubr.bf16.mxu0 0
    %3009 = vmatmul.mubr.bf16.gmra.mrb[0].mxu0 %v2958
    %v3010 = vpop.f32.mrb[0].mxu0
    %v3011 = vadd.f32 0.0, %v3010
    %v3012 = vpop.f32.mrb[0].mxu0
    %v3013 = vadd.f32 0.0, %v3012
    %v3014 = vpop.f32.mrb[0].mxu0
    %v3015 = vadd.f32 0.0, %v3014
    %v3016 = vpop.f32.mrb[0].mxu0
    %v3017 = vadd.f32 0.0, %v3016
    %3018 = vmatprep.mubr.bf16.mxu0 0
    %3019 = vmatmul.mubr.bf16.gmra.mrb[0].mxu0 %v2961
    %v3020 = vpop.f32.mrb[0].mxu0
    %v3021 = vadd.f32 0.0, %v3020
    %v3022 = vpop.f32.mrb[0].mxu0
    %v3023 = vadd.f32 0.0, %v3022
    %v3024 = vpop.f32.mrb[0].mxu0
    %v3025 = vadd.f32 0.0, %v3024
    %v3026 = vpop.f32.mrb[0].mxu0
    %v3027 = vadd.f32 0.0, %v3026
    %3028 = vmatprep.mubr.bf16.mxu0 0
    %3029 = vmatmul.mubr.bf16.gmra.mrb[0].mxu0 %v2964
    %v3030 = vpop.f32.mrb[0].mxu0
    %v3031 = vadd.f32 0.0, %v3030
    %v3032 = vpop.f32.mrb[0].mxu0
    %v3033 = vadd.f32 0.0, %v3032
    %v3034 = vpop.f32.mrb[0].mxu0
    %v3035 = vadd.f32 0.0, %v3034
    %v3036 = vpop.f32.mrb[0].mxu0
    %v3037 = vadd.f32 0.0, %v3036
    %3038 = vdwg.mxu0
    %v3039 = vld [vmem:[%s19] sm:$0xff]
    %v3040 = vld [vmem:[%s19 + $0x8] sm:$0xff]
    %v3041 = vld [vmem:[%s19 + $0x10] sm:$0xff]
    %v3042 = vld [vmem:[%s19 + $0x18] sm:$0xff]
    %v3043 = vld [vmem:[%s19 + $0x20] sm:$0xff]
    %v3044 = vld [vmem:[%s19 + $0x28] sm:$0xff]
    %v3045 = vld [vmem:[%s19 + $0x30] sm:$0xff]
    %v3046 = vld [vmem:[%s19 + $0x38] sm:$0xff]
    %v3047 = vld [vmem:[%s19 + $0x40] sm:$0xff]
    %v3048 = vld [vmem:[%s19 + $0x48] sm:$0xff]
    %v3049 = vld [vmem:[%s19 + $0x50] sm:$0xff]
    %v3050 = vld [vmem:[%s19 + $0x58] sm:$0xff]
    %v3051 = vld [vmem:[%s19 + $0x60] sm:$0xff]
    %v3052 = vld [vmem:[%s19 + $0x68] sm:$0xff]
    %v3053 = vld [vmem:[%s19 + $0x70] sm:$0xff]
    %v3054 = vld [vmem:[%s19 + $0x78] sm:$0xff]
    %v3055 = vld [vmem:[%s19 + $0x80] sm:$0xff]
    %v3056 = vld [vmem:[%s19 + $0x88] sm:$0xff]
    %v3057 = vld [vmem:[%s19 + $0x90] sm:$0xff]
    %v3058 = vld [vmem:[%s19 + $0x98] sm:$0xff]
    %v3059 = vld [vmem:[%s19 + $0xa0] sm:$0xff]
    %v3060 = vld [vmem:[%s19 + $0xa8] sm:$0xff]
    %v3061 = vld [vmem:[%s19 + $0xb0] sm:$0xff]
    %v3062 = vld [vmem:[%s19 + $0xb8] sm:$0xff]
    %v3063 = vpack.c.bf16 %v3005, %v3001
    %v3064 = vpack.c.bf16 %v3007, %v3003
    %s3065 = scalar_lea.vmem %s19, 192
    %v3066 = vld [vmem:[%s3065] sm:$0xff]
    %v3067 = vld [vmem:[%s3065 + $0x8] sm:$0xff]
    %v3068 = vld [vmem:[%s3065 + $0x10] sm:$0xff]
    %v3069 = vld [vmem:[%s3065 + $0x18] sm:$0xff]
    %v3070 = vld [vmem:[%s3065 + $0x20] sm:$0xff]
    %v3071 = vld [vmem:[%s3065 + $0x28] sm:$0xff]
    %v3072 = vld [vmem:[%s3065 + $0x30] sm:$0xff]
    %v3073 = vld [vmem:[%s3065 + $0x38] sm:$0xff]
    %v3074 = vld [vmem:[%s3065 + $0x40] sm:$0xff]
    %v3075 = vld [vmem:[%s3065 + $0x48] sm:$0xff]
    %v3076 = vld [vmem:[%s3065 + $0x50] sm:$0xff]
    %v3077 = vld [vmem:[%s3065 + $0x58] sm:$0xff]
    %v3078 = vld [vmem:[%s3065 + $0x60] sm:$0xff]
    %v3079 = vld [vmem:[%s3065 + $0x68] sm:$0xff]
    %v3080 = vld [vmem:[%s3065 + $0x70] sm:$0xff]
    %v3081 = vld [vmem:[%s3065 + $0x78] sm:$0xff]
    %v3082 = vld [vmem:[%s3065 + $0x80] sm:$0xff]
    %v3083 = vld [vmem:[%s3065 + $0x88] sm:$0xff]
    %v3084 = vld [vmem:[%s3065 + $0x90] sm:$0xff]
    %v3085 = vld [vmem:[%s3065 + $0x98] sm:$0xff]
    %v3086 = vld [vmem:[%s3065 + $0xa0] sm:$0xff]
    %v3087 = vld [vmem:[%s3065 + $0xa8] sm:$0xff]
    %v3088 = vld [vmem:[%s3065 + $0xb0] sm:$0xff]
    %v3089 = vld [vmem:[%s3065 + $0xb8] sm:$0xff]
    %v3090 = vpack.c.bf16 %v3011, %v3005
    %v3091 = vpack.c.bf16 %v3013, %v3007
    %v3094 = vrot.slane %v3090, 2
    %v3095 = vrot.slane %v3091, 2
    %v3121 = vunpack.c.l.b16 %v3066
    %v3122 = vunpack.c.h.b16 %v3066
    %v3123 = vunpack.c.l.b16 %v3067
    %v3124 = vunpack.c.h.b16 %v3067
    %v3125 = vunpack.c.l.b16 %v3068
    %v3126 = vunpack.c.h.b16 %v3068
    %v3127 = vunpack.c.l.b16 %v3069
    %v3128 = vunpack.c.h.b16 %v3069
    %v3129 = vunpack.c.l.b16 %v3070
    %v3130 = vunpack.c.h.b16 %v3070
    %v3131 = vunpack.c.l.b16 %v3071
    %v3132 = vunpack.c.h.b16 %v3071
    %v3133 = vunpack.c.l.b16 %v3072
    %v3134 = vunpack.c.h.b16 %v3072
    %v3135 = vunpack.c.l.b16 %v3073
    %v3136 = vunpack.c.h.b16 %v3073
    %v3137 = vunpack.c.l.b16 %v3074
    %v3138 = vunpack.c.h.b16 %v3074
    %v3139 = vunpack.c.l.b16 %v3075
    %v3140 = vunpack.c.h.b16 %v3075
    %v3141 = vunpack.c.l.b16 %v3076
    %v3142 = vunpack.c.h.b16 %v3076
    %v3143 = vunpack.c.l.b16 %v3077
    %v3144 = vunpack.c.h.b16 %v3077
    %v3145 = vunpack.c.l.b16 %v3078
    %v3146 = vunpack.c.h.b16 %v3078
    %v3147 = vunpack.c.l.b16 %v3079
    %v3148 = vunpack.c.h.b16 %v3079
    %v3149 = vunpack.c.l.b16 %v3080
    %v3150 = vunpack.c.h.b16 %v3080
    %v3151 = vunpack.c.l.b16 %v3081
    %v3152 = vunpack.c.h.b16 %v3081
    %v3153 = vunpack.c.l.b16 %v3082
    %v3154 = vunpack.c.h.b16 %v3082
    %v3155 = vunpack.c.l.b16 %v3083
    %v3156 = vunpack.c.h.b16 %v3083
    %v3157 = vunpack.c.l.b16 %v3084
    %v3158 = vunpack.c.h.b16 %v3084
    %v3159 = vunpack.c.l.b16 %v3085
    %v3160 = vunpack.c.h.b16 %v3085
    %v3161 = vunpack.c.l.b16 %v3086
    %v3162 = vunpack.c.h.b16 %v3086
    %v3163 = vunpack.c.l.b16 %v3087
    %v3164 = vunpack.c.h.b16 %v3087
    %v3165 = vunpack.c.l.b16 %v3088
    %v3166 = vunpack.c.h.b16 %v3088
    %v3167 = vunpack.c.l.b16 %v3089
    %v3168 = vunpack.c.h.b16 %v3089
    %v3169 = vpack.c.b16 %v3123, %v3121
    %v3170 = vpack.c.b16 %v3124, %v3122
    %v3171 = vpack.c.b16 %v3127, %v3125
    %v3172 = vpack.c.b16 %v3128, %v3126
    %v3173 = vpack.c.b16 %v3131, %v3129
    %v3174 = vpack.c.b16 %v3132, %v3130
    %v3175 = vpack.c.b16 %v3135, %v3133
    %v3176 = vpack.c.b16 %v3136, %v3134
    %v3177 = vpack.c.b16 %v3139, %v3137
    %v3178 = vpack.c.b16 %v3140, %v3138
    %v3179 = vpack.c.b16 %v3143, %v3141
    %v3180 = vpack.c.b16 %v3144, %v3142
    %v3181 = vpack.c.b16 %v3147, %v3145
    %v3182 = vpack.c.b16 %v3148, %v3146
    %v3183 = vpack.c.b16 %v3151, %v3149
    %v3184 = vpack.c.b16 %v3152, %v3150
    %v3185 = vpack.c.b16 %v3155, %v3153
    %v3186 = vpack.c.b16 %v3156, %v3154
    %v3187 = vpack.c.b16 %v3159, %v3157
    %v3188 = vpack.c.b16 %v3160, %v3158
    %v3189 = vpack.c.b16 %v3163, %v3161
    %v3190 = vpack.c.b16 %v3164, %v3162
    %v3191 = vpack.c.b16 %v3167, %v3165
    %v3192 = vpack.c.b16 %v3168, %v3166
    %v3218 = vsel %vm1112, %v3095, 0
    %3220 = vmatprep.subr.bf16.mxu0 %v3170
    %3221 = vmatpush1.bf16.msra.mxu0 %v3169
    %3222 = vmatprep.subr.bf16.mxu0 %v3172
    %3223 = vmatpush1.bf16.msra.mxu0 %v3171
    %3224 = vmatprep.subr.bf16.mxu0 %v3174
    %3225 = vmatpush1.bf16.msra.mxu0 %v3173
    %3226 = vmatprep.subr.bf16.mxu0 %v3176
    %3227 = vmatpush1.bf16.msra.mxu0 %v3175
    %3228 = vmatprep.subr.bf16.mxu0 %v3178
    %3229 = vmatpush1.bf16.msra.mxu0 %v3177
    %3230 = vmatprep.subr.bf16.mxu0 %v3180
    %3231 = vmatpush1.bf16.msra.mxu0 %v3179
    %3232 = vmatprep.subr.bf16.mxu0 %v3182
    %3233 = vmatpush1.bf16.msra.mxu0 %v3181
    %3234 = vmatprep.subr.bf16.mxu0 %v3184
    %3235 = vmatpush1.bf16.msra.mxu0 %v3183
    %3236 = vmatprep.subr.bf16.mxu0 %v3186
    %3237 = vmatpush1.bf16.msra.mxu0 %v3185
    %3238 = vmatprep.subr.bf16.mxu0 %v3188
    %3239 = vmatpush1.bf16.msra.mxu0 %v3187
    %3240 = vmatprep.subr.bf16.mxu0 %v3190
    %3241 = vmatpush1.bf16.msra.mxu0 %v3189
    %3242 = vmatprep.subr.bf16.mxu0 %v3192
    %3243 = vmatpush1.bf16.msra.mxu0 %v3191
    %3244 = vmatprep.subr.bf16.mxu0 0
    %3245 = vmatpush1.bf16.msra.mxu0 0
    %3246 = vmatprep.subr.bf16.mxu0 0
    %3247 = vmatpush1.bf16.msra.mxu0 0
    %3248 = vmatprep.subr.bf16.mxu0 0
    %3249 = vmatpush1.bf16.msra.mxu0 0
    %3250 = vmatprep.subr.bf16.mxu0 0
    %3251 = vmatpush1.bf16.msra.mxu0 0
    %3252 = vmatprep.mubr.bf16.mxu0 %v3218
    %3253 = vmatmul.mubr.bf16.gmra.mrb[0].mxu0 %v3094
    %v3254 = vpop.f32.mrb[0].mxu0
    %v3255 = vadd.f32 0.0, %v3254
    %v3256 = vpop.f32.mrb[0].mxu0
    %v3257 = vadd.f32 0.0, %v3256
    %v3258 = vpop.f32.mrb[0].mxu0
    %v3259 = vadd.f32 0.0, %v3258
    %v3260 = vpop.f32.mrb[0].mxu0
    %v3261 = vadd.f32 0.0, %v3260
    %3262 = vdwg.mxu0
    %v3287 = vunpack.c.l.b16 %v3039
    %v3288 = vunpack.c.h.b16 %v3039
    %v3289 = vunpack.c.l.b16 %v3040
    %v3290 = vunpack.c.h.b16 %v3040
    %v3291 = vunpack.c.l.b16 %v3041
    %v3292 = vunpack.c.h.b16 %v3041
    %v3293 = vunpack.c.l.b16 %v3042
    %v3294 = vunpack.c.h.b16 %v3042
    %v3295 = vunpack.c.l.b16 %v3043
    %v3296 = vunpack.c.h.b16 %v3043
    %v3297 = vunpack.c.l.b16 %v3044
    %v3298 = vunpack.c.h.b16 %v3044
    %v3299 = vunpack.c.l.b16 %v3045
    %v3300 = vunpack.c.h.b16 %v3045
    %v3301 = vunpack.c.l.b16 %v3046
    %v3302 = vunpack.c.h.b16 %v3046
    %v3303 = vunpack.c.l.b16 %v3047
    %v3304 = vunpack.c.h.b16 %v3047
    %v3305 = vunpack.c.l.b16 %v3048
    %v3306 = vunpack.c.h.b16 %v3048
    %v3307 = vunpack.c.l.b16 %v3049
    %v3308 = vunpack.c.h.b16 %v3049
    %v3309 = vunpack.c.l.b16 %v3050
    %v3310 = vunpack.c.h.b16 %v3050
    %v3311 = vunpack.c.l.b16 %v3051
    %v3312 = vunpack.c.h.b16 %v3051
    %v3313 = vunpack.c.l.b16 %v3052
    %v3314 = vunpack.c.h.b16 %v3052
    %v3315 = vunpack.c.l.b16 %v3053
    %v3316 = vunpack.c.h.b16 %v3053
    %v3317 = vunpack.c.l.b16 %v3054
    %v3318 = vunpack.c.h.b16 %v3054
    %v3319 = vunpack.c.l.b16 %v3055
    %v3320 = vunpack.c.h.b16 %v3055
    %v3321 = vunpack.c.l.b16 %v3056
    %v3322 = vunpack.c.h.b16 %v3056
    %v3323 = vunpack.c.l.b16 %v3057
    %v3324 = vunpack.c.h.b16 %v3057
    %v3325 = vunpack.c.l.b16 %v3058
    %v3326 = vunpack.c.h.b16 %v3058
    %v3327 = vunpack.c.l.b16 %v3059
    %v3328 = vunpack.c.h.b16 %v3059
    %v3329 = vunpack.c.l.b16 %v3060
    %v3330 = vunpack.c.h.b16 %v3060
    %v3331 = vunpack.c.l.b16 %v3061
    %v3332 = vunpack.c.h.b16 %v3061
    %v3333 = vunpack.c.l.b16 %v3062
    %v3334 = vunpack.c.h.b16 %v3062
    %v3335 = vpack.c.b16 %v3289, %v3287
    %v3336 = vpack.c.b16 %v3290, %v3288
    %v3337 = vpack.c.b16 %v3293, %v3291
    %v3338 = vpack.c.b16 %v3294, %v3292
    %v3339 = vpack.c.b16 %v3297, %v3295
    %v3340 = vpack.c.b16 %v3298, %v3296
    %v3341 = vpack.c.b16 %v3301, %v3299
    %v3342 = vpack.c.b16 %v3302, %v3300
    %v3343 = vpack.c.b16 %v3305, %v3303
    %v3344 = vpack.c.b16 %v3306, %v3304
    %v3345 = vpack.c.b16 %v3309, %v3307
    %v3346 = vpack.c.b16 %v3310, %v3308
    %v3347 = vpack.c.b16 %v3313, %v3311
    %v3348 = vpack.c.b16 %v3314, %v3312
    %v3349 = vpack.c.b16 %v3317, %v3315
    %v3350 = vpack.c.b16 %v3318, %v3316
    %v3351 = vpack.c.b16 %v3321, %v3319
    %v3352 = vpack.c.b16 %v3322, %v3320
    %v3353 = vpack.c.b16 %v3325, %v3323
    %v3354 = vpack.c.b16 %v3326, %v3324
    %v3355 = vpack.c.b16 %v3329, %v3327
    %v3356 = vpack.c.b16 %v3330, %v3328
    %v3357 = vpack.c.b16 %v3333, %v3331
    %v3358 = vpack.c.b16 %v3334, %v3332
    %v3384 = vsel %vm1112, %v3064, 0
    %3386 = vmatprep.subr.bf16.mxu0 %v3336
    %3387 = vmatpush1.bf16.msra.mxu0 %v3335
    %3388 = vmatprep.subr.bf16.mxu0 %v3338
    %3389 = vmatpush1.bf16.msra.mxu0 %v3337
    %3390 = vmatprep.subr.bf16.mxu0 %v3340
    %3391 = vmatpush1.bf16.msra.mxu0 %v3339
    %3392 = vmatprep.subr.bf16.mxu0 %v3342
    %3393 = vmatpush1.bf16.msra.mxu0 %v3341
    %3394 = vmatprep.subr.bf16.mxu0 %v3344
    %3395 = vmatpush1.bf16.msra.mxu0 %v3343
    %3396 = vmatprep.subr.bf16.mxu0 %v3346
    %3397 = vmatpush1.bf16.msra.mxu0 %v3345
    %3398 = vmatprep.subr.bf16.mxu0 %v3348
    %3399 = vmatpush1.bf16.msra.mxu0 %v3347
    %3400 = vmatprep.subr.bf16.mxu0 %v3350
    %3401 = vmatpush1.bf16.msra.mxu0 %v3349
    %3402 = vmatprep.subr.bf16.mxu0 %v3352
    %3403 = vmatpush1.bf16.msra.mxu0 %v3351
    %3404 = vmatprep.subr.bf16.mxu0 %v3354
    %3405 = vmatpush1.bf16.msra.mxu0 %v3353
    %3406 = vmatprep.subr.bf16.mxu0 %v3356
    %3407 = vmatpush1.bf16.msra.mxu0 %v3355
    %3408 = vmatprep.subr.bf16.mxu0 %v3358
    %3409 = vmatpush1.bf16.msra.mxu0 %v3357
    %3410 = vmatprep.subr.bf16.mxu0 0
    %3411 = vmatpush1.bf16.msra.mxu0 0
    %3412 = vmatprep.subr.bf16.mxu0 0
    %3413 = vmatpush1.bf16.msra.mxu0 0
    %3414 = vmatprep.subr.bf16.mxu0 0
    %3415 = vmatpush1.bf16.msra.mxu0 0
    %3416 = vmatprep.subr.bf16.mxu0 0
    %3417 = vmatpush1.bf16.msra.mxu0 0
    %3418 = vmatprep.mubr.bf16.mxu0 %v3384
    %3419 = vmatmul.mubr.bf16.gmra.mrb[0].mxu0 %v3063
    %v3420 = vpop.f32.mrb[0].mxu0
    %v3421 = vadd.f32 %v3255, %v3420
    %v3422 = vpop.f32.mrb[0].mxu0
    %v3423 = vadd.f32 %v3257, %v3422
    %v3424 = vpop.f32.mrb[0].mxu0
    %v3425 = vadd.f32 %v3259, %v3424
    %v3426 = vpop.f32.mrb[0].mxu0
    %v3427 = vadd.f32 %v3261, %v3426
    %3428 = vdwg.mxu0
    %s3429 = scalar_lea.vmem %s19, 384
    %v3430 = vld [vmem:[%s3429] sm:$0xff]
    %v3431 = vld [vmem:[%s3429 + $0x8] sm:$0xff]
    %v3432 = vld [vmem:[%s3429 + $0x10] sm:$0xff]
    %v3433 = vld [vmem:[%s3429 + $0x18] sm:$0xff]
    %v3434 = vld [vmem:[%s3429 + $0x20] sm:$0xff]
    %v3435 = vld [vmem:[%s3429 + $0x28] sm:$0xff]
    %v3436 = vld [vmem:[%s3429 + $0x30] sm:$0xff]
    %v3437 = vld [vmem:[%s3429 + $0x38] sm:$0xff]
    %v3438 = vld [vmem:[%s3429 + $0x40] sm:$0xff]
    %v3439 = vld [vmem:[%s3429 + $0x48] sm:$0xff]
    %v3440 = vld [vmem:[%s3429 + $0x50] sm:$0xff]
    %v3441 = vld [vmem:[%s3429 + $0x58] sm:$0xff]
    %v3442 = vld [vmem:[%s3429 + $0x60] sm:$0xff]
    %v3443 = vld [vmem:[%s3429 + $0x68] sm:$0xff]
    %v3444 = vld [vmem:[%s3429 + $0x70] sm:$0xff]
    %v3445 = vld [vmem:[%s3429 + $0x78] sm:$0xff]
    %v3446 = vld [vmem:[%s3429 + $0x80] sm:$0xff]
    %v3447 = vld [vmem:[%s3429 + $0x88] sm:$0xff]
    %v3448 = vld [vmem:[%s3429 + $0x90] sm:$0xff]
    %v3449 = vld [vmem:[%s3429 + $0x98] sm:$0xff]
    %v3450 = vld [vmem:[%s3429 + $0xa0] sm:$0xff]
    %v3451 = vld [vmem:[%s3429 + $0xa8] sm:$0xff]
    %v3452 = vld [vmem:[%s3429 + $0xb0] sm:$0xff]
    %v3453 = vld [vmem:[%s3429 + $0xb8] sm:$0xff]
    %v3454 = vpack.c.bf16 %v3021, %v3015
    %v3455 = vpack.c.bf16 %v3023, %v3017
    %v3480 = vunpack.c.l.b16 %v3430
    %v3481 = vunpack.c.h.b16 %v3430
    %v3482 = vunpack.c.l.b16 %v3431
    %v3483 = vunpack.c.h.b16 %v3431
    %v3484 = vunpack.c.l.b16 %v3432
    %v3485 = vunpack.c.h.b16 %v3432
    %v3486 = vunpack.c.l.b16 %v3433
    %v3487 = vunpack.c.h.b16 %v3433
    %v3488 = vunpack.c.l.b16 %v3434
    %v3489 = vunpack.c.h.b16 %v3434
    %v3490 = vunpack.c.l.b16 %v3435
    %v3491 = vunpack.c.h.b16 %v3435
    %v3492 = vunpack.c.l.b16 %v3436
    %v3493 = vunpack.c.h.b16 %v3436
    %v3494 = vunpack.c.l.b16 %v3437
    %v3495 = vunpack.c.h.b16 %v3437
    %v3496 = vunpack.c.l.b16 %v3438
    %v3497 = vunpack.c.h.b16 %v3438
    %v3498 = vunpack.c.l.b16 %v3439
    %v3499 = vunpack.c.h.b16 %v3439
    %v3500 = vunpack.c.l.b16 %v3440
    %v3501 = vunpack.c.h.b16 %v3440
    %v3502 = vunpack.c.l.b16 %v3441
    %v3503 = vunpack.c.h.b16 %v3441
    %v3504 = vunpack.c.l.b16 %v3442
    %v3505 = vunpack.c.h.b16 %v3442
    %v3506 = vunpack.c.l.b16 %v3443
    %v3507 = vunpack.c.h.b16 %v3443
    %v3508 = vunpack.c.l.b16 %v3444
    %v3509 = vunpack.c.h.b16 %v3444
    %v3510 = vunpack.c.l.b16 %v3445
    %v3511 = vunpack.c.h.b16 %v3445
    %v3512 = vunpack.c.l.b16 %v3446
    %v3513 = vunpack.c.h.b16 %v3446
    %v3514 = vunpack.c.l.b16 %v3447
    %v3515 = vunpack.c.h.b16 %v3447
    %v3516 = vunpack.c.l.b16 %v3448
    %v3517 = vunpack.c.h.b16 %v3448
    %v3518 = vunpack.c.l.b16 %v3449
    %v3519 = vunpack.c.h.b16 %v3449
    %v3520 = vunpack.c.l.b16 %v3450
    %v3521 = vunpack.c.h.b16 %v3450
    %v3522 = vunpack.c.l.b16 %v3451
    %v3523 = vunpack.c.h.b16 %v3451
    %v3524 = vunpack.c.l.b16 %v3452
    %v3525 = vunpack.c.h.b16 %v3452
    %v3526 = vunpack.c.l.b16 %v3453
    %v3527 = vunpack.c.h.b16 %v3453
    %v3528 = vpack.c.b16 %v3482, %v3480
    %v3529 = vpack.c.b16 %v3483, %v3481
    %v3530 = vpack.c.b16 %v3486, %v3484
    %v3531 = vpack.c.b16 %v3487, %v3485
    %v3532 = vpack.c.b16 %v3490, %v3488
    %v3533 = vpack.c.b16 %v3491, %v3489
    %v3534 = vpack.c.b16 %v3494, %v3492
    %v3535 = vpack.c.b16 %v3495, %v3493
    %v3536 = vpack.c.b16 %v3498, %v3496
    %v3537 = vpack.c.b16 %v3499, %v3497
    %v3538 = vpack.c.b16 %v3502, %v3500
    %v3539 = vpack.c.b16 %v3503, %v3501
    %v3540 = vpack.c.b16 %v3506, %v3504
    %v3541 = vpack.c.b16 %v3507, %v3505
    %v3542 = vpack.c.b16 %v3510, %v3508
    %v3543 = vpack.c.b16 %v3511, %v3509
    %v3544 = vpack.c.b16 %v3514, %v3512
    %v3545 = vpack.c.b16 %v3515, %v3513
    %v3546 = vpack.c.b16 %v3518, %v3516
    %v3547 = vpack.c.b16 %v3519, %v3517
    %v3548 = vpack.c.b16 %v3522, %v3520
    %v3549 = vpack.c.b16 %v3523, %v3521
    %v3550 = vpack.c.b16 %v3526, %v3524
    %v3551 = vpack.c.b16 %v3527, %v3525
    %v3577 = vsel %vm1112, %v3455, 0
    %3579 = vmatprep.subr.bf16.mxu0 %v3529
    %3580 = vmatpush1.bf16.msra.mxu0 %v3528
    %3581 = vmatprep.subr.bf16.mxu0 %v3531
    %3582 = vmatpush1.bf16.msra.mxu0 %v3530
    %3583 = vmatprep.subr.bf16.mxu0 %v3533
    %3584 = vmatpush1.bf16.msra.mxu0 %v3532
    %3585 = vmatprep.subr.bf16.mxu0 %v3535
    %3586 = vmatpush1.bf16.msra.mxu0 %v3534
    %3587 = vmatprep.subr.bf16.mxu0 %v3537
    %3588 = vmatpush1.bf16.msra.mxu0 %v3536
    %3589 = vmatprep.subr.bf16.mxu0 %v3539
    %3590 = vmatpush1.bf16.msra.mxu0 %v3538
    %3591 = vmatprep.subr.bf16.mxu0 %v3541
    %3592 = vmatpush1.bf16.msra.mxu0 %v3540
    %3593 = vmatprep.subr.bf16.mxu0 %v3543
    %3594 = vmatpush1.bf16.msra.mxu0 %v3542
    %3595 = vmatprep.subr.bf16.mxu0 %v3545
    %3596 = vmatpush1.bf16.msra.mxu0 %v3544
    %3597 = vmatprep.subr.bf16.mxu0 %v3547
    %3598 = vmatpush1.bf16.msra.mxu0 %v3546
    %3599 = vmatprep.subr.bf16.mxu0 %v3549
    %3600 = vmatpush1.bf16.msra.mxu0 %v3548
    %3601 = vmatprep.subr.bf16.mxu0 %v3551
    %3602 = vmatpush1.bf16.msra.mxu0 %v3550
    %3603 = vmatprep.subr.bf16.mxu0 0
    %3604 = vmatpush1.bf16.msra.mxu0 0
    %3605 = vmatprep.subr.bf16.mxu0 0
    %3606 = vmatpush1.bf16.msra.mxu0 0
    %3607 = vmatprep.subr.bf16.mxu0 0
    %3608 = vmatpush1.bf16.msra.mxu0 0
    %3609 = vmatprep.subr.bf16.mxu0 0
    %3610 = vmatpush1.bf16.msra.mxu0 0
    %3611 = vmatprep.mubr.bf16.mxu0 %v3577
    %3612 = vmatmul.mubr.bf16.gmra.mrb[0].mxu0 %v3454
    %v3613 = vpop.f32.mrb[0].mxu0
    %v3614 = vadd.f32 0.0, %v3613
    %v3615 = vpop.f32.mrb[0].mxu0
    %v3616 = vadd.f32 0.0, %v3615
    %v3617 = vpop.f32.mrb[0].mxu0
    %v3618 = vadd.f32 0.0, %v3617
    %v3619 = vpop.f32.mrb[0].mxu0
    %v3620 = vadd.f32 0.0, %v3619
    %3621 = vdwg.mxu0
    %v3622 = vadd.f32 %v3421, %v3614
    %v3623 = vadd.f32 %v3423, %v3616
    %v3624 = vadd.f32 %v3425, %v3618
    %v3625 = vadd.f32 %v3427, %v3620
    %s3626 = scalar_lea.vmem %s19, 576
    %v3627 = vld [vmem:[%s3626] sm:$0xff]
    %v3628 = vld [vmem:[%s3626 + $0x8] sm:$0xff]
    %v3629 = vld [vmem:[%s3626 + $0x10] sm:$0xff]
    %v3630 = vld [vmem:[%s3626 + $0x18] sm:$0xff]
    %v3631 = vld [vmem:[%s3626 + $0x20] sm:$0xff]
    %v3632 = vld [vmem:[%s3626 + $0x28] sm:$0xff]
    %v3633 = vld [vmem:[%s3626 + $0x30] sm:$0xff]
    %v3634 = vld [vmem:[%s3626 + $0x38] sm:$0xff]
    %v3635 = vld [vmem:[%s3626 + $0x40] sm:$0xff]
    %v3636 = vld [vmem:[%s3626 + $0x48] sm:$0xff]
    %v3637 = vld [vmem:[%s3626 + $0x50] sm:$0xff]
    %v3638 = vld [vmem:[%s3626 + $0x58] sm:$0xff]
    %v3639 = vld [vmem:[%s3626 + $0x60] sm:$0xff]
    %v3640 = vld [vmem:[%s3626 + $0x68] sm:$0xff]
    %v3641 = vld [vmem:[%s3626 + $0x70] sm:$0xff]
    %v3642 = vld [vmem:[%s3626 + $0x78] sm:$0xff]
    %v3643 = vld [vmem:[%s3626 + $0x80] sm:$0xff]
    %v3644 = vld [vmem:[%s3626 + $0x88] sm:$0xff]
    %v3645 = vld [vmem:[%s3626 + $0x90] sm:$0xff]
    %v3646 = vld [vmem:[%s3626 + $0x98] sm:$0xff]
    %v3647 = vld [vmem:[%s3626 + $0xa0] sm:$0xff]
    %v3648 = vld [vmem:[%s3626 + $0xa8] sm:$0xff]
    %v3649 = vld [vmem:[%s3626 + $0xb0] sm:$0xff]
    %v3650 = vld [vmem:[%s3626 + $0xb8] sm:$0xff]
    %v3651 = vpack.c.bf16 %v3025, %v3021
    %v3652 = vpack.c.bf16 %v3027, %v3023
    %v3655 = vrot.slane %v3651, 2
    %v3656 = vrot.slane %v3652, 2
    %v3682 = vunpack.c.l.b16 %v3627
    %v3683 = vunpack.c.h.b16 %v3627
    %v3684 = vunpack.c.l.b16 %v3628
    %v3685 = vunpack.c.h.b16 %v3628
    %v3686 = vunpack.c.l.b16 %v3629
    %v3687 = vunpack.c.h.b16 %v3629
    %v3688 = vunpack.c.l.b16 %v3630
    %v3689 = vunpack.c.h.b16 %v3630
    %v3690 = vunpack.c.l.b16 %v3631
    %v3691 = vunpack.c.h.b16 %v3631
    %v3692 = vunpack.c.l.b16 %v3632
    %v3693 = vunpack.c.h.b16 %v3632
    %v3694 = vunpack.c.l.b16 %v3633
    %v3695 = vunpack.c.h.b16 %v3633
    %v3696 = vunpack.c.l.b16 %v3634
    %v3697 = vunpack.c.h.b16 %v3634
    %v3698 = vunpack.c.l.b16 %v3635
    %v3699 = vunpack.c.h.b16 %v3635
    %v3700 = vunpack.c.l.b16 %v3636
    %v3701 = vunpack.c.h.b16 %v3636
    %v3702 = vunpack.c.l.b16 %v3637
    %v3703 = vunpack.c.h.b16 %v3637
    %v3704 = vunpack.c.l.b16 %v3638
    %v3705 = vunpack.c.h.b16 %v3638
    %v3706 = vunpack.c.l.b16 %v3639
    %v3707 = vunpack.c.h.b16 %v3639
    %v3708 = vunpack.c.l.b16 %v3640
    %v3709 = vunpack.c.h.b16 %v3640
    %v3710 = vunpack.c.l.b16 %v3641
    %v3711 = vunpack.c.h.b16 %v3641
    %v3712 = vunpack.c.l.b16 %v3642
    %v3713 = vunpack.c.h.b16 %v3642
    %v3714 = vunpack.c.l.b16 %v3643
    %v3715 = vunpack.c.h.b16 %v3643
    %v3716 = vunpack.c.l.b16 %v3644
    %v3717 = vunpack.c.h.b16 %v3644
    %v3718 = vunpack.c.l.b16 %v3645
    %v3719 = vunpack.c.h.b16 %v3645
    %v3720 = vunpack.c.l.b16 %v3646
    %v3721 = vunpack.c.h.b16 %v3646
    %v3722 = vunpack.c.l.b16 %v3647
    %v3723 = vunpack.c.h.b16 %v3647
    %v3724 = vunpack.c.l.b16 %v3648
    %v3725 = vunpack.c.h.b16 %v3648
    %v3726 = vunpack.c.l.b16 %v3649
    %v3727 = vunpack.c.h.b16 %v3649
    %v3728 = vunpack.c.l.b16 %v3650
    %v3729 = vunpack.c.h.b16 %v3650
    %v3730 = vpack.c.b16 %v3684, %v3682
    %v3731 = vpack.c.b16 %v3685, %v3683
    %v3732 = vpack.c.b16 %v3688, %v3686
    %v3733 = vpack.c.b16 %v3689, %v3687
    %v3734 = vpack.c.b16 %v3692, %v3690
    %v3735 = vpack.c.b16 %v3693, %v3691
    %v3736 = vpack.c.b16 %v3696, %v3694
    %v3737 = vpack.c.b16 %v3697, %v3695
    %v3738 = vpack.c.b16 %v3700, %v3698
    %v3739 = vpack.c.b16 %v3701, %v3699
    %v3740 = vpack.c.b16 %v3704, %v3702
    %v3741 = vpack.c.b16 %v3705, %v3703
    %v3742 = vpack.c.b16 %v3708, %v3706
    %v3743 = vpack.c.b16 %v3709, %v3707
    %v3744 = vpack.c.b16 %v3712, %v3710
    %v3745 = vpack.c.b16 %v3713, %v3711
    %v3746 = vpack.c.b16 %v3716, %v3714
    %v3747 = vpack.c.b16 %v3717, %v3715
    %v3748 = vpack.c.b16 %v3720, %v3718
    %v3749 = vpack.c.b16 %v3721, %v3719
    %v3750 = vpack.c.b16 %v3724, %v3722
    %v3751 = vpack.c.b16 %v3725, %v3723
    %v3752 = vpack.c.b16 %v3728, %v3726
    %v3753 = vpack.c.b16 %v3729, %v3727
    %v3779 = vsel %vm1112, %v3656, 0
    %3781 = vmatprep.subr.bf16.mxu0 %v3731
    %3782 = vmatpush1.bf16.msra.mxu0 %v3730
    %3783 = vmatprep.subr.bf16.mxu0 %v3733
    %3784 = vmatpush1.bf16.msra.mxu0 %v3732
    %3785 = vmatprep.subr.bf16.mxu0 %v3735
    %3786 = vmatpush1.bf16.msra.mxu0 %v3734
    %3787 = vmatprep.subr.bf16.mxu0 %v3737
    %3788 = vmatpush1.bf16.msra.mxu0 %v3736
    %3789 = vmatprep.subr.bf16.mxu0 %v3739
    %3790 = vmatpush1.bf16.msra.mxu0 %v3738
    %3791 = vmatprep.subr.bf16.mxu0 %v3741
    %3792 = vmatpush1.bf16.msra.mxu0 %v3740
    %3793 = vmatprep.subr.bf16.mxu0 %v3743
    %3794 = vmatpush1.bf16.msra.mxu0 %v3742
    %3795 = vmatprep.subr.bf16.mxu0 %v3745
    %3796 = vmatpush1.bf16.msra.mxu0 %v3744
    %3797 = vmatprep.subr.bf16.mxu0 %v3747
    %3798 = vmatpush1.bf16.msra.mxu0 %v3746
    %3799 = vmatprep.subr.bf16.mxu0 %v3749
    %3800 = vmatpush1.bf16.msra.mxu0 %v3748
    %3801 = vmatprep.subr.bf16.mxu0 %v3751
    %3802 = vmatpush1.bf16.msra.mxu0 %v3750
    %3803 = vmatprep.subr.bf16.mxu0 %v3753
    %3804 = vmatpush1.bf16.msra.mxu0 %v3752
    %3805 = vmatprep.subr.bf16.mxu0 0
    %3806 = vmatpush1.bf16.msra.mxu0 0
    %3807 = vmatprep.subr.bf16.mxu0 0
    %3808 = vmatpush1.bf16.msra.mxu0 0
    %3809 = vmatprep.subr.bf16.mxu0 0
    %3810 = vmatpush1.bf16.msra.mxu0 0
    %3811 = vmatprep.subr.bf16.mxu0 0
    %3812 = vmatpush1.bf16.msra.mxu0 0
    %3813 = vmatprep.mubr.bf16.mxu0 %v3779
    %3814 = vmatmul.mubr.bf16.gmra.mrb[0].mxu0 %v3655
    %v3815 = vpop.f32.mrb[0].mxu0
    %v3816 = vadd.f32 0.0, %v3815
    %v3817 = vpop.f32.mrb[0].mxu0
    %v3818 = vadd.f32 0.0, %v3817
    %v3819 = vpop.f32.mrb[0].mxu0
    %v3820 = vadd.f32 0.0, %v3819
    %v3821 = vpop.f32.mrb[0].mxu0
    %v3822 = vadd.f32 0.0, %v3821
    %3823 = vdwg.mxu0
    %v3824 = vadd.f32 %v3622, %v3816
    %v3825 = vadd.f32 %v3623, %v3818
    %v3826 = vadd.f32 %v3624, %v3820
    %v3827 = vadd.f32 %v3625, %v3822
    %s3828 = scalar_lea.vmem %s19, 768
    %v3829 = vld [vmem:[%s3828] sm:$0xff]
    %v3830 = vld [vmem:[%s3828 + $0x8] sm:$0xff]
    %v3831 = vld [vmem:[%s3828 + $0x10] sm:$0xff]
    %v3832 = vld [vmem:[%s3828 + $0x18] sm:$0xff]
    %v3833 = vld [vmem:[%s3828 + $0x20] sm:$0xff]
    %v3834 = vld [vmem:[%s3828 + $0x28] sm:$0xff]
    %v3835 = vld [vmem:[%s3828 + $0x30] sm:$0xff]
    %v3836 = vld [vmem:[%s3828 + $0x38] sm:$0xff]
    %v3837 = vld [vmem:[%s3828 + $0x40] sm:$0xff]
    %v3838 = vld [vmem:[%s3828 + $0x48] sm:$0xff]
    %v3839 = vld [vmem:[%s3828 + $0x50] sm:$0xff]
    %v3840 = vld [vmem:[%s3828 + $0x58] sm:$0xff]
    %v3841 = vld [vmem:[%s3828 + $0x60] sm:$0xff]
    %v3842 = vld [vmem:[%s3828 + $0x68] sm:$0xff]
    %v3843 = vld [vmem:[%s3828 + $0x70] sm:$0xff]
    %v3844 = vld [vmem:[%s3828 + $0x78] sm:$0xff]
    %v3845 = vld [vmem:[%s3828 + $0x80] sm:$0xff]
    %v3846 = vld [vmem:[%s3828 + $0x88] sm:$0xff]
    %v3847 = vld [vmem:[%s3828 + $0x90] sm:$0xff]
    %v3848 = vld [vmem:[%s3828 + $0x98] sm:$0xff]
    %v3849 = vld [vmem:[%s3828 + $0xa0] sm:$0xff]
    %v3850 = vld [vmem:[%s3828 + $0xa8] sm:$0xff]
    %v3851 = vld [vmem:[%s3828 + $0xb0] sm:$0xff]
    %v3852 = vld [vmem:[%s3828 + $0xb8] sm:$0xff]
    %v3853 = vpack.c.bf16 %v3035, %v3031
    %v3854 = vpack.c.bf16 %v3037, %v3033
    %v3879 = vunpack.c.l.b16 %v3829
    %v3880 = vunpack.c.h.b16 %v3829
    %v3881 = vunpack.c.l.b16 %v3830
    %v3882 = vunpack.c.h.b16 %v3830
    %v3883 = vunpack.c.l.b16 %v3831
    %v3884 = vunpack.c.h.b16 %v3831
    %v3885 = vunpack.c.l.b16 %v3832
    %v3886 = vunpack.c.h.b16 %v3832
    %v3887 = vunpack.c.l.b16 %v3833
    %v3888 = vunpack.c.h.b16 %v3833
    %v3889 = vunpack.c.l.b16 %v3834
    %v3890 = vunpack.c.h.b16 %v3834
    %v3891 = vunpack.c.l.b16 %v3835
    %v3892 = vunpack.c.h.b16 %v3835
    %v3893 = vunpack.c.l.b16 %v3836
    %v3894 = vunpack.c.h.b16 %v3836
    %v3895 = vunpack.c.l.b16 %v3837
    %v3896 = vunpack.c.h.b16 %v3837
    %v3897 = vunpack.c.l.b16 %v3838
    %v3898 = vunpack.c.h.b16 %v3838
    %v3899 = vunpack.c.l.b16 %v3839
    %v3900 = vunpack.c.h.b16 %v3839
    %v3901 = vunpack.c.l.b16 %v3840
    %v3902 = vunpack.c.h.b16 %v3840
    %v3903 = vunpack.c.l.b16 %v3841
    %v3904 = vunpack.c.h.b16 %v3841
    %v3905 = vunpack.c.l.b16 %v3842
    %v3906 = vunpack.c.h.b16 %v3842
    %v3907 = vunpack.c.l.b16 %v3843
    %v3908 = vunpack.c.h.b16 %v3843
    %v3909 = vunpack.c.l.b16 %v3844
    %v3910 = vunpack.c.h.b16 %v3844
    %v3911 = vunpack.c.l.b16 %v3845
    %v3912 = vunpack.c.h.b16 %v3845
    %v3913 = vunpack.c.l.b16 %v3846
    %v3914 = vunpack.c.h.b16 %v3846
    %v3915 = vunpack.c.l.b16 %v3847
    %v3916 = vunpack.c.h.b16 %v3847
    %v3917 = vunpack.c.l.b16 %v3848
    %v3918 = vunpack.c.h.b16 %v3848
    %v3919 = vunpack.c.l.b16 %v3849
    %v3920 = vunpack.c.h.b16 %v3849
    %v3921 = vunpack.c.l.b16 %v3850
    %v3922 = vunpack.c.h.b16 %v3850
    %v3923 = vunpack.c.l.b16 %v3851
    %v3924 = vunpack.c.h.b16 %v3851
    %v3925 = vunpack.c.l.b16 %v3852
    %v3926 = vunpack.c.h.b16 %v3852
    %v3927 = vpack.c.b16 %v3881, %v3879
    %v3928 = vpack.c.b16 %v3882, %v3880
    %v3929 = vpack.c.b16 %v3885, %v3883
    %v3930 = vpack.c.b16 %v3886, %v3884
    %v3931 = vpack.c.b16 %v3889, %v3887
    %v3932 = vpack.c.b16 %v3890, %v3888
    %v3933 = vpack.c.b16 %v3893, %v3891
    %v3934 = vpack.c.b16 %v3894, %v3892
    %v3935 = vpack.c.b16 %v3897, %v3895
    %v3936 = vpack.c.b16 %v3898, %v3896
    %v3937 = vpack.c.b16 %v3901, %v3899
    %v3938 = vpack.c.b16 %v3902, %v3900
    %v3939 = vpack.c.b16 %v3905, %v3903
    %v3940 = vpack.c.b16 %v3906, %v3904
    %v3941 = vpack.c.b16 %v3909, %v3907
    %v3942 = vpack.c.b16 %v3910, %v3908
    %v3943 = vpack.c.b16 %v3913, %v3911
    %v3944 = vpack.c.b16 %v3914, %v3912
    %v3945 = vpack.c.b16 %v3917, %v3915
    %v3946 = vpack.c.b16 %v3918, %v3916
    %v3947 = vpack.c.b16 %v3921, %v3919
    %v3948 = vpack.c.b16 %v3922, %v3920
    %v3949 = vpack.c.b16 %v3925, %v3923
    %v3950 = vpack.c.b16 %v3926, %v3924
    %v3976 = vsel %vm1112, %v3854, 0
    %3978 = vmatprep.subr.bf16.mxu0 %v3928
    %3979 = vmatpush1.bf16.msra.mxu0 %v3927
    %3980 = vmatprep.subr.bf16.mxu0 %v3930
    %3981 = vmatpush1.bf16.msra.mxu0 %v3929
    %3982 = vmatprep.subr.bf16.mxu0 %v3932
    %3983 = vmatpush1.bf16.msra.mxu0 %v3931
    %3984 = vmatprep.subr.bf16.mxu0 %v3934
    %3985 = vmatpush1.bf16.msra.mxu0 %v3933
    %3986 = vmatprep.subr.bf16.mxu0 %v3936
    %3987 = vmatpush1.bf16.msra.mxu0 %v3935
    %3988 = vmatprep.subr.bf16.mxu0 %v3938
    %3989 = vmatpush1.bf16.msra.mxu0 %v3937
    %3990 = vmatprep.subr.bf16.mxu0 %v3940
    %3991 = vmatpush1.bf16.msra.mxu0 %v3939
    %3992 = vmatprep.subr.bf16.mxu0 %v3942
    %3993 = vmatpush1.bf16.msra.mxu0 %v3941
    %3994 = vmatprep.subr.bf16.mxu0 %v3944
    %3995 = vmatpush1.bf16.msra.mxu0 %v3943
    %3996 = vmatprep.subr.bf16.mxu0 %v3946
    %3997 = vmatpush1.bf16.msra.mxu0 %v3945
    %3998 = vmatprep.subr.bf16.mxu0 %v3948
    %3999 = vmatpush1.bf16.msra.mxu0 %v3947
    %4000 = vmatprep.subr.bf16.mxu0 %v3950
    %4001 = vmatpush1.bf16.msra.mxu0 %v3949
    %4002 = vmatprep.subr.bf16.mxu0 0
    %4003 = vmatpush1.bf16.msra.mxu0 0
    %4004 = vmatprep.subr.bf16.mxu0 0
    %4005 = vmatpush1.bf16.msra.mxu0 0
    %4006 = vmatprep.subr.bf16.mxu0 0
    %4007 = vmatpush1.bf16.msra.mxu0 0
    %4008 = vmatprep.subr.bf16.mxu0 0
    %4009 = vmatpush1.bf16.msra.mxu0 0
    %4010 = vmatprep.mubr.bf16.mxu0 %v3976
    %4011 = vmatmul.mubr.bf16.gmra.mrb[0].mxu0 %v3853
    %v4012 = vpop.f32.mrb[0].mxu0
    %v4013 = vadd.f32 0.0, %v4012
    %v4014 = vpop.f32.mrb[0].mxu0
    %v4015 = vadd.f32 0.0, %v4014
    %v4016 = vpop.f32.mrb[0].mxu0
    %v4017 = vadd.f32 0.0, %v4016
    %v4018 = vpop.f32.mrb[0].mxu0
    %v4019 = vadd.f32 0.0, %v4018
    %4020 = vdwg.mxu0
    %v4021 = vadd.f32 %v3824, %v4013
    %v4022 = vadd.f32 %v3825, %v4015
    %v4023 = vadd.f32 %v3826, %v4017
    %v4024 = vadd.f32 %v3827, %v4019
    %v4025 = vld [vmem:[%s21] sm:$0x1]
    %v4026 = vmax.f32 %v4021, %v4022
    %v4027 = vmax.f32 %v4023, %v4024
    %v4029 = vlaneseq
    %v4030 = vshrl.u32 %v4029, 7
    %v4031 = vsub.s32 0, %v4030
    %v4032 = vrot.slane %v4025, %v4031
    %v4034 = vadd.f32 %v4026, %v4032
    %v4035 = vadd.f32 %v4027, %v4032
    %v4036 = vmax.f32 %v4034, 0.0
    %v4037 = vmax.f32 %v4035, 0.0
    %v4038 = vld [vmem:[%s25] sm:$0xff]
    %v4039 = vld [vmem:[%s25 + $0x8] sm:$0xf]
    %v4040 = vld [vmem:[%s23] sm:$0xff]
    %v4041 = vld [vmem:[%s23 + $0x8] sm:$0xf]
    %v4042 = vadd.f32 %v4036, %v4040
    %v4043 = vadd.f32 %v4037, %v4041
    %v4044 = vld [vmem:[%s31] sm:$0xf]
    %v4045 = vld [vmem:[%s31 + $0x4] sm:$0xf]
    %v4046 = vld [vmem:[%s31 + $0x8] sm:$0xf]
    %v4047 = vld [vmem:[%s31 + $0xc] sm:$0xf]
    %v4048 = vld [vmem:[%s31 + $0x10] sm:$0xf]
    %v4049 = vld [vmem:[%s31 + $0x14] sm:$0xf]
    %v4050 = vld [vmem:[%s31 + $0x18] sm:$0xf]
    %v4051 = vld [vmem:[%s31 + $0x1c] sm:$0xf]
    %v4052 = vld [vmem:[%s31 + $0x20] sm:$0xf]
    %v4053 = vld [vmem:[%s31 + $0x24] sm:$0xf]
    %v4054 = vld [vmem:[%s31 + $0x28] sm:$0xf]
    %v4055 = vld [vmem:[%s31 + $0x2c] sm:$0xf]
    %v4056 = vld [vmem:[%s31 + $0x30] sm:$0xf]
    %v4057 = vld [vmem:[%s31 + $0x34] sm:$0xf]
    %v4058 = vld [vmem:[%s31 + $0x38] sm:$0xf]
    %v4059 = vld [vmem:[%s31 + $0x3c] sm:$0xf]
    %v4060 = vld [vmem:[%s27] sm:$0xff]
    %v4061 = vld [vmem:[%s27 + $0x8] sm:$0xf]
    %v4062 = vld [vmem:[%s27 + $0xc] sm:$0xff]
    %v4063 = vld [vmem:[%s27 + $0x14] sm:$0xf]
    %v4064 = vld [vmem:[%s27 + $0x18] sm:$0xff]
    %v4065 = vld [vmem:[%s27 + $0x20] sm:$0xf]
    %v4066 = vld [vmem:[%s27 + $0x24] sm:$0xff]
    %v4067 = vld [vmem:[%s27 + $0x2c] sm:$0xf]
    %v4068 = vld [vmem:[%s27 + $0x30] sm:$0xff]
    %v4069 = vld [vmem:[%s27 + $0x38] sm:$0xf]
    %v4070 = vld [vmem:[%s27 + $0x3c] sm:$0xff]
    %v4071 = vld [vmem:[%s27 + $0x44] sm:$0xf]
    %v4072 = vld [vmem:[%s27 + $0x48] sm:$0xff]
    %v4073 = vld [vmem:[%s27 + $0x50] sm:$0xf]
    %v4074 = vld [vmem:[%s27 + $0x54] sm:$0xff]
    %v4075 = vld [vmem:[%s27 + $0x5c] sm:$0xf]
    %v4076 = vld [vmem:[%s27 + $0x60] sm:$0xff]
    %v4077 = vld [vmem:[%s27 + $0x68] sm:$0xf]
    %v4078 = vld [vmem:[%s27 + $0x6c] sm:$0xff]
    %v4079 = vld [vmem:[%s27 + $0x74] sm:$0xf]
    %v4080 = vld [vmem:[%s27 + $0x78] sm:$0xff]
    %v4081 = vld [vmem:[%s27 + $0x80] sm:$0xf]
    %v4082 = vld [vmem:[%s27 + $0x84] sm:$0xff]
    %v4083 = vld [vmem:[%s27 + $0x8c] sm:$0xf]
    %v4084 = vld [vmem:[%s27 + $0x90] sm:$0xff]
    %v4085 = vld [vmem:[%s27 + $0x98] sm:$0xf]
    %v4086 = vld [vmem:[%s27 + $0x9c] sm:$0xff]
    %v4087 = vld [vmem:[%s27 + $0xa4] sm:$0xf]
    %v4088 = vld [vmem:[%s27 + $0xa8] sm:$0xff]
    %v4089 = vld [vmem:[%s27 + $0xb0] sm:$0xf]
    %v4090 = vld [vmem:[%s27 + $0xb4] sm:$0xff]
    %v4091 = vld [vmem:[%s27 + $0xbc] sm:$0xf]
    %v4092 = vpack.c.bf16 %v4043, %v4042
    %v4093 = vld [vmem:[%s29] sm:$0x7]
    %v4095 = vlaneseq
    %v4096 = vshrl.u32 %v4095, 7
    %v4097 = vsub.s32 0, %v4096
    %v4098 = vrot.slane %v4093, %v4097
    %v4099 = vlaneseq
    %v4100 = vshrl.u32 %v4099, 7
    %v4101 = vsub.s32 1, %v4100
    %v4102 = vrot.slane %v4093, %v4101
    %v4103 = vlaneseq
    %v4104 = vshrl.u32 %v4103, 7
    %v4105 = vsub.s32 2, %v4104
    %v4106 = vrot.slane %v4093, %v4105
    %v4142 = vunpack.c.l.b16 %v4060
    %v4143 = vunpack.c.h.b16 %v4060
    %v4144 = vunpack.c.l.b16 %v4061
    %v4145 = vunpack.c.l.b16 %v4062
    %v4146 = vunpack.c.h.b16 %v4062
    %v4147 = vunpack.c.l.b16 %v4063
    %v4148 = vunpack.c.l.b16 %v4064
    %v4149 = vunpack.c.h.b16 %v4064
    %v4150 = vunpack.c.l.b16 %v4065
    %v4151 = vunpack.c.l.b16 %v4066
    %v4152 = vunpack.c.h.b16 %v4066
    %v4153 = vunpack.c.l.b16 %v4067
    %v4154 = vunpack.c.l.b16 %v4068
    %v4155 = vunpack.c.h.b16 %v4068
    %v4156 = vunpack.c.l.b16 %v4069
    %v4157 = vunpack.c.l.b16 %v4070
    %v4158 = vunpack.c.h.b16 %v4070
    %v4159 = vunpack.c.l.b16 %v4071
    %v4160 = vunpack.c.l.b16 %v4072
    %v4161 = vunpack.c.h.b16 %v4072
    %v4162 = vunpack.c.l.b16 %v4073
    %v4163 = vunpack.c.l.b16 %v4074
    %v4164 = vunpack.c.h.b16 %v4074
    %v4165 = vunpack.c.l.b16 %v4075
    %v4166 = vunpack.c.l.b16 %v4076
    %v4167 = vunpack.c.h.b16 %v4076
    %v4168 = vunpack.c.l.b16 %v4077
    %v4169 = vunpack.c.l.b16 %v4078
    %v4170 = vunpack.c.h.b16 %v4078
    %v4171 = vunpack.c.l.b16 %v4079
    %v4172 = vunpack.c.l.b16 %v4080
    %v4173 = vunpack.c.h.b16 %v4080
    %v4174 = vunpack.c.l.b16 %v4081
    %v4175 = vunpack.c.l.b16 %v4082
    %v4176 = vunpack.c.h.b16 %v4082
    %v4177 = vunpack.c.l.b16 %v4083
    %v4178 = vunpack.c.l.b16 %v4084
    %v4179 = vunpack.c.h.b16 %v4084
    %v4180 = vunpack.c.l.b16 %v4085
    %v4181 = vunpack.c.l.b16 %v4086
    %v4182 = vunpack.c.h.b16 %v4086
    %v4183 = vunpack.c.l.b16 %v4087
    %v4184 = vunpack.c.l.b16 %v4088
    %v4185 = vunpack.c.h.b16 %v4088
    %v4186 = vunpack.c.l.b16 %v4089
    %v4187 = vunpack.c.l.b16 %v4090
    %v4188 = vunpack.c.h.b16 %v4090
    %v4189 = vunpack.c.l.b16 %v4091
    %v4190 = vpack.c.b16 %v4145, %v4142
    %v4191 = vpack.c.b16 %v4146, %v4143
    %v4192 = vpack.c.b16 %v4147, %v4144
    %v4193 = vpack.c.b16 %v4151, %v4148
    %v4194 = vpack.c.b16 %v4152, %v4149
    %v4195 = vpack.c.b16 %v4153, %v4150
    %v4196 = vpack.c.b16 %v4157, %v4154
    %v4197 = vpack.c.b16 %v4158, %v4155
    %v4198 = vpack.c.b16 %v4159, %v4156
    %v4199 = vpack.c.b16 %v4163, %v4160
    %v4200 = vpack.c.b16 %v4164, %v4161
    %v4201 = vpack.c.b16 %v4165, %v4162
    %v4202 = vpack.c.b16 %v4169, %v4166
    %v4203 = vpack.c.b16 %v4170, %v4167
    %v4204 = vpack.c.b16 %v4171, %v4168
    %v4205 = vpack.c.b16 %v4175, %v4172
    %v4206 = vpack.c.b16 %v4176, %v4173
    %v4207 = vpack.c.b16 %v4177, %v4174
    %v4208 = vpack.c.b16 %v4181, %v4178
    %v4209 = vpack.c.b16 %v4182, %v4179
    %v4210 = vpack.c.b16 %v4183, %v4180
    %v4211 = vpack.c.b16 %v4187, %v4184
    %v4212 = vpack.c.b16 %v4188, %v4185
    %v4213 = vpack.c.b16 %v4189, %v4186
    %4238 = vmatprep.subr.bf16.mxu0 %v4191
    %4239 = vmatpush1.bf16.msra.mxu0 %v4190
    %4240 = vmatprep.subr.bf16.mxu0 %v4194
    %4241 = vmatpush1.bf16.msra.mxu0 %v4193
    %4242 = vmatprep.subr.bf16.mxu0 %v4197
    %4243 = vmatpush1.bf16.msra.mxu0 %v4196
    %4244 = vmatprep.subr.bf16.mxu0 %v4200
    %4245 = vmatpush1.bf16.msra.mxu0 %v4199
    %4246 = vmatprep.subr.bf16.mxu0 %v4203
    %4247 = vmatpush1.bf16.msra.mxu0 %v4202
    %4248 = vmatprep.subr.bf16.mxu0 %v4206
    %4249 = vmatpush1.bf16.msra.mxu0 %v4205
    %4250 = vmatprep.subr.bf16.mxu0 %v4209
    %4251 = vmatpush1.bf16.msra.mxu0 %v4208
    %4252 = vmatprep.subr.bf16.mxu0 %v4212
    %4253 = vmatpush1.bf16.msra.mxu0 %v4211
    %4254 = vmatprep.subr.bf16.mxu0 0
    %4255 = vmatpush1.bf16.msra.mxu0 0
    %4256 = vmatprep.subr.bf16.mxu0 0
    %4257 = vmatpush1.bf16.msra.mxu0 0
    %4258 = vmatprep.subr.bf16.mxu0 0
    %4259 = vmatpush1.bf16.msra.mxu0 0
    %4260 = vmatprep.subr.bf16.mxu0 0
    %4261 = vmatpush1.bf16.msra.mxu0 0
    %4262 = vmatprep.subr.bf16.mxu0 0
    %4263 = vmatpush1.bf16.msra.mxu0 0
    %4264 = vmatprep.subr.bf16.mxu0 0
    %4265 = vmatpush1.bf16.msra.mxu0 0
    %4266 = vmatprep.subr.bf16.mxu0 0
    %4267 = vmatpush1.bf16.msra.mxu0 0
    %4268 = vmatprep.subr.bf16.mxu0 0
    %4269 = vmatpush1.bf16.msra.mxu0 0
    %4270 = vmatprep.mubr.bf16.mxu0 0
    %4271 = vmatmul.mubr.bf16.gmra.mrb[0].mxu0 %v4092
    %v4272 = vpop.f32.mrb[0].mxu0
    %v4273 = vadd.f32 %v4098, %v4272
    %v4274 = vpop.f32.mrb[0].mxu0
    %v4275 = vadd.f32 %v4102, %v4274
    %v4276 = vpop.f32.mrb[0].mxu0
    %v4277 = vadd.f32 %v4098, %v4276
    %v4278 = vpop.f32.mrb[0].mxu0
    %v4279 = vadd.f32 %v4102, %v4278
    %4280 = vdwg.mxu0
    %4281 = vmatprep.subr.bf16.mxu0 0
    %4282 = vmatpush1.bf16.msra.mxu0 %v4192
    %4283 = vmatprep.subr.bf16.mxu0 0
    %4284 = vmatpush1.bf16.msra.mxu0 %v4195
    %4285 = vmatprep.subr.bf16.mxu0 0
    %4286 = vmatpush1.bf16.msra.mxu0 %v4198
    %4287 = vmatprep.subr.bf16.mxu0 0
    %4288 = vmatpush1.bf16.msra.mxu0 %v4201
    %4289 = vmatprep.subr.bf16.mxu0 0
    %4290 = vmatpush1.bf16.msra.mxu0 %v4204
    %4291 = vmatprep.subr.bf16.mxu0 0
    %4292 = vmatpush1.bf16.msra.mxu0 %v4207
    %4293 = vmatprep.subr.bf16.mxu0 0
    %4294 = vmatpush1.bf16.msra.mxu0 %v4210
    %4295 = vmatprep.subr.bf16.mxu0 0
    %4296 = vmatpush1.bf16.msra.mxu0 %v4213
    %4297 = vmatprep.subr.bf16.mxu0 0
    %4298 = vmatpush1.bf16.msra.mxu0 0
    %4299 = vmatprep.subr.bf16.mxu0 0
    %4300 = vmatpush1.bf16.msra.mxu0 0
    %4301 = vmatprep.subr.bf16.mxu0 0
    %4302 = vmatpush1.bf16.msra.mxu0 0
    %4303 = vmatprep.subr.bf16.mxu0 0
    %4304 = vmatpush1.bf16.msra.mxu0 0
    %4305 = vmatprep.subr.bf16.mxu0 0
    %4306 = vmatpush1.bf16.msra.mxu0 0
    %4307 = vmatprep.subr.bf16.mxu0 0
    %4308 = vmatpush1.bf16.msra.mxu0 0
    %4309 = vmatprep.subr.bf16.mxu0 0
    %4310 = vmatpush1.bf16.msra.mxu0 0
    %4311 = vmatprep.subr.bf16.mxu0 0
    %4312 = vmatpush1.bf16.msra.mxu0 0
    %4313 = vmatprep.mubr.bf16.mxu0 0
    %4314 = vmatmul.mubr.bf16.gmra.mrb[0].mxu0 %v4092
    %v4315 = vpop.f32.mrb[0].mxu0
    %v4316 = vadd.f32 %v4106, %v4315
    %v4317 = vpop.f32.mrb[0].mxu0
    %v4318 = vpop.f32.mrb[0].mxu0
    %v4319 = vadd.f32 %v4106, %v4318
    %v4320 = vpop.f32.mrb[0].mxu0
    %4321 = vdwg.mxu0
    %v4322 = vpack.c.bf16 %v4277, %v4273
    %v4323 = vpack.c.bf16 %v4279, %v4275
    %vm4324 = vcmask 261120
    %v4326 = vsel %vm4324, %v4322, 0
    %v4329 = vsel %vm4324, %v4323, 0
    %4331 = vmatprep.subr.bf16.mxu0 0
    %4332 = vmatpush1.bf16.xpose.msra.mxu0 %v4329
    %4333 = vmatprep.subr.bf16.mxu0 0
    %4334 = vmatpush1.bf16.xpose.msra.mxu0 0
    %4335 = vmatprep.subr.bf16.mxu0 0
    %4336 = vmatpush1.bf16.xpose.msra.mxu0 0
    %4337 = vmatprep.subr.bf16.mxu0 0
    %4338 = vmatpush1.bf16.xpose.msra.mxu0 0
    %4339 = vmatprep.subr.bf16.mxu0 0
    %4340 = vmatpush1.bf16.xpose.msra.mxu0 0
    %4341 = vmatprep.subr.bf16.mxu0 0
    %4342 = vmatpush1.bf16.xpose.msra.mxu0 0
    %4343 = vmatprep.subr.bf16.mxu0 0
    %4344 = vmatpush1.bf16.xpose.msra.mxu0 0
    %4345 = vmatprep.subr.bf16.mxu0 0
    %4346 = vmatpush1.bf16.xpose.msra.mxu0 0
    %4347 = vmatprep.subr.bf16.mxu0 0
    %4348 = vmatpush1.bf16.xpose.msra.mxu0 0
    %4349 = vmatprep.subr.bf16.mxu0 0
    %4350 = vmatpush1.bf16.xpose.msra.mxu0 0
    %4351 = vmatprep.subr.bf16.mxu0 0
    %4352 = vmatpush1.bf16.xpose.msra.mxu0 0
    %4353 = vmatprep.subr.bf16.mxu0 0
    %4354 = vmatpush1.bf16.xpose.msra.mxu0 0
    %4355 = vmatprep.subr.bf16.mxu0 0
    %4356 = vmatpush1.bf16.xpose.msra.mxu0 0
    %4357 = vmatprep.subr.bf16.mxu0 0
    %4358 = vmatpush1.bf16.xpose.msra.mxu0 0
    %4359 = vmatprep.subr.bf16.mxu0 0
    %4360 = vmatpush1.bf16.xpose.msra.mxu0 0
    %4361 = vmatprep.subr.bf16.mxu0 0
    %4362 = vmatpush1.bf16.xpose.msra.mxu0 0
    %4363 = vmatprep.mubr.bf16.mxu0 0
    %4364 = vmatmul.mubr.bf16.gmra.mrb[0].mxu0 %v4326
    %v4365 = vpop.f32.mrb[0].mxu0
    %v4366 = vadd.f32 %v4038, %v4365
    %v4367 = vpop.f32.mrb[0].mxu0
    %v4368 = vpop.f32.mrb[0].mxu0
    %v4369 = vadd.f32 %v4039, %v4368
    %v4370 = vpop.f32.mrb[0].mxu0
    %4371 = vdwg.mxu0
    %vm4372 = vcmask 97280
    %v4373 = vsel %vm4372, %v4366, -inf
    %4374 = vmax.xlane.f32.xlu0 %v4373
    %v4375 = vpop.xlane.xlu0 %4374
    %vm4376 = vcmask 93184
    %v4377 = vsel %vm4376, %v4369, -inf
    %4378 = vmax.xlane.f32.xlu0 %v4377
    %v4379 = vpop.xlane.xlu0 %4378
    %v4380 = vsub.f32 %v4366, %v4375
    %v4381 = vsub.f32 %v4369, %v4379
    %v4382 = vmul.f32 %v4380, 1.442695
    %v4383 = vpow.pop %v4382
    %v4384 = vmul.f32 %v4381, 1.442695
    %v4385 = vpow.pop %v4384
    %v4386 = vsel %vm4372, %v4383, 0.0
    %4387 = vadd.xlane.f32.xlu0 %v4386
    %v4388 = vpop.xlane.xlu0 %4387
    %v4389 = vsel %vm4376, %v4385, 0.0
    %4390 = vadd.xlane.f32.xlu0 %v4389
    %v4391 = vpop.xlane.xlu0 %4390
    %v4392 = vrcp.pop %v4388
    %v4393 = vrcp.pop %v4391
    %v4394 = vmul.f32 %v4383, %v4392
    %v4395 = vmul.f32 %v4385, %v4393
    %v4396 = vpack.c.bf16 %v4395, %v4394
    %v4397 = vpack.c.bf16 %v4319, %v4316
    %v4399 = vsel %vm4372, %v4396, 0
    %vm4401 = vcmask 1045504
    %v4403 = vsel %vm4401, %v4397, 0
    %4405 = vmatprep.subr.bf16.mxu0 0
    %4406 = vmatpush1.bf16.msra.mxu0 %v4403
    %4407 = vmatprep.subr.bf16.mxu0 0
    %4408 = vmatpush1.bf16.msra.mxu0 0
    %4409 = vmatprep.subr.bf16.mxu0 0
    %4410 = vmatpush1.bf16.msra.mxu0 0
    %4411 = vmatprep.subr.bf16.mxu0 0
    %4412 = vmatpush1.bf16.msra.mxu0 0
    %4413 = vmatprep.subr.bf16.mxu0 0
    %4414 = vmatpush1.bf16.msra.mxu0 0
    %4415 = vmatprep.subr.bf16.mxu0 0
    %4416 = vmatpush1.bf16.msra.mxu0 0
    %4417 = vmatprep.subr.bf16.mxu0 0
    %4418 = vmatpush1.bf16.msra.mxu0 0
    %4419 = vmatprep.subr.bf16.mxu0 0
    %4420 = vmatpush1.bf16.msra.mxu0 0
    %4421 = vmatprep.subr.bf16.mxu0 0
    %4422 = vmatpush1.bf16.msra.mxu0 0
    %4423 = vmatprep.subr.bf16.mxu0 0
    %4424 = vmatpush1.bf16.msra.mxu0 0
    %4425 = vmatprep.subr.bf16.mxu0 0
    %4426 = vmatpush1.bf16.msra.mxu0 0
    %4427 = vmatprep.subr.bf16.mxu0 0
    %4428 = vmatpush1.bf16.msra.mxu0 0
    %4429 = vmatprep.subr.bf16.mxu0 0
    %4430 = vmatpush1.bf16.msra.mxu0 0
    %4431 = vmatprep.subr.bf16.mxu0 0
    %4432 = vmatpush1.bf16.msra.mxu0 0
    %4433 = vmatprep.subr.bf16.mxu0 0
    %4434 = vmatpush1.bf16.msra.mxu0 0
    %4435 = vmatprep.subr.bf16.mxu0 0
    %4436 = vmatpush1.bf16.msra.mxu0 0
    %4437 = vmatprep.mubr.bf16.mxu0 0
    %4438 = vmatmul.mubr.bf16.gmra.mrb[0].mxu0 %v4399
    %v4439 = vpop.f32.mrb[0].mxu0
    %v4440 = vadd.f32 0.0, %v4439
    %v4441 = vpop.f32.mrb[0].mxu0
    %v4442 = vpop.f32.mrb[0].mxu0
    %v4443 = vadd.f32 0.0, %v4442
    %v4444 = vpop.f32.mrb[0].mxu0
    %4445 = vdwg.mxu0
    %v4446 = vpack.c.bf16 %v4443, %v4440
    %4448 = vrot.lane.b32.xlu0 %v4322, 96
    %v4449 = vpop.permute.xlu0 %4448
    %4451 = vrot.lane.b32.xlu0 %v4323, 96
    %v4452 = vpop.permute.xlu0 %4451
    %v4454 = vsel %vm4324, %v4449, 0
    %v4457 = vsel %vm4324, %v4452, 0
    %4459 = vmatprep.subr.bf16.mxu0 0
    %4460 = vmatpush1.bf16.xpose.msra.mxu0 %v4457
    %4461 = vmatprep.subr.bf16.mxu0 0
    %4462 = vmatpush1.bf16.xpose.msra.mxu0 0
    %4463 = vmatprep.subr.bf16.mxu0 0
    %4464 = vmatpush1.bf16.xpose.msra.mxu0 0
    %4465 = vmatprep.subr.bf16.mxu0 0
    %4466 = vmatpush1.bf16.xpose.msra.mxu0 0
    %4467 = vmatprep.subr.bf16.mxu0 0
    %4468 = vmatpush1.bf16.xpose.msra.mxu0 0
    %4469 = vmatprep.subr.bf16.mxu0 0
    %4470 = vmatpush1.bf16.xpose.msra.mxu0 0
    %4471 = vmatprep.subr.bf16.mxu0 0
    %4472 = vmatpush1.bf16.xpose.msra.mxu0 0
    %4473 = vmatprep.subr.bf16.mxu0 0
    %4474 = vmatpush1.bf16.xpose.msra.mxu0 0
    %4475 = vmatprep.subr.bf16.mxu0 0
    %4476 = vmatpush1.bf16.xpose.msra.mxu0 0
    %4477 = vmatprep.subr.bf16.mxu0 0
    %4478 = vmatpush1.bf16.xpose.msra.mxu0 0
    %4479 = vmatprep.subr.bf16.mxu0 0
    %4480 = vmatpush1.bf16.xpose.msra.mxu0 0
    %4481 = vmatprep.subr.bf16.mxu0 0
    %4482 = vmatpush1.bf16.xpose.msra.mxu0 0
    %4483 = vmatprep.subr.bf16.mxu0 0
    %4484 = vmatpush1.bf16.xpose.msra.mxu0 0
    %4485 = vmatprep.subr.bf16.mxu0 0
    %4486 = vmatpush1.bf16.xpose.msra.mxu0 0
    %4487 = vmatprep.subr.bf16.mxu0 0
    %4488 = vmatpush1.bf16.xpose.msra.mxu0 0
    %4489 = vmatprep.subr.bf16.mxu0 0
    %4490 = vmatpush1.bf16.xpose.msra.mxu0 0
    %4491 = vmatprep.mubr.bf16.mxu0 0
    %4492 = vmatmul.mubr.bf16.gmra.mrb[0].mxu0 %v4454
    %v4493 = vpop.f32.mrb[0].mxu0
    %v4494 = vadd.f32 %v4038, %v4493
    %v4495 = vpop.f32.mrb[0].mxu0
    %v4496 = vpop.f32.mrb[0].mxu0
    %v4497 = vadd.f32 %v4039, %v4496
    %v4498 = vpop.f32.mrb[0].mxu0
    %4499 = vdwg.mxu0
    %v4500 = vsel %vm4372, %v4494, -inf
    %4501 = vmax.xlane.f32.xlu0 %v4500
    %v4502 = vpop.xlane.xlu0 %4501
    %v4503 = vsel %vm4376, %v4497, -inf
    %4504 = vmax.xlane.f32.xlu0 %v4503
    %v4505 = vpop.xlane.xlu0 %4504
    %v4506 = vsub.f32 %v4494, %v4502
    %v4507 = vsub.f32 %v4497, %v4505
    %v4508 = vmul.f32 %v4506, 1.442695
    %v4509 = vpow.pop %v4508
    %v4510 = vmul.f32 %v4507, 1.442695
    %v4511 = vpow.pop %v4510
    %v4512 = vsel %vm4372, %v4509, 0.0
    %4513 = vadd.xlane.f32.xlu0 %v4512
    %v4514 = vpop.xlane.xlu0 %4513
    %v4515 = vsel %vm4376, %v4511, 0.0
    %4516 = vadd.xlane.f32.xlu0 %v4515
    %v4517 = vpop.xlane.xlu0 %4516
    %v4518 = vrcp.pop %v4514
    %v4519 = vrcp.pop %v4517
    %v4520 = vmul.f32 %v4509, %v4518
    %v4521 = vmul.f32 %v4511, %v4519
    %v4522 = vpack.c.bf16 %v4521, %v4520
    %4524 = vrot.lane.b32.xlu0 %v4397, 96
    %v4525 = vpop.permute.xlu0 %4524
    %v4527 = vsel %vm4372, %v4522, 0
    %v4530 = vsel %vm4401, %v4525, 0
    %4532 = vmatprep.subr.bf16.mxu0 0
    %4533 = vmatpush1.bf16.msra.mxu0 %v4530
    %4534 = vmatprep.subr.bf16.mxu0 0
    %4535 = vmatpush1.bf16.msra.mxu0 0
    %4536 = vmatprep.subr.bf16.mxu0 0
    %4537 = vmatpush1.bf16.msra.mxu0 0
    %4538 = vmatprep.subr.bf16.mxu0 0
    %4539 = vmatpush1.bf16.msra.mxu0 0
    %4540 = vmatprep.subr.bf16.mxu0 0
    %4541 = vmatpush1.bf16.msra.mxu0 0
    %4542 = vmatprep.subr.bf16.mxu0 0
    %4543 = vmatpush1.bf16.msra.mxu0 0
    %4544 = vmatprep.subr.bf16.mxu0 0
    %4545 = vmatpush1.bf16.msra.mxu0 0
    %4546 = vmatprep.subr.bf16.mxu0 0
    %4547 = vmatpush1.bf16.msra.mxu0 0
    %4548 = vmatprep.subr.bf16.mxu0 0
    %4549 = vmatpush1.bf16.msra.mxu0 0
    %4550 = vmatprep.subr.bf16.mxu0 0
    %4551 = vmatpush1.bf16.msra.mxu0 0
    %4552 = vmatprep.subr.bf16.mxu0 0
    %4553 = vmatpush1.bf16.msra.mxu0 0
    %4554 = vmatprep.subr.bf16.mxu0 0
    %4555 = vmatpush1.bf16.msra.mxu0 0
    %4556 = vmatprep.subr.bf16.mxu0 0
    %4557 = vmatpush1.bf16.msra.mxu0 0
    %4558 = vmatprep.subr.bf16.mxu0 0
    %4559 = vmatpush1.bf16.msra.mxu0 0
    %4560 = vmatprep.subr.bf16.mxu0 0
    %4561 = vmatpush1.bf16.msra.mxu0 0
    %4562 = vmatprep.subr.bf16.mxu0 0
    %4563 = vmatpush1.bf16.msra.mxu0 0
    %4564 = vmatprep.mubr.bf16.mxu0 0
    %4565 = vmatmul.mubr.bf16.gmra.mrb[0].mxu0 %v4527
    %v4566 = vpop.f32.mrb[0].mxu0
    %v4567 = vadd.f32 0.0, %v4566
    %v4568 = vpop.f32.mrb[0].mxu0
    %v4569 = vpop.f32.mrb[0].mxu0
    %v4570 = vadd.f32 0.0, %v4569
    %v4571 = vpop.f32.mrb[0].mxu0
    %4572 = vdwg.mxu0
    %v4573 = vpack.c.bf16 %v4570, %v4567
    %v4578 = vunpack.c.l.b16 %v4048
    %v4579 = vunpack.c.l.b16 %v4049
    %v4580 = vunpack.c.l.b16 %v4050
    %v4581 = vunpack.c.l.b16 %v4051
    %v4582 = vpack.c.b16 %v4579, %v4578
    %v4583 = vpack.c.b16 %v4581, %v4580
    %v4587 = vsel %vm4324, %v4573, 0
    %4589 = vmatprep.subr.bf16.mxu0 0
    %4590 = vmatpush1.bf16.msra.mxu0 %v4582
    %4591 = vmatprep.subr.bf16.mxu0 0
    %4592 = vmatpush1.bf16.msra.mxu0 %v4583
    %4593 = vmatprep.subr.bf16.mxu0 0
    %4594 = vmatpush1.bf16.msra.mxu0 0
    %4595 = vmatprep.subr.bf16.mxu0 0
    %4596 = vmatpush1.bf16.msra.mxu0 0
    %4597 = vmatprep.subr.bf16.mxu0 0
    %4598 = vmatpush1.bf16.msra.mxu0 0
    %4599 = vmatprep.subr.bf16.mxu0 0
    %4600 = vmatpush1.bf16.msra.mxu0 0
    %4601 = vmatprep.subr.bf16.mxu0 0
    %4602 = vmatpush1.bf16.msra.mxu0 0
    %4603 = vmatprep.subr.bf16.mxu0 0
    %4604 = vmatpush1.bf16.msra.mxu0 0
    %4605 = vmatprep.subr.bf16.mxu0 0
    %4606 = vmatpush1.bf16.msra.mxu0 0
    %4607 = vmatprep.subr.bf16.mxu0 0
    %4608 = vmatpush1.bf16.msra.mxu0 0
    %4609 = vmatprep.subr.bf16.mxu0 0
    %4610 = vmatpush1.bf16.msra.mxu0 0
    %4611 = vmatprep.subr.bf16.mxu0 0
    %4612 = vmatpush1.bf16.msra.mxu0 0
    %4613 = vmatprep.subr.bf16.mxu0 0
    %4614 = vmatpush1.bf16.msra.mxu0 0
    %4615 = vmatprep.subr.bf16.mxu0 0
    %4616 = vmatpush1.bf16.msra.mxu0 0
    %4617 = vmatprep.subr.bf16.mxu0 0
    %4618 = vmatpush1.bf16.msra.mxu0 0
    %4619 = vmatprep.subr.bf16.mxu0 0
    %4620 = vmatpush1.bf16.msra.mxu0 0
    %4621 = vmatprep.mubr.bf16.mxu0 0
    %4622 = vmatmul.mubr.bf16.gmra.mrb[0].mxu0 %v4587
    %v4623 = vpop.f32.mrb[0].mxu0
    %v4624 = vadd.f32 0.0, %v4623
    %v4625 = vpop.f32.mrb[0].mxu0
    %v4626 = vpop.f32.mrb[0].mxu0
    %v4627 = vadd.f32 0.0, %v4626
    %v4628 = vpop.f32.mrb[0].mxu0
    %4629 = vdwg.mxu0
    %v4634 = vunpack.c.l.b16 %v4044
    %v4635 = vunpack.c.l.b16 %v4045
    %v4636 = vunpack.c.l.b16 %v4046
    %v4637 = vunpack.c.l.b16 %v4047
    %v4638 = vpack.c.b16 %v4635, %v4634
    %v4639 = vpack.c.b16 %v4637, %v4636
    %v4643 = vsel %vm4324, %v4446, 0
    %4645 = vmatprep.subr.bf16.mxu0 0
    %4646 = vmatpush1.bf16.msra.mxu0 %v4638
    %4647 = vmatprep.subr.bf16.mxu0 0
    %4648 = vmatpush1.bf16.msra.mxu0 %v4639
    %4649 = vmatprep.subr.bf16.mxu0 0
    %4650 = vmatpush1.bf16.msra.mxu0 0
    %4651 = vmatprep.subr.bf16.mxu0 0
    %4652 = vmatpush1.bf16.msra.mxu0 0
    %4653 = vmatprep.subr.bf16.mxu0 0
    %4654 = vmatpush1.bf16.msra.mxu0 0
    %4655 = vmatprep.subr.bf16.mxu0 0
    %4656 = vmatpush1.bf16.msra.mxu0 0
    %4657 = vmatprep.subr.bf16.mxu0 0
    %4658 = vmatpush1.bf16.msra.mxu0 0
    %4659 = vmatprep.subr.bf16.mxu0 0
    %4660 = vmatpush1.bf16.msra.mxu0 0
    %4661 = vmatprep.subr.bf16.mxu0 0
    %4662 = vmatpush1.bf16.msra.mxu0 0
    %4663 = vmatprep.subr.bf16.mxu0 0
    %4664 = vmatpush1.bf16.msra.mxu0 0
    %4665 = vmatprep.subr.bf16.mxu0 0
    %4666 = vmatpush1.bf16.msra.mxu0 0
    %4667 = vmatprep.subr.bf16.mxu0 0
    %4668 = vmatpush1.bf16.msra.mxu0 0
    %4669 = vmatprep.subr.bf16.mxu0 0
    %4670 = vmatpush1.bf16.msra.mxu0 0
    %4671 = vmatprep.subr.bf16.mxu0 0
    %4672 = vmatpush1.bf16.msra.mxu0 0
    %4673 = vmatprep.subr.bf16.mxu0 0
    %4674 = vmatpush1.bf16.msra.mxu0 0
    %4675 = vmatprep.subr.bf16.mxu0 0
    %4676 = vmatpush1.bf16.msra.mxu0 0
    %4677 = vmatprep.mubr.bf16.mxu0 0
    %4678 = vmatmul.mubr.bf16.gmra.mrb[0].mxu0 %v4643
    %v4679 = vpop.f32.mrb[0].mxu0
    %v4680 = vadd.f32 %v4624, %v4679
    %v4681 = vpop.f32.mrb[0].mxu0
    %v4682 = vpop.f32.mrb[0].mxu0
    %v4683 = vadd.f32 %v4627, %v4682
    %v4684 = vpop.f32.mrb[0].mxu0
    %4685 = vdwg.mxu0
    %4686 = vrot.lane.b32.xlu0 %v4322, 64
    %v4687 = vpop.permute.xlu0 %4686
    %4688 = vrot.lane.b32.xlu0 %v4323, 64
    %v4689 = vpop.permute.xlu0 %4688
    %v4691 = vsel %vm4324, %v4687, 0
    %v4694 = vsel %vm4324, %v4689, 0
    %4696 = vmatprep.subr.bf16.mxu0 0
    %4697 = vmatpush1.bf16.xpose.msra.mxu0 %v4694
    %4698 = vmatprep.subr.bf16.mxu0 0
    %4699 = vmatpush1.bf16.xpose.msra.mxu0 0
    %4700 = vmatprep.subr.bf16.mxu0 0
    %4701 = vmatpush1.bf16.xpose.msra.mxu0 0
    %4702 = vmatprep.subr.bf16.mxu0 0
    %4703 = vmatpush1.bf16.xpose.msra.mxu0 0
    %4704 = vmatprep.subr.bf16.mxu0 0
    %4705 = vmatpush1.bf16.xpose.msra.mxu0 0
    %4706 = vmatprep.subr.bf16.mxu0 0
    %4707 = vmatpush1.bf16.xpose.msra.mxu0 0
    %4708 = vmatprep.subr.bf16.mxu0 0
    %4709 = vmatpush1.bf16.xpose.msra.mxu0 0
    %4710 = vmatprep.subr.bf16.mxu0 0
    %4711 = vmatpush1.bf16.xpose.msra.mxu0 0
    %4712 = vmatprep.subr.bf16.mxu0 0
    %4713 = vmatpush1.bf16.xpose.msra.mxu0 0
    %4714 = vmatprep.subr.bf16.mxu0 0
    %4715 = vmatpush1.bf16.xpose.msra.mxu0 0
    %4716 = vmatprep.subr.bf16.mxu0 0
    %4717 = vmatpush1.bf16.xpose.msra.mxu0 0
    %4718 = vmatprep.subr.bf16.mxu0 0
    %4719 = vmatpush1.bf16.xpose.msra.mxu0 0
    %4720 = vmatprep.subr.bf16.mxu0 0
    %4721 = vmatpush1.bf16.xpose.msra.mxu0 0
    %4722 = vmatprep.subr.bf16.mxu0 0
    %4723 = vmatpush1.bf16.xpose.msra.mxu0 0
    %4724 = vmatprep.subr.bf16.mxu0 0
    %4725 = vmatpush1.bf16.xpose.msra.mxu0 0
    %4726 = vmatprep.subr.bf16.mxu0 0
    %4727 = vmatpush1.bf16.xpose.msra.mxu0 0
    %4728 = vmatprep.mubr.bf16.mxu0 0
    %4729 = vmatmul.mubr.bf16.gmra.mrb[0].mxu0 %v4691
    %v4730 = vpop.f32.mrb[0].mxu0
    %v4731 = vadd.f32 %v4038, %v4730
    %v4732 = vpop.f32.mrb[0].mxu0
    %v4733 = vpop.f32.mrb[0].mxu0
    %v4734 = vadd.f32 %v4039, %v4733
    %v4735 = vpop.f32.mrb[0].mxu0
    %4736 = vdwg.mxu0
    %v4737 = vsel %vm4372, %v4731, -inf
    %4738 = vmax.xlane.f32.xlu0 %v4737
    %v4739 = vpop.xlane.xlu0 %4738
    %v4740 = vsel %vm4376, %v4734, -inf
    %4741 = vmax.xlane.f32.xlu0 %v4740
    %v4742 = vpop.xlane.xlu0 %4741
    %v4743 = vsub.f32 %v4731, %v4739
    %v4744 = vsub.f32 %v4734, %v4742
    %v4745 = vmul.f32 %v4743, 1.442695
    %v4746 = vpow.pop %v4745
    %v4747 = vmul.f32 %v4744, 1.442695
    %v4748 = vpow.pop %v4747
    %v4749 = vsel %vm4372, %v4746, 0.0
    %4750 = vadd.xlane.f32.xlu0 %v4749
    %v4751 = vpop.xlane.xlu0 %4750
    %v4752 = vsel %vm4376, %v4748, 0.0
    %4753 = vadd.xlane.f32.xlu0 %v4752
    %v4754 = vpop.xlane.xlu0 %4753
    %v4755 = vrcp.pop %v4751
    %v4756 = vrcp.pop %v4754
    %v4757 = vmul.f32 %v4746, %v4755
    %v4758 = vmul.f32 %v4748, %v4756
    %v4759 = vpack.c.bf16 %v4758, %v4757
    %4760 = vrot.lane.b32.xlu0 %v4397, 64
    %v4761 = vpop.permute.xlu0 %4760
    %v4763 = vsel %vm4372, %v4759, 0
    %v4766 = vsel %vm4401, %v4761, 0
    %4768 = vmatprep.subr.bf16.mxu0 0
    %4769 = vmatpush1.bf16.msra.mxu0 %v4766
    %4770 = vmatprep.subr.bf16.mxu0 0
    %4771 = vmatpush1.bf16.msra.mxu0 0
    %4772 = vmatprep.subr.bf16.mxu0 0
    %4773 = vmatpush1.bf16.msra.mxu0 0
    %4774 = vmatprep.subr.bf16.mxu0 0
    %4775 = vmatpush1.bf16.msra.mxu0 0
    %4776 = vmatprep.subr.bf16.mxu0 0
    %4777 = vmatpush1.bf16.msra.mxu0 0
    %4778 = vmatprep.subr.bf16.mxu0 0
    %4779 = vmatpush1.bf16.msra.mxu0 0
    %4780 = vmatprep.subr.bf16.mxu0 0
    %4781 = vmatpush1.bf16.msra.mxu0 0
    %4782 = vmatprep.subr.bf16.mxu0 0
    %4783 = vmatpush1.bf16.msra.mxu0 0
    %4784 = vmatprep.subr.bf16.mxu0 0
    %4785 = vmatpush1.bf16.msra.mxu0 0
    %4786 = vmatprep.subr.bf16.mxu0 0
    %4787 = vmatpush1.bf16.msra.mxu0 0
    %4788 = vmatprep.subr.bf16.mxu0 0
    %4789 = vmatpush1.bf16.msra.mxu0 0
    %4790 = vmatprep.subr.bf16.mxu0 0
    %4791 = vmatpush1.bf16.msra.mxu0 0
    %4792 = vmatprep.subr.bf16.mxu0 0
    %4793 = vmatpush1.bf16.msra.mxu0 0
    %4794 = vmatprep.subr.bf16.mxu0 0
    %4795 = vmatpush1.bf16.msra.mxu0 0
    %4796 = vmatprep.subr.bf16.mxu0 0
    %4797 = vmatpush1.bf16.msra.mxu0 0
    %4798 = vmatprep.subr.bf16.mxu0 0
    %4799 = vmatpush1.bf16.msra.mxu0 0
    %4800 = vmatprep.mubr.bf16.mxu0 0
    %4801 = vmatmul.mubr.bf16.gmra.mrb[0].mxu0 %v4763
    %v4802 = vpop.f32.mrb[0].mxu0
    %v4803 = vadd.f32 0.0, %v4802
    %v4804 = vpop.f32.mrb[0].mxu0
    %v4805 = vpop.f32.mrb[0].mxu0
    %v4806 = vadd.f32 0.0, %v4805
    %v4807 = vpop.f32.mrb[0].mxu0
    %4808 = vdwg.mxu0
    %v4809 = vpack.c.bf16 %v4806, %v4803
    %v4814 = vunpack.c.l.b16 %v4052
    %v4815 = vunpack.c.l.b16 %v4053
    %v4816 = vunpack.c.l.b16 %v4054
    %v4817 = vunpack.c.l.b16 %v4055
    %v4818 = vpack.c.b16 %v4815, %v4814
    %v4819 = vpack.c.b16 %v4817, %v4816
    %v4823 = vsel %vm4324, %v4809, 0
    %4825 = vmatprep.subr.bf16.mxu0 0
    %4826 = vmatpush1.bf16.msra.mxu0 %v4818
    %4827 = vmatprep.subr.bf16.mxu0 0
    %4828 = vmatpush1.bf16.msra.mxu0 %v4819
    %4829 = vmatprep.subr.bf16.mxu0 0
    %4830 = vmatpush1.bf16.msra.mxu0 0
    %4831 = vmatprep.subr.bf16.mxu0 0
    %4832 = vmatpush1.bf16.msra.mxu0 0
    %4833 = vmatprep.subr.bf16.mxu0 0
    %4834 = vmatpush1.bf16.msra.mxu0 0
    %4835 = vmatprep.subr.bf16.mxu0 0
    %4836 = vmatpush1.bf16.msra.mxu0 0
    %4837 = vmatprep.subr.bf16.mxu0 0
    %4838 = vmatpush1.bf16.msra.mxu0 0
    %4839 = vmatprep.subr.bf16.mxu0 0
    %4840 = vmatpush1.bf16.msra.mxu0 0
    %4841 = vmatprep.subr.bf16.mxu0 0
    %4842 = vmatpush1.bf16.msra.mxu0 0
    %4843 = vmatprep.subr.bf16.mxu0 0
    %4844 = vmatpush1.bf16.msra.mxu0 0
    %4845 = vmatprep.subr.bf16.mxu0 0
    %4846 = vmatpush1.bf16.msra.mxu0 0
    %4847 = vmatprep.subr.bf16.mxu0 0
    %4848 = vmatpush1.bf16.msra.mxu0 0
    %4849 = vmatprep.subr.bf16.mxu0 0
    %4850 = vmatpush1.bf16.msra.mxu0 0
    %4851 = vmatprep.subr.bf16.mxu0 0
    %4852 = vmatpush1.bf16.msra.mxu0 0
    %4853 = vmatprep.subr.bf16.mxu0 0
    %4854 = vmatpush1.bf16.msra.mxu0 0
    %4855 = vmatprep.subr.bf16.mxu0 0
    %4856 = vmatpush1.bf16.msra.mxu0 0
    %4857 = vmatprep.mubr.bf16.mxu0 0
    %4858 = vmatmul.mubr.bf16.gmra.mrb[0].mxu0 %v4823
    %v4859 = vpop.f32.mrb[0].mxu0
    %v4860 = vadd.f32 0.0, %v4859
    %v4861 = vpop.f32.mrb[0].mxu0
    %v4862 = vpop.f32.mrb[0].mxu0
    %v4863 = vadd.f32 0.0, %v4862
    %v4864 = vpop.f32.mrb[0].mxu0
    %4865 = vdwg.mxu0
    %v4866 = vadd.f32 %v4680, %v4860
    %v4867 = vadd.f32 %v4683, %v4863
    %4868 = vrot.lane.b32.xlu0 %v4322, 32
    %v4869 = vpop.permute.xlu0 %4868
    %4870 = vrot.lane.b32.xlu0 %v4323, 32
    %v4871 = vpop.permute.xlu0 %4870
    %v4873 = vsel %vm4324, %v4869, 0
    %v4876 = vsel %vm4324, %v4871, 0
    %4878 = vmatprep.subr.bf16.mxu0 0
    %4879 = vmatpush1.bf16.xpose.msra.mxu0 %v4876
    %4880 = vmatprep.subr.bf16.mxu0 0
    %4881 = vmatpush1.bf16.xpose.msra.mxu0 0
    %4882 = vmatprep.subr.bf16.mxu0 0
    %4883 = vmatpush1.bf16.xpose.msra.mxu0 0
    %4884 = vmatprep.subr.bf16.mxu0 0
    %4885 = vmatpush1.bf16.xpose.msra.mxu0 0
    %4886 = vmatprep.subr.bf16.mxu0 0
    %4887 = vmatpush1.bf16.xpose.msra.mxu0 0
    %4888 = vmatprep.subr.bf16.mxu0 0
    %4889 = vmatpush1.bf16.xpose.msra.mxu0 0
    %4890 = vmatprep.subr.bf16.mxu0 0
    %4891 = vmatpush1.bf16.xpose.msra.mxu0 0
    %4892 = vmatprep.subr.bf16.mxu0 0
    %4893 = vmatpush1.bf16.xpose.msra.mxu0 0
    %4894 = vmatprep.subr.bf16.mxu0 0
    %4895 = vmatpush1.bf16.xpose.msra.mxu0 0
    %4896 = vmatprep.subr.bf16.mxu0 0
    %4897 = vmatpush1.bf16.xpose.msra.mxu0 0
    %4898 = vmatprep.subr.bf16.mxu0 0
    %4899 = vmatpush1.bf16.xpose.msra.mxu0 0
    %4900 = vmatprep.subr.bf16.mxu0 0
    %4901 = vmatpush1.bf16.xpose.msra.mxu0 0
    %4902 = vmatprep.subr.bf16.mxu0 0
    %4903 = vmatpush1.bf16.xpose.msra.mxu0 0
    %4904 = vmatprep.subr.bf16.mxu0 0
    %4905 = vmatpush1.bf16.xpose.msra.mxu0 0
    %4906 = vmatprep.subr.bf16.mxu0 0
    %4907 = vmatpush1.bf16.xpose.msra.mxu0 0
    %4908 = vmatprep.subr.bf16.mxu0 0
    %4909 = vmatpush1.bf16.xpose.msra.mxu0 0
    %4910 = vmatprep.mubr.bf16.mxu0 0
    %4911 = vmatmul.mubr.bf16.gmra.mrb[0].mxu0 %v4873
    %v4912 = vpop.f32.mrb[0].mxu0
    %v4913 = vadd.f32 %v4038, %v4912
    %v4914 = vpop.f32.mrb[0].mxu0
    %v4915 = vpop.f32.mrb[0].mxu0
    %v4916 = vadd.f32 %v4039, %v4915
    %v4917 = vpop.f32.mrb[0].mxu0
    %4918 = vdwg.mxu0
    %v4919 = vsel %vm4372, %v4913, -inf
    %4920 = vmax.xlane.f32.xlu0 %v4919
    %v4921 = vpop.xlane.xlu0 %4920
    %v4922 = vsel %vm4376, %v4916, -inf
    %4923 = vmax.xlane.f32.xlu0 %v4922
    %v4924 = vpop.xlane.xlu0 %4923
    %v4925 = vsub.f32 %v4913, %v4921
    %v4926 = vsub.f32 %v4916, %v4924
    %v4927 = vmul.f32 %v4925, 1.442695
    %v4928 = vpow.pop %v4927
    %v4929 = vmul.f32 %v4926, 1.442695
    %v4930 = vpow.pop %v4929
    %v4931 = vsel %vm4372, %v4928, 0.0
    %4932 = vadd.xlane.f32.xlu0 %v4931
    %v4933 = vpop.xlane.xlu0 %4932
    %v4934 = vsel %vm4376, %v4930, 0.0
    %4935 = vadd.xlane.f32.xlu0 %v4934
    %v4936 = vpop.xlane.xlu0 %4935
    %v4937 = vrcp.pop %v4933
    %v4938 = vrcp.pop %v4936
    %v4939 = vmul.f32 %v4928, %v4937
    %v4940 = vmul.f32 %v4930, %v4938
    %v4941 = vpack.c.bf16 %v4940, %v4939
    %4942 = vrot.lane.b32.xlu0 %v4397, 32
    %v4943 = vpop.permute.xlu0 %4942
    %v4945 = vsel %vm4372, %v4941, 0
    %v4948 = vsel %vm4401, %v4943, 0
    %4950 = vmatprep.subr.bf16.mxu0 0
    %4951 = vmatpush1.bf16.msra.mxu0 %v4948
    %4952 = vmatprep.subr.bf16.mxu0 0
    %4953 = vmatpush1.bf16.msra.mxu0 0
    %4954 = vmatprep.subr.bf16.mxu0 0
    %4955 = vmatpush1.bf16.msra.mxu0 0
    %4956 = vmatprep.subr.bf16.mxu0 0
    %4957 = vmatpush1.bf16.msra.mxu0 0
    %4958 = vmatprep.subr.bf16.mxu0 0
    %4959 = vmatpush1.bf16.msra.mxu0 0
    %4960 = vmatprep.subr.bf16.mxu0 0
    %4961 = vmatpush1.bf16.msra.mxu0 0
    %4962 = vmatprep.subr.bf16.mxu0 0
    %4963 = vmatpush1.bf16.msra.mxu0 0
    %4964 = vmatprep.subr.bf16.mxu0 0
    %4965 = vmatpush1.bf16.msra.mxu0 0
    %4966 = vmatprep.subr.bf16.mxu0 0
    %4967 = vmatpush1.bf16.msra.mxu0 0
    %4968 = vmatprep.subr.bf16.mxu0 0
    %4969 = vmatpush1.bf16.msra.mxu0 0
    %4970 = vmatprep.subr.bf16.mxu0 0
    %4971 = vmatpush1.bf16.msra.mxu0 0
    %4972 = vmatprep.subr.bf16.mxu0 0
    %4973 = vmatpush1.bf16.msra.mxu0 0
    %4974 = vmatprep.subr.bf16.mxu0 0
    %4975 = vmatpush1.bf16.msra.mxu0 0
    %4976 = vmatprep.subr.bf16.mxu0 0
    %4977 = vmatpush1.bf16.msra.mxu0 0
    %4978 = vmatprep.subr.bf16.mxu0 0
    %4979 = vmatpush1.bf16.msra.mxu0 0
    %4980 = vmatprep.subr.bf16.mxu0 0
    %4981 = vmatpush1.bf16.msra.mxu0 0
    %4982 = vmatprep.mubr.bf16.mxu0 0
    %4983 = vmatmul.mubr.bf16.gmra.mrb[0].mxu0 %v4945
    %v4984 = vpop.f32.mrb[0].mxu0
    %v4985 = vadd.f32 0.0, %v4984
    %v4986 = vpop.f32.mrb[0].mxu0
    %v4987 = vpop.f32.mrb[0].mxu0
    %v4988 = vadd.f32 0.0, %v4987
    %v4989 = vpop.f32.mrb[0].mxu0
    %4990 = vdwg.mxu0
    %v4991 = vpack.c.bf16 %v4988, %v4985
    %v4996 = vunpack.c.l.b16 %v4056
    %v4997 = vunpack.c.l.b16 %v4057
    %v4998 = vunpack.c.l.b16 %v4058
    %v4999 = vunpack.c.l.b16 %v4059
    %v5000 = vpack.c.b16 %v4997, %v4996
    %v5001 = vpack.c.b16 %v4999, %v4998
    %v5005 = vsel %vm4324, %v4991, 0
    %5007 = vmatprep.subr.bf16.mxu0 0
    %5008 = vmatpush1.bf16.msra.mxu0 %v5000
    %5009 = vmatprep.subr.bf16.mxu0 0
    %5010 = vmatpush1.bf16.msra.mxu0 %v5001
    %5011 = vmatprep.subr.bf16.mxu0 0
    %5012 = vmatpush1.bf16.msra.mxu0 0
    %5013 = vmatprep.subr.bf16.mxu0 0
    %5014 = vmatpush1.bf16.msra.mxu0 0
    %5015 = vmatprep.subr.bf16.mxu0 0
    %5016 = vmatpush1.bf16.msra.mxu0 0
    %5017 = vmatprep.subr.bf16.mxu0 0
    %5018 = vmatpush1.bf16.msra.mxu0 0
    %5019 = vmatprep.subr.bf16.mxu0 0
    %5020 = vmatpush1.bf16.msra.mxu0 0
    %5021 = vmatprep.subr.bf16.mxu0 0
    %5022 = vmatpush1.bf16.msra.mxu0 0
    %5023 = vmatprep.subr.bf16.mxu0 0
    %5024 = vmatpush1.bf16.msra.mxu0 0
    %5025 = vmatprep.subr.bf16.mxu0 0
    %5026 = vmatpush1.bf16.msra.mxu0 0
    %5027 = vmatprep.subr.bf16.mxu0 0
    %5028 = vmatpush1.bf16.msra.mxu0 0
    %5029 = vmatprep.subr.bf16.mxu0 0
    %5030 = vmatpush1.bf16.msra.mxu0 0
    %5031 = vmatprep.subr.bf16.mxu0 0
    %5032 = vmatpush1.bf16.msra.mxu0 0
    %5033 = vmatprep.subr.bf16.mxu0 0
    %5034 = vmatpush1.bf16.msra.mxu0 0
    %5035 = vmatprep.subr.bf16.mxu0 0
    %5036 = vmatpush1.bf16.msra.mxu0 0
    %5037 = vmatprep.subr.bf16.mxu0 0
    %5038 = vmatpush1.bf16.msra.mxu0 0
    %5039 = vmatprep.mubr.bf16.mxu0 0
    %5040 = vmatmul.mubr.bf16.gmra.mrb[0].mxu0 %v5005
    %v5041 = vpop.f32.mrb[0].mxu0
    %v5042 = vadd.f32 0.0, %v5041
    %v5043 = vpop.f32.mrb[0].mxu0
    %v5044 = vpop.f32.mrb[0].mxu0
    %v5045 = vadd.f32 0.0, %v5044
    %v5046 = vpop.f32.mrb[0].mxu0
    %5047 = vdwg.mxu0
    %v5048 = vadd.f32 %v4866, %v5042
    %v5049 = vadd.f32 %v4867, %v5045
    %v5050 = vld [vmem:[%s33] sm:$0x1]
    %v5052 = vlaneseq
    %v5053 = vshrl.u32 %v5052, 7
    %v5054 = vsub.s32 0, %v5053
    %v5055 = vrot.slane %v5050, %v5054
    %v5057 = vadd.f32 %v5048, %v5055
    %v5058 = vadd.f32 %v5049, %v5055
    %v5059 = vadd.f32 %v4042, %v5057
    %v5060 = vadd.f32 %v4043, %v5058
    %v5061 = vld [vmem:[%s43] sm:$0x1]
    %v5062 = vld [vmem:[%s45] sm:$0x1]
    %5063 = vadd.xlane.f32.xlu0 %v5059
    %v5064 = vpop.xlane.xlu0 %5063
    %vm5065 = vcmask 1043456
    %v5066 = vsel %vm5065, %v5060, 0.0
    %5067 = vadd.xlane.f32.xlu0 %v5066
    %v5068 = vpop.xlane.xlu0 %5067
    %v5069 = vrcp.pop 128.0
    %v5070 = vmul.f32 %v5064, %v5069
    %v5071 = vmul.f32 %v5068, %v5069
    %v5072 = vsub.f32 %v5059, %v5070
    %v5073 = vsub.f32 %v5060, %v5071
    %v5074 = vmul.f32 %v5072, %v5072
    %v5075 = vmul.f32 %v5073, %v5073
    %5076 = vadd.xlane.f32.xlu0 %v5074
    %v5077 = vpop.xlane.xlu0 %5076
    %v5078 = vsel %vm5065, %v5075, 0.0
    %5079 = vadd.xlane.f32.xlu0 %v5078
    %v5080 = vpop.xlane.xlu0 %5079
    %v5081 = vmul.f32 %v5077, %v5069
    %v5082 = vmul.f32 %v5080, %v5069
    %v5083 = vadd.f32 %v5081, 1e-05
    %v5084 = vadd.f32 %v5082, 1e-05
    %v5085 = vrsqrt.pop %v5083
    %v5086 = vrsqrt.pop %v5084
    %v5087 = vmul.f32 %v5072, %v5085
    %v5088 = vmul.f32 %v5073, %v5086
    %v5090 = vlaneseq
    %v5091 = vshrl.u32 %v5090, 7
    %v5092 = vsub.s32 0, %v5091
    %v5093 = vrot.slane %v5061, %v5092
    %v5095 = vmul.f32 %v5087, %v5093
    %v5096 = vmul.f32 %v5088, %v5093
    %v5098 = vlaneseq
    %v5099 = vshrl.u32 %v5098, 7
    %v5100 = vsub.s32 0, %v5099
    %v5101 = vrot.slane %v5062, %v5100
    %v5103 = vadd.f32 %v5095, %v5101
    %v5104 = vadd.f32 %v5096, %v5101
    %v5105 = vld [vmem:[%s35] sm:$0xff]
    %v5106 = vld [vmem:[%s35 + $0x8] sm:$0xff]
    %v5107 = vld [vmem:[%s35 + $0x10] sm:$0xff]
    %v5108 = vld [vmem:[%s35 + $0x18] sm:$0xff]
    %v5109 = vld [vmem:[%s35 + $0x20] sm:$0xff]
    %v5110 = vld [vmem:[%s35 + $0x28] sm:$0xff]
    %v5111 = vld [vmem:[%s35 + $0x30] sm:$0xff]
    %v5112 = vld [vmem:[%s35 + $0x38] sm:$0xff]
    %v5113 = vld [vmem:[%s35 + $0x40] sm:$0xff]
    %v5114 = vld [vmem:[%s35 + $0x48] sm:$0xff]
    %v5115 = vld [vmem:[%s35 + $0x50] sm:$0xff]
    %v5116 = vld [vmem:[%s35 + $0x58] sm:$0xff]
    %v5117 = vld [vmem:[%s35 + $0x60] sm:$0xff]
    %v5118 = vld [vmem:[%s35 + $0x68] sm:$0xff]
    %v5119 = vld [vmem:[%s35 + $0x70] sm:$0xff]
    %v5120 = vld [vmem:[%s35 + $0x78] sm:$0xff]
    %v5121 = vpack.c.bf16 %v5104, %v5103
    %v5122 = vld [vmem:[%s37] sm:$0x3]
    %v5124 = vlaneseq
    %v5125 = vshrl.u32 %v5124, 7
    %v5126 = vsub.s32 0, %v5125
    %v5127 = vrot.slane %v5122, %v5126
    %v5128 = vlaneseq
    %v5129 = vshrl.u32 %v5128, 7
    %v5130 = vsub.s32 1, %v5129
    %v5131 = vrot.slane %v5122, %v5130
    %v5150 = vunpack.c.l.b16 %v5105
    %v5151 = vunpack.c.h.b16 %v5105
    %v5152 = vunpack.c.l.b16 %v5106
    %v5153 = vunpack.c.h.b16 %v5106
    %v5154 = vunpack.c.l.b16 %v5107
    %v5155 = vunpack.c.h.b16 %v5107
    %v5156 = vunpack.c.l.b16 %v5108
    %v5157 = vunpack.c.h.b16 %v5108
    %v5158 = vunpack.c.l.b16 %v5109
    %v5159 = vunpack.c.h.b16 %v5109
    %v5160 = vunpack.c.l.b16 %v5110
    %v5161 = vunpack.c.h.b16 %v5110
    %v5162 = vunpack.c.l.b16 %v5111
    %v5163 = vunpack.c.h.b16 %v5111
    %v5164 = vunpack.c.l.b16 %v5112
    %v5165 = vunpack.c.h.b16 %v5112
    %v5166 = vunpack.c.l.b16 %v5113
    %v5167 = vunpack.c.h.b16 %v5113
    %v5168 = vunpack.c.l.b16 %v5114
    %v5169 = vunpack.c.h.b16 %v5114
    %v5170 = vunpack.c.l.b16 %v5115
    %v5171 = vunpack.c.h.b16 %v5115
    %v5172 = vunpack.c.l.b16 %v5116
    %v5173 = vunpack.c.h.b16 %v5116
    %v5174 = vunpack.c.l.b16 %v5117
    %v5175 = vunpack.c.h.b16 %v5117
    %v5176 = vunpack.c.l.b16 %v5118
    %v5177 = vunpack.c.h.b16 %v5118
    %v5178 = vunpack.c.l.b16 %v5119
    %v5179 = vunpack.c.h.b16 %v5119
    %v5180 = vunpack.c.l.b16 %v5120
    %v5181 = vunpack.c.h.b16 %v5120
    %v5182 = vpack.c.b16 %v5152, %v5150
    %v5183 = vpack.c.b16 %v5153, %v5151
    %v5184 = vpack.c.b16 %v5156, %v5154
    %v5185 = vpack.c.b16 %v5157, %v5155
    %v5186 = vpack.c.b16 %v5160, %v5158
    %v5187 = vpack.c.b16 %v5161, %v5159
    %v5188 = vpack.c.b16 %v5164, %v5162
    %v5189 = vpack.c.b16 %v5165, %v5163
    %v5190 = vpack.c.b16 %v5168, %v5166
    %v5191 = vpack.c.b16 %v5169, %v5167
    %v5192 = vpack.c.b16 %v5172, %v5170
    %v5193 = vpack.c.b16 %v5173, %v5171
    %v5194 = vpack.c.b16 %v5176, %v5174
    %v5195 = vpack.c.b16 %v5177, %v5175
    %v5196 = vpack.c.b16 %v5180, %v5178
    %v5197 = vpack.c.b16 %v5181, %v5179
    %5214 = vmatprep.subr.bf16.mxu0 %v5183
    %5215 = vmatpush1.bf16.msra.mxu0 %v5182
    %5216 = vmatprep.subr.bf16.mxu0 %v5185
    %5217 = vmatpush1.bf16.msra.mxu0 %v5184
    %5218 = vmatprep.subr.bf16.mxu0 %v5187
    %5219 = vmatpush1.bf16.msra.mxu0 %v5186
    %5220 = vmatprep.subr.bf16.mxu0 %v5189
    %5221 = vmatpush1.bf16.msra.mxu0 %v5188
    %5222 = vmatprep.subr.bf16.mxu0 %v5191
    %5223 = vmatpush1.bf16.msra.mxu0 %v5190
    %5224 = vmatprep.subr.bf16.mxu0 %v5193
    %5225 = vmatpush1.bf16.msra.mxu0 %v5192
    %5226 = vmatprep.subr.bf16.mxu0 %v5195
    %5227 = vmatpush1.bf16.msra.mxu0 %v5194
    %5228 = vmatprep.subr.bf16.mxu0 %v5197
    %5229 = vmatpush1.bf16.msra.mxu0 %v5196
    %5230 = vmatprep.subr.bf16.mxu0 0
    %5231 = vmatpush1.bf16.msra.mxu0 0
    %5232 = vmatprep.subr.bf16.mxu0 0
    %5233 = vmatpush1.bf16.msra.mxu0 0
    %5234 = vmatprep.subr.bf16.mxu0 0
    %5235 = vmatpush1.bf16.msra.mxu0 0
    %5236 = vmatprep.subr.bf16.mxu0 0
    %5237 = vmatpush1.bf16.msra.mxu0 0
    %5238 = vmatprep.subr.bf16.mxu0 0
    %5239 = vmatpush1.bf16.msra.mxu0 0
    %5240 = vmatprep.subr.bf16.mxu0 0
    %5241 = vmatpush1.bf16.msra.mxu0 0
    %5242 = vmatprep.subr.bf16.mxu0 0
    %5243 = vmatpush1.bf16.msra.mxu0 0
    %5244 = vmatprep.subr.bf16.mxu0 0
    %5245 = vmatpush1.bf16.msra.mxu0 0
    %5246 = vmatprep.mubr.bf16.mxu0 0
    %5247 = vmatmul.mubr.bf16.gmra.mrb[0].mxu0 %v5121
    %v5248 = vpop.f32.mrb[0].mxu0
    %v5249 = vadd.f32 %v5127, %v5248
    %v5250 = vpop.f32.mrb[0].mxu0
    %v5251 = vadd.f32 %v5131, %v5250
    %v5252 = vpop.f32.mrb[0].mxu0
    %v5253 = vadd.f32 %v5127, %v5252
    %v5254 = vpop.f32.mrb[0].mxu0
    %v5255 = vadd.f32 %v5131, %v5254
    %5256 = vdwg.mxu0
    %v5257 = vmax.f32 %v5249, 0.0
    %v5258 = vmax.f32 %v5251, 0.0
    %v5259 = vmax.f32 %v5253, 0.0
    %v5260 = vmax.f32 %v5255, 0.0
    %v5261 = vld [vmem:[%s39] sm:$0xf]
    %v5262 = vld [vmem:[%s39 + $0x4] sm:$0xf]
    %v5263 = vld [vmem:[%s39 + $0x8] sm:$0xf]
    %v5264 = vld [vmem:[%s39 + $0xc] sm:$0xf]
    %v5265 = vld [vmem:[%s39 + $0x10] sm:$0xf]
    %v5266 = vld [vmem:[%s39 + $0x14] sm:$0xf]
    %v5267 = vld [vmem:[%s39 + $0x18] sm:$0xf]
    %v5268 = vld [vmem:[%s39 + $0x1c] sm:$0xf]
    %v5269 = vld [vmem:[%s39 + $0x20] sm:$0xf]
    %v5270 = vld [vmem:[%s39 + $0x24] sm:$0xf]
    %v5271 = vld [vmem:[%s39 + $0x28] sm:$0xf]
    %v5272 = vld [vmem:[%s39 + $0x2c] sm:$0xf]
    %v5273 = vld [vmem:[%s39 + $0x30] sm:$0xf]
    %v5274 = vld [vmem:[%s39 + $0x34] sm:$0xf]
    %v5275 = vld [vmem:[%s39 + $0x38] sm:$0xf]
    %v5276 = vld [vmem:[%s39 + $0x3c] sm:$0xf]
    %v5277 = vld [vmem:[%s39 + $0x40] sm:$0xf]
    %v5278 = vld [vmem:[%s39 + $0x44] sm:$0xf]
    %v5279 = vld [vmem:[%s39 + $0x48] sm:$0xf]
    %v5280 = vld [vmem:[%s39 + $0x4c] sm:$0xf]
    %v5281 = vld [vmem:[%s39 + $0x50] sm:$0xf]
    %v5282 = vld [vmem:[%s39 + $0x54] sm:$0xf]
    %v5283 = vld [vmem:[%s39 + $0x58] sm:$0xf]
    %v5284 = vld [vmem:[%s39 + $0x5c] sm:$0xf]
    %v5285 = vld [vmem:[%s39 + $0x60] sm:$0xf]
    %v5286 = vld [vmem:[%s39 + $0x64] sm:$0xf]
    %v5287 = vld [vmem:[%s39 + $0x68] sm:$0xf]
    %v5288 = vld [vmem:[%s39 + $0x6c] sm:$0xf]
    %v5289 = vld [vmem:[%s39 + $0x70] sm:$0xf]
    %v5290 = vld [vmem:[%s39 + $0x74] sm:$0xf]
    %v5291 = vld [vmem:[%s39 + $0x78] sm:$0xf]
    %v5292 = vld [vmem:[%s39 + $0x7c] sm:$0xf]
    %v5293 = vpack.c.bf16 %v5259, %v5257
    %v5294 = vpack.c.bf16 %v5260, %v5258
    %v5295 = vld [vmem:[%s41] sm:$0x1]
    %v5297 = vlaneseq
    %v5298 = vshrl.u32 %v5297, 7
    %v5299 = vsub.s32 0, %v5298
    %v5300 = vrot.slane %v5295, %v5299
    %v5334 = vunpack.c.l.b16 %v5261
    %v5335 = vunpack.c.l.b16 %v5262
    %v5336 = vunpack.c.l.b16 %v5263
    %v5337 = vunpack.c.l.b16 %v5264
    %v5338 = vunpack.c.l.b16 %v5265
    %v5339 = vunpack.c.l.b16 %v5266
    %v5340 = vunpack.c.l.b16 %v5267
    %v5341 = vunpack.c.l.b16 %v5268
    %v5342 = vunpack.c.l.b16 %v5269
    %v5343 = vunpack.c.l.b16 %v5270
    %v5344 = vunpack.c.l.b16 %v5271
    %v5345 = vunpack.c.l.b16 %v5272
    %v5346 = vunpack.c.l.b16 %v5273
    %v5347 = vunpack.c.l.b16 %v5274
    %v5348 = vunpack.c.l.b16 %v5275
    %v5349 = vunpack.c.l.b16 %v5276
    %v5350 = vunpack.c.l.b16 %v5277
    %v5351 = vunpack.c.l.b16 %v5278
    %v5352 = vunpack.c.l.b16 %v5279
    %v5353 = vunpack.c.l.b16 %v5280
    %v5354 = vunpack.c.l.b16 %v5281
    %v5355 = vunpack.c.l.b16 %v5282
    %v5356 = vunpack.c.l.b16 %v5283
    %v5357 = vunpack.c.l.b16 %v5284
    %v5358 = vunpack.c.l.b16 %v5285
    %v5359 = vunpack.c.l.b16 %v5286
    %v5360 = vunpack.c.l.b16 %v5287
    %v5361 = vunpack.c.l.b16 %v5288
    %v5362 = vunpack.c.l.b16 %v5289
    %v5363 = vunpack.c.l.b16 %v5290
    %v5364 = vunpack.c.l.b16 %v5291
    %v5365 = vunpack.c.l.b16 %v5292
    %v5366 = vpack.c.b16 %v5335, %v5334
    %v5367 = vpack.c.b16 %v5337, %v5336
    %v5368 = vpack.c.b16 %v5339, %v5338
    %v5369 = vpack.c.b16 %v5341, %v5340
    %v5370 = vpack.c.b16 %v5343, %v5342
    %v5371 = vpack.c.b16 %v5345, %v5344
    %v5372 = vpack.c.b16 %v5347, %v5346
    %v5373 = vpack.c.b16 %v5349, %v5348
    %v5374 = vpack.c.b16 %v5351, %v5350
    %v5375 = vpack.c.b16 %v5353, %v5352
    %v5376 = vpack.c.b16 %v5355, %v5354
    %v5377 = vpack.c.b16 %v5357, %v5356
    %v5378 = vpack.c.b16 %v5359, %v5358
    %v5379 = vpack.c.b16 %v5361, %v5360
    %v5380 = vpack.c.b16 %v5363, %v5362
    %v5381 = vpack.c.b16 %v5365, %v5364
    %5398 = vmatprep.subr.bf16.mxu0 0
    %5399 = vmatpush1.bf16.msra.mxu0 %v5366
    %5400 = vmatprep.subr.bf16.mxu0 0
    %5401 = vmatpush1.bf16.msra.mxu0 %v5367
    %5402 = vmatprep.subr.bf16.mxu0 0
    %5403 = vmatpush1.bf16.msra.mxu0 %v5368
    %5404 = vmatprep.subr.bf16.mxu0 0
    %5405 = vmatpush1.bf16.msra.mxu0 %v5369
    %5406 = vmatprep.subr.bf16.mxu0 0
    %5407 = vmatpush1.bf16.msra.mxu0 %v5370
    %5408 = vmatprep.subr.bf16.mxu0 0
    %5409 = vmatpush1.bf16.msra.mxu0 %v5371
    %5410 = vmatprep.subr.bf16.mxu0 0
    %5411 = vmatpush1.bf16.msra.mxu0 %v5372
    %5412 = vmatprep.subr.bf16.mxu0 0
    %5413 = vmatpush1.bf16.msra.mxu0 %v5373
    %5414 = vmatprep.subr.bf16.mxu0 0
    %5415 = vmatpush1.bf16.msra.mxu0 %v5374
    %5416 = vmatprep.subr.bf16.mxu0 0
    %5417 = vmatpush1.bf16.msra.mxu0 %v5375
    %5418 = vmatprep.subr.bf16.mxu0 0
    %5419 = vmatpush1.bf16.msra.mxu0 %v5376
    %5420 = vmatprep.subr.bf16.mxu0 0
    %5421 = vmatpush1.bf16.msra.mxu0 %v5377
    %5422 = vmatprep.subr.bf16.mxu0 0
    %5423 = vmatpush1.bf16.msra.mxu0 %v5378
    %5424 = vmatprep.subr.bf16.mxu0 0
    %5425 = vmatpush1.bf16.msra.mxu0 %v5379
    %5426 = vmatprep.subr.bf16.mxu0 0
    %5427 = vmatpush1.bf16.msra.mxu0 %v5380
    %5428 = vmatprep.subr.bf16.mxu0 0
    %5429 = vmatpush1.bf16.msra.mxu0 %v5381
    %5430 = vmatprep.mubr.bf16.mxu0 %v5294
    %5431 = vmatmul.mubr.bf16.gmra.mrb[0].mxu0 %v5293
    %v5432 = vpop.f32.mrb[0].mxu0
    %v5433 = vadd.f32 %v5300, %v5432
    %v5434 = vpop.f32.mrb[0].mxu0
    %v5435 = vpop.f32.mrb[0].mxu0
    %v5436 = vadd.f32 %v5300, %v5435
    %v5437 = vpop.f32.mrb[0].mxu0
    %5438 = vdwg.mxu0
    %v5439 = vadd.f32 %v5103, %v5433
    %v5440 = vadd.f32 %v5104, %v5436
    %v5441 = vld [vmem:[%s47] sm:$0x1]
    %v5442 = vld [vmem:[%s49] sm:$0x1]
    %5443 = vadd.xlane.f32.xlu0 %v5439
    %v5444 = vpop.xlane.xlu0 %5443
    %v5445 = vsel %vm5065, %v5440, 0.0
    %5446 = vadd.xlane.f32.xlu0 %v5445
    %v5447 = vpop.xlane.xlu0 %5446
    %v5448 = vmul.f32 %v5444, %v5069
    %v5449 = vmul.f32 %v5447, %v5069
    %v5450 = vsub.f32 %v5439, %v5448
    %v5451 = vsub.f32 %v5440, %v5449
    %v5452 = vmul.f32 %v5450, %v5450
    %v5453 = vmul.f32 %v5451, %v5451
    %5454 = vadd.xlane.f32.xlu0 %v5452
    %v5455 = vpop.xlane.xlu0 %5454
    %v5456 = vsel %vm5065, %v5453, 0.0
    %5457 = vadd.xlane.f32.xlu0 %v5456
    %v5458 = vpop.xlane.xlu0 %5457
    %v5459 = vmul.f32 %v5455, %v5069
    %v5460 = vmul.f32 %v5458, %v5069
    %v5461 = vadd.f32 %v5459, 1e-05
    %v5462 = vadd.f32 %v5460, 1e-05
    %v5463 = vrsqrt.pop %v5461
    %v5464 = vrsqrt.pop %v5462
    %v5465 = vmul.f32 %v5450, %v5463
    %v5466 = vmul.f32 %v5451, %v5464
    %v5468 = vlaneseq
    %v5469 = vshrl.u32 %v5468, 7
    %v5470 = vsub.s32 0, %v5469
    %v5471 = vrot.slane %v5441, %v5470
    %v5473 = vmul.f32 %v5465, %v5471
    %v5474 = vmul.f32 %v5466, %v5471
    %v5476 = vlaneseq
    %v5477 = vshrl.u32 %v5476, 7
    %v5478 = vsub.s32 0, %v5477
    %v5479 = vrot.slane %v5442, %v5478
    %v5481 = vadd.f32 %v5473, %v5479
    %v5482 = vadd.f32 %v5474, %v5479
    %s5483 = scalar_lea.vmem %s31, 64
    %v5484 = vld [vmem:[%s5483] sm:$0xf]
    %v5485 = vld [vmem:[%s5483 + $0x4] sm:$0xf]
    %v5486 = vld [vmem:[%s5483 + $0x8] sm:$0xf]
    %v5487 = vld [vmem:[%s5483 + $0xc] sm:$0xf]
    %v5488 = vld [vmem:[%s5483 + $0x10] sm:$0xf]
    %v5489 = vld [vmem:[%s5483 + $0x14] sm:$0xf]
    %v5490 = vld [vmem:[%s5483 + $0x18] sm:$0xf]
    %v5491 = vld [vmem:[%s5483 + $0x1c] sm:$0xf]
    %v5492 = vld [vmem:[%s5483 + $0x20] sm:$0xf]
    %v5493 = vld [vmem:[%s5483 + $0x24] sm:$0xf]
    %v5494 = vld [vmem:[%s5483 + $0x28] sm:$0xf]
    %v5495 = vld [vmem:[%s5483 + $0x2c] sm:$0xf]
    %v5496 = vld [vmem:[%s5483 + $0x30] sm:$0xf]
    %v5497 = vld [vmem:[%s5483 + $0x34] sm:$0xf]
    %v5498 = vld [vmem:[%s5483 + $0x38] sm:$0xf]
    %v5499 = vld [vmem:[%s5483 + $0x3c] sm:$0xf]
    %s5500 = scalar_lea.vmem %s27, 192
    %v5501 = vld [vmem:[%s5500] sm:$0xff]
    %v5502 = vld [vmem:[%s5500 + $0x8] sm:$0xf]
    %v5503 = vld [vmem:[%s5500 + $0xc] sm:$0xff]
    %v5504 = vld [vmem:[%s5500 + $0x14] sm:$0xf]
    %v5505 = vld [vmem:[%s5500 + $0x18] sm:$0xff]
    %v5506 = vld [vmem:[%s5500 + $0x20] sm:$0xf]
    %v5507 = vld [vmem:[%s5500 + $0x24] sm:$0xff]
    %v5508 = vld [vmem:[%s5500 + $0x2c] sm:$0xf]
    %v5509 = vld [vmem:[%s5500 + $0x30] sm:$0xff]
    %v5510 = vld [vmem:[%s5500 + $0x38] sm:$0xf]
    %v5511 = vld [vmem:[%s5500 + $0x3c] sm:$0xff]
    %v5512 = vld [vmem:[%s5500 + $0x44] sm:$0xf]
    %v5513 = vld [vmem:[%s5500 + $0x48] sm:$0xff]
    %v5514 = vld [vmem:[%s5500 + $0x50] sm:$0xf]
    %v5515 = vld [vmem:[%s5500 + $0x54] sm:$0xff]
    %v5516 = vld [vmem:[%s5500 + $0x5c] sm:$0xf]
    %v5517 = vld [vmem:[%s5500 + $0x60] sm:$0xff]
    %v5518 = vld [vmem:[%s5500 + $0x68] sm:$0xf]
    %v5519 = vld [vmem:[%s5500 + $0x6c] sm:$0xff]
    %v5520 = vld [vmem:[%s5500 + $0x74] sm:$0xf]
    %v5521 = vld [vmem:[%s5500 + $0x78] sm:$0xff]
    %v5522 = vld [vmem:[%s5500 + $0x80] sm:$0xf]
    %v5523 = vld [vmem:[%s5500 + $0x84] sm:$0xff]
    %v5524 = vld [vmem:[%s5500 + $0x8c] sm:$0xf]
    %v5525 = vld [vmem:[%s5500 + $0x90] sm:$0xff]
    %v5526 = vld [vmem:[%s5500 + $0x98] sm:$0xf]
    %v5527 = vld [vmem:[%s5500 + $0x9c] sm:$0xff]
    %v5528 = vld [vmem:[%s5500 + $0xa4] sm:$0xf]
    %v5529 = vld [vmem:[%s5500 + $0xa8] sm:$0xff]
    %v5530 = vld [vmem:[%s5500 + $0xb0] sm:$0xf]
    %v5531 = vld [vmem:[%s5500 + $0xb4] sm:$0xff]
    %v5532 = vld [vmem:[%s5500 + $0xbc] sm:$0xf]
    %v5533 = vpack.c.bf16 %v5482, %v5481
    %s5534 = scalar_lea.vmem %s29, 3
    %v5535 = vld [vmem:[%s5534] sm:$0x7]
    %v5537 = vlaneseq
    %v5538 = vshrl.u32 %v5537, 7
    %v5539 = vsub.s32 0, %v5538
    %v5540 = vrot.slane %v5535, %v5539
    %v5541 = vlaneseq
    %v5542 = vshrl.u32 %v5541, 7
    %v5543 = vsub.s32 1, %v5542
    %v5544 = vrot.slane %v5535, %v5543
    %v5545 = vlaneseq
    %v5546 = vshrl.u32 %v5545, 7
    %v5547 = vsub.s32 2, %v5546
    %v5548 = vrot.slane %v5535, %v5547
    %v5584 = vunpack.c.l.b16 %v5501
    %v5585 = vunpack.c.h.b16 %v5501
    %v5586 = vunpack.c.l.b16 %v5502
    %v5587 = vunpack.c.l.b16 %v5503
    %v5588 = vunpack.c.h.b16 %v5503
    %v5589 = vunpack.c.l.b16 %v5504
    %v5590 = vunpack.c.l.b16 %v5505
    %v5591 = vunpack.c.h.b16 %v5505
    %v5592 = vunpack.c.l.b16 %v5506
    %v5593 = vunpack.c.l.b16 %v5507
    %v5594 = vunpack.c.h.b16 %v5507
    %v5595 = vunpack.c.l.b16 %v5508
    %v5596 = vunpack.c.l.b16 %v5509
    %v5597 = vunpack.c.h.b16 %v5509
    %v5598 = vunpack.c.l.b16 %v5510
    %v5599 = vunpack.c.l.b16 %v5511
    %v5600 = vunpack.c.h.b16 %v5511
    %v5601 = vunpack.c.l.b16 %v5512
    %v5602 = vunpack.c.l.b16 %v5513
    %v5603 = vunpack.c.h.b16 %v5513
    %v5604 = vunpack.c.l.b16 %v5514
    %v5605 = vunpack.c.l.b16 %v5515
    %v5606 = vunpack.c.h.b16 %v5515
    %v5607 = vunpack.c.l.b16 %v5516
    %v5608 = vunpack.c.l.b16 %v5517
    %v5609 = vunpack.c.h.b16 %v5517
    %v5610 = vunpack.c.l.b16 %v5518
    %v5611 = vunpack.c.l.b16 %v5519
    %v5612 = vunpack.c.h.b16 %v5519
    %v5613 = vunpack.c.l.b16 %v5520
    %v5614 = vunpack.c.l.b16 %v5521
    %v5615 = vunpack.c.h.b16 %v5521
    %v5616 = vunpack.c.l.b16 %v5522
    %v5617 = vunpack.c.l.b16 %v5523
    %v5618 = vunpack.c.h.b16 %v5523
    %v5619 = vunpack.c.l.b16 %v5524
    %v5620 = vunpack.c.l.b16 %v5525
    %v5621 = vunpack.c.h.b16 %v5525
    %v5622 = vunpack.c.l.b16 %v5526
    %v5623 = vunpack.c.l.b16 %v5527
    %v5624 = vunpack.c.h.b16 %v5527
    %v5625 = vunpack.c.l.b16 %v5528
    %v5626 = vunpack.c.l.b16 %v5529
    %v5627 = vunpack.c.h.b16 %v5529
    %v5628 = vunpack.c.l.b16 %v5530
    %v5629 = vunpack.c.l.b16 %v5531
    %v5630 = vunpack.c.h.b16 %v5531
    %v5631 = vunpack.c.l.b16 %v5532
    %v5632 = vpack.c.b16 %v5587, %v5584
    %v5633 = vpack.c.b16 %v5588, %v5585
    %v5634 = vpack.c.b16 %v5589, %v5586
    %v5635 = vpack.c.b16 %v5593, %v5590
    %v5636 = vpack.c.b16 %v5594, %v5591
    %v5637 = vpack.c.b16 %v5595, %v5592
    %v5638 = vpack.c.b16 %v5599, %v5596
    %v5639 = vpack.c.b16 %v5600, %v5597
    %v5640 = vpack.c.b16 %v5601, %v5598
    %v5641 = vpack.c.b16 %v5605, %v5602
    %v5642 = vpack.c.b16 %v5606, %v5603
    %v5643 = vpack.c.b16 %v5607, %v5604
    %v5644 = vpack.c.b16 %v5611, %v5608
    %v5645 = vpack.c.b16 %v5612, %v5609
    %v5646 = vpack.c.b16 %v5613, %v5610
    %v5647 = vpack.c.b16 %v5617, %v5614
    %v5648 = vpack.c.b16 %v5618, %v5615
    %v5649 = vpack.c.b16 %v5619, %v5616
    %v5650 = vpack.c.b16 %v5623, %v5620
    %v5651 = vpack.c.b16 %v5624, %v5621
    %v5652 = vpack.c.b16 %v5625, %v5622
    %v5653 = vpack.c.b16 %v5629, %v5626
    %v5654 = vpack.c.b16 %v5630, %v5627
    %v5655 = vpack.c.b16 %v5631, %v5628
    %5680 = vmatprep.subr.bf16.mxu0 %v5633
    %5681 = vmatpush1.bf16.msra.mxu0 %v5632
    %5682 = vmatprep.subr.bf16.mxu0 %v5636
    %5683 = vmatpush1.bf16.msra.mxu0 %v5635
    %5684 = vmatprep.subr.bf16.mxu0 %v5639
    %5685 = vmatpush1.bf16.msra.mxu0 %v5638
    %5686 = vmatprep.subr.bf16.mxu0 %v5642
    %5687 = vmatpush1.bf16.msra.mxu0 %v5641
    %5688 = vmatprep.subr.bf16.mxu0 %v5645
    %5689 = vmatpush1.bf16.msra.mxu0 %v5644
    %5690 = vmatprep.subr.bf16.mxu0 %v5648
    %5691 = vmatpush1.bf16.msra.mxu0 %v5647
    %5692 = vmatprep.subr.bf16.mxu0 %v5651
    %5693 = vmatpush1.bf16.msra.mxu0 %v5650
    %5694 = vmatprep.subr.bf16.mxu0 %v5654
    %5695 = vmatpush1.bf16.msra.mxu0 %v5653
    %5696 = vmatprep.subr.bf16.mxu0 0
    %5697 = vmatpush1.bf16.msra.mxu0 0
    %5698 = vmatprep.subr.bf16.mxu0 0
    %5699 = vmatpush1.bf16.msra.mxu0 0
    %5700 = vmatprep.subr.bf16.mxu0 0
    %5701 = vmatpush1.bf16.msra.mxu0 0
    %5702 = vmatprep.subr.bf16.mxu0 0
    %5703 = vmatpush1.bf16.msra.mxu0 0
    %5704 = vmatprep.subr.bf16.mxu0 0
    %5705 = vmatpush1.bf16.msra.mxu0 0
    %5706 = vmatprep.subr.bf16.mxu0 0
    %5707 = vmatpush1.bf16.msra.mxu0 0
    %5708 = vmatprep.subr.bf16.mxu0 0
    %5709 = vmatpush1.bf16.msra.mxu0 0
    %5710 = vmatprep.subr.bf16.mxu0 0
    %5711 = vmatpush1.bf16.msra.mxu0 0
    %5712 = vmatprep.mubr.bf16.mxu0 0
    %5713 = vmatmul.mubr.bf16.gmra.mrb[0].mxu0 %v5533
    %v5714 = vpop.f32.mrb[0].mxu0
    %v5715 = vadd.f32 %v5540, %v5714
    %v5716 = vpop.f32.mrb[0].mxu0
    %v5717 = vadd.f32 %v5544, %v5716
    %v5718 = vpop.f32.mrb[0].mxu0
    %v5719 = vadd.f32 %v5540, %v5718
    %v5720 = vpop.f32.mrb[0].mxu0
    %v5721 = vadd.f32 %v5544, %v5720
    %5722 = vdwg.mxu0
    %5723 = vmatprep.subr.bf16.mxu0 0
    %5724 = vmatpush1.bf16.msra.mxu0 %v5634
    %5725 = vmatprep.subr.bf16.mxu0 0
    %5726 = vmatpush1.bf16.msra.mxu0 %v5637
    %5727 = vmatprep.subr.bf16.mxu0 0
    %5728 = vmatpush1.bf16.msra.mxu0 %v5640
    %5729 = vmatprep.subr.bf16.mxu0 0
    %5730 = vmatpush1.bf16.msra.mxu0 %v5643
    %5731 = vmatprep.subr.bf16.mxu0 0
    %5732 = vmatpush1.bf16.msra.mxu0 %v5646
    %5733 = vmatprep.subr.bf16.mxu0 0
    %5734 = vmatpush1.bf16.msra.mxu0 %v5649
    %5735 = vmatprep.subr.bf16.mxu0 0
    %5736 = vmatpush1.bf16.msra.mxu0 %v5652
    %5737 = vmatprep.subr.bf16.mxu0 0
    %5738 = vmatpush1.bf16.msra.mxu0 %v5655
    %5739 = vmatprep.subr.bf16.mxu0 0
    %5740 = vmatpush1.bf16.msra.mxu0 0
    %5741 = vmatprep.subr.bf16.mxu0 0
    %5742 = vmatpush1.bf16.msra.mxu0 0
    %5743 = vmatprep.subr.bf16.mxu0 0
    %5744 = vmatpush1.bf16.msra.mxu0 0
    %5745 = vmatprep.subr.bf16.mxu0 0
    %5746 = vmatpush1.bf16.msra.mxu0 0
    %5747 = vmatprep.subr.bf16.mxu0 0
    %5748 = vmatpush1.bf16.msra.mxu0 0
    %5749 = vmatprep.subr.bf16.mxu0 0
    %5750 = vmatpush1.bf16.msra.mxu0 0
    %5751 = vmatprep.subr.bf16.mxu0 0
    %5752 = vmatpush1.bf16.msra.mxu0 0
    %5753 = vmatprep.subr.bf16.mxu0 0
    %5754 = vmatpush1.bf16.msra.mxu0 0
    %5755 = vmatprep.mubr.bf16.mxu0 0
    %5756 = vmatmul.mubr.bf16.gmra.mrb[0].mxu0 %v5533
    %v5757 = vpop.f32.mrb[0].mxu0
    %v5758 = vadd.f32 %v5548, %v5757
    %v5759 = vpop.f32.mrb[0].mxu0
    %v5760 = vpop.f32.mrb[0].mxu0
    %v5761 = vadd.f32 %v5548, %v5760
    %v5762 = vpop.f32.mrb[0].mxu0
    %5763 = vdwg.mxu0
    %v5764 = vpack.c.bf16 %v5719, %v5715
    %v5765 = vpack.c.bf16 %v5721, %v5717
    %v5767 = vsel %vm4324, %v5764, 0
    %v5770 = vsel %vm4324, %v5765, 0
    %5772 = vmatprep.subr.bf16.mxu0 0
    %5773 = vmatpush1.bf16.xpose.msra.mxu0 %v5770
    %5774 = vmatprep.subr.bf16.mxu0 0
    %5775 = vmatpush1.bf16.xpose.msra.mxu0 0
    %5776 = vmatprep.subr.bf16.mxu0 0
    %5777 = vmatpush1.bf16.xpose.msra.mxu0 0
    %5778 = vmatprep.subr.bf16.mxu0 0
    %5779 = vmatpush1.bf16.xpose.msra.mxu0 0
    %5780 = vmatprep.subr.bf16.mxu0 0
    %5781 = vmatpush1.bf16.xpose.msra.mxu0 0
    %5782 = vmatprep.subr.bf16.mxu0 0
    %5783 = vmatpush1.bf16.xpose.msra.mxu0 0
    %5784 = vmatprep.subr.bf16.mxu0 0
    %5785 = vmatpush1.bf16.xpose.msra.mxu0 0
    %5786 = vmatprep.subr.bf16.mxu0 0
    %5787 = vmatpush1.bf16.xpose.msra.mxu0 0
    %5788 = vmatprep.subr.bf16.mxu0 0
    %5789 = vmatpush1.bf16.xpose.msra.mxu0 0
    %5790 = vmatprep.subr.bf16.mxu0 0
    %5791 = vmatpush1.bf16.xpose.msra.mxu0 0
    %5792 = vmatprep.subr.bf16.mxu0 0
    %5793 = vmatpush1.bf16.xpose.msra.mxu0 0
    %5794 = vmatprep.subr.bf16.mxu0 0
    %5795 = vmatpush1.bf16.xpose.msra.mxu0 0
    %5796 = vmatprep.subr.bf16.mxu0 0
    %5797 = vmatpush1.bf16.xpose.msra.mxu0 0
    %5798 = vmatprep.subr.bf16.mxu0 0
    %5799 = vmatpush1.bf16.xpose.msra.mxu0 0
    %5800 = vmatprep.subr.bf16.mxu0 0
    %5801 = vmatpush1.bf16.xpose.msra.mxu0 0
    %5802 = vmatprep.subr.bf16.mxu0 0
    %5803 = vmatpush1.bf16.xpose.msra.mxu0 0
    %5804 = vmatprep.mubr.bf16.mxu0 0
    %5805 = vmatmul.mubr.bf16.gmra.mrb[0].mxu0 %v5767
    %v5806 = vpop.f32.mrb[0].mxu0
    %v5807 = vadd.f32 %v4038, %v5806
    %v5808 = vpop.f32.mrb[0].mxu0
    %v5809 = vpop.f32.mrb[0].mxu0
    %v5810 = vadd.f32 %v4039, %v5809
    %v5811 = vpop.f32.mrb[0].mxu0
    %5812 = vdwg.mxu0
    %v5813 = vsel %vm4372, %v5807, -inf
    %5814 = vmax.xlane.f32.xlu0 %v5813
    %v5815 = vpop.xlane.xlu0 %5814
    %v5816 = vsel %vm4376, %v5810, -inf
    %5817 = vmax.xlane.f32.xlu0 %v5816
    %v5818 = vpop.xlane.xlu0 %5817
    %v5819 = vsub.f32 %v5807, %v5815
    %v5820 = vsub.f32 %v5810, %v5818
    %v5821 = vmul.f32 %v5819, 1.442695
    %v5822 = vpow.pop %v5821
    %v5823 = vmul.f32 %v5820, 1.442695
    %v5824 = vpow.pop %v5823
    %v5825 = vsel %vm4372, %v5822, 0.0
    %5826 = vadd.xlane.f32.xlu0 %v5825
    %v5827 = vpop.xlane.xlu0 %5826
    %v5828 = vsel %vm4376, %v5824, 0.0
    %5829 = vadd.xlane.f32.xlu0 %v5828
    %v5830 = vpop.xlane.xlu0 %5829
    %v5831 = vrcp.pop %v5827
    %v5832 = vrcp.pop %v5830
    %v5833 = vmul.f32 %v5822, %v5831
    %v5834 = vmul.f32 %v5824, %v5832
    %v5835 = vpack.c.bf16 %v5834, %v5833
    %v5836 = vpack.c.bf16 %v5761, %v5758
    %v5838 = vsel %vm4372, %v5835, 0
    %v5841 = vsel %vm4401, %v5836, 0
    %5843 = vmatprep.subr.bf16.mxu0 0
    %5844 = vmatpush1.bf16.msra.mxu0 %v5841
    %5845 = vmatprep.subr.bf16.mxu0 0
    %5846 = vmatpush1.bf16.msra.mxu0 0
    %5847 = vmatprep.subr.bf16.mxu0 0
    %5848 = vmatpush1.bf16.msra.mxu0 0
    %5849 = vmatprep.subr.bf16.mxu0 0
    %5850 = vmatpush1.bf16.msra.mxu0 0
    %5851 = vmatprep.subr.bf16.mxu0 0
    %5852 = vmatpush1.bf16.msra.mxu0 0
    %5853 = vmatprep.subr.bf16.mxu0 0
    %5854 = vmatpush1.bf16.msra.mxu0 0
    %5855 = vmatprep.subr.bf16.mxu0 0
    %5856 = vmatpush1.bf16.msra.mxu0 0
    %5857 = vmatprep.subr.bf16.mxu0 0
    %5858 = vmatpush1.bf16.msra.mxu0 0
    %5859 = vmatprep.subr.bf16.mxu0 0
    %5860 = vmatpush1.bf16.msra.mxu0 0
    %5861 = vmatprep.subr.bf16.mxu0 0
    %5862 = vmatpush1.bf16.msra.mxu0 0
    %5863 = vmatprep.subr.bf16.mxu0 0
    %5864 = vmatpush1.bf16.msra.mxu0 0
    %5865 = vmatprep.subr.bf16.mxu0 0
    %5866 = vmatpush1.bf16.msra.mxu0 0
    %5867 = vmatprep.subr.bf16.mxu0 0
    %5868 = vmatpush1.bf16.msra.mxu0 0
    %5869 = vmatprep.subr.bf16.mxu0 0
    %5870 = vmatpush1.bf16.msra.mxu0 0
    %5871 = vmatprep.subr.bf16.mxu0 0
    %5872 = vmatpush1.bf16.msra.mxu0 0
    %5873 = vmatprep.subr.bf16.mxu0 0
    %5874 = vmatpush1.bf16.msra.mxu0 0
    %5875 = vmatprep.mubr.bf16.mxu0 0
    %5876 = vmatmul.mubr.bf16.gmra.mrb[0].mxu0 %v5838
    %v5877 = vpop.f32.mrb[0].mxu0
    %v5878 = vadd.f32 0.0, %v5877
    %v5879 = vpop.f32.mrb[0].mxu0
    %v5880 = vpop.f32.mrb[0].mxu0
    %v5881 = vadd.f32 0.0, %v5880
    %v5882 = vpop.f32.mrb[0].mxu0
    %5883 = vdwg.mxu0
    %v5884 = vpack.c.bf16 %v5881, %v5878
    %5886 = vrot.lane.b32.xlu0 %v5764, 96
    %v5887 = vpop.permute.xlu0 %5886
    %5889 = vrot.lane.b32.xlu0 %v5765, 96
    %v5890 = vpop.permute.xlu0 %5889
    %v5892 = vsel %vm4324, %v5887, 0
    %v5895 = vsel %vm4324, %v5890, 0
    %5897 = vmatprep.subr.bf16.mxu0 0
    %5898 = vmatpush1.bf16.xpose.msra.mxu0 %v5895
    %5899 = vmatprep.subr.bf16.mxu0 0
    %5900 = vmatpush1.bf16.xpose.msra.mxu0 0
    %5901 = vmatprep.subr.bf16.mxu0 0
    %5902 = vmatpush1.bf16.xpose.msra.mxu0 0
    %5903 = vmatprep.subr.bf16.mxu0 0
    %5904 = vmatpush1.bf16.xpose.msra.mxu0 0
    %5905 = vmatprep.subr.bf16.mxu0 0
    %5906 = vmatpush1.bf16.xpose.msra.mxu0 0
    %5907 = vmatprep.subr.bf16.mxu0 0
    %5908 = vmatpush1.bf16.xpose.msra.mxu0 0
    %5909 = vmatprep.subr.bf16.mxu0 0
    %5910 = vmatpush1.bf16.xpose.msra.mxu0 0
    %5911 = vmatprep.subr.bf16.mxu0 0
    %5912 = vmatpush1.bf16.xpose.msra.mxu0 0
    %5913 = vmatprep.subr.bf16.mxu0 0
    %5914 = vmatpush1.bf16.xpose.msra.mxu0 0
    %5915 = vmatprep.subr.bf16.mxu0 0
    %5916 = vmatpush1.bf16.xpose.msra.mxu0 0
    %5917 = vmatprep.subr.bf16.mxu0 0
    %5918 = vmatpush1.bf16.xpose.msra.mxu0 0
    %5919 = vmatprep.subr.bf16.mxu0 0
    %5920 = vmatpush1.bf16.xpose.msra.mxu0 0
    %5921 = vmatprep.subr.bf16.mxu0 0
    %5922 = vmatpush1.bf16.xpose.msra.mxu0 0
    %5923 = vmatprep.subr.bf16.mxu0 0
    %5924 = vmatpush1.bf16.xpose.msra.mxu0 0
    %5925 = vmatprep.subr.bf16.mxu0 0
    %5926 = vmatpush1.bf16.xpose.msra.mxu0 0
    %5927 = vmatprep.subr.bf16.mxu0 0
    %5928 = vmatpush1.bf16.xpose.msra.mxu0 0
    %5929 = vmatprep.mubr.bf16.mxu0 0
    %5930 = vmatmul.mubr.bf16.gmra.mrb[0].mxu0 %v5892
    %v5931 = vpop.f32.mrb[0].mxu0
    %v5932 = vadd.f32 %v4038, %v5931
    %v5933 = vpop.f32.mrb[0].mxu0
    %v5934 = vpop.f32.mrb[0].mxu0
    %v5935 = vadd.f32 %v4039, %v5934
    %v5936 = vpop.f32.mrb[0].mxu0
    %5937 = vdwg.mxu0
    %v5938 = vsel %vm4372, %v5932, -inf
    %5939 = vmax.xlane.f32.xlu0 %v5938
    %v5940 = vpop.xlane.xlu0 %5939
    %v5941 = vsel %vm4376, %v5935, -inf
    %5942 = vmax.xlane.f32.xlu0 %v5941
    %v5943 = vpop.xlane.xlu0 %5942
    %v5944 = vsub.f32 %v5932, %v5940
    %v5945 = vsub.f32 %v5935, %v5943
    %v5946 = vmul.f32 %v5944, 1.442695
    %v5947 = vpow.pop %v5946
    %v5948 = vmul.f32 %v5945, 1.442695
    %v5949 = vpow.pop %v5948
    %v5950 = vsel %vm4372, %v5947, 0.0
    %5951 = vadd.xlane.f32.xlu0 %v5950
    %v5952 = vpop.xlane.xlu0 %5951
    %v5953 = vsel %vm4376, %v5949, 0.0
    %5954 = vadd.xlane.f32.xlu0 %v5953
    %v5955 = vpop.xlane.xlu0 %5954
    %v5956 = vrcp.pop %v5952
    %v5957 = vrcp.pop %v5955
    %v5958 = vmul.f32 %v5947, %v5956
    %v5959 = vmul.f32 %v5949, %v5957
    %v5960 = vpack.c.bf16 %v5959, %v5958
    %5962 = vrot.lane.b32.xlu0 %v5836, 96
    %v5963 = vpop.permute.xlu0 %5962
    %v5965 = vsel %vm4372, %v5960, 0
    %v5968 = vsel %vm4401, %v5963, 0
    %5970 = vmatprep.subr.bf16.mxu0 0
    %5971 = vmatpush1.bf16.msra.mxu0 %v5968
    %5972 = vmatprep.subr.bf16.mxu0 0
    %5973 = vmatpush1.bf16.msra.mxu0 0
    %5974 = vmatprep.subr.bf16.mxu0 0
    %5975 = vmatpush1.bf16.msra.mxu0 0
    %5976 = vmatprep.subr.bf16.mxu0 0
    %5977 = vmatpush1.bf16.msra.mxu0 0
    %5978 = vmatprep.subr.bf16.mxu0 0
    %5979 = vmatpush1.bf16.msra.mxu0 0
    %5980 = vmatprep.subr.bf16.mxu0 0
    %5981 = vmatpush1.bf16.msra.mxu0 0
    %5982 = vmatprep.subr.bf16.mxu0 0
    %5983 = vmatpush1.bf16.msra.mxu0 0
    %5984 = vmatprep.subr.bf16.mxu0 0
    %5985 = vmatpush1.bf16.msra.mxu0 0
    %5986 = vmatprep.subr.bf16.mxu0 0
    %5987 = vmatpush1.bf16.msra.mxu0 0
    %5988 = vmatprep.subr.bf16.mxu0 0
    %5989 = vmatpush1.bf16.msra.mxu0 0
    %5990 = vmatprep.subr.bf16.mxu0 0
    %5991 = vmatpush1.bf16.msra.mxu0 0
    %5992 = vmatprep.subr.bf16.mxu0 0
    %5993 = vmatpush1.bf16.msra.mxu0 0
    %5994 = vmatprep.subr.bf16.mxu0 0
    %5995 = vmatpush1.bf16.msra.mxu0 0
    %5996 = vmatprep.subr.bf16.mxu0 0
    %5997 = vmatpush1.bf16.msra.mxu0 0
    %5998 = vmatprep.subr.bf16.mxu0 0
    %5999 = vmatpush1.bf16.msra.mxu0 0
    %6000 = vmatprep.subr.bf16.mxu0 0
    %6001 = vmatpush1.bf16.msra.mxu0 0
    %6002 = vmatprep.mubr.bf16.mxu0 0
    %6003 = vmatmul.mubr.bf16.gmra.mrb[0].mxu0 %v5965
    %v6004 = vpop.f32.mrb[0].mxu0
    %v6005 = vadd.f32 0.0, %v6004
    %v6006 = vpop.f32.mrb[0].mxu0
    %v6007 = vpop.f32.mrb[0].mxu0
    %v6008 = vadd.f32 0.0, %v6007
    %v6009 = vpop.f32.mrb[0].mxu0
    %6010 = vdwg.mxu0
    %v6011 = vpack.c.bf16 %v6008, %v6005
    %v6016 = vunpack.c.l.b16 %v5488
    %v6017 = vunpack.c.l.b16 %v5489
    %v6018 = vunpack.c.l.b16 %v5490
    %v6019 = vunpack.c.l.b16 %v5491
    %v6020 = vpack.c.b16 %v6017, %v6016
    %v6021 = vpack.c.b16 %v6019, %v6018
    %v6025 = vsel %vm4324, %v6011, 0
    %6027 = vmatprep.subr.bf16.mxu0 0
    %6028 = vmatpush1.bf16.msra.mxu0 %v6020
    %6029 = vmatprep.subr.bf16.mxu0 0
    %6030 = vmatpush1.bf16.msra.mxu0 %v6021
    %6031 = vmatprep.subr.bf16.mxu0 0
    %6032 = vmatpush1.bf16.msra.mxu0 0
    %6033 = vmatprep.subr.bf16.mxu0 0
    %6034 = vmatpush1.bf16.msra.mxu0 0
    %6035 = vmatprep.subr.bf16.mxu0 0
    %6036 = vmatpush1.bf16.msra.mxu0 0
    %6037 = vmatprep.subr.bf16.mxu0 0
    %6038 = vmatpush1.bf16.msra.mxu0 0
    %6039 = vmatprep.subr.bf16.mxu0 0
    %6040 = vmatpush1.bf16.msra.mxu0 0
    %6041 = vmatprep.subr.bf16.mxu0 0
    %6042 = vmatpush1.bf16.msra.mxu0 0
    %6043 = vmatprep.subr.bf16.mxu0 0
    %6044 = vmatpush1.bf16.msra.mxu0 0
    %6045 = vmatprep.subr.bf16.mxu0 0
    %6046 = vmatpush1.bf16.msra.mxu0 0
    %6047 = vmatprep.subr.bf16.mxu0 0
    %6048 = vmatpush1.bf16.msra.mxu0 0
    %6049 = vmatprep.subr.bf16.mxu0 0
    %6050 = vmatpush1.bf16.msra.mxu0 0
    %6051 = vmatprep.subr.bf16.mxu0 0
    %6052 = vmatpush1.bf16.msra.mxu0 0
    %6053 = vmatprep.subr.bf16.mxu0 0
    %6054 = vmatpush1.bf16.msra.mxu0 0
    %6055 = vmatprep.subr.bf16.mxu0 0
    %6056 = vmatpush1.bf16.msra.mxu0 0
    %6057 = vmatprep.subr.bf16.mxu0 0
    %6058 = vmatpush1.bf16.msra.mxu0 0
    %6059 = vmatprep.mubr.bf16.mxu0 0
    %6060 = vmatmul.mubr.bf16.gmra.mrb[0].mxu0 %v6025
    %v6061 = vpop.f32.mrb[0].mxu0
    %v6062 = vadd.f32 0.0, %v6061
    %v6063 = vpop.f32.mrb[0].mxu0
    %v6064 = vpop.f32.mrb[0].mxu0
    %v6065 = vadd.f32 0.0, %v6064
    %v6066 = vpop.f32.mrb[0].mxu0
    %6067 = vdwg.mxu0
    %v6072 = vunpack.c.l.b16 %v5484
    %v6073 = vunpack.c.l.b16 %v5485
    %v6074 = vunpack.c.l.b16 %v5486
    %v6075 = vunpack.c.l.b16 %v5487
    %v6076 = vpack.c.b16 %v6073, %v6072
    %v6077 = vpack.c.b16 %v6075, %v6074
    %v6081 = vsel %vm4324, %v5884, 0
    %6083 = vmatprep.subr.bf16.mxu0 0
    %6084 = vmatpush1.bf16.msra.mxu0 %v6076
    %6085 = vmatprep.subr.bf16.mxu0 0
    %6086 = vmatpush1.bf16.msra.mxu0 %v6077
    %6087 = vmatprep.subr.bf16.mxu0 0
    %6088 = vmatpush1.bf16.msra.mxu0 0
    %6089 = vmatprep.subr.bf16.mxu0 0
    %6090 = vmatpush1.bf16.msra.mxu0 0
    %6091 = vmatprep.subr.bf16.mxu0 0
    %6092 = vmatpush1.bf16.msra.mxu0 0
    %6093 = vmatprep.subr.bf16.mxu0 0
    %6094 = vmatpush1.bf16.msra.mxu0 0
    %6095 = vmatprep.subr.bf16.mxu0 0
    %6096 = vmatpush1.bf16.msra.mxu0 0
    %6097 = vmatprep.subr.bf16.mxu0 0
    %6098 = vmatpush1.bf16.msra.mxu0 0
    %6099 = vmatprep.subr.bf16.mxu0 0
    %6100 = vmatpush1.bf16.msra.mxu0 0
    %6101 = vmatprep.subr.bf16.mxu0 0
    %6102 = vmatpush1.bf16.msra.mxu0 0
    %6103 = vmatprep.subr.bf16.mxu0 0
    %6104 = vmatpush1.bf16.msra.mxu0 0
    %6105 = vmatprep.subr.bf16.mxu0 0
    %6106 = vmatpush1.bf16.msra.mxu0 0
    %6107 = vmatprep.subr.bf16.mxu0 0
    %6108 = vmatpush1.bf16.msra.mxu0 0
    %6109 = vmatprep.subr.bf16.mxu0 0
    %6110 = vmatpush1.bf16.msra.mxu0 0
    %6111 = vmatprep.subr.bf16.mxu0 0
    %6112 = vmatpush1.bf16.msra.mxu0 0
    %6113 = vmatprep.subr.bf16.mxu0 0
    %6114 = vmatpush1.bf16.msra.mxu0 0
    %6115 = vmatprep.mubr.bf16.mxu0 0
    %6116 = vmatmul.mubr.bf16.gmra.mrb[0].mxu0 %v6081
    %v6117 = vpop.f32.mrb[0].mxu0
    %v6118 = vadd.f32 %v6062, %v6117
    %v6119 = vpop.f32.mrb[0].mxu0
    %v6120 = vpop.f32.mrb[0].mxu0
    %v6121 = vadd.f32 %v6065, %v6120
    %v6122 = vpop.f32.mrb[0].mxu0
    %6123 = vdwg.mxu0
    %6124 = vrot.lane.b32.xlu0 %v5764, 64
    %v6125 = vpop.permute.xlu0 %6124
    %6126 = vrot.lane.b32.xlu0 %v5765, 64
    %v6127 = vpop.permute.xlu0 %6126
    %v6129 = vsel %vm4324, %v6125, 0
    %v6132 = vsel %vm4324, %v6127, 0
    %6134 = vmatprep.subr.bf16.mxu0 0
    %6135 = vmatpush1.bf16.xpose.msra.mxu0 %v6132
    %6136 = vmatprep.subr.bf16.mxu0 0
    %6137 = vmatpush1.bf16.xpose.msra.mxu0 0
    %6138 = vmatprep.subr.bf16.mxu0 0
    %6139 = vmatpush1.bf16.xpose.msra.mxu0 0
    %6140 = vmatprep.subr.bf16.mxu0 0
    %6141 = vmatpush1.bf16.xpose.msra.mxu0 0
    %6142 = vmatprep.subr.bf16.mxu0 0
    %6143 = vmatpush1.bf16.xpose.msra.mxu0 0
    %6144 = vmatprep.subr.bf16.mxu0 0
    %6145 = vmatpush1.bf16.xpose.msra.mxu0 0
    %6146 = vmatprep.subr.bf16.mxu0 0
    %6147 = vmatpush1.bf16.xpose.msra.mxu0 0
    %6148 = vmatprep.subr.bf16.mxu0 0
    %6149 = vmatpush1.bf16.xpose.msra.mxu0 0
    %6150 = vmatprep.subr.bf16.mxu0 0
    %6151 = vmatpush1.bf16.xpose.msra.mxu0 0
    %6152 = vmatprep.subr.bf16.mxu0 0
    %6153 = vmatpush1.bf16.xpose.msra.mxu0 0
    %6154 = vmatprep.subr.bf16.mxu0 0
    %6155 = vmatpush1.bf16.xpose.msra.mxu0 0
    %6156 = vmatprep.subr.bf16.mxu0 0
    %6157 = vmatpush1.bf16.xpose.msra.mxu0 0
    %6158 = vmatprep.subr.bf16.mxu0 0
    %6159 = vmatpush1.bf16.xpose.msra.mxu0 0
    %6160 = vmatprep.subr.bf16.mxu0 0
    %6161 = vmatpush1.bf16.xpose.msra.mxu0 0
    %6162 = vmatprep.subr.bf16.mxu0 0
    %6163 = vmatpush1.bf16.xpose.msra.mxu0 0
    %6164 = vmatprep.subr.bf16.mxu0 0
    %6165 = vmatpush1.bf16.xpose.msra.mxu0 0
    %6166 = vmatprep.mubr.bf16.mxu0 0
    %6167 = vmatmul.mubr.bf16.gmra.mrb[0].mxu0 %v6129
    %v6168 = vpop.f32.mrb[0].mxu0
    %v6169 = vadd.f32 %v4038, %v6168
    %v6170 = vpop.f32.mrb[0].mxu0
    %v6171 = vpop.f32.mrb[0].mxu0
    %v6172 = vadd.f32 %v4039, %v6171
    %v6173 = vpop.f32.mrb[0].mxu0
    %6174 = vdwg.mxu0
    %v6175 = vsel %vm4372, %v6169, -inf
    %6176 = vmax.xlane.f32.xlu0 %v6175
    %v6177 = vpop.xlane.xlu0 %6176
    %v6178 = vsel %vm4376, %v6172, -inf
    %6179 = vmax.xlane.f32.xlu0 %v6178
    %v6180 = vpop.xlane.xlu0 %6179
    %v6181 = vsub.f32 %v6169, %v6177
    %v6182 = vsub.f32 %v6172, %v6180
    %v6183 = vmul.f32 %v6181, 1.442695
    %v6184 = vpow.pop %v6183
    %v6185 = vmul.f32 %v6182, 1.442695
    %v6186 = vpow.pop %v6185
    %v6187 = vsel %vm4372, %v6184, 0.0
    %6188 = vadd.xlane.f32.xlu0 %v6187
    %v6189 = vpop.xlane.xlu0 %6188
    %v6190 = vsel %vm4376, %v6186, 0.0
    %6191 = vadd.xlane.f32.xlu0 %v6190
    %v6192 = vpop.xlane.xlu0 %6191
    %v6193 = vrcp.pop %v6189
    %v6194 = vrcp.pop %v6192
    %v6195 = vmul.f32 %v6184, %v6193
    %v6196 = vmul.f32 %v6186, %v6194
    %v6197 = vpack.c.bf16 %v6196, %v6195
    %6198 = vrot.lane.b32.xlu0 %v5836, 64
    %v6199 = vpop.permute.xlu0 %6198
    %v6201 = vsel %vm4372, %v6197, 0
    %v6204 = vsel %vm4401, %v6199, 0
    %6206 = vmatprep.subr.bf16.mxu0 0
    %6207 = vmatpush1.bf16.msra.mxu0 %v6204
    %6208 = vmatprep.subr.bf16.mxu0 0
    %6209 = vmatpush1.bf16.msra.mxu0 0
    %6210 = vmatprep.subr.bf16.mxu0 0
    %6211 = vmatpush1.bf16.msra.mxu0 0
    %6212 = vmatprep.subr.bf16.mxu0 0
    %6213 = vmatpush1.bf16.msra.mxu0 0
    %6214 = vmatprep.subr.bf16.mxu0 0
    %6215 = vmatpush1.bf16.msra.mxu0 0
    %6216 = vmatprep.subr.bf16.mxu0 0
    %6217 = vmatpush1.bf16.msra.mxu0 0
    %6218 = vmatprep.subr.bf16.mxu0 0
    %6219 = vmatpush1.bf16.msra.mxu0 0
    %6220 = vmatprep.subr.bf16.mxu0 0
    %6221 = vmatpush1.bf16.msra.mxu0 0
    %6222 = vmatprep.subr.bf16.mxu0 0
    %6223 = vmatpush1.bf16.msra.mxu0 0
    %6224 = vmatprep.subr.bf16.mxu0 0
    %6225 = vmatpush1.bf16.msra.mxu0 0
    %6226 = vmatprep.subr.bf16.mxu0 0
    %6227 = vmatpush1.bf16.msra.mxu0 0
    %6228 = vmatprep.subr.bf16.mxu0 0
    %6229 = vmatpush1.bf16.msra.mxu0 0
    %6230 = vmatprep.subr.bf16.mxu0 0
    %6231 = vmatpush1.bf16.msra.mxu0 0
    %6232 = vmatprep.subr.bf16.mxu0 0
    %6233 = vmatpush1.bf16.msra.mxu0 0
    %6234 = vmatprep.subr.bf16.mxu0 0
    %6235 = vmatpush1.bf16.msra.mxu0 0
    %6236 = vmatprep.subr.bf16.mxu0 0
    %6237 = vmatpush1.bf16.msra.mxu0 0
    %6238 = vmatprep.mubr.bf16.mxu0 0
    %6239 = vmatmul.mubr.bf16.gmra.mrb[0].mxu0 %v6201
    %v6240 = vpop.f32.mrb[0].mxu0
    %v6241 = vadd.f32 0.0, %v6240
    %v6242 = vpop.f32.mrb[0].mxu0
    %v6243 = vpop.f32.mrb[0].mxu0
    %v6244 = vadd.f32 0.0, %v6243
    %v6245 = vpop.f32.mrb[0].mxu0
    %6246 = vdwg.mxu0
    %v6247 = vpack.c.bf16 %v6244, %v6241
    %v6252 = vunpack.c.l.b16 %v5492
    %v6253 = vunpack.c.l.b16 %v5493
    %v6254 = vunpack.c.l.b16 %v5494
    %v6255 = vunpack.c.l.b16 %v5495
    %v6256 = vpack.c.b16 %v6253, %v6252
    %v6257 = vpack.c.b16 %v6255, %v6254
    %v6261 = vsel %vm4324, %v6247, 0
    %6263 = vmatprep.subr.bf16.mxu0 0
    %6264 = vmatpush1.bf16.msra.mxu0 %v6256
    %6265 = vmatprep.subr.bf16.mxu0 0
    %6266 = vmatpush1.bf16.msra.mxu0 %v6257
    %6267 = vmatprep.subr.bf16.mxu0 0
    %6268 = vmatpush1.bf16.msra.mxu0 0
    %6269 = vmatprep.subr.bf16.mxu0 0
    %6270 = vmatpush1.bf16.msra.mxu0 0
    %6271 = vmatprep.subr.bf16.mxu0 0
    %6272 = vmatpush1.bf16.msra.mxu0 0
    %6273 = vmatprep.subr.bf16.mxu0 0
    %6274 = vmatpush1.bf16.msra.mxu0 0
    %6275 = vmatprep.subr.bf16.mxu0 0
    %6276 = vmatpush1.bf16.msra.mxu0 0
    %6277 = vmatprep.subr.bf16.mxu0 0
    %6278 = vmatpush1.bf16.msra.mxu0 0
    %6279 = vmatprep.subr.bf16.mxu0 0
    %6280 = vmatpush1.bf16.msra.mxu0 0
    %6281 = vmatprep.subr.bf16.mxu0 0
    %6282 = vmatpush1.bf16.msra.mxu0 0
    %6283 = vmatprep.subr.bf16.mxu0 0
    %6284 = vmatpush1.bf16.msra.mxu0 0
    %6285 = vmatprep.subr.bf16.mxu0 0
    %6286 = vmatpush1.bf16.msra.mxu0 0
    %6287 = vmatprep.subr.bf16.mxu0 0
    %6288 = vmatpush1.bf16.msra.mxu0 0
    %6289 = vmatprep.subr.bf16.mxu0 0
    %6290 = vmatpush1.bf16.msra.mxu0 0
    %6291 = vmatprep.subr.bf16.mxu0 0
    %6292 = vmatpush1.bf16.msra.mxu0 0
    %6293 = vmatprep.subr.bf16.mxu0 0
    %6294 = vmatpush1.bf16.msra.mxu0 0
    %6295 = vmatprep.mubr.bf16.mxu0 0
    %6296 = vmatmul.mubr.bf16.gmra.mrb[0].mxu0 %v6261
    %v6297 = vpop.f32.mrb[0].mxu0
    %v6298 = vadd.f32 0.0, %v6297
    %v6299 = vpop.f32.mrb[0].mxu0
    %v6300 = vpop.f32.mrb[0].mxu0
    %v6301 = vadd.f32 0.0, %v6300
    %v6302 = vpop.f32.mrb[0].mxu0
    %6303 = vdwg.mxu0
    %v6304 = vadd.f32 %v6118, %v6298
    %v6305 = vadd.f32 %v6121, %v6301
    %6306 = vrot.lane.b32.xlu0 %v5764, 32
    %v6307 = vpop.permute.xlu0 %6306
    %6308 = vrot.lane.b32.xlu0 %v5765, 32
    %v6309 = vpop.permute.xlu0 %6308
    %v6311 = vsel %vm4324, %v6307, 0
    %v6314 = vsel %vm4324, %v6309, 0
    %6316 = vmatprep.subr.bf16.mxu0 0
    %6317 = vmatpush1.bf16.xpose.msra.mxu0 %v6314
    %6318 = vmatprep.subr.bf16.mxu0 0
    %6319 = vmatpush1.bf16.xpose.msra.mxu0 0
    %6320 = vmatprep.subr.bf16.mxu0 0
    %6321 = vmatpush1.bf16.xpose.msra.mxu0 0
    %6322 = vmatprep.subr.bf16.mxu0 0
    %6323 = vmatpush1.bf16.xpose.msra.mxu0 0
    %6324 = vmatprep.subr.bf16.mxu0 0
    %6325 = vmatpush1.bf16.xpose.msra.mxu0 0
    %6326 = vmatprep.subr.bf16.mxu0 0
    %6327 = vmatpush1.bf16.xpose.msra.mxu0 0
    %6328 = vmatprep.subr.bf16.mxu0 0
    %6329 = vmatpush1.bf16.xpose.msra.mxu0 0
    %6330 = vmatprep.subr.bf16.mxu0 0
    %6331 = vmatpush1.bf16.xpose.msra.mxu0 0
    %6332 = vmatprep.subr.bf16.mxu0 0
    %6333 = vmatpush1.bf16.xpose.msra.mxu0 0
    %6334 = vmatprep.subr.bf16.mxu0 0
    %6335 = vmatpush1.bf16.xpose.msra.mxu0 0
    %6336 = vmatprep.subr.bf16.mxu0 0
    %6337 = vmatpush1.bf16.xpose.msra.mxu0 0
    %6338 = vmatprep.subr.bf16.mxu0 0
    %6339 = vmatpush1.bf16.xpose.msra.mxu0 0
    %6340 = vmatprep.subr.bf16.mxu0 0
    %6341 = vmatpush1.bf16.xpose.msra.mxu0 0
    %6342 = vmatprep.subr.bf16.mxu0 0
    %6343 = vmatpush1.bf16.xpose.msra.mxu0 0
    %6344 = vmatprep.subr.bf16.mxu0 0
    %6345 = vmatpush1.bf16.xpose.msra.mxu0 0
    %6346 = vmatprep.subr.bf16.mxu0 0
    %6347 = vmatpush1.bf16.xpose.msra.mxu0 0
    %6348 = vmatprep.mubr.bf16.mxu0 0
    %6349 = vmatmul.mubr.bf16.gmra.mrb[0].mxu0 %v6311
    %v6350 = vpop.f32.mrb[0].mxu0
    %v6351 = vadd.f32 %v4038, %v6350
    %v6352 = vpop.f32.mrb[0].mxu0
    %v6353 = vpop.f32.mrb[0].mxu0
    %v6354 = vadd.f32 %v4039, %v6353
    %v6355 = vpop.f32.mrb[0].mxu0
    %6356 = vdwg.mxu0
    %v6357 = vsel %vm4372, %v6351, -inf
    %6358 = vmax.xlane.f32.xlu0 %v6357
    %v6359 = vpop.xlane.xlu0 %6358
    %v6360 = vsel %vm4376, %v6354, -inf
    %6361 = vmax.xlane.f32.xlu0 %v6360
    %v6362 = vpop.xlane.xlu0 %6361
    %v6363 = vsub.f32 %v6351, %v6359
    %v6364 = vsub.f32 %v6354, %v6362
    %v6365 = vmul.f32 %v6363, 1.442695
    %v6366 = vpow.pop %v6365
    %v6367 = vmul.f32 %v6364, 1.442695
    %v6368 = vpow.pop %v6367
    %v6369 = vsel %vm4372, %v6366, 0.0
    %6370 = vadd.xlane.f32.xlu0 %v6369
    %v6371 = vpop.xlane.xlu0 %6370
    %v6372 = vsel %vm4376, %v6368, 0.0
    %6373 = vadd.xlane.f32.xlu0 %v6372
    %v6374 = vpop.xlane.xlu0 %6373
    %v6375 = vrcp.pop %v6371
    %v6376 = vrcp.pop %v6374
    %v6377 = vmul.f32 %v6366, %v6375
    %v6378 = vmul.f32 %v6368, %v6376
    %v6379 = vpack.c.bf16 %v6378, %v6377
    %6380 = vrot.lane.b32.xlu0 %v5836, 32
    %v6381 = vpop.permute.xlu0 %6380
    %v6383 = vsel %vm4372, %v6379, 0
    %v6386 = vsel %vm4401, %v6381, 0
    %6388 = vmatprep.subr.bf16.mxu0 0
    %6389 = vmatpush1.bf16.msra.mxu0 %v6386
    %6390 = vmatprep.subr.bf16.mxu0 0
    %6391 = vmatpush1.bf16.msra.mxu0 0
    %6392 = vmatprep.subr.bf16.mxu0 0
    %6393 = vmatpush1.bf16.msra.mxu0 0
    %6394 = vmatprep.subr.bf16.mxu0 0
    %6395 = vmatpush1.bf16.msra.mxu0 0
    %6396 = vmatprep.subr.bf16.mxu0 0
    %6397 = vmatpush1.bf16.msra.mxu0 0
    %6398 = vmatprep.subr.bf16.mxu0 0
    %6399 = vmatpush1.bf16.msra.mxu0 0
    %6400 = vmatprep.subr.bf16.mxu0 0
    %6401 = vmatpush1.bf16.msra.mxu0 0
    %6402 = vmatprep.subr.bf16.mxu0 0
    %6403 = vmatpush1.bf16.msra.mxu0 0
    %6404 = vmatprep.subr.bf16.mxu0 0
    %6405 = vmatpush1.bf16.msra.mxu0 0
    %6406 = vmatprep.subr.bf16.mxu0 0
    %6407 = vmatpush1.bf16.msra.mxu0 0
    %6408 = vmatprep.subr.bf16.mxu0 0
    %6409 = vmatpush1.bf16.msra.mxu0 0
    %6410 = vmatprep.subr.bf16.mxu0 0
    %6411 = vmatpush1.bf16.msra.mxu0 0
    %6412 = vmatprep.subr.bf16.mxu0 0
    %6413 = vmatpush1.bf16.msra.mxu0 0
    %6414 = vmatprep.subr.bf16.mxu0 0
    %6415 = vmatpush1.bf16.msra.mxu0 0
    %6416 = vmatprep.subr.bf16.mxu0 0
    %6417 = vmatpush1.bf16.msra.mxu0 0
    %6418 = vmatprep.subr.bf16.mxu0 0
    %6419 = vmatpush1.bf16.msra.mxu0 0
    %6420 = vmatprep.mubr.bf16.mxu0 0
    %6421 = vmatmul.mubr.bf16.gmra.mrb[0].mxu0 %v6383
    %v6422 = vpop.f32.mrb[0].mxu0
    %v6423 = vadd.f32 0.0, %v6422
    %v6424 = vpop.f32.mrb[0].mxu0
    %v6425 = vpop.f32.mrb[0].mxu0
    %v6426 = vadd.f32 0.0, %v6425
    %v6427 = vpop.f32.mrb[0].mxu0
    %6428 = vdwg.mxu0
    %v6429 = vpack.c.bf16 %v6426, %v6423
    %v6434 = vunpack.c.l.b16 %v5496
    %v6435 = vunpack.c.l.b16 %v5497
    %v6436 = vunpack.c.l.b16 %v5498
    %v6437 = vunpack.c.l.b16 %v5499
    %v6438 = vpack.c.b16 %v6435, %v6434
    %v6439 = vpack.c.b16 %v6437, %v6436
    %v6443 = vsel %vm4324, %v6429, 0
    %6445 = vmatprep.subr.bf16.mxu0 0
    %6446 = vmatpush1.bf16.msra.mxu0 %v6438
    %6447 = vmatprep.subr.bf16.mxu0 0
    %6448 = vmatpush1.bf16.msra.mxu0 %v6439
    %6449 = vmatprep.subr.bf16.mxu0 0
    %6450 = vmatpush1.bf16.msra.mxu0 0
    %6451 = vmatprep.subr.bf16.mxu0 0
    %6452 = vmatpush1.bf16.msra.mxu0 0
    %6453 = vmatprep.subr.bf16.mxu0 0
    %6454 = vmatpush1.bf16.msra.mxu0 0
    %6455 = vmatprep.subr.bf16.mxu0 0
    %6456 = vmatpush1.bf16.msra.mxu0 0
    %6457 = vmatprep.subr.bf16.mxu0 0
    %6458 = vmatpush1.bf16.msra.mxu0 0
    %6459 = vmatprep.subr.bf16.mxu0 0
    %6460 = vmatpush1.bf16.msra.mxu0 0
    %6461 = vmatprep.subr.bf16.mxu0 0
    %6462 = vmatpush1.bf16.msra.mxu0 0
    %6463 = vmatprep.subr.bf16.mxu0 0
    %6464 = vmatpush1.bf16.msra.mxu0 0
    %6465 = vmatprep.subr.bf16.mxu0 0
    %6466 = vmatpush1.bf16.msra.mxu0 0
    %6467 = vmatprep.subr.bf16.mxu0 0
    %6468 = vmatpush1.bf16.msra.mxu0 0
    %6469 = vmatprep.subr.bf16.mxu0 0
    %6470 = vmatpush1.bf16.msra.mxu0 0
    %6471 = vmatprep.subr.bf16.mxu0 0
    %6472 = vmatpush1.bf16.msra.mxu0 0
    %6473 = vmatprep.subr.bf16.mxu0 0
    %6474 = vmatpush1.bf16.msra.mxu0 0
    %6475 = vmatprep.subr.bf16.mxu0 0
    %6476 = vmatpush1.bf16.msra.mxu0 0
    %6477 = vmatprep.mubr.bf16.mxu0 0
    %6478 = vmatmul.mubr.bf16.gmra.mrb[0].mxu0 %v6443
    %v6479 = vpop.f32.mrb[0].mxu0
    %v6480 = vadd.f32 0.0, %v6479
    %v6481 = vpop.f32.mrb[0].mxu0
    %v6482 = vpop.f32.mrb[0].mxu0
    %v6483 = vadd.f32 0.0, %v6482
    %v6484 = vpop.f32.mrb[0].mxu0
    %6485 = vdwg.mxu0
    %v6486 = vadd.f32 %v6304, %v6480
    %v6487 = vadd.f32 %v6305, %v6483
    %s6488 = scalar_lea.vmem %s33, 1
    %v6489 = vld [vmem:[%s6488] sm:$0x1]
    %v6491 = vlaneseq
    %v6492 = vshrl.u32 %v6491, 7
    %v6493 = vsub.s32 0, %v6492
    %v6494 = vrot.slane %v6489, %v6493
    %v6496 = vadd.f32 %v6486, %v6494
    %v6497 = vadd.f32 %v6487, %v6494
    %v6498 = vadd.f32 %v5481, %v6496
    %v6499 = vadd.f32 %v5482, %v6497
    %s6500 = scalar_lea.vmem %s43, 1
    %v6501 = vld [vmem:[%s6500] sm:$0x1]
    %s6502 = scalar_lea.vmem %s45, 1
    %v6503 = vld [vmem:[%s6502] sm:$0x1]
    %6504 = vadd.xlane.f32.xlu0 %v6498
    %v6505 = vpop.xlane.xlu0 %6504
    %v6506 = vsel %vm5065, %v6499, 0.0
    %6507 = vadd.xlane.f32.xlu0 %v6506
    %v6508 = vpop.xlane.xlu0 %6507
    %v6509 = vmul.f32 %v6505, %v5069
    %v6510 = vmul.f32 %v6508, %v5069
    %v6511 = vsub.f32 %v6498, %v6509
    %v6512 = vsub.f32 %v6499, %v6510
    %v6513 = vmul.f32 %v6511, %v6511
    %v6514 = vmul.f32 %v6512, %v6512
    %6515 = vadd.xlane.f32.xlu0 %v6513
    %v6516 = vpop.xlane.xlu0 %6515
    %v6517 = vsel %vm5065, %v6514, 0.0
    %6518 = vadd.xlane.f32.xlu0 %v6517
    %v6519 = vpop.xlane.xlu0 %6518
    %v6520 = vmul.f32 %v6516, %v5069
    %v6521 = vmul.f32 %v6519, %v5069
    %v6522 = vadd.f32 %v6520, 1e-05
    %v6523 = vadd.f32 %v6521, 1e-05
    %v6524 = vrsqrt.pop %v6522
    %v6525 = vrsqrt.pop %v6523
    %v6526 = vmul.f32 %v6511, %v6524
    %v6527 = vmul.f32 %v6512, %v6525
    %v6529 = vlaneseq
    %v6530 = vshrl.u32 %v6529, 7
    %v6531 = vsub.s32 0, %v6530
    %v6532 = vrot.slane %v6501, %v6531
    %v6534 = vmul.f32 %v6526, %v6532
    %v6535 = vmul.f32 %v6527, %v6532
    %v6537 = vlaneseq
    %v6538 = vshrl.u32 %v6537, 7
    %v6539 = vsub.s32 0, %v6538
    %v6540 = vrot.slane %v6503, %v6539
    %v6542 = vadd.f32 %v6534, %v6540
    %v6543 = vadd.f32 %v6535, %v6540
    %s6544 = scalar_lea.vmem %s35, 128
    %v6545 = vld [vmem:[%s6544] sm:$0xff]
    %v6546 = vld [vmem:[%s6544 + $0x8] sm:$0xff]
    %v6547 = vld [vmem:[%s6544 + $0x10] sm:$0xff]
    %v6548 = vld [vmem:[%s6544 + $0x18] sm:$0xff]
    %v6549 = vld [vmem:[%s6544 + $0x20] sm:$0xff]
    %v6550 = vld [vmem:[%s6544 + $0x28] sm:$0xff]
    %v6551 = vld [vmem:[%s6544 + $0x30] sm:$0xff]
    %v6552 = vld [vmem:[%s6544 + $0x38] sm:$0xff]
    %v6553 = vld [vmem:[%s6544 + $0x40] sm:$0xff]
    %v6554 = vld [vmem:[%s6544 + $0x48] sm:$0xff]
    %v6555 = vld [vmem:[%s6544 + $0x50] sm:$0xff]
    %v6556 = vld [vmem:[%s6544 + $0x58] sm:$0xff]
    %v6557 = vld [vmem:[%s6544 + $0x60] sm:$0xff]
    %v6558 = vld [vmem:[%s6544 + $0x68] sm:$0xff]
    %v6559 = vld [vmem:[%s6544 + $0x70] sm:$0xff]
    %v6560 = vld [vmem:[%s6544 + $0x78] sm:$0xff]
    %v6561 = vpack.c.bf16 %v6543, %v6542
    %s6562 = scalar_lea.vmem %s37, 2
    %v6563 = vld [vmem:[%s6562] sm:$0x3]
    %v6565 = vlaneseq
    %v6566 = vshrl.u32 %v6565, 7
    %v6567 = vsub.s32 0, %v6566
    %v6568 = vrot.slane %v6563, %v6567
    %v6569 = vlaneseq
    %v6570 = vshrl.u32 %v6569, 7
    %v6571 = vsub.s32 1, %v6570
    %v6572 = vrot.slane %v6563, %v6571
    %v6591 = vunpack.c.l.b16 %v6545
    %v6592 = vunpack.c.h.b16 %v6545
    %v6593 = vunpack.c.l.b16 %v6546
    %v6594 = vunpack.c.h.b16 %v6546
    %v6595 = vunpack.c.l.b16 %v6547
    %v6596 = vunpack.c.h.b16 %v6547
    %v6597 = vunpack.c.l.b16 %v6548
    %v6598 = vunpack.c.h.b16 %v6548
    %v6599 = vunpack.c.l.b16 %v6549
    %v6600 = vunpack.c.h.b16 %v6549
    %v6601 = vunpack.c.l.b16 %v6550
    %v6602 = vunpack.c.h.b16 %v6550
    %v6603 = vunpack.c.l.b16 %v6551
    %v6604 = vunpack.c.h.b16 %v6551
    %v6605 = vunpack.c.l.b16 %v6552
    %v6606 = vunpack.c.h.b16 %v6552
    %v6607 = vunpack.c.l.b16 %v6553
    %v6608 = vunpack.c.h.b16 %v6553
    %v6609 = vunpack.c.l.b16 %v6554
    %v6610 = vunpack.c.h.b16 %v6554
    %v6611 = vunpack.c.l.b16 %v6555
    %v6612 = vunpack.c.h.b16 %v6555
    %v6613 = vunpack.c.l.b16 %v6556
    %v6614 = vunpack.c.h.b16 %v6556
    %v6615 = vunpack.c.l.b16 %v6557
    %v6616 = vunpack.c.h.b16 %v6557
    %v6617 = vunpack.c.l.b16 %v6558
    %v6618 = vunpack.c.h.b16 %v6558
    %v6619 = vunpack.c.l.b16 %v6559
    %v6620 = vunpack.c.h.b16 %v6559
    %v6621 = vunpack.c.l.b16 %v6560
    %v6622 = vunpack.c.h.b16 %v6560
    %v6623 = vpack.c.b16 %v6593, %v6591
    %v6624 = vpack.c.b16 %v6594, %v6592
    %v6625 = vpack.c.b16 %v6597, %v6595
    %v6626 = vpack.c.b16 %v6598, %v6596
    %v6627 = vpack.c.b16 %v6601, %v6599
    %v6628 = vpack.c.b16 %v6602, %v6600
    %v6629 = vpack.c.b16 %v6605, %v6603
    %v6630 = vpack.c.b16 %v6606, %v6604
    %v6631 = vpack.c.b16 %v6609, %v6607
    %v6632 = vpack.c.b16 %v6610, %v6608
    %v6633 = vpack.c.b16 %v6613, %v6611
    %v6634 = vpack.c.b16 %v6614, %v6612
    %v6635 = vpack.c.b16 %v6617, %v6615
    %v6636 = vpack.c.b16 %v6618, %v6616
    %v6637 = vpack.c.b16 %v6621, %v6619
    %v6638 = vpack.c.b16 %v6622, %v6620
    %6655 = vmatprep.subr.bf16.mxu0 %v6624
    %6656 = vmatpush1.bf16.msra.mxu0 %v6623
    %6657 = vmatprep.subr.bf16.mxu0 %v6626
    %6658 = vmatpush1.bf16.msra.mxu0 %v6625
    %6659 = vmatprep.subr.bf16.mxu0 %v6628
    %6660 = vmatpush1.bf16.msra.mxu0 %v6627
    %6661 = vmatprep.subr.bf16.mxu0 %v6630
    %6662 = vmatpush1.bf16.msra.mxu0 %v6629
    %6663 = vmatprep.subr.bf16.mxu0 %v6632
    %6664 = vmatpush1.bf16.msra.mxu0 %v6631
    %6665 = vmatprep.subr.bf16.mxu0 %v6634
    %6666 = vmatpush1.bf16.msra.mxu0 %v6633
    %6667 = vmatprep.subr.bf16.mxu0 %v6636
    %6668 = vmatpush1.bf16.msra.mxu0 %v6635
    %6669 = vmatprep.subr.bf16.mxu0 %v6638
    %6670 = vmatpush1.bf16.msra.mxu0 %v6637
    %6671 = vmatprep.subr.bf16.mxu0 0
    %6672 = vmatpush1.bf16.msra.mxu0 0
    %6673 = vmatprep.subr.bf16.mxu0 0
    %6674 = vmatpush1.bf16.msra.mxu0 0
    %6675 = vmatprep.subr.bf16.mxu0 0
    %6676 = vmatpush1.bf16.msra.mxu0 0
    %6677 = vmatprep.subr.bf16.mxu0 0
    %6678 = vmatpush1.bf16.msra.mxu0 0
    %6679 = vmatprep.subr.bf16.mxu0 0
    %6680 = vmatpush1.bf16.msra.mxu0 0
    %6681 = vmatprep.subr.bf16.mxu0 0
    %6682 = vmatpush1.bf16.msra.mxu0 0
    %6683 = vmatprep.subr.bf16.mxu0 0
    %6684 = vmatpush1.bf16.msra.mxu0 0
    %6685 = vmatprep.subr.bf16.mxu0 0
    %6686 = vmatpush1.bf16.msra.mxu0 0
    %6687 = vmatprep.mubr.bf16.mxu0 0
    %6688 = vmatmul.mubr.bf16.gmra.mrb[0].mxu0 %v6561
    %v6689 = vpop.f32.mrb[0].mxu0
    %v6690 = vadd.f32 %v6568, %v6689
    %v6691 = vpop.f32.mrb[0].mxu0
    %v6692 = vadd.f32 %v6572, %v6691
    %v6693 = vpop.f32.mrb[0].mxu0
    %v6694 = vadd.f32 %v6568, %v6693
    %v6695 = vpop.f32.mrb[0].mxu0
    %v6696 = vadd.f32 %v6572, %v6695
    %6697 = vdwg.mxu0
    %v6698 = vmax.f32 %v6690, 0.0
    %v6699 = vmax.f32 %v6692, 0.0
    %v6700 = vmax.f32 %v6694, 0.0
    %v6701 = vmax.f32 %v6696, 0.0
    %s6702 = scalar_lea.vmem %s39, 128
    %v6703 = vld [vmem:[%s6702] sm:$0xf]
    %v6704 = vld [vmem:[%s6702 + $0x4] sm:$0xf]
    %v6705 = vld [vmem:[%s6702 + $0x8] sm:$0xf]
    %v6706 = vld [vmem:[%s6702 + $0xc] sm:$0xf]
    %v6707 = vld [vmem:[%s6702 + $0x10] sm:$0xf]
    %v6708 = vld [vmem:[%s6702 + $0x14] sm:$0xf]
    %v6709 = vld [vmem:[%s6702 + $0x18] sm:$0xf]
    %v6710 = vld [vmem:[%s6702 + $0x1c] sm:$0xf]
    %v6711 = vld [vmem:[%s6702 + $0x20] sm:$0xf]
    %v6712 = vld [vmem:[%s6702 + $0x24] sm:$0xf]
    %v6713 = vld [vmem:[%s6702 + $0x28] sm:$0xf]
    %v6714 = vld [vmem:[%s6702 + $0x2c] sm:$0xf]
    %v6715 = vld [vmem:[%s6702 + $0x30] sm:$0xf]
    %v6716 = vld [vmem:[%s6702 + $0x34] sm:$0xf]
    %v6717 = vld [vmem:[%s6702 + $0x38] sm:$0xf]
    %v6718 = vld [vmem:[%s6702 + $0x3c] sm:$0xf]
    %v6719 = vld [vmem:[%s6702 + $0x40] sm:$0xf]
    %v6720 = vld [vmem:[%s6702 + $0x44] sm:$0xf]
    %v6721 = vld [vmem:[%s6702 + $0x48] sm:$0xf]
    %v6722 = vld [vmem:[%s6702 + $0x4c] sm:$0xf]
    %v6723 = vld [vmem:[%s6702 + $0x50] sm:$0xf]
    %v6724 = vld [vmem:[%s6702 + $0x54] sm:$0xf]
    %v6725 = vld [vmem:[%s6702 + $0x58] sm:$0xf]
    %v6726 = vld [vmem:[%s6702 + $0x5c] sm:$0xf]
    %v6727 = vld [vmem:[%s6702 + $0x60] sm:$0xf]
    %v6728 = vld [vmem:[%s6702 + $0x64] sm:$0xf]
    %v6729 = vld [vmem:[%s6702 + $0x68] sm:$0xf]
    %v6730 = vld [vmem:[%s6702 + $0x6c] sm:$0xf]
    %v6731 = vld [vmem:[%s6702 + $0x70] sm:$0xf]
    %v6732 = vld [vmem:[%s6702 + $0x74] sm:$0xf]
    %v6733 = vld [vmem:[%s6702 + $0x78] sm:$0xf]
    %v6734 = vld [vmem:[%s6702 + $0x7c] sm:$0xf]
    %v6735 = vpack.c.bf16 %v6700, %v6698
    %v6736 = vpack.c.bf16 %v6701, %v6699
    %s6737 = scalar_lea.vmem %s41, 1
    %v6738 = vld [vmem:[%s6737] sm:$0x1]
    %v6740 = vlaneseq
    %v6741 = vshrl.u32 %v6740, 7
    %v6742 = vsub.s32 0, %v6741
    %v6743 = vrot.slane %v6738, %v6742
    %v6777 = vunpack.c.l.b16 %v6703
    %v6778 = vunpack.c.l.b16 %v6704
    %v6779 = vunpack.c.l.b16 %v6705
    %v6780 = vunpack.c.l.b16 %v6706
    %v6781 = vunpack.c.l.b16 %v6707
    %v6782 = vunpack.c.l.b16 %v6708
    %v6783 = vunpack.c.l.b16 %v6709
    %v6784 = vunpack.c.l.b16 %v6710
    %v6785 = vunpack.c.l.b16 %v6711
    %v6786 = vunpack.c.l.b16 %v6712
    %v6787 = vunpack.c.l.b16 %v6713
    %v6788 = vunpack.c.l.b16 %v6714
    %v6789 = vunpack.c.l.b16 %v6715
    %v6790 = vunpack.c.l.b16 %v6716
    %v6791 = vunpack.c.l.b16 %v6717
    %v6792 = vunpack.c.l.b16 %v6718
    %v6793 = vunpack.c.l.b16 %v6719
    %v6794 = vunpack.c.l.b16 %v6720
    %v6795 = vunpack.c.l.b16 %v6721
    %v6796 = vunpack.c.l.b16 %v6722
    %v6797 = vunpack.c.l.b16 %v6723
    %v6798 = vunpack.c.l.b16 %v6724
    %v6799 = vunpack.c.l.b16 %v6725
    %v6800 = vunpack.c.l.b16 %v6726
    %v6801 = vunpack.c.l.b16 %v6727
    %v6802 = vunpack.c.l.b16 %v6728
    %v6803 = vunpack.c.l.b16 %v6729
    %v6804 = vunpack.c.l.b16 %v6730
    %v6805 = vunpack.c.l.b16 %v6731
    %v6806 = vunpack.c.l.b16 %v6732
    %v6807 = vunpack.c.l.b16 %v6733
    %v6808 = vunpack.c.l.b16 %v6734
    %v6809 = vpack.c.b16 %v6778, %v6777
    %v6810 = vpack.c.b16 %v6780, %v6779
    %v6811 = vpack.c.b16 %v6782, %v6781
    %v6812 = vpack.c.b16 %v6784, %v6783
    %v6813 = vpack.c.b16 %v6786, %v6785
    %v6814 = vpack.c.b16 %v6788, %v6787
    %v6815 = vpack.c.b16 %v6790, %v6789
    %v6816 = vpack.c.b16 %v6792, %v6791
    %v6817 = vpack.c.b16 %v6794, %v6793
    %v6818 = vpack.c.b16 %v6796, %v6795
    %v6819 = vpack.c.b16 %v6798, %v6797
    %v6820 = vpack.c.b16 %v6800, %v6799
    %v6821 = vpack.c.b16 %v6802, %v6801
    %v6822 = vpack.c.b16 %v6804, %v6803
    %v6823 = vpack.c.b16 %v6806, %v6805
    %v6824 = vpack.c.b16 %v6808, %v6807
    %6841 = vmatprep.subr.bf16.mxu0 0
    %6842 = vmatpush1.bf16.msra.mxu0 %v6809
    %6843 = vmatprep.subr.bf16.mxu0 0
    %6844 = vmatpush1.bf16.msra.mxu0 %v6810
    %6845 = vmatprep.subr.bf16.mxu0 0
    %6846 = vmatpush1.bf16.msra.mxu0 %v6811
    %6847 = vmatprep.subr.bf16.mxu0 0
    %6848 = vmatpush1.bf16.msra.mxu0 %v6812
    %6849 = vmatprep.subr.bf16.mxu0 0
    %6850 = vmatpush1.bf16.msra.mxu0 %v6813
    %6851 = vmatprep.subr.bf16.mxu0 0
    %6852 = vmatpush1.bf16.msra.mxu0 %v6814
    %6853 = vmatprep.subr.bf16.mxu0 0
    %6854 = vmatpush1.bf16.msra.mxu0 %v6815
    %6855 = vmatprep.subr.bf16.mxu0 0
    %6856 = vmatpush1.bf16.msra.mxu0 %v6816
    %6857 = vmatprep.subr.bf16.mxu0 0
    %6858 = vmatpush1.bf16.msra.mxu0 %v6817
    %6859 = vmatprep.subr.bf16.mxu0 0
    %6860 = vmatpush1.bf16.msra.mxu0 %v6818
    %6861 = vmatprep.subr.bf16.mxu0 0
    %6862 = vmatpush1.bf16.msra.mxu0 %v6819
    %6863 = vmatprep.subr.bf16.mxu0 0
    %6864 = vmatpush1.bf16.msra.mxu0 %v6820
    %6865 = vmatprep.subr.bf16.mxu0 0
    %6866 = vmatpush1.bf16.msra.mxu0 %v6821
    %6867 = vmatprep.subr.bf16.mxu0 0
    %6868 = vmatpush1.bf16.msra.mxu0 %v6822
    %6869 = vmatprep.subr.bf16.mxu0 0
    %6870 = vmatpush1.bf16.msra.mxu0 %v6823
    %6871 = vmatprep.subr.bf16.mxu0 0
    %6872 = vmatpush1.bf16.msra.mxu0 %v6824
    %6873 = vmatprep.mubr.bf16.mxu0 %v6736
    %6874 = vmatmul.mubr.bf16.gmra.mrb[0].mxu0 %v6735
    %v6875 = vpop.f32.mrb[0].mxu0
    %v6876 = vadd.f32 %v6743, %v6875
    %v6877 = vpop.f32.mrb[0].mxu0
    %v6878 = vpop.f32.mrb[0].mxu0
    %v6879 = vadd.f32 %v6743, %v6878
    %v6880 = vpop.f32.mrb[0].mxu0
    %6881 = vdwg.mxu0
    %v6882 = vadd.f32 %v6542, %v6876
    %v6883 = vadd.f32 %v6543, %v6879
    %s6884 = scalar_lea.vmem %s47, 1
    %v6885 = vld [vmem:[%s6884] sm:$0x1]
    %s6886 = scalar_lea.vmem %s49, 1
    %v6887 = vld [vmem:[%s6886] sm:$0x1]
    %6888 = vadd.xlane.f32.xlu0 %v6882
    %v6889 = vpop.xlane.xlu0 %6888
    %v6890 = vsel %vm5065, %v6883, 0.0
    %6891 = vadd.xlane.f32.xlu0 %v6890
    %v6892 = vpop.xlane.xlu0 %6891
    %v6893 = vmul.f32 %v6889, %v5069
    %v6894 = vmul.f32 %v6892, %v5069
    %v6895 = vsub.f32 %v6882, %v6893
    %v6896 = vsub.f32 %v6883, %v6894
    %v6897 = vmul.f32 %v6895, %v6895
    %v6898 = vmul.f32 %v6896, %v6896
    %6899 = vadd.xlane.f32.xlu0 %v6897
    %v6900 = vpop.xlane.xlu0 %6899
    %v6901 = vsel %vm5065, %v6898, 0.0
    %6902 = vadd.xlane.f32.xlu0 %v6901
    %v6903 = vpop.xlane.xlu0 %6902
    %v6904 = vmul.f32 %v6900, %v5069
    %v6905 = vmul.f32 %v6903, %v5069
    %v6906 = vadd.f32 %v6904, 1e-05
    %v6907 = vadd.f32 %v6905, 1e-05
    %v6908 = vrsqrt.pop %v6906
    %v6909 = vrsqrt.pop %v6907
    %v6910 = vmul.f32 %v6895, %v6908
    %v6911 = vmul.f32 %v6896, %v6909
    %v6913 = vlaneseq
    %v6914 = vshrl.u32 %v6913, 7
    %v6915 = vsub.s32 0, %v6914
    %v6916 = vrot.slane %v6885, %v6915
    %v6918 = vmul.f32 %v6910, %v6916
    %v6919 = vmul.f32 %v6911, %v6916
    %v6921 = vlaneseq
    %v6922 = vshrl.u32 %v6921, 7
    %v6923 = vsub.s32 0, %v6922
    %v6924 = vrot.slane %v6887, %v6923
    %v6926 = vadd.f32 %v6918, %v6924
    %v6927 = vadd.f32 %v6919, %v6924
    %v6928 = vld [vmem:[%s51] sm:$0xf]
    %v6929 = vld [vmem:[%s51 + $0x4] sm:$0xf]
    %v6930 = vld [vmem:[%s51 + $0x8] sm:$0xf]
    %v6931 = vld [vmem:[%s51 + $0xc] sm:$0xf]
    %v6932 = vld [vmem:[%s51 + $0x10] sm:$0xf]
    %v6933 = vld [vmem:[%s51 + $0x14] sm:$0xf]
    %v6934 = vld [vmem:[%s51 + $0x18] sm:$0xf]
    %v6935 = vld [vmem:[%s51 + $0x1c] sm:$0xf]
    %v6936 = vld [vmem:[%s51 + $0x20] sm:$0xf]
    %v6937 = vld [vmem:[%s51 + $0x24] sm:$0xf]
    %v6938 = vld [vmem:[%s51 + $0x28] sm:$0xf]
    %v6939 = vld [vmem:[%s51 + $0x2c] sm:$0xf]
    %v6940 = vld [vmem:[%s51 + $0x30] sm:$0xf]
    %v6941 = vld [vmem:[%s51 + $0x34] sm:$0xf]
    %v6942 = vld [vmem:[%s51 + $0x38] sm:$0xf]
    %v6943 = vld [vmem:[%s51 + $0x3c] sm:$0xf]
    %v6944 = vpack.c.bf16 %v4037, %v4036
    %v6945 = vld [vmem:[%s53] sm:$0x1]
    %v6947 = vlaneseq
    %v6948 = vshrl.u32 %v6947, 7
    %v6949 = vsub.s32 0, %v6948
    %v6950 = vrot.slane %v6945, %v6949
    %v6968 = vunpack.c.l.b16 %v6928
    %v6969 = vunpack.c.l.b16 %v6929
    %v6970 = vunpack.c.l.b16 %v6930
    %v6971 = vunpack.c.l.b16 %v6931
    %v6972 = vunpack.c.l.b16 %v6932
    %v6973 = vunpack.c.l.b16 %v6933
    %v6974 = vunpack.c.l.b16 %v6934
    %v6975 = vunpack.c.l.b16 %v6935
    %v6976 = vunpack.c.l.b16 %v6936
    %v6977 = vunpack.c.l.b16 %v6937
    %v6978 = vunpack.c.l.b16 %v6938
    %v6979 = vunpack.c.l.b16 %v6939
    %v6980 = vunpack.c.l.b16 %v6940
    %v6981 = vunpack.c.l.b16 %v6941
    %v6982 = vunpack.c.l.b16 %v6942
    %v6983 = vunpack.c.l.b16 %v6943
    %v6984 = vpack.c.b16 %v6969, %v6968
    %v6985 = vpack.c.b16 %v6971, %v6970
    %v6986 = vpack.c.b16 %v6973, %v6972
    %v6987 = vpack.c.b16 %v6975, %v6974
    %v6988 = vpack.c.b16 %v6977, %v6976
    %v6989 = vpack.c.b16 %v6979, %v6978
    %v6990 = vpack.c.b16 %v6981, %v6980
    %v6991 = vpack.c.b16 %v6983, %v6982
    %7000 = vmatprep.subr.bf16.mxu0 0
    %7001 = vmatpush1.bf16.msra.mxu0 %v6984
    %7002 = vmatprep.subr.bf16.mxu0 0
    %7003 = vmatpush1.bf16.msra.mxu0 %v6985
    %7004 = vmatprep.subr.bf16.mxu0 0
    %7005 = vmatpush1.bf16.msra.mxu0 %v6986
    %7006 = vmatprep.subr.bf16.mxu0 0
    %7007 = vmatpush1.bf16.msra.mxu0 %v6987
    %7008 = vmatprep.subr.bf16.mxu0 0
    %7009 = vmatpush1.bf16.msra.mxu0 %v6988
    %7010 = vmatprep.subr.bf16.mxu0 0
    %7011 = vmatpush1.bf16.msra.mxu0 %v6989
    %7012 = vmatprep.subr.bf16.mxu0 0
    %7013 = vmatpush1.bf16.msra.mxu0 %v6990
    %7014 = vmatprep.subr.bf16.mxu0 0
    %7015 = vmatpush1.bf16.msra.mxu0 %v6991
    %7016 = vmatprep.subr.bf16.mxu0 0
    %7017 = vmatpush1.bf16.msra.mxu0 0
    %7018 = vmatprep.subr.bf16.mxu0 0
    %7019 = vmatpush1.bf16.msra.mxu0 0
    %7020 = vmatprep.subr.bf16.mxu0 0
    %7021 = vmatpush1.bf16.msra.mxu0 0
    %7022 = vmatprep.subr.bf16.mxu0 0
    %7023 = vmatpush1.bf16.msra.mxu0 0
    %7024 = vmatprep.subr.bf16.mxu0 0
    %7025 = vmatpush1.bf16.msra.mxu0 0
    %7026 = vmatprep.subr.bf16.mxu0 0
    %7027 = vmatpush1.bf16.msra.mxu0 0
    %7028 = vmatprep.subr.bf16.mxu0 0
    %7029 = vmatpush1.bf16.msra.mxu0 0
    %7030 = vmatprep.subr.bf16.mxu0 0
    %7031 = vmatpush1.bf16.msra.mxu0 0
    %7032 = vmatprep.mubr.bf16.mxu0 0
    %7033 = vmatmul.mubr.bf16.gmra.mrb[0].mxu0 %v6944
    %v7034 = vpop.f32.mrb[0].mxu0
    %v7035 = vadd.f32 %v6950, %v7034
    %v7036 = vpop.f32.mrb[0].mxu0
    %v7037 = vpop.f32.mrb[0].mxu0
    %v7038 = vadd.f32 %v6950, %v7037
    %v7039 = vpop.f32.mrb[0].mxu0
    %7040 = vdwg.mxu0
    %v7041 = vadd.f32 %v6926, %v7035
    %v7042 = vadd.f32 %v6927, %v7038
    %v7043 = vmax.f32 %v7041, 0.0
    %v7044 = vmax.f32 %v7042, 0.0
    %v7045 = vld [vmem:[%s55] sm:$0x3]
    %v7046 = vpack.c.bf16 %v7045, %v7045
    %v7047 = vpack.c.bf16 %v7044, %v7043
    %v7048 = vld [vmem:[%s57] sm:$0x1]
    %v7050 = vlaneseq
    %v7051 = vshrl.u32 %v7050, 7
    %v7052 = vsub.s32 0, %v7051
    %v7053 = vrot.slane %v7048, %v7052
    %v7056 = vsel %vm4372, %v7046, 0
    %v7059 = vsel %vm4401, %v7047, 0
    %7061 = vmatprep.subr.bf16.mxu0 0
    %7062 = vmatpush1.bf16.msra.mxu0 %v7059
    %7063 = vmatprep.subr.bf16.mxu0 0
    %7064 = vmatpush1.bf16.msra.mxu0 0
    %7065 = vmatprep.subr.bf16.mxu0 0
    %7066 = vmatpush1.bf16.msra.mxu0 0
    %7067 = vmatprep.subr.bf16.mxu0 0
    %7068 = vmatpush1.bf16.msra.mxu0 0
    %7069 = vmatprep.subr.bf16.mxu0 0
    %7070 = vmatpush1.bf16.msra.mxu0 0
    %7071 = vmatprep.subr.bf16.mxu0 0
    %7072 = vmatpush1.bf16.msra.mxu0 0
    %7073 = vmatprep.subr.bf16.mxu0 0
    %7074 = vmatpush1.bf16.msra.mxu0 0
    %7075 = vmatprep.subr.bf16.mxu0 0
    %7076 = vmatpush1.bf16.msra.mxu0 0
    %7077 = vmatprep.subr.bf16.mxu0 0
    %7078 = vmatpush1.bf16.msra.mxu0 0
    %7079 = vmatprep.subr.bf16.mxu0 0
    %7080 = vmatpush1.bf16.msra.mxu0 0
    %7081 = vmatprep.subr.bf16.mxu0 0
    %7082 = vmatpush1.bf16.msra.mxu0 0
    %7083 = vmatprep.subr.bf16.mxu0 0
    %7084 = vmatpush1.bf16.msra.mxu0 0
    %7085 = vmatprep.subr.bf16.mxu0 0
    %7086 = vmatpush1.bf16.msra.mxu0 0
    %7087 = vmatprep.subr.bf16.mxu0 0
    %7088 = vmatpush1.bf16.msra.mxu0 0
    %7089 = vmatprep.subr.bf16.mxu0 0
    %7090 = vmatpush1.bf16.msra.mxu0 0
    %7091 = vmatprep.subr.bf16.mxu0 0
    %7092 = vmatpush1.bf16.msra.mxu0 0
    %7093 = vmatprep.mubr.bf16.mxu0 0
    %7094 = vmatmul.mubr.bf16.gmra.mrb[0].mxu0 %v7056
    %v7095 = vpop.f32.mrb[0].mxu0
    %v7096 = vadd.f32 %v7053, %v7095
    %v7097 = vpop.f32.mrb[0].mxu0
    %v7098 = vpop.f32.mrb[0].mxu0
    %v7099 = vpop.f32.mrb[0].mxu0
    %7100 = vdwg.mxu0
    %v7101 = vld [vmem:[%s59] sm:$0xf]
    %v7102 = vld [vmem:[%s59 + $0x4] sm:$0xf]
    %v7103 = vld [vmem:[%s59 + $0x8] sm:$0xf]
    %v7104 = vld [vmem:[%s59 + $0xc] sm:$0xf]
    %v7105 = vld [vmem:[%s59 + $0x10] sm:$0xf]
    %v7106 = vld [vmem:[%s59 + $0x14] sm:$0xf]
    %v7107 = vld [vmem:[%s59 + $0x18] sm:$0xf]
    %v7108 = vld [vmem:[%s59 + $0x1c] sm:$0xf]
    %v7109 = vld [vmem:[%s59 + $0x20] sm:$0xf]
    %v7110 = vld [vmem:[%s59 + $0x24] sm:$0xf]
    %v7111 = vld [vmem:[%s59 + $0x28] sm:$0xf]
    %v7112 = vld [vmem:[%s59 + $0x2c] sm:$0xf]
    %v7113 = vld [vmem:[%s59 + $0x30] sm:$0xf]
    %v7114 = vld [vmem:[%s59 + $0x34] sm:$0xf]
    %v7115 = vld [vmem:[%s59 + $0x38] sm:$0xf]
    %v7116 = vld [vmem:[%s59 + $0x3c] sm:$0xf]
    %v7117 = vpack.c.bf16 %v7096, %v7096
    %v7118 = vld [vmem:[%s61] sm:$0x1]
    %v7120 = vlaneseq
    %v7121 = vshrl.u32 %v7120, 7
    %v7122 = vsub.s32 0, %v7121
    %v7123 = vrot.slane %v7118, %v7122
    %v7141 = vunpack.c.l.b16 %v7101
    %v7142 = vunpack.c.l.b16 %v7102
    %v7143 = vunpack.c.l.b16 %v7103
    %v7144 = vunpack.c.l.b16 %v7104
    %v7145 = vunpack.c.l.b16 %v7105
    %v7146 = vunpack.c.l.b16 %v7106
    %v7147 = vunpack.c.l.b16 %v7107
    %v7148 = vunpack.c.l.b16 %v7108
    %v7149 = vunpack.c.l.b16 %v7109
    %v7150 = vunpack.c.l.b16 %v7110
    %v7151 = vunpack.c.l.b16 %v7111
    %v7152 = vunpack.c.l.b16 %v7112
    %v7153 = vunpack.c.l.b16 %v7113
    %v7154 = vunpack.c.l.b16 %v7114
    %v7155 = vunpack.c.l.b16 %v7115
    %v7156 = vunpack.c.l.b16 %v7116
    %v7157 = vpack.c.b16 %v7142, %v7141
    %v7158 = vpack.c.b16 %v7144, %v7143
    %v7159 = vpack.c.b16 %v7146, %v7145
    %v7160 = vpack.c.b16 %v7148, %v7147
    %v7161 = vpack.c.b16 %v7150, %v7149
    %v7162 = vpack.c.b16 %v7152, %v7151
    %v7163 = vpack.c.b16 %v7154, %v7153
    %v7164 = vpack.c.b16 %v7156, %v7155
    %7173 = vmatprep.subr.bf16.mxu0 0
    %7174 = vmatpush1.bf16.msra.mxu0 %v7157
    %7175 = vmatprep.subr.bf16.mxu0 0
    %7176 = vmatpush1.bf16.msra.mxu0 %v7158
    %7177 = vmatprep.subr.bf16.mxu0 0
    %7178 = vmatpush1.bf16.msra.mxu0 %v7159
    %7179 = vmatprep.subr.bf16.mxu0 0
    %7180 = vmatpush1.bf16.msra.mxu0 %v7160
    %7181 = vmatprep.subr.bf16.mxu0 0
    %7182 = vmatpush1.bf16.msra.mxu0 %v7161
    %7183 = vmatprep.subr.bf16.mxu0 0
    %7184 = vmatpush1.bf16.msra.mxu0 %v7162
    %7185 = vmatprep.subr.bf16.mxu0 0
    %7186 = vmatpush1.bf16.msra.mxu0 %v7163
    %7187 = vmatprep.subr.bf16.mxu0 0
    %7188 = vmatpush1.bf16.msra.mxu0 %v7164
    %7189 = vmatprep.subr.bf16.mxu0 0
    %7190 = vmatpush1.bf16.msra.mxu0 0
    %7191 = vmatprep.subr.bf16.mxu0 0
    %7192 = vmatpush1.bf16.msra.mxu0 0
    %7193 = vmatprep.subr.bf16.mxu0 0
    %7194 = vmatpush1.bf16.msra.mxu0 0
    %7195 = vmatprep.subr.bf16.mxu0 0
    %7196 = vmatpush1.bf16.msra.mxu0 0
    %7197 = vmatprep.subr.bf16.mxu0 0
    %7198 = vmatpush1.bf16.msra.mxu0 0
    %7199 = vmatprep.subr.bf16.mxu0 0
    %7200 = vmatpush1.bf16.msra.mxu0 0
    %7201 = vmatprep.subr.bf16.mxu0 0
    %7202 = vmatpush1.bf16.msra.mxu0 0
    %7203 = vmatprep.subr.bf16.mxu0 0
    %7204 = vmatpush1.bf16.msra.mxu0 0
    %7205 = vmatprep.mubr.bf16.mxu0 0
    %7206 = vmatmul.mubr.bf16.gmra.mrb[0].mxu0 %v7117
    %v7207 = vpop.f32.mrb[0].mxu0
    %v7208 = vadd.f32 %v7123, %v7207
    %v7209 = vpop.f32.mrb[0].mxu0
    %v7210 = vpop.f32.mrb[0].mxu0
    %v7211 = vpop.f32.mrb[0].mxu0
    %7212 = vdwg.mxu0
    %vm7213 = vcmask 812032
    %7214 = vst.msk [vmem:[#allocation2] sm:$0x3] %vm7213, %v7208
    // Predicated region
    $region126: #{cnn2d_transam_forward.1} parent=1 // pred_check
      _
    $region127: #{cnn2d_transam_forward.1} parent=1 // pred_check_branch
      %7216 = sbr.rel (0) target = $region129
    $region128: #{cnn2d_transam_forward.1} parent=1 // pred_region
      %s7218 = ssub.s32 32, 32
      %7219 = vsyncadd [#allocation3], %s7218
      %s7221 = sshll.u32 [#allocation2], 4
      %s7222 = int_to_ptr.vmem [resolvable:$true] %s7221
      %7224 = dma.vmem_to_hbm [thread:$0]  %s7222, 32, %s63, [#allocation3]
    $region129: #{cnn2d_transam_forward.1} parent=1 // pred_fallthru
      _
    // Predicated region
    $region130: #{cnn2d_transam_forward.1} parent=1 // pred_check
      _
    $region131: #{cnn2d_transam_forward.1} parent=1 // pred_check_branch
      %7226 = sbr.rel (0) target = $region133
    $region132: #{cnn2d_transam_forward.1} parent=1 // pred_region
      %7227 = dma.done [#allocation3], 32
    $region133: #{cnn2d_transam_forward.1} parent=1 // pred_fallthru
      _
    %7228 = vsyncpa [#allocation3], 1

</llo_original>
